<compile_context>
chip_gen: v7x
topology: tpu7x:2x2x1
jax: 0.10.0
libtpu: 0.0.40
codegen_flags: <defaults>
</compile_context>

<pallas_src>
import functools

import jax
import jax.numpy as jnp
import numpy as np
from jax.experimental import pallas as pl
from jax.experimental.pallas import tpu as pltpu


def _round_up(x, m):
    return ((x + m - 1) // m) * m


# --------------------------------------------------------------------------- #
# Kernel
# --------------------------------------------------------------------------- #
def _repconv_kernel(x_ref, halo_ref, w_ref, b_ref, o_ref, *scratch,
                    wp, th, use_im2col):
    """One grid step = one (image, H-strip).

    x_ref:     (TH*Wp, C1)          flattened padded strip rows [t*TH, (t+1)*TH)
    halo_ref:  (8*Wp, C1)           next 8 padded rows (only 3 are used)
    w_ref:     (9*C1, C2p) im2col   fused 3x3 weights (both branches + BN folded)
               or (9, C1, C2p)
    b_ref:     (1, C2p)             fused bias (f32)
    o_ref:     (TH*Wp, C2p)         output strip; cols w in [W, Wp) are garbage
    scratch:   stitch VMEM ((TH+3)*Wp, C1) [+ acc VMEM (TH*Wp, C2p) f32]
    """
    L = th * wp
    stitch_ref = scratch[0]

    # Stitch the strip plus 3 halo rows into one contiguous VMEM buffer so every
    # conv tap is a single contiguous (sublane-shifted) slice of it.
    stitch_ref[pl.ds(0, L), :] = x_ref[...]
    stitch_ref[pl.ds(L, 3 * wp), :] = halo_ref[pl.ds(0, 3 * wp), :]

    if use_im2col:
        # Single MXU matmul with contraction depth K = 9*C1 (better MXU fill for
        # shallow layers).  Lane concat is 128-aligned by construction.
        patch = jnp.concatenate(
            [stitch_ref[pl.ds(kh * wp + kw, L), :]
             for kh in range(3) for kw in range(3)],
            axis=-1)
        acc = jnp.dot(patch, w_ref[...], preferred_element_type=jnp.float32)
    else:
        # 3x3 conv as 9 MXU matmuls accumulated in an f32 VMEM scratch (caps the
        # number of live (L, C2p) temporaries at one buffer).
        acc_ref = scratch[1]
        for kh in range(3):
            for kw in range(3):
                d = jnp.dot(stitch_ref[pl.ds(kh * wp + kw, L), :],
                            w_ref[kh * 3 + kw],
                            preferred_element_type=jnp.float32)
                if kh == 0 and kw == 0:
                    acc_ref[...] = d
                else:
                    acc_ref[...] += d
        acc = acc_ref[...]

    y = acc + b_ref[...]
    # SiLU(y) = y * sigmoid(y) = 0.5*y*(1 + tanh(y/2)): one EUP transcendental,
    # bounded output even for the garbage columns that get trimmed later.
    y = 0.5 * y * (1.0 + jnp.tanh(0.5 * y))
    o_ref[...] = y.astype(o_ref.dtype)


# --------------------------------------------------------------------------- #
# Trace-time parameter fusion (RepVGG reparameterization, eval-mode BN)
# --------------------------------------------------------------------------- #
def _fold_bn(bn):
    gamma, beta, mean, var, eps = bn
    scale = gamma / jnp.sqrt(var + eps)
    return scale, beta - mean * scale


def _fuse_repconv_params(w3_oihw, w1_oihw, bn3, bn1, bn_id=None):
    """Fold conv3x3+BN, conv1x1+BN (and optional identity BN) into one 3x3 HWIO
    kernel + bias.  Exact for eval-mode BatchNorm (modulo f32 rounding)."""
    c2, c1 = w3_oihw.shape[0], w3_oihw.shape[1]
    s3, b3 = _fold_bn(bn3)
    s1, b1 = _fold_bn(bn1)
    w3 = jnp.transpose(w3_oihw, (2, 3, 1, 0)) * s3            # (3,3,C1,C2)
    w1 = jnp.transpose(w1_oihw, (2, 3, 1, 0)) * s1            # (1,1,C1,C2)
    w = w3.at[1, 1].add(w1[0, 0])                             # 1x1 -> center tap
    b = b3 + b1
    if bn_id is not None:                                     # RepConv(bn=True)
        assert c1 == c2, "identity-BN branch requires c1 == c2"
        sid, bid = _fold_bn(bn_id)
        w = w.at[1, 1].add(jnp.diag(sid))
        b = b + bid
    return w, b


# --------------------------------------------------------------------------- #
# VMEM-budget-driven strip height
# --------------------------------------------------------------------------- #
def _choose_strip_height(N, H, Wp, C1, C2p, isz, use_im2col):
    """Pick TH (multiple of 8) so the per-step working set fits ~0.7x of the
    per-generation vmem limit; force >=2 strips at batch 1 (v7x megacore)."""
    try:
        cap = pltpu.get_tpu_info().vmem_capacity_bytes        # 128 MiB v5e/v6e, 64 MiB v7x
    except Exception:
        cap = 64 * 1024 * 1024
    vmem_limit = int(cap * 3 // 4)
    budget = int(vmem_limit * 7 // 10)

    # Costs independent of TH: double-buffered weights + bias, double-buffered
    # 8-row halo block, 3 extra stitch rows.
    fixed = (2 * 9 * C1 * C2p * isz + 2 * 2 * C2p * 4
             + 2 * 8 * Wp * C1 * isz + 3 * Wp * C1 * isz)
    per_row = Wp * (
        2 * C1 * isz                                   # main input, double buffered
        + C1 * isz                                     # stitch scratch
        + 2 * C2p * isz                                # output, double buffered
        + C2p * 4                                      # f32 elementwise temp
        + (9 * C1 * isz if use_im2col else C2p * 4)    # im2col patch vs acc scratch
    )
    max_th = max(8, (budget - fixed) // max(1, per_row))
    th = int(max(8, (max_th // 8) * 8))

    if N == 1 and H > 8:
        th_cap = _round_up((H + 1) // 2, 8)            # >=2 strips at batch 1
    else:
        th_cap = _round_up(H, 8)
    th = min(th, max(8, th_cap))
    return th, vmem_limit


# --------------------------------------------------------------------------- #
# Wrapper
# --------------------------------------------------------------------------- #
def repconv_forward(x_nchw, w3_oihw, w1_oihw, bn3, bn1, bn_id=None,
                    compute_dtype=jnp.bfloat16):
    """RepConv forward.  x_nchw: (N, C1, H, W).  Returns (N, C2, H, W)."""
    N, C1, H, W = x_nchw.shape
    C2 = w3_oihw.shape[0]
    C2p = _round_up(C2, 128)                 # lane-dense output channels
    Wp = _round_up(W + 2, 8)                 # padded width, multiple of 8 sublanes
    isz = jnp.dtype(compute_dtype).itemsize

    # im2col only when the lane concat is 128-aligned and the depth gain matters.
    use_im2col = (C1 % 128 == 0) and (C1 <= 128)

    # Fuse branches + BN into one 3x3 kernel and bias; pad channels; cast weights.
    w, b = _fuse_repconv_params(w3_oihw, w1_oihw, bn3, bn1, bn_id)
    w = jnp.pad(w, ((0, 0), (0, 0), (0, 0), (0, C2p - C2))).astype(compute_dtype)
    wk = w.reshape(9 * C1, C2p) if use_im2col else w.reshape(9, C1, C2p)
    b = jnp.pad(b, (0, C2p - C2)).reshape(1, C2p).astype(jnp.float32)

    TH, vmem_limit = _choose_strip_height(N, H, Wp, C1, C2p, isz, use_im2col)
    T = -(-H // TH)                          # ragged strips allowed (output rows padded)
    Hp_tot = T * TH + 8                      # 1 top halo + T*TH rows + bottom halo/guard/8-row block

    # NCHW -> NHWC, cast to MXU dtype, zero-pad (single fused XLA pass), flatten rows.
    x = jnp.transpose(x_nchw, (0, 2, 3, 1)).astype(compute_dtype)
    xpad = jnp.pad(x, ((0, 0), (1, Hp_tot - 1 - H), (1, Wp - 1 - W), (0, 0)))
    xflat = xpad.reshape(N, Hp_tot * Wp, C1)

    kernel = functools.partial(_repconv_kernel, wp=Wp, th=TH,
                               use_im2col=use_im2col)

    if use_im2col:
        w_spec = pl.BlockSpec((9 * C1, C2p), lambda n, t: (0, 0))
        scratch = [pltpu.VMEM(((TH + 3) * Wp, C1), compute_dtype)]
    else:
        w_spec = pl.BlockSpec((9, C1, C2p), lambda n, t: (0, 0, 0))
        scratch = [pltpu.VMEM(((TH + 3) * Wp, C1), compute_dtype),
                   pltpu.VMEM((TH * Wp, C2p), jnp.float32)]

    out = pl.pallas_call(
        kernel,
        out_shape=jax.ShapeDtypeStruct((N, T * TH * Wp, C2p), compute_dtype),
        grid=(N, T),
        in_specs=[
            # Main strip: blocked, non-overlapping rows [t*TH, (t+1)*TH).
            pl.BlockSpec((None, TH * Wp, C1), lambda n, t: (n, t, 0)),
            # Halo: the next 8 padded rows, 8-row-aligned blocked view of the same array.
            pl.BlockSpec((None, 8 * Wp, C1),
                         lambda n, t: (n, (t + 1) * (TH // 8), 0)),
            w_spec,
            pl.BlockSpec((1, C2p), lambda n, t: (0, 0)),
        ],
        out_specs=pl.BlockSpec((None, TH * Wp, C2p), lambda n, t: (n, t, 0)),
        scratch_shapes=scratch,
        compiler_params=pltpu.CompilerParams(
            dimension_semantics=("parallel", "parallel"),
            vmem_limit_bytes=vmem_limit,
        ),
    )(xflat, xflat, wk, b)

    # Drop padded rows / width / channels, back to NCHW and the caller's dtype.
    out = out.reshape(N, T * TH, Wp, C2p)[:, :H, :W, :C2]
    return jnp.transpose(out, (0, 3, 1, 2)).astype(x_nchw.dtype)


# --------------------------------------------------------------------------- #
# Plain-JAX reference (matches the PyTorch forward with eval-mode BN)
# --------------------------------------------------------------------------- #
def _reference_forward(x_nchw, w3_oihw, w1_oihw, bn3, bn1, bn_id=None):
    dn = ("NCHW", "OIHW", "NCHW")
    y3 = jax.lax.conv_general_dilated(x_nchw, w3_oihw, (1, 1), ((1, 1), (1, 1)),
                                      dimension_numbers=dn)
    y1 = jax.lax.conv_general_dilated(x_nchw, w1_oihw, (1, 1), ((0, 0), (0, 0)),
                                      dimension_numbers=dn)

    def bn_apply(y, bn):
        gamma, beta, mean, var, eps = bn
        scale = (gamma / jnp.sqrt(var + eps)).reshape(1, -1, 1, 1)
        bias = (beta - mean * gamma / jnp.sqrt(var + eps)).reshape(1, -1, 1, 1)
        return y * scale + bias

    y = bn_apply(y3, bn3) + bn_apply(y1, bn1)
    if bn_id is not None:
        y = y + bn_apply(x_nchw, bn_id)
    return y * jax.nn.sigmoid(y)


if __name__ == "__main__":
    key = jax.random.PRNGKey(0)
    ks = jax.random.split(key, 24)
    eps = 1e-5  # nn.BatchNorm2d default

    def make_bn(kg, kb, km, kv, c):
        return (jax.random.uniform(kg, (c,), jnp.float32, 0.5, 1.5),   # gamma
                jax.random.normal(kb, (c,), jnp.float32) * 0.1,        # beta
                jax.random.normal(km, (c,), jnp.float32) * 0.1,        # running_mean
                jax.random.uniform(kv, (c,), jnp.float32, 0.5, 1.5),   # running_var
                eps)

    # ---------------- Case 1/2: default RepConv, c1 != c2 -------------------
    N, C1, C2, H, W = 2, 4, 8, 16, 16
    x = jax.random.normal(ks[0], (N, C1, H, W), jnp.float32)
    w3 = jax.random.normal(ks[1], (C2, C1, 3, 3), jnp.float32) * 0.1
    w1 = jax.random.normal(ks[2], (C2, C1, 1, 1), jnp.float32) * 0.1
    bn3 = make_bn(ks[3], ks[4], ks[5], ks[6], C2)
    bn1 = make_bn(ks[7], ks[8], ks[9], ks[10], C2)
    ref = jax.block_until_ready(_reference_forward(x, w3, w1, bn3, bn1))

    # 1) Exact-precision path: validates forward semantics.
    out_f32 = jax.block_until_ready(
        repconv_forward(x, w3, w1, bn3, bn1, compute_dtype=jnp.float32))
    np.testing.assert_allclose(np.asarray(out_f32), np.asarray(ref),
                               rtol=1e-4, atol=1e-4)

    # 2) Fast bf16-MXU path (default), bf16 output.
    out_bf16 = jax.block_until_ready(repconv_forward(x, w3, w1, bn3, bn1))
    np.testing.assert_allclose(np.asarray(out_bf16), np.asarray(ref),
                               rtol=5e-2, atol=5e-2)

    # ---------------- Case 3: identity-BN branch (RepConv(bn=True)) ---------
    Cid = 8
    x_id = jax.random.normal(ks[11], (N, Cid, H, W), jnp.float32)
    w3_id = jax.random.normal(ks[12], (Cid, Cid, 3, 3), jnp.float32) * 0.1
    w1_id = jax.random.normal(ks[13], (Cid, Cid, 1, 1), jnp.float32) * 0.1
    bn3_id = make_bn(ks[3], ks[4], ks[5], ks[6], Cid)
    bn1_id = make_bn(ks[7], ks[8], ks[9], ks[10], Cid)
    bnid = make_bn(ks[14], ks[15], ks[5], ks[6], Cid)
    ref_id = jax.block_until_ready(
        _reference_forward(x_id, w3_id, w1_id, bn3_id, bn1_id, bnid))
    out_id = jax.block_until_ready(
        repconv_forward(x_id, w3_id, w1_id, bn3_id, bn1_id, bn_id=bnid,
                        compute_dtype=jnp.float32))
    np.testing.assert_allclose(np.asarray(out_id), np.asarray(ref_id),
                               rtol=1e-4, atol=1e-4)

    # ---------------- Case 4: im2col + multi-strip (ragged H, batch 1) ------
    # C1 = 128 triggers the single K=9*C1 matmul; N=1 forces >=2 H-strips, which
    # exercises the blocked main+halo stitch path and the ragged-row trimming.
    N4, C14, C24, H4, W4 = 1, 128, 128, 13, 11
    x4 = jax.random.normal(ks[16], (N4, C14, H4, W4), jnp.float32)
    w3_4 = jax.random.normal(ks[17], (C24, C14, 3, 3), jnp.float32) * 0.1
    w1_4 = jax.random.normal(ks[18], (C24, C14, 1, 1), jnp.float32) * 0.1
    bn3_4 = make_bn(ks[19], ks[20], ks[5], ks[6], C24)
    bn1_4 = make_bn(ks[21], ks[22], ks[9], ks[10], C24)
    ref4 = jax.block_until_ready(_reference_forward(x4, w3_4, w1_4, bn3_4, bn1_4))
    out4 = jax.block_until_ready(repconv_forward(x4, w3_4, w1_4, bn3_4, bn1_4))
    np.testing.assert_allclose(np.asarray(out4), np.asarray(ref4),
                               rtol=5e-2, atol=5e-2)

    print("KERNEL_OK")
</pallas_src>

<mosaic_0001>
module attributes {stable_mosaic.version = 11 : i64} {
  func.func @_repconv_kernel(%arg0: i32, %arg1: i32, %arg2: memref<1x384x4xf32, #tpu.memory_space<vmem>>, %arg3: memref<1x192x4xf32, #tpu.memory_space<vmem>>, %arg4: memref<9x4x128xf32, #tpu.memory_space<vmem>>, %arg5: memref<1x128xf32, #tpu.memory_space<vmem>>, %arg6: memref<1x384x128xf32, #tpu.memory_space<vmem>>, %arg7: memref<456x4xf32, #tpu.memory_space<vmem>>, %arg8: memref<384x128xf32, #tpu.memory_space<vmem>>) attributes {dimension_semantics = [#tpu.dimension_semantics<parallel>, #tpu.dimension_semantics<parallel>], iteration_bounds = array<i64: 2, 1>, scalar_prefetch = 0 : i64, scratch_operands = 2 : i64, tpu.core_type = #tpu.core_type<tc>, window_params = [{transform_indices = @transform_0, window_bounds = array<i64: 1, 384, 4>}, {transform_indices = @transform_1, window_bounds = array<i64: 1, 192, 4>}, {pipeline_mode = #tpu.pipeline_mode<synchronous>, transform_indices = @transform_2, window_bounds = array<i64: 9, 4, 128>}, {pipeline_mode = #tpu.pipeline_mode<synchronous>, transform_indices = @transform_3, window_bounds = array<i64: 1, 128>}, {transform_indices = @transform_4, window_bounds = array<i64: 1, 384, 128>}]} {
    %c0 = arith.constant 0 : index
    %c0_0 = arith.constant 0 : index
    %c0_1 = arith.constant 0 : index
    %0 = vector.load %arg2[%c0, %c0_0, %c0_1] : memref<1x384x4xf32, #tpu.memory_space<vmem>>, vector<1x384x4xf32>
    %1 = vector.shape_cast %0 : vector<1x384x4xf32> to vector<384x4xf32>
    %c0_2 = arith.constant 0 : index
    %c0_3 = arith.constant 0 : index
    %2 = vector.load %arg7[%c0_2, %c0_3] : memref<456x4xf32, #tpu.memory_space<vmem>>, vector<384x4xf32>
    tpu.vector_store %arg7[%c0_2, %c0_3], %1 {strides = array<i32>} : memref<456x4xf32, #tpu.memory_space<vmem>>, vector<384x4xf32>,
    %c0_4 = arith.constant 0 : index
    %c0_5 = arith.constant 0 : index
    %c0_6 = arith.constant 0 : index
    %3 = vector.load %arg3[%c0_4, %c0_5, %c0_6] : memref<1x192x4xf32, #tpu.memory_space<vmem>>, vector<1x72x4xf32>
    %4 = vector.shape_cast %3 : vector<1x72x4xf32> to vector<72x4xf32>
    %c384 = arith.constant 384 : index
    %c0_7 = arith.constant 0 : index
    %5 = vector.load %arg7[%c384, %c0_7] : memref<456x4xf32, #tpu.memory_space<vmem>>, vector<72x4xf32>
    tpu.vector_store %arg7[%c384, %c0_7], %4 {strides = array<i32>} : memref<456x4xf32, #tpu.memory_space<vmem>>, vector<72x4xf32>,
    %c0_8 = arith.constant 0 : index
    %c0_9 = arith.constant 0 : index
    %6 = vector.load %arg7[%c0_8, %c0_9] : memref<456x4xf32, #tpu.memory_space<vmem>>, vector<384x4xf32>
    %c0_10 = arith.constant 0 : index
    %c0_11 = arith.constant 0 : index
    %c0_12 = arith.constant 0 : index
    %7 = vector.load %arg4[%c0_10, %c0_11, %c0_12] : memref<9x4x128xf32, #tpu.memory_space<vmem>>, vector<1x4x128xf32>
    %8 = vector.shape_cast %7 : vector<1x4x128xf32> to vector<4x128xf32>
    %cst = arith.constant dense<0.000000e+00> : vector<384x128xf32>
    %9 = tpu.matmul %6, %8, %cst {dimension_numbers = #tpu.dot_dimension_numbers<[1], [0], [0], [1], [0, 0, 1, 1], [], []>} : vector<384x4xf32>, vector<4x128xf32>, vector<384x128xf32> -> vector<384x128xf32>
    %c0_13 = arith.constant 0 : index
    %c0_14 = arith.constant 0 : index
    %10 = vector.load %arg8[%c0_13, %c0_14] : memref<384x128xf32, #tpu.memory_space<vmem>>, vector<384x128xf32>
    tpu.vector_store %arg8[%c0_13, %c0_14], %9 {strides = array<i32>} : memref<384x128xf32, #tpu.memory_space<vmem>>, vector<384x128xf32>,
    %c1 = arith.constant 1 : index
    %c0_15 = arith.constant 0 : index
    %11 = vector.load %arg7[%c1, %c0_15] : memref<456x4xf32, #tpu.memory_space<vmem>>, vector<384x4xf32>
    %c1_16 = arith.constant 1 : index
    %c0_17 = arith.constant 0 : index
    %c0_18 = arith.constant 0 : index
    %12 = vector.load %arg4[%c1_16, %c0_17, %c0_18] : memref<9x4x128xf32, #tpu.memory_space<vmem>>, vector<1x4x128xf32>
    %13 = vector.shape_cast %12 : vector<1x4x128xf32> to vector<4x128xf32>
    %cst_19 = arith.constant dense<0.000000e+00> : vector<384x128xf32>
    %14 = tpu.matmul %11, %13, %cst_19 {dimension_numbers = #tpu.dot_dimension_numbers<[1], [0], [0], [1], [0, 0, 1, 1], [], []>} : vector<384x4xf32>, vector<4x128xf32>, vector<384x128xf32> -> vector<384x128xf32>
    %c0_20 = arith.constant 0 : index
    %c0_21 = arith.constant 0 : index
    %15 = vector.load %arg8[%c0_20, %c0_21] : memref<384x128xf32, #tpu.memory_space<vmem>>, vector<384x128xf32>
    %16 = arith.addf %15, %14 : vector<384x128xf32>
    %c0_22 = arith.constant 0 : index
    %c0_23 = arith.constant 0 : index
    %17 = vector.load %arg8[%c0_22, %c0_23] : memref<384x128xf32, #tpu.memory_space<vmem>>, vector<384x128xf32>
    tpu.vector_store %arg8[%c0_22, %c0_23], %16 {strides = array<i32>} : memref<384x128xf32, #tpu.memory_space<vmem>>, vector<384x128xf32>,
    %c2 = arith.constant 2 : index
    %c0_24 = arith.constant 0 : index
    %18 = vector.load %arg7[%c2, %c0_24] : memref<456x4xf32, #tpu.memory_space<vmem>>, vector<384x4xf32>
    %c2_25 = arith.constant 2 : index
    %c0_26 = arith.constant 0 : index
    %c0_27 = arith.constant 0 : index
    %19 = vector.load %arg4[%c2_25, %c0_26, %c0_27] : memref<9x4x128xf32, #tpu.memory_space<vmem>>, vector<1x4x128xf32>
    %20 = vector.shape_cast %19 : vector<1x4x128xf32> to vector<4x128xf32>
    %cst_28 = arith.constant dense<0.000000e+00> : vector<384x128xf32>
    %21 = tpu.matmul %18, %20, %cst_28 {dimension_numbers = #tpu.dot_dimension_numbers<[1], [0], [0], [1], [0, 0, 1, 1], [], []>} : vector<384x4xf32>, vector<4x128xf32>, vector<384x128xf32> -> vector<384x128xf32>
    %c0_29 = arith.constant 0 : index
    %c0_30 = arith.constant 0 : index
    %22 = vector.load %arg8[%c0_29, %c0_30] : memref<384x128xf32, #tpu.memory_space<vmem>>, vector<384x128xf32>
    %23 = arith.addf %22, %21 : vector<384x128xf32>
    %c0_31 = arith.constant 0 : index
    %c0_32 = arith.constant 0 : index
    %24 = vector.load %arg8[%c0_31, %c0_32] : memref<384x128xf32, #tpu.memory_space<vmem>>, vector<384x128xf32>
    tpu.vector_store %arg8[%c0_31, %c0_32], %23 {strides = array<i32>} : memref<384x128xf32, #tpu.memory_space<vmem>>, vector<384x128xf32>,
    %c24 = arith.constant 24 : index
    %c0_33 = arith.constant 0 : index
    %25 = vector.load %arg7[%c24, %c0_33] : memref<456x4xf32, #tpu.memory_space<vmem>>, vector<384x4xf32>
    %c3 = arith.constant 3 : index
    %c0_34 = arith.constant 0 : index
    %c0_35 = arith.constant 0 : index
    %26 = vector.load %arg4[%c3, %c0_34, %c0_35] : memref<9x4x128xf32, #tpu.memory_space<vmem>>, vector<1x4x128xf32>
    %27 = vector.shape_cast %26 : vector<1x4x128xf32> to vector<4x128xf32>
    %cst_36 = arith.constant dense<0.000000e+00> : vector<384x128xf32>
    %28 = tpu.matmul %25, %27, %cst_36 {dimension_numbers = #tpu.dot_dimension_numbers<[1], [0], [0], [1], [0, 0, 1, 1], [], []>} : vector<384x4xf32>, vector<4x128xf32>, vector<384x128xf32> -> vector<384x128xf32>
    %c0_37 = arith.constant 0 : index
    %c0_38 = arith.constant 0 : index
    %29 = vector.load %arg8[%c0_37, %c0_38] : memref<384x128xf32, #tpu.memory_space<vmem>>, vector<384x128xf32>
    %30 = arith.addf %29, %28 : vector<384x128xf32>
    %c0_39 = arith.constant 0 : index
    %c0_40 = arith.constant 0 : index
    %31 = vector.load %arg8[%c0_39, %c0_40] : memref<384x128xf32, #tpu.memory_space<vmem>>, vector<384x128xf32>
    tpu.vector_store %arg8[%c0_39, %c0_40], %30 {strides = array<i32>} : memref<384x128xf32, #tpu.memory_space<vmem>>, vector<384x128xf32>,
    %c25 = arith.constant 25 : index
    %c0_41 = arith.constant 0 : index
    %32 = vector.load %arg7[%c25, %c0_41] : memref<456x4xf32, #tpu.memory_space<vmem>>, vector<384x4xf32>
    %c4 = arith.constant 4 : index
    %c0_42 = arith.constant 0 : index
    %c0_43 = arith.constant 0 : index
    %33 = vector.load %arg4[%c4, %c0_42, %c0_43] : memref<9x4x128xf32, #tpu.memory_space<vmem>>, vector<1x4x128xf32>
    %34 = vector.shape_cast %33 : vector<1x4x128xf32> to vector<4x128xf32>
    %cst_44 = arith.constant dense<0.000000e+00> : vector<384x128xf32>
    %35 = tpu.matmul %32, %34, %cst_44 {dimension_numbers = #tpu.dot_dimension_numbers<[1], [0], [0], [1], [0, 0, 1, 1], [], []>} : vector<384x4xf32>, vector<4x128xf32>, vector<384x128xf32> -> vector<384x128xf32>
    %c0_45 = arith.constant 0 : index
    %c0_46 = arith.constant 0 : index
    %36 = vector.load %arg8[%c0_45, %c0_46] : memref<384x128xf32, #tpu.memory_space<vmem>>, vector<384x128xf32>
    %37 = arith.addf %36, %35 : vector<384x128xf32>
    %c0_47 = arith.constant 0 : index
    %c0_48 = arith.constant 0 : index
    %38 = vector.load %arg8[%c0_47, %c0_48] : memref<384x128xf32, #tpu.memory_space<vmem>>, vector<384x128xf32>
    tpu.vector_store %arg8[%c0_47, %c0_48], %37 {strides = array<i32>} : memref<384x128xf32, #tpu.memory_space<vmem>>, vector<384x128xf32>,
    %c26 = arith.constant 26 : index
    %c0_49 = arith.constant 0 : index
    %39 = vector.load %arg7[%c26, %c0_49] : memref<456x4xf32, #tpu.memory_space<vmem>>, vector<384x4xf32>
    %c5 = arith.constant 5 : index
    %c0_50 = arith.constant 0 : index
    %c0_51 = arith.constant 0 : index
    %40 = vector.load %arg4[%c5, %c0_50, %c0_51] : memref<9x4x128xf32, #tpu.memory_space<vmem>>, vector<1x4x128xf32>
    %41 = vector.shape_cast %40 : vector<1x4x128xf32> to vector<4x128xf32>
    %cst_52 = arith.constant dense<0.000000e+00> : vector<384x128xf32>
    %42 = tpu.matmul %39, %41, %cst_52 {dimension_numbers = #tpu.dot_dimension_numbers<[1], [0], [0], [1], [0, 0, 1, 1], [], []>} : vector<384x4xf32>, vector<4x128xf32>, vector<384x128xf32> -> vector<384x128xf32>
    %c0_53 = arith.constant 0 : index
    %c0_54 = arith.constant 0 : index
    %43 = vector.load %arg8[%c0_53, %c0_54] : memref<384x128xf32, #tpu.memory_space<vmem>>, vector<384x128xf32>
    %44 = arith.addf %43, %42 : vector<384x128xf32>
    %c0_55 = arith.constant 0 : index
    %c0_56 = arith.constant 0 : index
    %45 = vector.load %arg8[%c0_55, %c0_56] : memref<384x128xf32, #tpu.memory_space<vmem>>, vector<384x128xf32>
    tpu.vector_store %arg8[%c0_55, %c0_56], %44 {strides = array<i32>} : memref<384x128xf32, #tpu.memory_space<vmem>>, vector<384x128xf32>,
    %c48 = arith.constant 48 : index
    %c0_57 = arith.constant 0 : index
    %46 = vector.load %arg7[%c48, %c0_57] : memref<456x4xf32, #tpu.memory_space<vmem>>, vector<384x4xf32>
    %c6 = arith.constant 6 : index
    %c0_58 = arith.constant 0 : index
    %c0_59 = arith.constant 0 : index
    %47 = vector.load %arg4[%c6, %c0_58, %c0_59] : memref<9x4x128xf32, #tpu.memory_space<vmem>>, vector<1x4x128xf32>
    %48 = vector.shape_cast %47 : vector<1x4x128xf32> to vector<4x128xf32>
    %cst_60 = arith.constant dense<0.000000e+00> : vector<384x128xf32>
    %49 = tpu.matmul %46, %48, %cst_60 {dimension_numbers = #tpu.dot_dimension_numbers<[1], [0], [0], [1], [0, 0, 1, 1], [], []>} : vector<384x4xf32>, vector<4x128xf32>, vector<384x128xf32> -> vector<384x128xf32>
    %c0_61 = arith.constant 0 : index
    %c0_62 = arith.constant 0 : index
    %50 = vector.load %arg8[%c0_61, %c0_62] : memref<384x128xf32, #tpu.memory_space<vmem>>, vector<384x128xf32>
    %51 = arith.addf %50, %49 : vector<384x128xf32>
    %c0_63 = arith.constant 0 : index
    %c0_64 = arith.constant 0 : index
    %52 = vector.load %arg8[%c0_63, %c0_64] : memref<384x128xf32, #tpu.memory_space<vmem>>, vector<384x128xf32>
    tpu.vector_store %arg8[%c0_63, %c0_64], %51 {strides = array<i32>} : memref<384x128xf32, #tpu.memory_space<vmem>>, vector<384x128xf32>,
    %c49 = arith.constant 49 : index
    %c0_65 = arith.constant 0 : index
    %53 = vector.load %arg7[%c49, %c0_65] : memref<456x4xf32, #tpu.memory_space<vmem>>, vector<384x4xf32>
    %c7 = arith.constant 7 : index
    %c0_66 = arith.constant 0 : index
    %c0_67 = arith.constant 0 : index
    %54 = vector.load %arg4[%c7, %c0_66, %c0_67] : memref<9x4x128xf32, #tpu.memory_space<vmem>>, vector<1x4x128xf32>
    %55 = vector.shape_cast %54 : vector<1x4x128xf32> to vector<4x128xf32>
    %cst_68 = arith.constant dense<0.000000e+00> : vector<384x128xf32>
    %56 = tpu.matmul %53, %55, %cst_68 {dimension_numbers = #tpu.dot_dimension_numbers<[1], [0], [0], [1], [0, 0, 1, 1], [], []>} : vector<384x4xf32>, vector<4x128xf32>, vector<384x128xf32> -> vector<384x128xf32>
    %c0_69 = arith.constant 0 : index
    %c0_70 = arith.constant 0 : index
    %57 = vector.load %arg8[%c0_69, %c0_70] : memref<384x128xf32, #tpu.memory_space<vmem>>, vector<384x128xf32>
    %58 = arith.addf %57, %56 : vector<384x128xf32>
    %c0_71 = arith.constant 0 : index
    %c0_72 = arith.constant 0 : index
    %59 = vector.load %arg8[%c0_71, %c0_72] : memref<384x128xf32, #tpu.memory_space<vmem>>, vector<384x128xf32>
    tpu.vector_store %arg8[%c0_71, %c0_72], %58 {strides = array<i32>} : memref<384x128xf32, #tpu.memory_space<vmem>>, vector<384x128xf32>,
    %c50 = arith.constant 50 : index
    %c0_73 = arith.constant 0 : index
    %60 = vector.load %arg7[%c50, %c0_73] : memref<456x4xf32, #tpu.memory_space<vmem>>, vector<384x4xf32>
    %c8 = arith.constant 8 : index
    %c0_74 = arith.constant 0 : index
    %c0_75 = arith.constant 0 : index
    %61 = vector.load %arg4[%c8, %c0_74, %c0_75] : memref<9x4x128xf32, #tpu.memory_space<vmem>>, vector<1x4x128xf32>
    %62 = vector.shape_cast %61 : vector<1x4x128xf32> to vector<4x128xf32>
    %cst_76 = arith.constant dense<0.000000e+00> : vector<384x128xf32>
    %63 = tpu.matmul %60, %62, %cst_76 {dimension_numbers = #tpu.dot_dimension_numbers<[1], [0], [0], [1], [0, 0, 1, 1], [], []>} : vector<384x4xf32>, vector<4x128xf32>, vector<384x128xf32> -> vector<384x128xf32>
    %c0_77 = arith.constant 0 : index
    %c0_78 = arith.constant 0 : index
    %64 = vector.load %arg8[%c0_77, %c0_78] : memref<384x128xf32, #tpu.memory_space<vmem>>, vector<384x128xf32>
    %65 = arith.addf %64, %63 : vector<384x128xf32>
    %c0_79 = arith.constant 0 : index
    %c0_80 = arith.constant 0 : index
    %66 = vector.load %arg8[%c0_79, %c0_80] : memref<384x128xf32, #tpu.memory_space<vmem>>, vector<384x128xf32>
    tpu.vector_store %arg8[%c0_79, %c0_80], %65 {strides = array<i32>} : memref<384x128xf32, #tpu.memory_space<vmem>>, vector<384x128xf32>,
    %c0_81 = arith.constant 0 : index
    %c0_82 = arith.constant 0 : index
    %67 = vector.load %arg8[%c0_81, %c0_82] : memref<384x128xf32, #tpu.memory_space<vmem>>, vector<384x128xf32>
    %c0_83 = arith.constant 0 : index
    %c0_84 = arith.constant 0 : index
    %68 = vector.load %arg5[%c0_83, %c0_84] : memref<1x128xf32, #tpu.memory_space<vmem>>, vector<1x128xf32>
    %69 = vector.broadcast %68 : vector<1x128xf32> to vector<384x128xf32>
    %70 = arith.addf %67, %69 : vector<384x128xf32>
    %cst_85 = arith.constant 5.000000e-01 : f32
    %71 = vector.broadcast %cst_85 : f32 to vector<384x128xf32>
    %72 = arith.mulf %71, %70 : vector<384x128xf32>
    %cst_86 = arith.constant 5.000000e-01 : f32
    %73 = vector.broadcast %cst_86 : f32 to vector<384x128xf32>
    %74 = arith.mulf %73, %70 : vector<384x128xf32>
    %75 = math.tanh %74 : vector<384x128xf32>
    %cst_87 = arith.constant 1.000000e+00 : f32
    %76 = vector.broadcast %cst_87 : f32 to vector<384x128xf32>
    %77 = arith.addf %76, %75 : vector<384x128xf32>
    %78 = arith.mulf %72, %77 : vector<384x128xf32>
    %c0_88 = arith.constant 0 : index
    %c0_89 = arith.constant 0 : index
    %c0_90 = arith.constant 0 : index
    %79 = vector.load %arg6[%c0_88, %c0_89, %c0_90] : memref<1x384x128xf32, #tpu.memory_space<vmem>>, vector<1x384x128xf32>
    %80 = vector.shape_cast %79 : vector<1x384x128xf32> to vector<384x128xf32>
    %81 = vector.shape_cast %78 : vector<384x128xf32> to vector<1x384x128xf32>
    tpu.vector_store %arg6[%c0_88, %c0_89, %c0_90], %81 {strides = array<i32>} : memref<1x384x128xf32, #tpu.memory_space<vmem>>, vector<1x384x128xf32>,
    return
  }
  func.func @transform_0(%arg0: i32, %arg1: i32) -> (i32, i32, i32) {
    %c0_i32 = arith.constant 0 : i32
    %c0_i32_0 = arith.constant 0 : i32
    return %arg0, %arg1, %c0_i32 : i32, i32, i32
  }
  func.func @transform_1(%arg0: i32, %arg1: i32) -> (i32, i32, i32) {
    %c1_i32 = arith.constant 1 : i32
    %0 = arith.addi %arg1, %c1_i32 : i32
    %c2_i32 = arith.constant 2 : i32
    %1 = arith.muli %0, %c2_i32 : i32
    %c0_i32 = arith.constant 0 : i32
    %c0_i32_0 = arith.constant 0 : i32
    return %arg0, %1, %c0_i32 : i32, i32, i32
  }
  func.func @transform_2(%arg0: i32, %arg1: i32) -> (i32, i32, i32) {
    %c0_i32 = arith.constant 0 : i32
    %c0_i32_0 = arith.constant 0 : i32
    %c0_i32_1 = arith.constant 0 : i32
    %c0_i32_2 = arith.constant 0 : i32
    return %c0_i32, %c0_i32_0, %c0_i32_1 : i32, i32, i32
  }
  func.func @transform_3(%arg0: i32, %arg1: i32) -> (i32, i32) {
    %c0_i32 = arith.constant 0 : i32
    %c0_i32_0 = arith.constant 0 : i32
    %c0_i32_1 = arith.constant 0 : i32
    return %c0_i32, %c0_i32_0 : i32, i32
  }
  func.func @transform_4(%arg0: i32, %arg1: i32) -> (i32, i32, i32) {
    %c0_i32 = arith.constant 0 : i32
    %c0_i32_0 = arith.constant 0 : i32
    return %arg0, %arg1, %c0_i32 : i32, i32, i32
  }
}

</mosaic_0001>

<llo_original>
// kernel: tpu_custom_call.1
$region0: #{tpu_custom_call.1}
  #allocation0 [shape = 'u32[]', space=smem, size = 0x4, offset = 0x4, fixed_abs, tag = 'smem constant byte address 0x4 - core index']
  #allocation1 [shape = 'u32[144,128]{1,0:T(1,128)}', space=vmem, size = 0x12000, scoped, tag = 'internal scratch']
  #allocation2 [shape = 'f32[456,4]{1,0:T(8,128)}', space=vmem, size = 0x39000, scoped, tag = 'scratch operand']
  #allocation3 [shape = 'f32[384,128]{1,0:T(8,128)}', space=vmem, size = 0x30000, scoped, tag = 'scratch operand']
  %s0 = inlined_call_operand.vmem [shape: f32[2,576,4], index: 0, kind: input, shape index: {}]
  %s1 = inlined_call_operand.vmem [shape: f32[2,576,4], index: 1, kind: input, shape index: {}]
  %s2 = inlined_call_operand.vmem [shape: f32[9,4,128], index: 2, kind: input, shape index: {}]
  %s3 = inlined_call_operand.vmem [shape: f32[1,128], index: 3, kind: input, shape index: {}]
  %s4 = inlined_call_operand.hbm [shape: f32[2,384,128], index: 4, kind: output, shape index: {}]
  %s5 = sld [smem:[#allocation0]]
  $region49: #{tpu_custom_call.1} parent=0
    _
  %s7 = ssub.s32 1, %s5
  %s8 = scalar_select 0, %s7, %s5
  $region1: #{tpu_custom_call.1} parent=0
    #allocation4 [shape = 'u8[393216]{0}', space=vmem, size = 0x60000, scoped, tag = 'output window, operand 0']
    #allocation5 [shape = 's32[2]{0}', space=sflag, size = 0x8, scoped, tag = 'scoped memory for tpu_custom_call.1']
    %9 = vsyncpa [#allocation5], 0
    %s10 = scalar_lea.sflag [#allocation5], 1
    %11 = vsyncpa %s10, 0
    loop: start=0, step=1, limit=4
    $region2: #{tpu_custom_call.1} parent=1 // loop_pre_header
      _
    $region3: #{tpu_custom_call.1} parent=1 // loop_header
      %s13 = sphi 0, %s17
      %p14 = scmp.ge.s32.totalorder %s13, 4
      %s20 = sphi 0, %s32
      %s21 = sphi 0, %s28
      %s22 = sphi 0, %s20
      %s23 = sphi 0, %s21
      %s24 = sphi 0, %s22
      %s25 = sphi 0, %s23
      %s37 = sphi 0, %s39
      %s40 = sphi 0, %s37
      %s41 = sphi 0, %s40
      %s57 = sphi 0, %s41
      %s69 = sphi 0, %s71
      %s72 = sphi 0, %s69
      %s73 = sphi 0, %s72
      %s89 = sphi 0, %s73
      %s93 = sphi 0, %s93
      %s95 = sphi 0, %s93
      %s96 = sphi 0, %s95
      %s110 = sphi 0, %s96
      %s114 = sphi 0, %s114
      %s116 = sphi 0, %s114
      %s117 = sphi 0, %s116
      %s131 = sphi 0, %s117
      %s139 = sphi 0, %s141
      %s142 = sphi 0, %s139
      %s143 = sphi 0, %s142
      %s159 = sphi 0, %s143
    $region4: #{tpu_custom_call.1} parent=1 // loop_header_branch
      %16 = sbr.rel (%p14) target = $region8
    $region5: #{tpu_custom_call.1} parent=1 // loop_body
      %s18 = ssub.s32 %s13, 1
      %s19 = ssub.s32 %s13, 2
      %s26 = sadd.s32 1, %s21
      %p27 = scmp.ge.s32.totalorder %s26, 1
      %s28 = scalar_select %p27, 0, %s26
      %s29 = sadd.s32 1, %s20
      %s30 = scalar_select %p27, %s29, %s20
      %p31 = scmp.ge.s32.totalorder %s30, 2
      %s32 = scalar_select %p31, 0, %s30
      %s33 = ssub.s32 %s20, %s32
      %s34 = ssub.s32 %s21, %s28
      %s35 = sor.u32 %s33, %s34
      %p36 = scmp.eq.s32.totalorder %s35, 0
      %s38 = sadd.s32 %s37, 1
      %s39 = scalar_select %p36, %s37, %s38
      %p42 = pneg %p36
      %p43 = scmp.eq.s32.totalorder %s13, 1
      %p44 = por %p42, %p43
      %p45 = scmp.ne.s32.totalorder %s37, %s40
      %p46 = scmp.eq.s32.totalorder %s13, 0
      %p47 = por %p45, %p46
      %p48 = scmp.ne.s32.totalorder %s37, %s40
      %p49 = scmp.eq.s32.totalorder %s18, 1
      %p50 = por %p48, %p49
      %p51 = scmp.ne.s32.totalorder %s40, %s41
      %p52 = scmp.eq.s32.totalorder %s18, 0
      %p53 = por %p51, %p52
      %p54 = scmp.ne.s32.totalorder %s40, %s41
      %p55 = scmp.eq.s32.totalorder %s19, 1
      %p56 = por %p54, %p55
      %p58 = scmp.ne.s32.totalorder %s41, %s57
      %p59 = scmp.eq.s32.totalorder %s19, 0
      %p60 = por %p58, %p59
      %s61 = sadd.s32 %s21, 1
      %s62 = smul.u32 %s61, 2
      %s63 = sadd.s32 %s28, 1
      %s64 = smul.u32 %s63, 2
      %s65 = ssub.s32 %s20, %s32
      %s66 = ssub.s32 %s62, %s64
      %s67 = sor.u32 %s65, %s66
      %p68 = scmp.eq.s32.totalorder %s67, 0
      %s70 = sadd.s32 %s69, 1
      %s71 = scalar_select %p68, %s69, %s70
      %p74 = pneg %p68
      %p75 = scmp.eq.s32.totalorder %s13, 1
      %p76 = por %p74, %p75
      %p77 = scmp.ne.s32.totalorder %s69, %s72
      %p78 = scmp.eq.s32.totalorder %s13, 0
      %p79 = por %p77, %p78
      %p80 = scmp.ne.s32.totalorder %s69, %s72
      %p81 = scmp.eq.s32.totalorder %s18, 1
      %p82 = por %p80, %p81
      %p83 = scmp.ne.s32.totalorder %s72, %s73
      %p84 = scmp.eq.s32.totalorder %s18, 0
      %p85 = por %p83, %p84
      %p86 = scmp.ne.s32.totalorder %s72, %s73
      %p87 = scmp.eq.s32.totalorder %s19, 1
      %p88 = por %p86, %p87
      %p90 = scmp.ne.s32.totalorder %s73, %s89
      %p91 = scmp.eq.s32.totalorder %s19, 0
      %p92 = por %p90, %p91
      %s94 = sadd.s32 %s93, 1
      %p97 = scmp.eq.s32.totalorder %s13, 1
      %p98 = scmp.ne.s32.totalorder %s93, %s95
      %p99 = scmp.eq.s32.totalorder %s13, 0
      %p100 = por %p98, %p99
      %p101 = scmp.ne.s32.totalorder %s93, %s95
      %p102 = scmp.eq.s32.totalorder %s18, 1
      %p103 = por %p101, %p102
      %p104 = scmp.ne.s32.totalorder %s95, %s96
      %p105 = scmp.eq.s32.totalorder %s18, 0
      %p106 = por %p104, %p105
      %p107 = scmp.ne.s32.totalorder %s95, %s96
      %p108 = scmp.eq.s32.totalorder %s19, 1
      %p109 = por %p107, %p108
      %p111 = scmp.ne.s32.totalorder %s96, %s110
      %p112 = scmp.eq.s32.totalorder %s19, 0
      %p113 = por %p111, %p112
      %s115 = sadd.s32 %s114, 1
      %p118 = scmp.eq.s32.totalorder %s13, 1
      %p119 = scmp.ne.s32.totalorder %s114, %s116
      %p120 = scmp.eq.s32.totalorder %s13, 0
      %p121 = por %p119, %p120
      %p122 = scmp.ne.s32.totalorder %s114, %s116
      %p123 = scmp.eq.s32.totalorder %s18, 1
      %p124 = por %p122, %p123
      %p125 = scmp.ne.s32.totalorder %s116, %s117
      %p126 = scmp.eq.s32.totalorder %s18, 0
      %p127 = por %p125, %p126
      %p128 = scmp.ne.s32.totalorder %s116, %s117
      %p129 = scmp.eq.s32.totalorder %s19, 1
      %p130 = por %p128, %p129
      %p132 = scmp.ne.s32.totalorder %s117, %s131
      %p133 = scmp.eq.s32.totalorder %s19, 0
      %p134 = por %p132, %p133
      %s135 = ssub.s32 %s20, %s32
      %s136 = ssub.s32 %s21, %s28
      %s137 = sor.u32 %s135, %s136
      %p138 = scmp.eq.s32.totalorder %s137, 0
      %s140 = sadd.s32 %s139, 1
      %s141 = scalar_select %p138, %s139, %s140
      %p144 = pneg %p138
      %p145 = scmp.eq.s32.totalorder %s13, 1
      %p146 = por %p144, %p145
      %p147 = scmp.ne.s32.totalorder %s139, %s142
      %p148 = scmp.eq.s32.totalorder %s13, 0
      %p149 = por %p147, %p148
      %p150 = scmp.ne.s32.totalorder %s139, %s142
      %p151 = scmp.eq.s32.totalorder %s18, 1
      %p152 = por %p150, %p151
      %p153 = scmp.ne.s32.totalorder %s142, %s143
      %p154 = scmp.eq.s32.totalorder %s18, 0
      %p155 = por %p153, %p154
      %p156 = scmp.ne.s32.totalorder %s142, %s143
      %p157 = scmp.eq.s32.totalorder %s19, 1
      %p158 = por %p156, %p157
      %p160 = scmp.ne.s32.totalorder %s143, %s159
      %p161 = scmp.eq.s32.totalorder %s19, 0
      %p162 = por %p160, %p161
      %p163 = scmp.le.s32.totalorder 1, %s13
      %p164 = scmp.lt.s32.totalorder %s13, 3
      %p165 = pnand %p163, %p164
      %p166 = pneg %p165
      // Predicated region
      $region9: #{tpu_custom_call.1} parent=5 // pred_check
        _
      $region10: #{tpu_custom_call.1} parent=5 // pred_check_branch
        %168 = sbr.rel (%p165) target = $region12
      $region11: #{tpu_custom_call.1} parent=5 // pred_region
        %s169 = ssub.s32 %s13, 1
        // Predicated region
        $region13: #{tpu_custom_call.1} parent=11 // pred_check
          %p170 = pneg %p106
        $region14: #{tpu_custom_call.1} parent=11 // pred_check_branch
          %172 = sbr.rel (%p170) target = $region16
        $region15: #{tpu_custom_call.1} parent=11 // pred_region
          _
        $region16: #{tpu_custom_call.1} parent=11 // pred_fallthru
          _
        // Predicated region
        $region17: #{tpu_custom_call.1} parent=11 // pred_check
          %p173 = pneg %p127
        $region18: #{tpu_custom_call.1} parent=11 // pred_check_branch
          %175 = sbr.rel (%p173) target = $region20
        $region19: #{tpu_custom_call.1} parent=11 // pred_region
          _
        $region20: #{tpu_custom_call.1} parent=11 // pred_fallthru
          _
      $region12: #{tpu_custom_call.1} parent=5 // pred_fallthru
        _
      %p176 = scmp.lt.s32.totalorder %s13, 2
      // Predicated region
      $region21: #{tpu_custom_call.1} parent=5 // pred_check
        %p177 = pneg %p176
      $region22: #{tpu_custom_call.1} parent=5 // pred_check_branch
        %179 = sbr.rel (%p177) target = $region24
      $region23: #{tpu_custom_call.1} parent=5 // pred_region
        // Predicated region
        $region25: #{tpu_custom_call.1} parent=23 // pred_check
          %p180 = pneg %p47
        $region26: #{tpu_custom_call.1} parent=23 // pred_check_branch
          %182 = sbr.rel (%p180) target = $region28
        $region27: #{tpu_custom_call.1} parent=23 // pred_region
          %s183 = smul.u32 48, %s21
          %s184 = ssub.s32 72, %s183
          %p185 = scmp.lt.s32.totalorder %s184, 48
          %s186 = scalar_select %p185, %s184, 48
          %s187 = smul.u32 128, %s186
          %p188 = scmp.lt.s32.totalorder %s20, 1
          %s189 = scalar_select %p188, %s20, 1
          %p190 = scmp.lt.s32.totalorder %s183, 71
          %s191 = scalar_select %p190, %s183, 71
          %s192 = smul.addr %s189, 72
          %s193 = sadd.s32 %s191, %s192
          %s194 = smul.addr %s193, 8
          %s195 = scalar_lea.vmem %s0, %s194
          %s196 = smul.u32 48, %s21
          %s197 = ssub.s32 72, %s196
          %p198 = scmp.lt.s32.totalorder %s197, 48
          %s199 = scalar_select %p198, %s197, 48
          %s200 = smul.u32 128, %s199
        $region28: #{tpu_custom_call.1} parent=23 // pred_fallthru
          _
        // Predicated region
        $region29: #{tpu_custom_call.1} parent=23 // pred_check
          %p201 = pneg %p79
        $region30: #{tpu_custom_call.1} parent=23 // pred_check_branch
          %203 = sbr.rel (%p201) target = $region32
        $region31: #{tpu_custom_call.1} parent=23 // pred_region
          %s204 = sadd.s32 %s21, 1
          %s205 = smul.u32 %s204, 2
          %s206 = smul.u32 24, %s205
          %p207 = scmp.lt.s32.totalorder %s20, 1
          %s208 = scalar_select %p207, %s20, 1
          %p209 = scmp.lt.s32.totalorder %s206, 71
          %s210 = scalar_select %p209, %s206, 71
          %s211 = smul.addr %s208, 72
          %s212 = sadd.s32 %s210, %s211
          %s213 = smul.addr %s212, 8
          %s214 = scalar_lea.vmem %s1, %s213
          %s215 = sadd.s32 %s21, 1
          %s216 = smul.u32 %s215, 2
          %s217 = smul.u32 24, %s216
        $region32: #{tpu_custom_call.1} parent=23 // pred_fallthru
          _
      $region24: #{tpu_custom_call.1} parent=5 // pred_fallthru
        _
      %p218 = scmp.le.s32.totalorder 1, %s13
      %p219 = scmp.lt.s32.totalorder %s13, 3
      %p220 = pnand %p218, %p219
      %p221 = pneg %p220
      // Predicated region
      $region33: #{tpu_custom_call.1} parent=5 // pred_check
        _
      $region34: #{tpu_custom_call.1} parent=5 // pred_check_branch
        %223 = sbr.rel (%p220) target = $region36
      $region35: #{tpu_custom_call.1} parent=5 // pred_region
        %s224 = ssub.s32 %s13, 1
        %s225 = smul.u32 48, %s23
        %s226 = ssub.s32 72, %s225
        %p227 = scmp.lt.s32.totalorder %s226, 48
        %s228 = scalar_select %p227, %s226, 48
        %s229 = smul.u32 128, %s228
        %p230 = scmp.lt.s32.totalorder %s22, 1
        %s231 = scalar_select %p230, %s22, 1
        %p232 = scmp.lt.s32.totalorder %s225, 71
        %s233 = scalar_select %p232, %s225, 71
        %s234 = smul.addr %s231, 72
        %s235 = sadd.s32 %s233, %s234
        %s236 = smul.addr %s235, 8
        %s237 = scalar_lea.vmem %s0, %s236
        %p238 = pneg %p53
        %p239 = pneg %p50
        %s240 = sadd.s32 %s23, 1
        %s241 = smul.u32 %s240, 2
        %s242 = smul.u32 24, %s241
        %p243 = scmp.lt.s32.totalorder %s22, 1
        %s244 = scalar_select %p243, %s22, 1
        %p245 = scmp.lt.s32.totalorder %s242, 71
        %s246 = scalar_select %p245, %s242, 71
        %s247 = smul.addr %s244, 72
        %s248 = sadd.s32 %s246, %s247
        %s249 = smul.addr %s248, 8
        %s250 = scalar_lea.vmem %s1, %s249
        %p251 = pneg %p85
        %p252 = pneg %p82
        %p253 = pneg %p106
        %p254 = pneg %p103
        %p255 = pneg %p127
        %p256 = pneg %p124
        %p257 = pneg %p155
        %p258 = pneg %p152
        %s259 = sand.u32 %s142, 1
        %s260 = scalar_lea.sflag [#allocation5], %s259
        %s261 = sand.u32 %s142, 1
        %s262 = smul.addr %s261, 384
        %s263 = scalar_lea.vmem [#allocation4], %s262
        %s264 = smul.u32 48, %s23
        %s265 = ssub.s32 72, %s264
        %p266 = scmp.lt.s32.totalorder %s265, 48
        %s267 = scalar_select %p266, %s265, 48
        %s268 = smul.u32 128, %s267
        %p269 = scmp.lt.s32.totalorder %s22, 1
        %s270 = scalar_select %p269, %s22, 1
        %p271 = scmp.lt.s32.totalorder %s264, 71
        %s272 = scalar_select %p271, %s264, 71
        %s273 = smul.addr %s270, 72
        %s274 = sadd.s32 %s272, %s273
        %s275 = smul.addr %s274, 8
        %s276 = scalar_lea.vmem %s0, %s275
        %s277 = smul.u32 48, %s23
        %s278 = ssub.s32 72, %s277
        %p279 = scmp.lt.s32.totalorder %s278, 48
        %s280 = scalar_select %p279, %s278, 48
        %s281 = smul.u32 128, %s280
        %s282 = sadd.s32 %s23, 1
        %s283 = smul.u32 %s282, 2
        %s284 = smul.u32 24, %s283
        %p285 = scmp.lt.s32.totalorder %s22, 1
        %s286 = scalar_select %p285, %s22, 1
        %p287 = scmp.lt.s32.totalorder %s284, 71
        %s288 = scalar_select %p287, %s284, 71
        %s289 = smul.addr %s286, 72
        %s290 = sadd.s32 %s288, %s289
        %s291 = smul.addr %s290, 8
        %s292 = scalar_lea.vmem %s1, %s291
        %s293 = sadd.s32 %s23, 1
        %s294 = smul.u32 %s293, 2
        %s295 = smul.u32 24, %s294
        %s296 = smul.u32 48, %s23
        %v297 = vld [vmem:[%s276] sm:$0xff]
        %v298 = vld [vmem:[%s276 + $0x8] sm:$0xff]
        %v299 = vld [vmem:[%s276 + $0x10] sm:$0xff]
        %v300 = vld [vmem:[%s276 + $0x18] sm:$0xff]
        %v301 = vld [vmem:[%s276 + $0x20] sm:$0xff]
        %v302 = vld [vmem:[%s276 + $0x28] sm:$0xff]
        %v303 = vld [vmem:[%s276 + $0x30] sm:$0xff]
        %v304 = vld [vmem:[%s276 + $0x38] sm:$0xff]
        %v305 = vld [vmem:[%s276 + $0x40] sm:$0xff]
        %v306 = vld [vmem:[%s276 + $0x48] sm:$0xff]
        %v307 = vld [vmem:[%s276 + $0x50] sm:$0xff]
        %v308 = vld [vmem:[%s276 + $0x58] sm:$0xff]
        %v309 = vld [vmem:[%s276 + $0x60] sm:$0xff]
        %v310 = vld [vmem:[%s276 + $0x68] sm:$0xff]
        %v311 = vld [vmem:[%s276 + $0x70] sm:$0xff]
        %v312 = vld [vmem:[%s276 + $0x78] sm:$0xff]
        %v313 = vld [vmem:[%s276 + $0x80] sm:$0xff]
        %v314 = vld [vmem:[%s276 + $0x88] sm:$0xff]
        %v315 = vld [vmem:[%s276 + $0x90] sm:$0xff]
        %v316 = vld [vmem:[%s276 + $0x98] sm:$0xff]
        %v317 = vld [vmem:[%s276 + $0xa0] sm:$0xff]
        %v318 = vld [vmem:[%s276 + $0xa8] sm:$0xff]
        %v319 = vld [vmem:[%s276 + $0xb0] sm:$0xff]
        %v320 = vld [vmem:[%s276 + $0xb8] sm:$0xff]
        %v321 = vld [vmem:[%s276 + $0xc0] sm:$0xff]
        %v322 = vld [vmem:[%s276 + $0xc8] sm:$0xff]
        %v323 = vld [vmem:[%s276 + $0xd0] sm:$0xff]
        %v324 = vld [vmem:[%s276 + $0xd8] sm:$0xff]
        %v325 = vld [vmem:[%s276 + $0xe0] sm:$0xff]
        %v326 = vld [vmem:[%s276 + $0xe8] sm:$0xff]
        %v327 = vld [vmem:[%s276 + $0xf0] sm:$0xff]
        %v328 = vld [vmem:[%s276 + $0xf8] sm:$0xff]
        %v329 = vld [vmem:[%s276 + $0x100] sm:$0xff]
        %v330 = vld [vmem:[%s276 + $0x108] sm:$0xff]
        %v331 = vld [vmem:[%s276 + $0x110] sm:$0xff]
        %v332 = vld [vmem:[%s276 + $0x118] sm:$0xff]
        %v333 = vld [vmem:[%s276 + $0x120] sm:$0xff]
        %v334 = vld [vmem:[%s276 + $0x128] sm:$0xff]
        %v335 = vld [vmem:[%s276 + $0x130] sm:$0xff]
        %v336 = vld [vmem:[%s276 + $0x138] sm:$0xff]
        %v337 = vld [vmem:[%s276 + $0x140] sm:$0xff]
        %v338 = vld [vmem:[%s276 + $0x148] sm:$0xff]
        %v339 = vld [vmem:[%s276 + $0x150] sm:$0xff]
        %v340 = vld [vmem:[%s276 + $0x158] sm:$0xff]
        %v341 = vld [vmem:[%s276 + $0x160] sm:$0xff]
        %v342 = vld [vmem:[%s276 + $0x168] sm:$0xff]
        %v343 = vld [vmem:[%s276 + $0x170] sm:$0xff]
        %v344 = vld [vmem:[%s276 + $0x178] sm:$0xff]
        %vm345 = vcmask 31744
        %346 = vst.msk [vmem:[#allocation2] sm:$0xff] %vm345, %v297
        %347 = vst.msk [vmem:[#allocation2 + $0x8] sm:$0xff] %vm345, %v298
        %348 = vst.msk [vmem:[#allocation2 + $0x10] sm:$0xff] %vm345, %v299
        %349 = vst.msk [vmem:[#allocation2 + $0x18] sm:$0xff] %vm345, %v300
        %350 = vst.msk [vmem:[#allocation2 + $0x20] sm:$0xff] %vm345, %v301
        %351 = vst.msk [vmem:[#allocation2 + $0x28] sm:$0xff] %vm345, %v302
        %352 = vst.msk [vmem:[#allocation2 + $0x30] sm:$0xff] %vm345, %v303
        %353 = vst.msk [vmem:[#allocation2 + $0x38] sm:$0xff] %vm345, %v304
        %354 = vst.msk [vmem:[#allocation2 + $0x40] sm:$0xff] %vm345, %v305
        %355 = vst.msk [vmem:[#allocation2 + $0x48] sm:$0xff] %vm345, %v306
        %356 = vst.msk [vmem:[#allocation2 + $0x50] sm:$0xff] %vm345, %v307
        %357 = vst.msk [vmem:[#allocation2 + $0x58] sm:$0xff] %vm345, %v308
        %358 = vst.msk [vmem:[#allocation2 + $0x60] sm:$0xff] %vm345, %v309
        %359 = vst.msk [vmem:[#allocation2 + $0x68] sm:$0xff] %vm345, %v310
        %360 = vst.msk [vmem:[#allocation2 + $0x70] sm:$0xff] %vm345, %v311
        %361 = vst.msk [vmem:[#allocation2 + $0x78] sm:$0xff] %vm345, %v312
        %362 = vst.msk [vmem:[#allocation2 + $0x80] sm:$0xff] %vm345, %v313
        %363 = vst.msk [vmem:[#allocation2 + $0x88] sm:$0xff] %vm345, %v314
        %364 = vst.msk [vmem:[#allocation2 + $0x90] sm:$0xff] %vm345, %v315
        %365 = vst.msk [vmem:[#allocation2 + $0x98] sm:$0xff] %vm345, %v316
        %366 = vst.msk [vmem:[#allocation2 + $0xa0] sm:$0xff] %vm345, %v317
        %367 = vst.msk [vmem:[#allocation2 + $0xa8] sm:$0xff] %vm345, %v318
        %368 = vst.msk [vmem:[#allocation2 + $0xb0] sm:$0xff] %vm345, %v319
        %369 = vst.msk [vmem:[#allocation2 + $0xb8] sm:$0xff] %vm345, %v320
        %370 = vst.msk [vmem:[#allocation2 + $0xc0] sm:$0xff] %vm345, %v321
        %371 = vst.msk [vmem:[#allocation2 + $0xc8] sm:$0xff] %vm345, %v322
        %372 = vst.msk [vmem:[#allocation2 + $0xd0] sm:$0xff] %vm345, %v323
        %373 = vst.msk [vmem:[#allocation2 + $0xd8] sm:$0xff] %vm345, %v324
        %374 = vst.msk [vmem:[#allocation2 + $0xe0] sm:$0xff] %vm345, %v325
        %375 = vst.msk [vmem:[#allocation2 + $0xe8] sm:$0xff] %vm345, %v326
        %376 = vst.msk [vmem:[#allocation2 + $0xf0] sm:$0xff] %vm345, %v327
        %377 = vst.msk [vmem:[#allocation2 + $0xf8] sm:$0xff] %vm345, %v328
        %378 = vst.msk [vmem:[#allocation2 + $0x100] sm:$0xff] %vm345, %v329
        %379 = vst.msk [vmem:[#allocation2 + $0x108] sm:$0xff] %vm345, %v330
        %380 = vst.msk [vmem:[#allocation2 + $0x110] sm:$0xff] %vm345, %v331
        %381 = vst.msk [vmem:[#allocation2 + $0x118] sm:$0xff] %vm345, %v332
        %382 = vst.msk [vmem:[#allocation2 + $0x120] sm:$0xff] %vm345, %v333
        %383 = vst.msk [vmem:[#allocation2 + $0x128] sm:$0xff] %vm345, %v334
        %384 = vst.msk [vmem:[#allocation2 + $0x130] sm:$0xff] %vm345, %v335
        %385 = vst.msk [vmem:[#allocation2 + $0x138] sm:$0xff] %vm345, %v336
        %386 = vst.msk [vmem:[#allocation2 + $0x140] sm:$0xff] %vm345, %v337
        %387 = vst.msk [vmem:[#allocation2 + $0x148] sm:$0xff] %vm345, %v338
        %388 = vst.msk [vmem:[#allocation2 + $0x150] sm:$0xff] %vm345, %v339
        %389 = vst.msk [vmem:[#allocation2 + $0x158] sm:$0xff] %vm345, %v340
        %390 = vst.msk [vmem:[#allocation2 + $0x160] sm:$0xff] %vm345, %v341
        %391 = vst.msk [vmem:[#allocation2 + $0x168] sm:$0xff] %vm345, %v342
        %392 = vst.msk [vmem:[#allocation2 + $0x170] sm:$0xff] %vm345, %v343
        %393 = vst.msk [vmem:[#allocation2 + $0x178] sm:$0xff] %vm345, %v344
        %v394 = vld [vmem:[%s292] sm:$0xff]
        %v395 = vld [vmem:[%s292 + $0x8] sm:$0xff]
        %v396 = vld [vmem:[%s292 + $0x10] sm:$0xff]
        %v397 = vld [vmem:[%s292 + $0x18] sm:$0xff]
        %v398 = vld [vmem:[%s292 + $0x20] sm:$0xff]
        %v399 = vld [vmem:[%s292 + $0x28] sm:$0xff]
        %v400 = vld [vmem:[%s292 + $0x30] sm:$0xff]
        %v401 = vld [vmem:[%s292 + $0x38] sm:$0xff]
        %v402 = vld [vmem:[%s292 + $0x40] sm:$0xff]
        %403 = vst.msk [vmem:[#allocation2 + $0x180] sm:$0xff] %vm345, %v394
        %404 = vst.msk [vmem:[#allocation2 + $0x188] sm:$0xff] %vm345, %v395
        %405 = vst.msk [vmem:[#allocation2 + $0x190] sm:$0xff] %vm345, %v396
        %406 = vst.msk [vmem:[#allocation2 + $0x198] sm:$0xff] %vm345, %v397
        %407 = vst.msk [vmem:[#allocation2 + $0x1a0] sm:$0xff] %vm345, %v398
        %408 = vst.msk [vmem:[#allocation2 + $0x1a8] sm:$0xff] %vm345, %v399
        %409 = vst.msk [vmem:[#allocation2 + $0x1b0] sm:$0xff] %vm345, %v400
        %410 = vst.msk [vmem:[#allocation2 + $0x1b8] sm:$0xff] %vm345, %v401
        %411 = vst.msk [vmem:[#allocation2 + $0x1c0] sm:$0xff] %vm345, %v402
        %v412 = vld [vmem:[#allocation2] sm:$0xff]
        %v413 = vld [vmem:[#allocation2 + $0x8] sm:$0xff]
        %v414 = vld [vmem:[#allocation2 + $0x10] sm:$0xff]
        %v415 = vld [vmem:[#allocation2 + $0x18] sm:$0xff]
        %v416 = vld [vmem:[#allocation2 + $0x20] sm:$0xff]
        %v417 = vld [vmem:[#allocation2 + $0x28] sm:$0xff]
        %v418 = vld [vmem:[#allocation2 + $0x30] sm:$0xff]
        %v419 = vld [vmem:[#allocation2 + $0x38] sm:$0xff]
        %v420 = vld [vmem:[#allocation2 + $0x40] sm:$0xff]
        %v421 = vld [vmem:[#allocation2 + $0x48] sm:$0xff]
        %v422 = vld [vmem:[#allocation2 + $0x50] sm:$0xff]
        %v423 = vld [vmem:[#allocation2 + $0x58] sm:$0xff]
        %v424 = vld [vmem:[#allocation2 + $0x60] sm:$0xff]
        %v425 = vld [vmem:[#allocation2 + $0x68] sm:$0xff]
        %v426 = vld [vmem:[#allocation2 + $0x70] sm:$0xff]
        %v427 = vld [vmem:[#allocation2 + $0x78] sm:$0xff]
        %v428 = vld [vmem:[#allocation2 + $0x80] sm:$0xff]
        %v429 = vld [vmem:[#allocation2 + $0x88] sm:$0xff]
        %v430 = vld [vmem:[#allocation2 + $0x90] sm:$0xff]
        %v431 = vld [vmem:[#allocation2 + $0x98] sm:$0xff]
        %v432 = vld [vmem:[#allocation2 + $0xa0] sm:$0xff]
        %v433 = vld [vmem:[#allocation2 + $0xa8] sm:$0xff]
        %v434 = vld [vmem:[#allocation2 + $0xb0] sm:$0xff]
        %v435 = vld [vmem:[#allocation2 + $0xb8] sm:$0xff]
        %v436 = vld [vmem:[#allocation2 + $0xc0] sm:$0xff]
        %v437 = vld [vmem:[#allocation2 + $0xc8] sm:$0xff]
        %v438 = vld [vmem:[#allocation2 + $0xd0] sm:$0xff]
        %v439 = vld [vmem:[#allocation2 + $0xd8] sm:$0xff]
        %v440 = vld [vmem:[#allocation2 + $0xe0] sm:$0xff]
        %v441 = vld [vmem:[#allocation2 + $0xe8] sm:$0xff]
        %v442 = vld [vmem:[#allocation2 + $0xf0] sm:$0xff]
        %v443 = vld [vmem:[#allocation2 + $0xf8] sm:$0xff]
        %v444 = vld [vmem:[#allocation2 + $0x100] sm:$0xff]
        %v445 = vld [vmem:[#allocation2 + $0x108] sm:$0xff]
        %v446 = vld [vmem:[#allocation2 + $0x110] sm:$0xff]
        %v447 = vld [vmem:[#allocation2 + $0x118] sm:$0xff]
        %v448 = vld [vmem:[#allocation2 + $0x120] sm:$0xff]
        %v449 = vld [vmem:[#allocation2 + $0x128] sm:$0xff]
        %v450 = vld [vmem:[#allocation2 + $0x130] sm:$0xff]
        %v451 = vld [vmem:[#allocation2 + $0x138] sm:$0xff]
        %v452 = vld [vmem:[#allocation2 + $0x140] sm:$0xff]
        %v453 = vld [vmem:[#allocation2 + $0x148] sm:$0xff]
        %v454 = vld [vmem:[#allocation2 + $0x150] sm:$0xff]
        %v455 = vld [vmem:[#allocation2 + $0x158] sm:$0xff]
        %v456 = vld [vmem:[#allocation2 + $0x160] sm:$0xff]
        %v457 = vld [vmem:[#allocation2 + $0x168] sm:$0xff]
        %v458 = vld [vmem:[#allocation2 + $0x170] sm:$0xff]
        %v459 = vld [vmem:[#allocation2 + $0x178] sm:$0xff]
        %v460 = vld [vmem:[%s2] sm:$0xf]
        %v462 = vsel %vm345, %v412, 0
        %v465 = vsel %vm345, %v413, 0
        %v468 = vsel %vm345, %v414, 0
        %v471 = vsel %vm345, %v415, 0
        %v474 = vsel %vm345, %v416, 0
        %v477 = vsel %vm345, %v417, 0
        %v480 = vsel %vm345, %v418, 0
        %v483 = vsel %vm345, %v419, 0
        %v486 = vsel %vm345, %v420, 0
        %v489 = vsel %vm345, %v421, 0
        %v492 = vsel %vm345, %v422, 0
        %v495 = vsel %vm345, %v423, 0
        %v498 = vsel %vm345, %v424, 0
        %v501 = vsel %vm345, %v425, 0
        %v504 = vsel %vm345, %v426, 0
        %v507 = vsel %vm345, %v427, 0
        %v510 = vsel %vm345, %v428, 0
        %v513 = vsel %vm345, %v429, 0
        %v516 = vsel %vm345, %v430, 0
        %v519 = vsel %vm345, %v431, 0
        %v522 = vsel %vm345, %v432, 0
        %v525 = vsel %vm345, %v433, 0
        %v528 = vsel %vm345, %v434, 0
        %v531 = vsel %vm345, %v435, 0
        %v534 = vsel %vm345, %v436, 0
        %v537 = vsel %vm345, %v437, 0
        %v540 = vsel %vm345, %v438, 0
        %v543 = vsel %vm345, %v439, 0
        %v546 = vsel %vm345, %v440, 0
        %v549 = vsel %vm345, %v441, 0
        %v552 = vsel %vm345, %v442, 0
        %v555 = vsel %vm345, %v443, 0
        %v558 = vsel %vm345, %v444, 0
        %v561 = vsel %vm345, %v445, 0
        %v564 = vsel %vm345, %v446, 0
        %v567 = vsel %vm345, %v447, 0
        %v570 = vsel %vm345, %v448, 0
        %v573 = vsel %vm345, %v449, 0
        %v576 = vsel %vm345, %v450, 0
        %v579 = vsel %vm345, %v451, 0
        %v582 = vsel %vm345, %v452, 0
        %v585 = vsel %vm345, %v453, 0
        %v588 = vsel %vm345, %v454, 0
        %v591 = vsel %vm345, %v455, 0
        %v594 = vsel %vm345, %v456, 0
        %v597 = vsel %vm345, %v457, 0
        %v600 = vsel %vm345, %v458, 0
        %v603 = vsel %vm345, %v459, 0
        %vm605 = vcmask 1043456
        %v607 = vsel %vm605, %v460, 0
        %609 = vmatprep.subr.mxu0 0.0
        %610 = vmatpush1.msra.mxu0 %v607
        %611 = vmatprep.subr.mxu0 0.0
        %612 = vmatpush1.msra.mxu0 0.0
        %613 = vmatprep.subr.mxu0 0.0
        %614 = vmatpush1.msra.mxu0 0.0
        %615 = vmatprep.subr.mxu0 0.0
        %616 = vmatpush1.msra.mxu0 0.0
        %617 = vmatprep.subr.mxu0 0.0
        %618 = vmatpush1.msra.mxu0 0.0
        %619 = vmatprep.subr.mxu0 0.0
        %620 = vmatpush1.msra.mxu0 0.0
        %621 = vmatprep.subr.mxu0 0.0
        %622 = vmatpush1.msra.mxu0 0.0
        %623 = vmatprep.subr.mxu0 0.0
        %624 = vmatpush1.msra.mxu0 0.0
        %625 = vmatprep.subr.mxu0 0.0
        %626 = vmatpush1.msra.mxu0 0.0
        %627 = vmatprep.subr.mxu0 0.0
        %628 = vmatpush1.msra.mxu0 0.0
        %629 = vmatprep.subr.mxu0 0.0
        %630 = vmatpush1.msra.mxu0 0.0
        %631 = vmatprep.subr.mxu0 0.0
        %632 = vmatpush1.msra.mxu0 0.0
        %633 = vmatprep.subr.mxu0 0.0
        %634 = vmatpush1.msra.mxu0 0.0
        %635 = vmatprep.subr.mxu0 0.0
        %636 = vmatpush1.msra.mxu0 0.0
        %637 = vmatprep.subr.mxu0 0.0
        %638 = vmatpush1.msra.mxu0 0.0
        %639 = vmatprep.subr.mxu0 0.0
        %640 = vmatpush1.msra.mxu0 0.0
        %641 = vmatprep.subr.mxu0 0.0
        %642 = vmatpush1.msra.mxu0 0.0
        %643 = vmatprep.subr.mxu0 0.0
        %644 = vmatpush1.msra.mxu0 0.0
        %645 = vmatprep.subr.mxu0 0.0
        %646 = vmatpush1.msra.mxu0 0.0
        %647 = vmatprep.subr.mxu0 0.0
        %648 = vmatpush1.msra.mxu0 0.0
        %649 = vmatprep.subr.mxu0 0.0
        %650 = vmatpush1.msra.mxu0 0.0
        %651 = vmatprep.subr.mxu0 0.0
        %652 = vmatpush1.msra.mxu0 0.0
        %653 = vmatprep.subr.mxu0 0.0
        %654 = vmatpush1.msra.mxu0 0.0
        %655 = vmatprep.subr.mxu0 0.0
        %656 = vmatpush1.msra.mxu0 0.0
        %657 = vmatprep.subr.mxu0 0.0
        %658 = vmatpush1.msra.mxu0 0.0
        %659 = vmatprep.subr.mxu0 0.0
        %660 = vmatpush1.msra.mxu0 0.0
        %661 = vmatprep.subr.mxu0 0.0
        %662 = vmatpush1.msra.mxu0 0.0
        %663 = vmatprep.subr.mxu0 0.0
        %664 = vmatpush1.msra.mxu0 0.0
        %665 = vmatprep.subr.mxu0 0.0
        %666 = vmatpush1.msra.mxu0 0.0
        %667 = vmatprep.subr.mxu0 0.0
        %668 = vmatpush1.msra.mxu0 0.0
        %669 = vmatprep.subr.mxu0 0.0
        %670 = vmatpush1.msra.mxu0 0.0
        %671 = vmatprep.subr.mxu0 0.0
        %672 = vmatpush1.msra.mxu0 0.0
        %673 = vmatprep.mubr.f32.mxu0 0.0
        %674 = vmatmul.mubr.f32.gmra.mrb[0].mxu0 %v462
        %v675 = vpop.f32.mrb[0].mxu0
        %v676 = vadd.f32 0.0, %v675
        %v677 = vpop.f32.mrb[0].mxu0
        %678 = vmatprep.mubr.f32.mxu0 0.0
        %679 = vmatmul.mubr.f32.gmra.mrb[0].mxu0 %v465
        %v680 = vpop.f32.mrb[0].mxu0
        %v681 = vadd.f32 0.0, %v680
        %v682 = vpop.f32.mrb[0].mxu0
        %683 = vmatprep.mubr.f32.mxu0 0.0
        %684 = vmatmul.mubr.f32.gmra.mrb[0].mxu0 %v468
        %v685 = vpop.f32.mrb[0].mxu0
        %v686 = vadd.f32 0.0, %v685
        %v687 = vpop.f32.mrb[0].mxu0
        %688 = vmatprep.mubr.f32.mxu0 0.0
        %689 = vmatmul.mubr.f32.gmra.mrb[0].mxu0 %v471
        %v690 = vpop.f32.mrb[0].mxu0
        %v691 = vadd.f32 0.0, %v690
        %v692 = vpop.f32.mrb[0].mxu0
        %693 = vmatprep.mubr.f32.mxu0 0.0
        %694 = vmatmul.mubr.f32.gmra.mrb[0].mxu0 %v474
        %v695 = vpop.f32.mrb[0].mxu0
        %v696 = vadd.f32 0.0, %v695
        %v697 = vpop.f32.mrb[0].mxu0
        %698 = vmatprep.mubr.f32.mxu0 0.0
        %699 = vmatmul.mubr.f32.gmra.mrb[0].mxu0 %v477
        %v700 = vpop.f32.mrb[0].mxu0
        %v701 = vadd.f32 0.0, %v700
        %v702 = vpop.f32.mrb[0].mxu0
        %703 = vmatprep.mubr.f32.mxu0 0.0
        %704 = vmatmul.mubr.f32.gmra.mrb[0].mxu0 %v480
        %v705 = vpop.f32.mrb[0].mxu0
        %v706 = vadd.f32 0.0, %v705
        %v707 = vpop.f32.mrb[0].mxu0
        %708 = vmatprep.mubr.f32.mxu0 0.0
        %709 = vmatmul.mubr.f32.gmra.mrb[0].mxu0 %v483
        %v710 = vpop.f32.mrb[0].mxu0
        %v711 = vadd.f32 0.0, %v710
        %v712 = vpop.f32.mrb[0].mxu0
        %713 = vmatprep.mubr.f32.mxu0 0.0
        %714 = vmatmul.mubr.f32.gmra.mrb[0].mxu0 %v486
        %v715 = vpop.f32.mrb[0].mxu0
        %v716 = vadd.f32 0.0, %v715
        %v717 = vpop.f32.mrb[0].mxu0
        %718 = vmatprep.mubr.f32.mxu0 0.0
        %719 = vmatmul.mubr.f32.gmra.mrb[0].mxu0 %v489
        %v720 = vpop.f32.mrb[0].mxu0
        %v721 = vadd.f32 0.0, %v720
        %v722 = vpop.f32.mrb[0].mxu0
        %723 = vmatprep.mubr.f32.mxu0 0.0
        %724 = vmatmul.mubr.f32.gmra.mrb[0].mxu0 %v492
        %v725 = vpop.f32.mrb[0].mxu0
        %v726 = vadd.f32 0.0, %v725
        %v727 = vpop.f32.mrb[0].mxu0
        %728 = vmatprep.mubr.f32.mxu0 0.0
        %729 = vmatmul.mubr.f32.gmra.mrb[0].mxu0 %v495
        %v730 = vpop.f32.mrb[0].mxu0
        %v731 = vadd.f32 0.0, %v730
        %v732 = vpop.f32.mrb[0].mxu0
        %733 = vmatprep.mubr.f32.mxu0 0.0
        %734 = vmatmul.mubr.f32.gmra.mrb[0].mxu0 %v498
        %v735 = vpop.f32.mrb[0].mxu0
        %v736 = vadd.f32 0.0, %v735
        %v737 = vpop.f32.mrb[0].mxu0
        %738 = vmatprep.mubr.f32.mxu0 0.0
        %739 = vmatmul.mubr.f32.gmra.mrb[0].mxu0 %v501
        %v740 = vpop.f32.mrb[0].mxu0
        %v741 = vadd.f32 0.0, %v740
        %v742 = vpop.f32.mrb[0].mxu0
        %743 = vmatprep.mubr.f32.mxu0 0.0
        %744 = vmatmul.mubr.f32.gmra.mrb[0].mxu0 %v504
        %v745 = vpop.f32.mrb[0].mxu0
        %v746 = vadd.f32 0.0, %v745
        %v747 = vpop.f32.mrb[0].mxu0
        %748 = vmatprep.mubr.f32.mxu0 0.0
        %749 = vmatmul.mubr.f32.gmra.mrb[0].mxu0 %v507
        %v750 = vpop.f32.mrb[0].mxu0
        %v751 = vadd.f32 0.0, %v750
        %v752 = vpop.f32.mrb[0].mxu0
        %753 = vmatprep.mubr.f32.mxu0 0.0
        %754 = vmatmul.mubr.f32.gmra.mrb[0].mxu0 %v510
        %v755 = vpop.f32.mrb[0].mxu0
        %v756 = vadd.f32 0.0, %v755
        %v757 = vpop.f32.mrb[0].mxu0
        %758 = vmatprep.mubr.f32.mxu0 0.0
        %759 = vmatmul.mubr.f32.gmra.mrb[0].mxu0 %v513
        %v760 = vpop.f32.mrb[0].mxu0
        %v761 = vadd.f32 0.0, %v760
        %v762 = vpop.f32.mrb[0].mxu0
        %763 = vmatprep.mubr.f32.mxu0 0.0
        %764 = vmatmul.mubr.f32.gmra.mrb[0].mxu0 %v516
        %v765 = vpop.f32.mrb[0].mxu0
        %v766 = vadd.f32 0.0, %v765
        %v767 = vpop.f32.mrb[0].mxu0
        %768 = vmatprep.mubr.f32.mxu0 0.0
        %769 = vmatmul.mubr.f32.gmra.mrb[0].mxu0 %v519
        %v770 = vpop.f32.mrb[0].mxu0
        %v771 = vadd.f32 0.0, %v770
        %v772 = vpop.f32.mrb[0].mxu0
        %773 = vmatprep.mubr.f32.mxu0 0.0
        %774 = vmatmul.mubr.f32.gmra.mrb[0].mxu0 %v522
        %v775 = vpop.f32.mrb[0].mxu0
        %v776 = vadd.f32 0.0, %v775
        %v777 = vpop.f32.mrb[0].mxu0
        %778 = vmatprep.mubr.f32.mxu0 0.0
        %779 = vmatmul.mubr.f32.gmra.mrb[0].mxu0 %v525
        %v780 = vpop.f32.mrb[0].mxu0
        %v781 = vadd.f32 0.0, %v780
        %v782 = vpop.f32.mrb[0].mxu0
        %783 = vmatprep.mubr.f32.mxu0 0.0
        %784 = vmatmul.mubr.f32.gmra.mrb[0].mxu0 %v528
        %v785 = vpop.f32.mrb[0].mxu0
        %v786 = vadd.f32 0.0, %v785
        %v787 = vpop.f32.mrb[0].mxu0
        %788 = vmatprep.mubr.f32.mxu0 0.0
        %789 = vmatmul.mubr.f32.gmra.mrb[0].mxu0 %v531
        %v790 = vpop.f32.mrb[0].mxu0
        %v791 = vadd.f32 0.0, %v790
        %v792 = vpop.f32.mrb[0].mxu0
        %793 = vmatprep.mubr.f32.mxu0 0.0
        %794 = vmatmul.mubr.f32.gmra.mrb[0].mxu0 %v534
        %v795 = vpop.f32.mrb[0].mxu0
        %v796 = vadd.f32 0.0, %v795
        %v797 = vpop.f32.mrb[0].mxu0
        %798 = vmatprep.mubr.f32.mxu0 0.0
        %799 = vmatmul.mubr.f32.gmra.mrb[0].mxu0 %v537
        %v800 = vpop.f32.mrb[0].mxu0
        %v801 = vadd.f32 0.0, %v800
        %v802 = vpop.f32.mrb[0].mxu0
        %803 = vmatprep.mubr.f32.mxu0 0.0
        %804 = vmatmul.mubr.f32.gmra.mrb[0].mxu0 %v540
        %v805 = vpop.f32.mrb[0].mxu0
        %v806 = vadd.f32 0.0, %v805
        %v807 = vpop.f32.mrb[0].mxu0
        %808 = vmatprep.mubr.f32.mxu0 0.0
        %809 = vmatmul.mubr.f32.gmra.mrb[0].mxu0 %v543
        %v810 = vpop.f32.mrb[0].mxu0
        %v811 = vadd.f32 0.0, %v810
        %v812 = vpop.f32.mrb[0].mxu0
        %813 = vmatprep.mubr.f32.mxu0 0.0
        %814 = vmatmul.mubr.f32.gmra.mrb[0].mxu0 %v546
        %v815 = vpop.f32.mrb[0].mxu0
        %v816 = vadd.f32 0.0, %v815
        %v817 = vpop.f32.mrb[0].mxu0
        %818 = vmatprep.mubr.f32.mxu0 0.0
        %819 = vmatmul.mubr.f32.gmra.mrb[0].mxu0 %v549
        %v820 = vpop.f32.mrb[0].mxu0
        %v821 = vadd.f32 0.0, %v820
        %v822 = vpop.f32.mrb[0].mxu0
        %823 = vmatprep.mubr.f32.mxu0 0.0
        %824 = vmatmul.mubr.f32.gmra.mrb[0].mxu0 %v552
        %v825 = vpop.f32.mrb[0].mxu0
        %v826 = vadd.f32 0.0, %v825
        %v827 = vpop.f32.mrb[0].mxu0
        %828 = vmatprep.mubr.f32.mxu0 0.0
        %829 = vmatmul.mubr.f32.gmra.mrb[0].mxu0 %v555
        %v830 = vpop.f32.mrb[0].mxu0
        %v831 = vadd.f32 0.0, %v830
        %v832 = vpop.f32.mrb[0].mxu0
        %833 = vmatprep.mubr.f32.mxu0 0.0
        %834 = vmatmul.mubr.f32.gmra.mrb[0].mxu0 %v558
        %v835 = vpop.f32.mrb[0].mxu0
        %v836 = vadd.f32 0.0, %v835
        %v837 = vpop.f32.mrb[0].mxu0
        %838 = vmatprep.mubr.f32.mxu0 0.0
        %839 = vmatmul.mubr.f32.gmra.mrb[0].mxu0 %v561
        %v840 = vpop.f32.mrb[0].mxu0
        %v841 = vadd.f32 0.0, %v840
        %v842 = vpop.f32.mrb[0].mxu0
        %843 = vmatprep.mubr.f32.mxu0 0.0
        %844 = vmatmul.mubr.f32.gmra.mrb[0].mxu0 %v564
        %v845 = vpop.f32.mrb[0].mxu0
        %v846 = vadd.f32 0.0, %v845
        %v847 = vpop.f32.mrb[0].mxu0
        %848 = vmatprep.mubr.f32.mxu0 0.0
        %849 = vmatmul.mubr.f32.gmra.mrb[0].mxu0 %v567
        %v850 = vpop.f32.mrb[0].mxu0
        %v851 = vadd.f32 0.0, %v850
        %v852 = vpop.f32.mrb[0].mxu0
        %853 = vmatprep.mubr.f32.mxu0 0.0
        %854 = vmatmul.mubr.f32.gmra.mrb[0].mxu0 %v570
        %v855 = vpop.f32.mrb[0].mxu0
        %v856 = vadd.f32 0.0, %v855
        %v857 = vpop.f32.mrb[0].mxu0
        %858 = vmatprep.mubr.f32.mxu0 0.0
        %859 = vmatmul.mubr.f32.gmra.mrb[0].mxu0 %v573
        %v860 = vpop.f32.mrb[0].mxu0
        %v861 = vadd.f32 0.0, %v860
        %v862 = vpop.f32.mrb[0].mxu0
        %863 = vmatprep.mubr.f32.mxu0 0.0
        %864 = vmatmul.mubr.f32.gmra.mrb[0].mxu0 %v576
        %v865 = vpop.f32.mrb[0].mxu0
        %v866 = vadd.f32 0.0, %v865
        %v867 = vpop.f32.mrb[0].mxu0
        %868 = vmatprep.mubr.f32.mxu0 0.0
        %869 = vmatmul.mubr.f32.gmra.mrb[0].mxu0 %v579
        %v870 = vpop.f32.mrb[0].mxu0
        %v871 = vadd.f32 0.0, %v870
        %v872 = vpop.f32.mrb[0].mxu0
        %873 = vmatprep.mubr.f32.mxu0 0.0
        %874 = vmatmul.mubr.f32.gmra.mrb[0].mxu0 %v582
        %v875 = vpop.f32.mrb[0].mxu0
        %v876 = vadd.f32 0.0, %v875
        %v877 = vpop.f32.mrb[0].mxu0
        %878 = vmatprep.mubr.f32.mxu0 0.0
        %879 = vmatmul.mubr.f32.gmra.mrb[0].mxu0 %v585
        %v880 = vpop.f32.mrb[0].mxu0
        %v881 = vadd.f32 0.0, %v880
        %v882 = vpop.f32.mrb[0].mxu0
        %883 = vmatprep.mubr.f32.mxu0 0.0
        %884 = vmatmul.mubr.f32.gmra.mrb[0].mxu0 %v588
        %v885 = vpop.f32.mrb[0].mxu0
        %v886 = vadd.f32 0.0, %v885
        %v887 = vpop.f32.mrb[0].mxu0
        %888 = vmatprep.mubr.f32.mxu0 0.0
        %889 = vmatmul.mubr.f32.gmra.mrb[0].mxu0 %v591
        %v890 = vpop.f32.mrb[0].mxu0
        %v891 = vadd.f32 0.0, %v890
        %v892 = vpop.f32.mrb[0].mxu0
        %893 = vmatprep.mubr.f32.mxu0 0.0
        %894 = vmatmul.mubr.f32.gmra.mrb[0].mxu0 %v594
        %v895 = vpop.f32.mrb[0].mxu0
        %v896 = vadd.f32 0.0, %v895
        %v897 = vpop.f32.mrb[0].mxu0
        %898 = vmatprep.mubr.f32.mxu0 0.0
        %899 = vmatmul.mubr.f32.gmra.mrb[0].mxu0 %v597
        %v900 = vpop.f32.mrb[0].mxu0
        %v901 = vadd.f32 0.0, %v900
        %v902 = vpop.f32.mrb[0].mxu0
        %903 = vmatprep.mubr.f32.mxu0 0.0
        %904 = vmatmul.mubr.f32.gmra.mrb[0].mxu0 %v600
        %v905 = vpop.f32.mrb[0].mxu0
        %v906 = vadd.f32 0.0, %v905
        %v907 = vpop.f32.mrb[0].mxu0
        %908 = vmatprep.mubr.f32.mxu0 0.0
        %909 = vmatmul.mubr.f32.gmra.mrb[0].mxu0 %v603
        %v910 = vpop.f32.mrb[0].mxu0
        %v911 = vadd.f32 0.0, %v910
        %v912 = vpop.f32.mrb[0].mxu0
        %913 = vdwg.mxu0
        %914 = vst [vmem:[#allocation3] sm:$0xff] %v676
        %915 = vst [vmem:[#allocation3 + $0x8] sm:$0xff] %v681
        %916 = vst [vmem:[#allocation3 + $0x10] sm:$0xff] %v686
        %917 = vst [vmem:[#allocation3 + $0x18] sm:$0xff] %v691
        %918 = vst [vmem:[#allocation3 + $0x20] sm:$0xff] %v696
        %919 = vst [vmem:[#allocation3 + $0x28] sm:$0xff] %v701
        %920 = vst [vmem:[#allocation3 + $0x30] sm:$0xff] %v706
        %921 = vst [vmem:[#allocation3 + $0x38] sm:$0xff] %v711
        %922 = vst [vmem:[#allocation3 + $0x40] sm:$0xff] %v716
        %923 = vst [vmem:[#allocation3 + $0x48] sm:$0xff] %v721
        %924 = vst [vmem:[#allocation3 + $0x50] sm:$0xff] %v726
        %925 = vst [vmem:[#allocation3 + $0x58] sm:$0xff] %v731
        %926 = vst [vmem:[#allocation3 + $0x60] sm:$0xff] %v736
        %927 = vst [vmem:[#allocation3 + $0x68] sm:$0xff] %v741
        %928 = vst [vmem:[#allocation3 + $0x70] sm:$0xff] %v746
        %929 = vst [vmem:[#allocation3 + $0x78] sm:$0xff] %v751
        %930 = vst [vmem:[#allocation3 + $0x80] sm:$0xff] %v756
        %931 = vst [vmem:[#allocation3 + $0x88] sm:$0xff] %v761
        %932 = vst [vmem:[#allocation3 + $0x90] sm:$0xff] %v766
        %933 = vst [vmem:[#allocation3 + $0x98] sm:$0xff] %v771
        %934 = vst [vmem:[#allocation3 + $0xa0] sm:$0xff] %v776
        %935 = vst [vmem:[#allocation3 + $0xa8] sm:$0xff] %v781
        %936 = vst [vmem:[#allocation3 + $0xb0] sm:$0xff] %v786
        %937 = vst [vmem:[#allocation3 + $0xb8] sm:$0xff] %v791
        %938 = vst [vmem:[#allocation3 + $0xc0] sm:$0xff] %v796
        %939 = vst [vmem:[#allocation3 + $0xc8] sm:$0xff] %v801
        %940 = vst [vmem:[#allocation3 + $0xd0] sm:$0xff] %v806
        %941 = vst [vmem:[#allocation3 + $0xd8] sm:$0xff] %v811
        %942 = vst [vmem:[#allocation3 + $0xe0] sm:$0xff] %v816
        %943 = vst [vmem:[#allocation3 + $0xe8] sm:$0xff] %v821
        %944 = vst [vmem:[#allocation3 + $0xf0] sm:$0xff] %v826
        %945 = vst [vmem:[#allocation3 + $0xf8] sm:$0xff] %v831
        %946 = vst [vmem:[#allocation3 + $0x100] sm:$0xff] %v836
        %947 = vst [vmem:[#allocation3 + $0x108] sm:$0xff] %v841
        %948 = vst [vmem:[#allocation3 + $0x110] sm:$0xff] %v846
        %949 = vst [vmem:[#allocation3 + $0x118] sm:$0xff] %v851
        %950 = vst [vmem:[#allocation3 + $0x120] sm:$0xff] %v856
        %951 = vst [vmem:[#allocation3 + $0x128] sm:$0xff] %v861
        %952 = vst [vmem:[#allocation3 + $0x130] sm:$0xff] %v866
        %953 = vst [vmem:[#allocation3 + $0x138] sm:$0xff] %v871
        %954 = vst [vmem:[#allocation3 + $0x140] sm:$0xff] %v876
        %955 = vst [vmem:[#allocation3 + $0x148] sm:$0xff] %v881
        %956 = vst [vmem:[#allocation3 + $0x150] sm:$0xff] %v886
        %957 = vst [vmem:[#allocation3 + $0x158] sm:$0xff] %v891
        %958 = vst [vmem:[#allocation3 + $0x160] sm:$0xff] %v896
        %959 = vst [vmem:[#allocation3 + $0x168] sm:$0xff] %v901
        %960 = vst [vmem:[#allocation3 + $0x170] sm:$0xff] %v906
        %961 = vst [vmem:[#allocation3 + $0x178] sm:$0xff] %v911
        %v962 = vld [vmem:[#allocation2 + $0x1] sm:$0xff]
        %v963 = vld [vmem:[#allocation2 + $0x9] sm:$0xff]
        %v964 = vld [vmem:[#allocation2 + $0x11] sm:$0xff]
        %v965 = vld [vmem:[#allocation2 + $0x19] sm:$0xff]
        %v966 = vld [vmem:[#allocation2 + $0x21] sm:$0xff]
        %v967 = vld [vmem:[#allocation2 + $0x29] sm:$0xff]
        %v968 = vld [vmem:[#allocation2 + $0x31] sm:$0xff]
        %v969 = vld [vmem:[#allocation2 + $0x39] sm:$0xff]
        %v970 = vld [vmem:[#allocation2 + $0x41] sm:$0xff]
        %v971 = vld [vmem:[#allocation2 + $0x49] sm:$0xff]
        %v972 = vld [vmem:[#allocation2 + $0x51] sm:$0xff]
        %v973 = vld [vmem:[#allocation2 + $0x59] sm:$0xff]
        %v974 = vld [vmem:[#allocation2 + $0x61] sm:$0xff]
        %v975 = vld [vmem:[#allocation2 + $0x69] sm:$0xff]
        %v976 = vld [vmem:[#allocation2 + $0x71] sm:$0xff]
        %v977 = vld [vmem:[#allocation2 + $0x79] sm:$0xff]
        %v978 = vld [vmem:[#allocation2 + $0x81] sm:$0xff]
        %v979 = vld [vmem:[#allocation2 + $0x89] sm:$0xff]
        %v980 = vld [vmem:[#allocation2 + $0x91] sm:$0xff]
        %v981 = vld [vmem:[#allocation2 + $0x99] sm:$0xff]
        %v982 = vld [vmem:[#allocation2 + $0xa1] sm:$0xff]
        %v983 = vld [vmem:[#allocation2 + $0xa9] sm:$0xff]
        %v984 = vld [vmem:[#allocation2 + $0xb1] sm:$0xff]
        %v985 = vld [vmem:[#allocation2 + $0xb9] sm:$0xff]
        %v986 = vld [vmem:[#allocation2 + $0xc1] sm:$0xff]
        %v987 = vld [vmem:[#allocation2 + $0xc9] sm:$0xff]
        %v988 = vld [vmem:[#allocation2 + $0xd1] sm:$0xff]
        %v989 = vld [vmem:[#allocation2 + $0xd9] sm:$0xff]
        %v990 = vld [vmem:[#allocation2 + $0xe1] sm:$0xff]
        %v991 = vld [vmem:[#allocation2 + $0xe9] sm:$0xff]
        %v992 = vld [vmem:[#allocation2 + $0xf1] sm:$0xff]
        %v993 = vld [vmem:[#allocation2 + $0xf9] sm:$0xff]
        %v994 = vld [vmem:[#allocation2 + $0x101] sm:$0xff]
        %v995 = vld [vmem:[#allocation2 + $0x109] sm:$0xff]
        %v996 = vld [vmem:[#allocation2 + $0x111] sm:$0xff]
        %v997 = vld [vmem:[#allocation2 + $0x119] sm:$0xff]
        %v998 = vld [vmem:[#allocation2 + $0x121] sm:$0xff]
        %v999 = vld [vmem:[#allocation2 + $0x129] sm:$0xff]
        %v1000 = vld [vmem:[#allocation2 + $0x131] sm:$0xff]
        %v1001 = vld [vmem:[#allocation2 + $0x139] sm:$0xff]
        %v1002 = vld [vmem:[#allocation2 + $0x141] sm:$0xff]
        %v1003 = vld [vmem:[#allocation2 + $0x149] sm:$0xff]
        %v1004 = vld [vmem:[#allocation2 + $0x151] sm:$0xff]
        %v1005 = vld [vmem:[#allocation2 + $0x159] sm:$0xff]
        %v1006 = vld [vmem:[#allocation2 + $0x161] sm:$0xff]
        %v1007 = vld [vmem:[#allocation2 + $0x169] sm:$0xff]
        %v1008 = vld [vmem:[#allocation2 + $0x171] sm:$0xff]
        %v1009 = vld [vmem:[#allocation2 + $0x179] sm:$0xff]
        %s1010 = scalar_lea.vmem %s2, 4
        %v1011 = vld [vmem:[%s1010] sm:$0xf]
        %v1013 = vsel %vm345, %v962, 0
        %v1016 = vsel %vm345, %v963, 0
        %v1019 = vsel %vm345, %v964, 0
        %v1022 = vsel %vm345, %v965, 0
        %v1025 = vsel %vm345, %v966, 0
        %v1028 = vsel %vm345, %v967, 0
        %v1031 = vsel %vm345, %v968, 0
        %v1034 = vsel %vm345, %v969, 0
        %v1037 = vsel %vm345, %v970, 0
        %v1040 = vsel %vm345, %v971, 0
        %v1043 = vsel %vm345, %v972, 0
        %v1046 = vsel %vm345, %v973, 0
        %v1049 = vsel %vm345, %v974, 0
        %v1052 = vsel %vm345, %v975, 0
        %v1055 = vsel %vm345, %v976, 0
        %v1058 = vsel %vm345, %v977, 0
        %v1061 = vsel %vm345, %v978, 0
        %v1064 = vsel %vm345, %v979, 0
        %v1067 = vsel %vm345, %v980, 0
        %v1070 = vsel %vm345, %v981, 0
        %v1073 = vsel %vm345, %v982, 0
        %v1076 = vsel %vm345, %v983, 0
        %v1079 = vsel %vm345, %v984, 0
        %v1082 = vsel %vm345, %v985, 0
        %v1085 = vsel %vm345, %v986, 0
        %v1088 = vsel %vm345, %v987, 0
        %v1091 = vsel %vm345, %v988, 0
        %v1094 = vsel %vm345, %v989, 0
        %v1097 = vsel %vm345, %v990, 0
        %v1100 = vsel %vm345, %v991, 0
        %v1103 = vsel %vm345, %v992, 0
        %v1106 = vsel %vm345, %v993, 0
        %v1109 = vsel %vm345, %v994, 0
        %v1112 = vsel %vm345, %v995, 0
        %v1115 = vsel %vm345, %v996, 0
        %v1118 = vsel %vm345, %v997, 0
        %v1121 = vsel %vm345, %v998, 0
        %v1124 = vsel %vm345, %v999, 0
        %v1127 = vsel %vm345, %v1000, 0
        %v1130 = vsel %vm345, %v1001, 0
        %v1133 = vsel %vm345, %v1002, 0
        %v1136 = vsel %vm345, %v1003, 0
        %v1139 = vsel %vm345, %v1004, 0
        %v1142 = vsel %vm345, %v1005, 0
        %v1145 = vsel %vm345, %v1006, 0
        %v1148 = vsel %vm345, %v1007, 0
        %v1151 = vsel %vm345, %v1008, 0
        %v1154 = vsel %vm345, %v1009, 0
        %v1157 = vsel %vm605, %v1011, 0
        %1159 = vmatprep.subr.mxu0 0.0
        %1160 = vmatpush1.msra.mxu0 %v1157
        %1161 = vmatprep.subr.mxu0 0.0
        %1162 = vmatpush1.msra.mxu0 0.0
        %1163 = vmatprep.subr.mxu0 0.0
        %1164 = vmatpush1.msra.mxu0 0.0
        %1165 = vmatprep.subr.mxu0 0.0
        %1166 = vmatpush1.msra.mxu0 0.0
        %1167 = vmatprep.subr.mxu0 0.0
        %1168 = vmatpush1.msra.mxu0 0.0
        %1169 = vmatprep.subr.mxu0 0.0
        %1170 = vmatpush1.msra.mxu0 0.0
        %1171 = vmatprep.subr.mxu0 0.0
        %1172 = vmatpush1.msra.mxu0 0.0
        %1173 = vmatprep.subr.mxu0 0.0
        %1174 = vmatpush1.msra.mxu0 0.0
        %1175 = vmatprep.subr.mxu0 0.0
        %1176 = vmatpush1.msra.mxu0 0.0
        %1177 = vmatprep.subr.mxu0 0.0
        %1178 = vmatpush1.msra.mxu0 0.0
        %1179 = vmatprep.subr.mxu0 0.0
        %1180 = vmatpush1.msra.mxu0 0.0
        %1181 = vmatprep.subr.mxu0 0.0
        %1182 = vmatpush1.msra.mxu0 0.0
        %1183 = vmatprep.subr.mxu0 0.0
        %1184 = vmatpush1.msra.mxu0 0.0
        %1185 = vmatprep.subr.mxu0 0.0
        %1186 = vmatpush1.msra.mxu0 0.0
        %1187 = vmatprep.subr.mxu0 0.0
        %1188 = vmatpush1.msra.mxu0 0.0
        %1189 = vmatprep.subr.mxu0 0.0
        %1190 = vmatpush1.msra.mxu0 0.0
        %1191 = vmatprep.subr.mxu0 0.0
        %1192 = vmatpush1.msra.mxu0 0.0
        %1193 = vmatprep.subr.mxu0 0.0
        %1194 = vmatpush1.msra.mxu0 0.0
        %1195 = vmatprep.subr.mxu0 0.0
        %1196 = vmatpush1.msra.mxu0 0.0
        %1197 = vmatprep.subr.mxu0 0.0
        %1198 = vmatpush1.msra.mxu0 0.0
        %1199 = vmatprep.subr.mxu0 0.0
        %1200 = vmatpush1.msra.mxu0 0.0
        %1201 = vmatprep.subr.mxu0 0.0
        %1202 = vmatpush1.msra.mxu0 0.0
        %1203 = vmatprep.subr.mxu0 0.0
        %1204 = vmatpush1.msra.mxu0 0.0
        %1205 = vmatprep.subr.mxu0 0.0
        %1206 = vmatpush1.msra.mxu0 0.0
        %1207 = vmatprep.subr.mxu0 0.0
        %1208 = vmatpush1.msra.mxu0 0.0
        %1209 = vmatprep.subr.mxu0 0.0
        %1210 = vmatpush1.msra.mxu0 0.0
        %1211 = vmatprep.subr.mxu0 0.0
        %1212 = vmatpush1.msra.mxu0 0.0
        %1213 = vmatprep.subr.mxu0 0.0
        %1214 = vmatpush1.msra.mxu0 0.0
        %1215 = vmatprep.subr.mxu0 0.0
        %1216 = vmatpush1.msra.mxu0 0.0
        %1217 = vmatprep.subr.mxu0 0.0
        %1218 = vmatpush1.msra.mxu0 0.0
        %1219 = vmatprep.subr.mxu0 0.0
        %1220 = vmatpush1.msra.mxu0 0.0
        %1221 = vmatprep.subr.mxu0 0.0
        %1222 = vmatpush1.msra.mxu0 0.0
        %1223 = vmatprep.mubr.f32.mxu0 0.0
        %1224 = vmatmul.mubr.f32.gmra.mrb[0].mxu0 %v1013
        %v1225 = vpop.f32.mrb[0].mxu0
        %v1226 = vadd.f32 0.0, %v1225
        %v1227 = vpop.f32.mrb[0].mxu0
        %1228 = vmatprep.mubr.f32.mxu0 0.0
        %1229 = vmatmul.mubr.f32.gmra.mrb[0].mxu0 %v1016
        %v1230 = vpop.f32.mrb[0].mxu0
        %v1231 = vadd.f32 0.0, %v1230
        %v1232 = vpop.f32.mrb[0].mxu0
        %1233 = vmatprep.mubr.f32.mxu0 0.0
        %1234 = vmatmul.mubr.f32.gmra.mrb[0].mxu0 %v1019
        %v1235 = vpop.f32.mrb[0].mxu0
        %v1236 = vadd.f32 0.0, %v1235
        %v1237 = vpop.f32.mrb[0].mxu0
        %1238 = vmatprep.mubr.f32.mxu0 0.0
        %1239 = vmatmul.mubr.f32.gmra.mrb[0].mxu0 %v1022
        %v1240 = vpop.f32.mrb[0].mxu0
        %v1241 = vadd.f32 0.0, %v1240
        %v1242 = vpop.f32.mrb[0].mxu0
        %1243 = vmatprep.mubr.f32.mxu0 0.0
        %1244 = vmatmul.mubr.f32.gmra.mrb[0].mxu0 %v1025
        %v1245 = vpop.f32.mrb[0].mxu0
        %v1246 = vadd.f32 0.0, %v1245
        %v1247 = vpop.f32.mrb[0].mxu0
        %1248 = vmatprep.mubr.f32.mxu0 0.0
        %1249 = vmatmul.mubr.f32.gmra.mrb[0].mxu0 %v1028
        %v1250 = vpop.f32.mrb[0].mxu0
        %v1251 = vadd.f32 0.0, %v1250
        %v1252 = vpop.f32.mrb[0].mxu0
        %1253 = vmatprep.mubr.f32.mxu0 0.0
        %1254 = vmatmul.mubr.f32.gmra.mrb[0].mxu0 %v1031
        %v1255 = vpop.f32.mrb[0].mxu0
        %v1256 = vadd.f32 0.0, %v1255
        %v1257 = vpop.f32.mrb[0].mxu0
        %1258 = vmatprep.mubr.f32.mxu0 0.0
        %1259 = vmatmul.mubr.f32.gmra.mrb[0].mxu0 %v1034
        %v1260 = vpop.f32.mrb[0].mxu0
        %v1261 = vadd.f32 0.0, %v1260
        %v1262 = vpop.f32.mrb[0].mxu0
        %1263 = vmatprep.mubr.f32.mxu0 0.0
        %1264 = vmatmul.mubr.f32.gmra.mrb[0].mxu0 %v1037
        %v1265 = vpop.f32.mrb[0].mxu0
        %v1266 = vadd.f32 0.0, %v1265
        %v1267 = vpop.f32.mrb[0].mxu0
        %1268 = vmatprep.mubr.f32.mxu0 0.0
        %1269 = vmatmul.mubr.f32.gmra.mrb[0].mxu0 %v1040
        %v1270 = vpop.f32.mrb[0].mxu0
        %v1271 = vadd.f32 0.0, %v1270
        %v1272 = vpop.f32.mrb[0].mxu0
        %1273 = vmatprep.mubr.f32.mxu0 0.0
        %1274 = vmatmul.mubr.f32.gmra.mrb[0].mxu0 %v1043
        %v1275 = vpop.f32.mrb[0].mxu0
        %v1276 = vadd.f32 0.0, %v1275
        %v1277 = vpop.f32.mrb[0].mxu0
        %1278 = vmatprep.mubr.f32.mxu0 0.0
        %1279 = vmatmul.mubr.f32.gmra.mrb[0].mxu0 %v1046
        %v1280 = vpop.f32.mrb[0].mxu0
        %v1281 = vadd.f32 0.0, %v1280
        %v1282 = vpop.f32.mrb[0].mxu0
        %1283 = vmatprep.mubr.f32.mxu0 0.0
        %1284 = vmatmul.mubr.f32.gmra.mrb[0].mxu0 %v1049
        %v1285 = vpop.f32.mrb[0].mxu0
        %v1286 = vadd.f32 0.0, %v1285
        %v1287 = vpop.f32.mrb[0].mxu0
        %1288 = vmatprep.mubr.f32.mxu0 0.0
        %1289 = vmatmul.mubr.f32.gmra.mrb[0].mxu0 %v1052
        %v1290 = vpop.f32.mrb[0].mxu0
        %v1291 = vadd.f32 0.0, %v1290
        %v1292 = vpop.f32.mrb[0].mxu0
        %1293 = vmatprep.mubr.f32.mxu0 0.0
        %1294 = vmatmul.mubr.f32.gmra.mrb[0].mxu0 %v1055
        %v1295 = vpop.f32.mrb[0].mxu0
        %v1296 = vadd.f32 0.0, %v1295
        %v1297 = vpop.f32.mrb[0].mxu0
        %1298 = vmatprep.mubr.f32.mxu0 0.0
        %1299 = vmatmul.mubr.f32.gmra.mrb[0].mxu0 %v1058
        %v1300 = vpop.f32.mrb[0].mxu0
        %v1301 = vadd.f32 0.0, %v1300
        %v1302 = vpop.f32.mrb[0].mxu0
        %1303 = vmatprep.mubr.f32.mxu0 0.0
        %1304 = vmatmul.mubr.f32.gmra.mrb[0].mxu0 %v1061
        %v1305 = vpop.f32.mrb[0].mxu0
        %v1306 = vadd.f32 0.0, %v1305
        %v1307 = vpop.f32.mrb[0].mxu0
        %1308 = vmatprep.mubr.f32.mxu0 0.0
        %1309 = vmatmul.mubr.f32.gmra.mrb[0].mxu0 %v1064
        %v1310 = vpop.f32.mrb[0].mxu0
        %v1311 = vadd.f32 0.0, %v1310
        %v1312 = vpop.f32.mrb[0].mxu0
        %1313 = vmatprep.mubr.f32.mxu0 0.0
        %1314 = vmatmul.mubr.f32.gmra.mrb[0].mxu0 %v1067
        %v1315 = vpop.f32.mrb[0].mxu0
        %v1316 = vadd.f32 0.0, %v1315
        %v1317 = vpop.f32.mrb[0].mxu0
        %1318 = vmatprep.mubr.f32.mxu0 0.0
        %1319 = vmatmul.mubr.f32.gmra.mrb[0].mxu0 %v1070
        %v1320 = vpop.f32.mrb[0].mxu0
        %v1321 = vadd.f32 0.0, %v1320
        %v1322 = vpop.f32.mrb[0].mxu0
        %1323 = vmatprep.mubr.f32.mxu0 0.0
        %1324 = vmatmul.mubr.f32.gmra.mrb[0].mxu0 %v1073
        %v1325 = vpop.f32.mrb[0].mxu0
        %v1326 = vadd.f32 0.0, %v1325
        %v1327 = vpop.f32.mrb[0].mxu0
        %1328 = vmatprep.mubr.f32.mxu0 0.0
        %1329 = vmatmul.mubr.f32.gmra.mrb[0].mxu0 %v1076
        %v1330 = vpop.f32.mrb[0].mxu0
        %v1331 = vadd.f32 0.0, %v1330
        %v1332 = vpop.f32.mrb[0].mxu0
        %1333 = vmatprep.mubr.f32.mxu0 0.0
        %1334 = vmatmul.mubr.f32.gmra.mrb[0].mxu0 %v1079
        %v1335 = vpop.f32.mrb[0].mxu0
        %v1336 = vadd.f32 0.0, %v1335
        %v1337 = vpop.f32.mrb[0].mxu0
        %1338 = vmatprep.mubr.f32.mxu0 0.0
        %1339 = vmatmul.mubr.f32.gmra.mrb[0].mxu0 %v1082
        %v1340 = vpop.f32.mrb[0].mxu0
        %v1341 = vadd.f32 0.0, %v1340
        %v1342 = vpop.f32.mrb[0].mxu0
        %1343 = vmatprep.mubr.f32.mxu0 0.0
        %1344 = vmatmul.mubr.f32.gmra.mrb[0].mxu0 %v1085
        %v1345 = vpop.f32.mrb[0].mxu0
        %v1346 = vadd.f32 0.0, %v1345
        %v1347 = vpop.f32.mrb[0].mxu0
        %1348 = vmatprep.mubr.f32.mxu0 0.0
        %1349 = vmatmul.mubr.f32.gmra.mrb[0].mxu0 %v1088
        %v1350 = vpop.f32.mrb[0].mxu0
        %v1351 = vadd.f32 0.0, %v1350
        %v1352 = vpop.f32.mrb[0].mxu0
        %1353 = vmatprep.mubr.f32.mxu0 0.0
        %1354 = vmatmul.mubr.f32.gmra.mrb[0].mxu0 %v1091
        %v1355 = vpop.f32.mrb[0].mxu0
        %v1356 = vadd.f32 0.0, %v1355
        %v1357 = vpop.f32.mrb[0].mxu0
        %1358 = vmatprep.mubr.f32.mxu0 0.0
        %1359 = vmatmul.mubr.f32.gmra.mrb[0].mxu0 %v1094
        %v1360 = vpop.f32.mrb[0].mxu0
        %v1361 = vadd.f32 0.0, %v1360
        %v1362 = vpop.f32.mrb[0].mxu0
        %1363 = vmatprep.mubr.f32.mxu0 0.0
        %1364 = vmatmul.mubr.f32.gmra.mrb[0].mxu0 %v1097
        %v1365 = vpop.f32.mrb[0].mxu0
        %v1366 = vadd.f32 0.0, %v1365
        %v1367 = vpop.f32.mrb[0].mxu0
        %1368 = vmatprep.mubr.f32.mxu0 0.0
        %1369 = vmatmul.mubr.f32.gmra.mrb[0].mxu0 %v1100
        %v1370 = vpop.f32.mrb[0].mxu0
        %v1371 = vadd.f32 0.0, %v1370
        %v1372 = vpop.f32.mrb[0].mxu0
        %1373 = vmatprep.mubr.f32.mxu0 0.0
        %1374 = vmatmul.mubr.f32.gmra.mrb[0].mxu0 %v1103
        %v1375 = vpop.f32.mrb[0].mxu0
        %v1376 = vadd.f32 0.0, %v1375
        %v1377 = vpop.f32.mrb[0].mxu0
        %1378 = vmatprep.mubr.f32.mxu0 0.0
        %1379 = vmatmul.mubr.f32.gmra.mrb[0].mxu0 %v1106
        %v1380 = vpop.f32.mrb[0].mxu0
        %v1381 = vadd.f32 0.0, %v1380
        %v1382 = vpop.f32.mrb[0].mxu0
        %1383 = vmatprep.mubr.f32.mxu0 0.0
        %1384 = vmatmul.mubr.f32.gmra.mrb[0].mxu0 %v1109
        %v1385 = vpop.f32.mrb[0].mxu0
        %v1386 = vadd.f32 0.0, %v1385
        %v1387 = vpop.f32.mrb[0].mxu0
        %1388 = vmatprep.mubr.f32.mxu0 0.0
        %1389 = vmatmul.mubr.f32.gmra.mrb[0].mxu0 %v1112
        %v1390 = vpop.f32.mrb[0].mxu0
        %v1391 = vadd.f32 0.0, %v1390
        %v1392 = vpop.f32.mrb[0].mxu0
        %1393 = vmatprep.mubr.f32.mxu0 0.0
        %1394 = vmatmul.mubr.f32.gmra.mrb[0].mxu0 %v1115
        %v1395 = vpop.f32.mrb[0].mxu0
        %v1396 = vadd.f32 0.0, %v1395
        %v1397 = vpop.f32.mrb[0].mxu0
        %1398 = vmatprep.mubr.f32.mxu0 0.0
        %1399 = vmatmul.mubr.f32.gmra.mrb[0].mxu0 %v1118
        %v1400 = vpop.f32.mrb[0].mxu0
        %v1401 = vadd.f32 0.0, %v1400
        %v1402 = vpop.f32.mrb[0].mxu0
        %1403 = vmatprep.mubr.f32.mxu0 0.0
        %1404 = vmatmul.mubr.f32.gmra.mrb[0].mxu0 %v1121
        %v1405 = vpop.f32.mrb[0].mxu0
        %v1406 = vadd.f32 0.0, %v1405
        %v1407 = vpop.f32.mrb[0].mxu0
        %1408 = vmatprep.mubr.f32.mxu0 0.0
        %1409 = vmatmul.mubr.f32.gmra.mrb[0].mxu0 %v1124
        %v1410 = vpop.f32.mrb[0].mxu0
        %v1411 = vadd.f32 0.0, %v1410
        %v1412 = vpop.f32.mrb[0].mxu0
        %1413 = vmatprep.mubr.f32.mxu0 0.0
        %1414 = vmatmul.mubr.f32.gmra.mrb[0].mxu0 %v1127
        %v1415 = vpop.f32.mrb[0].mxu0
        %v1416 = vadd.f32 0.0, %v1415
        %v1417 = vpop.f32.mrb[0].mxu0
        %1418 = vmatprep.mubr.f32.mxu0 0.0
        %1419 = vmatmul.mubr.f32.gmra.mrb[0].mxu0 %v1130
        %v1420 = vpop.f32.mrb[0].mxu0
        %v1421 = vadd.f32 0.0, %v1420
        %v1422 = vpop.f32.mrb[0].mxu0
        %1423 = vmatprep.mubr.f32.mxu0 0.0
        %1424 = vmatmul.mubr.f32.gmra.mrb[0].mxu0 %v1133
        %v1425 = vpop.f32.mrb[0].mxu0
        %v1426 = vadd.f32 0.0, %v1425
        %v1427 = vpop.f32.mrb[0].mxu0
        %1428 = vmatprep.mubr.f32.mxu0 0.0
        %1429 = vmatmul.mubr.f32.gmra.mrb[0].mxu0 %v1136
        %v1430 = vpop.f32.mrb[0].mxu0
        %v1431 = vadd.f32 0.0, %v1430
        %v1432 = vpop.f32.mrb[0].mxu0
        %1433 = vmatprep.mubr.f32.mxu0 0.0
        %1434 = vmatmul.mubr.f32.gmra.mrb[0].mxu0 %v1139
        %v1435 = vpop.f32.mrb[0].mxu0
        %v1436 = vadd.f32 0.0, %v1435
        %v1437 = vpop.f32.mrb[0].mxu0
        %1438 = vmatprep.mubr.f32.mxu0 0.0
        %1439 = vmatmul.mubr.f32.gmra.mrb[0].mxu0 %v1142
        %v1440 = vpop.f32.mrb[0].mxu0
        %v1441 = vadd.f32 0.0, %v1440
        %v1442 = vpop.f32.mrb[0].mxu0
        %1443 = vmatprep.mubr.f32.mxu0 0.0
        %1444 = vmatmul.mubr.f32.gmra.mrb[0].mxu0 %v1145
        %v1445 = vpop.f32.mrb[0].mxu0
        %v1446 = vadd.f32 0.0, %v1445
        %v1447 = vpop.f32.mrb[0].mxu0
        %1448 = vmatprep.mubr.f32.mxu0 0.0
        %1449 = vmatmul.mubr.f32.gmra.mrb[0].mxu0 %v1148
        %v1450 = vpop.f32.mrb[0].mxu0
        %v1451 = vadd.f32 0.0, %v1450
        %v1452 = vpop.f32.mrb[0].mxu0
        %1453 = vmatprep.mubr.f32.mxu0 0.0
        %1454 = vmatmul.mubr.f32.gmra.mrb[0].mxu0 %v1151
        %v1455 = vpop.f32.mrb[0].mxu0
        %v1456 = vadd.f32 0.0, %v1455
        %v1457 = vpop.f32.mrb[0].mxu0
        %1458 = vmatprep.mubr.f32.mxu0 0.0
        %1459 = vmatmul.mubr.f32.gmra.mrb[0].mxu0 %v1154
        %v1460 = vpop.f32.mrb[0].mxu0
        %v1461 = vadd.f32 0.0, %v1460
        %v1462 = vpop.f32.mrb[0].mxu0
        %1463 = vdwg.mxu0
        %v1464 = vld [vmem:[#allocation3] sm:$0xff]
        %v1465 = vld [vmem:[#allocation3 + $0x8] sm:$0xff]
        %v1466 = vld [vmem:[#allocation3 + $0x10] sm:$0xff]
        %v1467 = vld [vmem:[#allocation3 + $0x18] sm:$0xff]
        %v1468 = vld [vmem:[#allocation3 + $0x20] sm:$0xff]
        %v1469 = vld [vmem:[#allocation3 + $0x28] sm:$0xff]
        %v1470 = vld [vmem:[#allocation3 + $0x30] sm:$0xff]
        %v1471 = vld [vmem:[#allocation3 + $0x38] sm:$0xff]
        %v1472 = vld [vmem:[#allocation3 + $0x40] sm:$0xff]
        %v1473 = vld [vmem:[#allocation3 + $0x48] sm:$0xff]
        %v1474 = vld [vmem:[#allocation3 + $0x50] sm:$0xff]
        %v1475 = vld [vmem:[#allocation3 + $0x58] sm:$0xff]
        %v1476 = vld [vmem:[#allocation3 + $0x60] sm:$0xff]
        %v1477 = vld [vmem:[#allocation3 + $0x68] sm:$0xff]
        %v1478 = vld [vmem:[#allocation3 + $0x70] sm:$0xff]
        %v1479 = vld [vmem:[#allocation3 + $0x78] sm:$0xff]
        %v1480 = vld [vmem:[#allocation3 + $0x80] sm:$0xff]
        %v1481 = vld [vmem:[#allocation3 + $0x88] sm:$0xff]
        %v1482 = vld [vmem:[#allocation3 + $0x90] sm:$0xff]
        %v1483 = vld [vmem:[#allocation3 + $0x98] sm:$0xff]
        %v1484 = vld [vmem:[#allocation3 + $0xa0] sm:$0xff]
        %v1485 = vld [vmem:[#allocation3 + $0xa8] sm:$0xff]
        %v1486 = vld [vmem:[#allocation3 + $0xb0] sm:$0xff]
        %v1487 = vld [vmem:[#allocation3 + $0xb8] sm:$0xff]
        %v1488 = vld [vmem:[#allocation3 + $0xc0] sm:$0xff]
        %v1489 = vld [vmem:[#allocation3 + $0xc8] sm:$0xff]
        %v1490 = vld [vmem:[#allocation3 + $0xd0] sm:$0xff]
        %v1491 = vld [vmem:[#allocation3 + $0xd8] sm:$0xff]
        %v1492 = vld [vmem:[#allocation3 + $0xe0] sm:$0xff]
        %v1493 = vld [vmem:[#allocation3 + $0xe8] sm:$0xff]
        %v1494 = vld [vmem:[#allocation3 + $0xf0] sm:$0xff]
        %v1495 = vld [vmem:[#allocation3 + $0xf8] sm:$0xff]
        %v1496 = vld [vmem:[#allocation3 + $0x100] sm:$0xff]
        %v1497 = vld [vmem:[#allocation3 + $0x108] sm:$0xff]
        %v1498 = vld [vmem:[#allocation3 + $0x110] sm:$0xff]
        %v1499 = vld [vmem:[#allocation3 + $0x118] sm:$0xff]
        %v1500 = vld [vmem:[#allocation3 + $0x120] sm:$0xff]
        %v1501 = vld [vmem:[#allocation3 + $0x128] sm:$0xff]
        %v1502 = vld [vmem:[#allocation3 + $0x130] sm:$0xff]
        %v1503 = vld [vmem:[#allocation3 + $0x138] sm:$0xff]
        %v1504 = vld [vmem:[#allocation3 + $0x140] sm:$0xff]
        %v1505 = vld [vmem:[#allocation3 + $0x148] sm:$0xff]
        %v1506 = vld [vmem:[#allocation3 + $0x150] sm:$0xff]
        %v1507 = vld [vmem:[#allocation3 + $0x158] sm:$0xff]
        %v1508 = vld [vmem:[#allocation3 + $0x160] sm:$0xff]
        %v1509 = vld [vmem:[#allocation3 + $0x168] sm:$0xff]
        %v1510 = vld [vmem:[#allocation3 + $0x170] sm:$0xff]
        %v1511 = vld [vmem:[#allocation3 + $0x178] sm:$0xff]
        %v1512 = vadd.f32 %v1464, %v1226
        %v1513 = vadd.f32 %v1465, %v1231
        %v1514 = vadd.f32 %v1466, %v1236
        %v1515 = vadd.f32 %v1467, %v1241
        %v1516 = vadd.f32 %v1468, %v1246
        %v1517 = vadd.f32 %v1469, %v1251
        %v1518 = vadd.f32 %v1470, %v1256
        %v1519 = vadd.f32 %v1471, %v1261
        %v1520 = vadd.f32 %v1472, %v1266
        %v1521 = vadd.f32 %v1473, %v1271
        %v1522 = vadd.f32 %v1474, %v1276
        %v1523 = vadd.f32 %v1475, %v1281
        %v1524 = vadd.f32 %v1476, %v1286
        %v1525 = vadd.f32 %v1477, %v1291
        %v1526 = vadd.f32 %v1478, %v1296
        %v1527 = vadd.f32 %v1479, %v1301
        %v1528 = vadd.f32 %v1480, %v1306
        %v1529 = vadd.f32 %v1481, %v1311
        %v1530 = vadd.f32 %v1482, %v1316
        %v1531 = vadd.f32 %v1483, %v1321
        %v1532 = vadd.f32 %v1484, %v1326
        %v1533 = vadd.f32 %v1485, %v1331
        %v1534 = vadd.f32 %v1486, %v1336
        %v1535 = vadd.f32 %v1487, %v1341
        %v1536 = vadd.f32 %v1488, %v1346
        %v1537 = vadd.f32 %v1489, %v1351
        %v1538 = vadd.f32 %v1490, %v1356
        %v1539 = vadd.f32 %v1491, %v1361
        %v1540 = vadd.f32 %v1492, %v1366
        %v1541 = vadd.f32 %v1493, %v1371
        %v1542 = vadd.f32 %v1494, %v1376
        %v1543 = vadd.f32 %v1495, %v1381
        %v1544 = vadd.f32 %v1496, %v1386
        %v1545 = vadd.f32 %v1497, %v1391
        %v1546 = vadd.f32 %v1498, %v1396
        %v1547 = vadd.f32 %v1499, %v1401
        %v1548 = vadd.f32 %v1500, %v1406
        %v1549 = vadd.f32 %v1501, %v1411
        %v1550 = vadd.f32 %v1502, %v1416
        %v1551 = vadd.f32 %v1503, %v1421
        %v1552 = vadd.f32 %v1504, %v1426
        %v1553 = vadd.f32 %v1505, %v1431
        %v1554 = vadd.f32 %v1506, %v1436
        %v1555 = vadd.f32 %v1507, %v1441
        %v1556 = vadd.f32 %v1508, %v1446
        %v1557 = vadd.f32 %v1509, %v1451
        %v1558 = vadd.f32 %v1510, %v1456
        %v1559 = vadd.f32 %v1511, %v1461
        %1560 = vst [vmem:[#allocation3] sm:$0xff] %v1512
        %1561 = vst [vmem:[#allocation3 + $0x8] sm:$0xff] %v1513
        %1562 = vst [vmem:[#allocation3 + $0x10] sm:$0xff] %v1514
        %1563 = vst [vmem:[#allocation3 + $0x18] sm:$0xff] %v1515
        %1564 = vst [vmem:[#allocation3 + $0x20] sm:$0xff] %v1516
        %1565 = vst [vmem:[#allocation3 + $0x28] sm:$0xff] %v1517
        %1566 = vst [vmem:[#allocation3 + $0x30] sm:$0xff] %v1518
        %1567 = vst [vmem:[#allocation3 + $0x38] sm:$0xff] %v1519
        %1568 = vst [vmem:[#allocation3 + $0x40] sm:$0xff] %v1520
        %1569 = vst [vmem:[#allocation3 + $0x48] sm:$0xff] %v1521
        %1570 = vst [vmem:[#allocation3 + $0x50] sm:$0xff] %v1522
        %1571 = vst [vmem:[#allocation3 + $0x58] sm:$0xff] %v1523
        %1572 = vst [vmem:[#allocation3 + $0x60] sm:$0xff] %v1524
        %1573 = vst [vmem:[#allocation3 + $0x68] sm:$0xff] %v1525
        %1574 = vst [vmem:[#allocation3 + $0x70] sm:$0xff] %v1526
        %1575 = vst [vmem:[#allocation3 + $0x78] sm:$0xff] %v1527
        %1576 = vst [vmem:[#allocation3 + $0x80] sm:$0xff] %v1528
        %1577 = vst [vmem:[#allocation3 + $0x88] sm:$0xff] %v1529
        %1578 = vst [vmem:[#allocation3 + $0x90] sm:$0xff] %v1530
        %1579 = vst [vmem:[#allocation3 + $0x98] sm:$0xff] %v1531
        %1580 = vst [vmem:[#allocation3 + $0xa0] sm:$0xff] %v1532
        %1581 = vst [vmem:[#allocation3 + $0xa8] sm:$0xff] %v1533
        %1582 = vst [vmem:[#allocation3 + $0xb0] sm:$0xff] %v1534
        %1583 = vst [vmem:[#allocation3 + $0xb8] sm:$0xff] %v1535
        %1584 = vst [vmem:[#allocation3 + $0xc0] sm:$0xff] %v1536
        %1585 = vst [vmem:[#allocation3 + $0xc8] sm:$0xff] %v1537
        %1586 = vst [vmem:[#allocation3 + $0xd0] sm:$0xff] %v1538
        %1587 = vst [vmem:[#allocation3 + $0xd8] sm:$0xff] %v1539
        %1588 = vst [vmem:[#allocation3 + $0xe0] sm:$0xff] %v1540
        %1589 = vst [vmem:[#allocation3 + $0xe8] sm:$0xff] %v1541
        %1590 = vst [vmem:[#allocation3 + $0xf0] sm:$0xff] %v1542
        %1591 = vst [vmem:[#allocation3 + $0xf8] sm:$0xff] %v1543
        %1592 = vst [vmem:[#allocation3 + $0x100] sm:$0xff] %v1544
        %1593 = vst [vmem:[#allocation3 + $0x108] sm:$0xff] %v1545
        %1594 = vst [vmem:[#allocation3 + $0x110] sm:$0xff] %v1546
        %1595 = vst [vmem:[#allocation3 + $0x118] sm:$0xff] %v1547
        %1596 = vst [vmem:[#allocation3 + $0x120] sm:$0xff] %v1548
        %1597 = vst [vmem:[#allocation3 + $0x128] sm:$0xff] %v1549
        %1598 = vst [vmem:[#allocation3 + $0x130] sm:$0xff] %v1550
        %1599 = vst [vmem:[#allocation3 + $0x138] sm:$0xff] %v1551
        %1600 = vst [vmem:[#allocation3 + $0x140] sm:$0xff] %v1552
        %1601 = vst [vmem:[#allocation3 + $0x148] sm:$0xff] %v1553
        %1602 = vst [vmem:[#allocation3 + $0x150] sm:$0xff] %v1554
        %1603 = vst [vmem:[#allocation3 + $0x158] sm:$0xff] %v1555
        %1604 = vst [vmem:[#allocation3 + $0x160] sm:$0xff] %v1556
        %1605 = vst [vmem:[#allocation3 + $0x168] sm:$0xff] %v1557
        %1606 = vst [vmem:[#allocation3 + $0x170] sm:$0xff] %v1558
        %1607 = vst [vmem:[#allocation3 + $0x178] sm:$0xff] %v1559
        %v1608 = vld [vmem:[#allocation2 + $0x2] sm:$0xff]
        %v1609 = vld [vmem:[#allocation2 + $0xa] sm:$0xff]
        %v1610 = vld [vmem:[#allocation2 + $0x12] sm:$0xff]
        %v1611 = vld [vmem:[#allocation2 + $0x1a] sm:$0xff]
        %v1612 = vld [vmem:[#allocation2 + $0x22] sm:$0xff]
        %v1613 = vld [vmem:[#allocation2 + $0x2a] sm:$0xff]
        %v1614 = vld [vmem:[#allocation2 + $0x32] sm:$0xff]
        %v1615 = vld [vmem:[#allocation2 + $0x3a] sm:$0xff]
        %v1616 = vld [vmem:[#allocation2 + $0x42] sm:$0xff]
        %v1617 = vld [vmem:[#allocation2 + $0x4a] sm:$0xff]
        %v1618 = vld [vmem:[#allocation2 + $0x52] sm:$0xff]
        %v1619 = vld [vmem:[#allocation2 + $0x5a] sm:$0xff]
        %v1620 = vld [vmem:[#allocation2 + $0x62] sm:$0xff]
        %v1621 = vld [vmem:[#allocation2 + $0x6a] sm:$0xff]
        %v1622 = vld [vmem:[#allocation2 + $0x72] sm:$0xff]
        %v1623 = vld [vmem:[#allocation2 + $0x7a] sm:$0xff]
        %v1624 = vld [vmem:[#allocation2 + $0x82] sm:$0xff]
        %v1625 = vld [vmem:[#allocation2 + $0x8a] sm:$0xff]
        %v1626 = vld [vmem:[#allocation2 + $0x92] sm:$0xff]
        %v1627 = vld [vmem:[#allocation2 + $0x9a] sm:$0xff]
        %v1628 = vld [vmem:[#allocation2 + $0xa2] sm:$0xff]
        %v1629 = vld [vmem:[#allocation2 + $0xaa] sm:$0xff]
        %v1630 = vld [vmem:[#allocation2 + $0xb2] sm:$0xff]
        %v1631 = vld [vmem:[#allocation2 + $0xba] sm:$0xff]
        %v1632 = vld [vmem:[#allocation2 + $0xc2] sm:$0xff]
        %v1633 = vld [vmem:[#allocation2 + $0xca] sm:$0xff]
        %v1634 = vld [vmem:[#allocation2 + $0xd2] sm:$0xff]
        %v1635 = vld [vmem:[#allocation2 + $0xda] sm:$0xff]
        %v1636 = vld [vmem:[#allocation2 + $0xe2] sm:$0xff]
        %v1637 = vld [vmem:[#allocation2 + $0xea] sm:$0xff]
        %v1638 = vld [vmem:[#allocation2 + $0xf2] sm:$0xff]
        %v1639 = vld [vmem:[#allocation2 + $0xfa] sm:$0xff]
        %v1640 = vld [vmem:[#allocation2 + $0x102] sm:$0xff]
        %v1641 = vld [vmem:[#allocation2 + $0x10a] sm:$0xff]
        %v1642 = vld [vmem:[#allocation2 + $0x112] sm:$0xff]
        %v1643 = vld [vmem:[#allocation2 + $0x11a] sm:$0xff]
        %v1644 = vld [vmem:[#allocation2 + $0x122] sm:$0xff]
        %v1645 = vld [vmem:[#allocation2 + $0x12a] sm:$0xff]
        %v1646 = vld [vmem:[#allocation2 + $0x132] sm:$0xff]
        %v1647 = vld [vmem:[#allocation2 + $0x13a] sm:$0xff]
        %v1648 = vld [vmem:[#allocation2 + $0x142] sm:$0xff]
        %v1649 = vld [vmem:[#allocation2 + $0x14a] sm:$0xff]
        %v1650 = vld [vmem:[#allocation2 + $0x152] sm:$0xff]
        %v1651 = vld [vmem:[#allocation2 + $0x15a] sm:$0xff]
        %v1652 = vld [vmem:[#allocation2 + $0x162] sm:$0xff]
        %v1653 = vld [vmem:[#allocation2 + $0x16a] sm:$0xff]
        %v1654 = vld [vmem:[#allocation2 + $0x172] sm:$0xff]
        %v1655 = vld [vmem:[#allocation2 + $0x17a] sm:$0xff]
        %s1656 = scalar_lea.vmem %s2, 8
        %v1657 = vld [vmem:[%s1656] sm:$0xf]
        %v1659 = vsel %vm345, %v1608, 0
        %v1662 = vsel %vm345, %v1609, 0
        %v1665 = vsel %vm345, %v1610, 0
        %v1668 = vsel %vm345, %v1611, 0
        %v1671 = vsel %vm345, %v1612, 0
        %v1674 = vsel %vm345, %v1613, 0
        %v1677 = vsel %vm345, %v1614, 0
        %v1680 = vsel %vm345, %v1615, 0
        %v1683 = vsel %vm345, %v1616, 0
        %v1686 = vsel %vm345, %v1617, 0
        %v1689 = vsel %vm345, %v1618, 0
        %v1692 = vsel %vm345, %v1619, 0
        %v1695 = vsel %vm345, %v1620, 0
        %v1698 = vsel %vm345, %v1621, 0
        %v1701 = vsel %vm345, %v1622, 0
        %v1704 = vsel %vm345, %v1623, 0
        %v1707 = vsel %vm345, %v1624, 0
        %v1710 = vsel %vm345, %v1625, 0
        %v1713 = vsel %vm345, %v1626, 0
        %v1716 = vsel %vm345, %v1627, 0
        %v1719 = vsel %vm345, %v1628, 0
        %v1722 = vsel %vm345, %v1629, 0
        %v1725 = vsel %vm345, %v1630, 0
        %v1728 = vsel %vm345, %v1631, 0
        %v1731 = vsel %vm345, %v1632, 0
        %v1734 = vsel %vm345, %v1633, 0
        %v1737 = vsel %vm345, %v1634, 0
        %v1740 = vsel %vm345, %v1635, 0
        %v1743 = vsel %vm345, %v1636, 0
        %v1746 = vsel %vm345, %v1637, 0
        %v1749 = vsel %vm345, %v1638, 0
        %v1752 = vsel %vm345, %v1639, 0
        %v1755 = vsel %vm345, %v1640, 0
        %v1758 = vsel %vm345, %v1641, 0
        %v1761 = vsel %vm345, %v1642, 0
        %v1764 = vsel %vm345, %v1643, 0
        %v1767 = vsel %vm345, %v1644, 0
        %v1770 = vsel %vm345, %v1645, 0
        %v1773 = vsel %vm345, %v1646, 0
        %v1776 = vsel %vm345, %v1647, 0
        %v1779 = vsel %vm345, %v1648, 0
        %v1782 = vsel %vm345, %v1649, 0
        %v1785 = vsel %vm345, %v1650, 0
        %v1788 = vsel %vm345, %v1651, 0
        %v1791 = vsel %vm345, %v1652, 0
        %v1794 = vsel %vm345, %v1653, 0
        %v1797 = vsel %vm345, %v1654, 0
        %v1800 = vsel %vm345, %v1655, 0
        %v1803 = vsel %vm605, %v1657, 0
        %1805 = vmatprep.subr.mxu0 0.0
        %1806 = vmatpush1.msra.mxu0 %v1803
        %1807 = vmatprep.subr.mxu0 0.0
        %1808 = vmatpush1.msra.mxu0 0.0
        %1809 = vmatprep.subr.mxu0 0.0
        %1810 = vmatpush1.msra.mxu0 0.0
        %1811 = vmatprep.subr.mxu0 0.0
        %1812 = vmatpush1.msra.mxu0 0.0
        %1813 = vmatprep.subr.mxu0 0.0
        %1814 = vmatpush1.msra.mxu0 0.0
        %1815 = vmatprep.subr.mxu0 0.0
        %1816 = vmatpush1.msra.mxu0 0.0
        %1817 = vmatprep.subr.mxu0 0.0
        %1818 = vmatpush1.msra.mxu0 0.0
        %1819 = vmatprep.subr.mxu0 0.0
        %1820 = vmatpush1.msra.mxu0 0.0
        %1821 = vmatprep.subr.mxu0 0.0
        %1822 = vmatpush1.msra.mxu0 0.0
        %1823 = vmatprep.subr.mxu0 0.0
        %1824 = vmatpush1.msra.mxu0 0.0
        %1825 = vmatprep.subr.mxu0 0.0
        %1826 = vmatpush1.msra.mxu0 0.0
        %1827 = vmatprep.subr.mxu0 0.0
        %1828 = vmatpush1.msra.mxu0 0.0
        %1829 = vmatprep.subr.mxu0 0.0
        %1830 = vmatpush1.msra.mxu0 0.0
        %1831 = vmatprep.subr.mxu0 0.0
        %1832 = vmatpush1.msra.mxu0 0.0
        %1833 = vmatprep.subr.mxu0 0.0
        %1834 = vmatpush1.msra.mxu0 0.0
        %1835 = vmatprep.subr.mxu0 0.0
        %1836 = vmatpush1.msra.mxu0 0.0
        %1837 = vmatprep.subr.mxu0 0.0
        %1838 = vmatpush1.msra.mxu0 0.0
        %1839 = vmatprep.subr.mxu0 0.0
        %1840 = vmatpush1.msra.mxu0 0.0
        %1841 = vmatprep.subr.mxu0 0.0
        %1842 = vmatpush1.msra.mxu0 0.0
        %1843 = vmatprep.subr.mxu0 0.0
        %1844 = vmatpush1.msra.mxu0 0.0
        %1845 = vmatprep.subr.mxu0 0.0
        %1846 = vmatpush1.msra.mxu0 0.0
        %1847 = vmatprep.subr.mxu0 0.0
        %1848 = vmatpush1.msra.mxu0 0.0
        %1849 = vmatprep.subr.mxu0 0.0
        %1850 = vmatpush1.msra.mxu0 0.0
        %1851 = vmatprep.subr.mxu0 0.0
        %1852 = vmatpush1.msra.mxu0 0.0
        %1853 = vmatprep.subr.mxu0 0.0
        %1854 = vmatpush1.msra.mxu0 0.0
        %1855 = vmatprep.subr.mxu0 0.0
        %1856 = vmatpush1.msra.mxu0 0.0
        %1857 = vmatprep.subr.mxu0 0.0
        %1858 = vmatpush1.msra.mxu0 0.0
        %1859 = vmatprep.subr.mxu0 0.0
        %1860 = vmatpush1.msra.mxu0 0.0
        %1861 = vmatprep.subr.mxu0 0.0
        %1862 = vmatpush1.msra.mxu0 0.0
        %1863 = vmatprep.subr.mxu0 0.0
        %1864 = vmatpush1.msra.mxu0 0.0
        %1865 = vmatprep.subr.mxu0 0.0
        %1866 = vmatpush1.msra.mxu0 0.0
        %1867 = vmatprep.subr.mxu0 0.0
        %1868 = vmatpush1.msra.mxu0 0.0
        %1869 = vmatprep.mubr.f32.mxu0 0.0
        %1870 = vmatmul.mubr.f32.gmra.mrb[0].mxu0 %v1659
        %v1871 = vpop.f32.mrb[0].mxu0
        %v1872 = vadd.f32 0.0, %v1871
        %v1873 = vpop.f32.mrb[0].mxu0
        %1874 = vmatprep.mubr.f32.mxu0 0.0
        %1875 = vmatmul.mubr.f32.gmra.mrb[0].mxu0 %v1662
        %v1876 = vpop.f32.mrb[0].mxu0
        %v1877 = vadd.f32 0.0, %v1876
        %v1878 = vpop.f32.mrb[0].mxu0
        %1879 = vmatprep.mubr.f32.mxu0 0.0
        %1880 = vmatmul.mubr.f32.gmra.mrb[0].mxu0 %v1665
        %v1881 = vpop.f32.mrb[0].mxu0
        %v1882 = vadd.f32 0.0, %v1881
        %v1883 = vpop.f32.mrb[0].mxu0
        %1884 = vmatprep.mubr.f32.mxu0 0.0
        %1885 = vmatmul.mubr.f32.gmra.mrb[0].mxu0 %v1668
        %v1886 = vpop.f32.mrb[0].mxu0
        %v1887 = vadd.f32 0.0, %v1886
        %v1888 = vpop.f32.mrb[0].mxu0
        %1889 = vmatprep.mubr.f32.mxu0 0.0
        %1890 = vmatmul.mubr.f32.gmra.mrb[0].mxu0 %v1671
        %v1891 = vpop.f32.mrb[0].mxu0
        %v1892 = vadd.f32 0.0, %v1891
        %v1893 = vpop.f32.mrb[0].mxu0
        %1894 = vmatprep.mubr.f32.mxu0 0.0
        %1895 = vmatmul.mubr.f32.gmra.mrb[0].mxu0 %v1674
        %v1896 = vpop.f32.mrb[0].mxu0
        %v1897 = vadd.f32 0.0, %v1896
        %v1898 = vpop.f32.mrb[0].mxu0
        %1899 = vmatprep.mubr.f32.mxu0 0.0
        %1900 = vmatmul.mubr.f32.gmra.mrb[0].mxu0 %v1677
        %v1901 = vpop.f32.mrb[0].mxu0
        %v1902 = vadd.f32 0.0, %v1901
        %v1903 = vpop.f32.mrb[0].mxu0
        %1904 = vmatprep.mubr.f32.mxu0 0.0
        %1905 = vmatmul.mubr.f32.gmra.mrb[0].mxu0 %v1680
        %v1906 = vpop.f32.mrb[0].mxu0
        %v1907 = vadd.f32 0.0, %v1906
        %v1908 = vpop.f32.mrb[0].mxu0
        %1909 = vmatprep.mubr.f32.mxu0 0.0
        %1910 = vmatmul.mubr.f32.gmra.mrb[0].mxu0 %v1683
        %v1911 = vpop.f32.mrb[0].mxu0
        %v1912 = vadd.f32 0.0, %v1911
        %v1913 = vpop.f32.mrb[0].mxu0
        %1914 = vmatprep.mubr.f32.mxu0 0.0
        %1915 = vmatmul.mubr.f32.gmra.mrb[0].mxu0 %v1686
        %v1916 = vpop.f32.mrb[0].mxu0
        %v1917 = vadd.f32 0.0, %v1916
        %v1918 = vpop.f32.mrb[0].mxu0
        %1919 = vmatprep.mubr.f32.mxu0 0.0
        %1920 = vmatmul.mubr.f32.gmra.mrb[0].mxu0 %v1689
        %v1921 = vpop.f32.mrb[0].mxu0
        %v1922 = vadd.f32 0.0, %v1921
        %v1923 = vpop.f32.mrb[0].mxu0
        %1924 = vmatprep.mubr.f32.mxu0 0.0
        %1925 = vmatmul.mubr.f32.gmra.mrb[0].mxu0 %v1692
        %v1926 = vpop.f32.mrb[0].mxu0
        %v1927 = vadd.f32 0.0, %v1926
        %v1928 = vpop.f32.mrb[0].mxu0
        %1929 = vmatprep.mubr.f32.mxu0 0.0
        %1930 = vmatmul.mubr.f32.gmra.mrb[0].mxu0 %v1695
        %v1931 = vpop.f32.mrb[0].mxu0
        %v1932 = vadd.f32 0.0, %v1931
        %v1933 = vpop.f32.mrb[0].mxu0
        %1934 = vmatprep.mubr.f32.mxu0 0.0
        %1935 = vmatmul.mubr.f32.gmra.mrb[0].mxu0 %v1698
        %v1936 = vpop.f32.mrb[0].mxu0
        %v1937 = vadd.f32 0.0, %v1936
        %v1938 = vpop.f32.mrb[0].mxu0
        %1939 = vmatprep.mubr.f32.mxu0 0.0
        %1940 = vmatmul.mubr.f32.gmra.mrb[0].mxu0 %v1701
        %v1941 = vpop.f32.mrb[0].mxu0
        %v1942 = vadd.f32 0.0, %v1941
        %v1943 = vpop.f32.mrb[0].mxu0
        %1944 = vmatprep.mubr.f32.mxu0 0.0
        %1945 = vmatmul.mubr.f32.gmra.mrb[0].mxu0 %v1704
        %v1946 = vpop.f32.mrb[0].mxu0
        %v1947 = vadd.f32 0.0, %v1946
        %v1948 = vpop.f32.mrb[0].mxu0
        %1949 = vmatprep.mubr.f32.mxu0 0.0
        %1950 = vmatmul.mubr.f32.gmra.mrb[0].mxu0 %v1707
        %v1951 = vpop.f32.mrb[0].mxu0
        %v1952 = vadd.f32 0.0, %v1951
        %v1953 = vpop.f32.mrb[0].mxu0
        %1954 = vmatprep.mubr.f32.mxu0 0.0
        %1955 = vmatmul.mubr.f32.gmra.mrb[0].mxu0 %v1710
        %v1956 = vpop.f32.mrb[0].mxu0
        %v1957 = vadd.f32 0.0, %v1956
        %v1958 = vpop.f32.mrb[0].mxu0
        %1959 = vmatprep.mubr.f32.mxu0 0.0
        %1960 = vmatmul.mubr.f32.gmra.mrb[0].mxu0 %v1713
        %v1961 = vpop.f32.mrb[0].mxu0
        %v1962 = vadd.f32 0.0, %v1961
        %v1963 = vpop.f32.mrb[0].mxu0
        %1964 = vmatprep.mubr.f32.mxu0 0.0
        %1965 = vmatmul.mubr.f32.gmra.mrb[0].mxu0 %v1716
        %v1966 = vpop.f32.mrb[0].mxu0
        %v1967 = vadd.f32 0.0, %v1966
        %v1968 = vpop.f32.mrb[0].mxu0
        %1969 = vmatprep.mubr.f32.mxu0 0.0
        %1970 = vmatmul.mubr.f32.gmra.mrb[0].mxu0 %v1719
        %v1971 = vpop.f32.mrb[0].mxu0
        %v1972 = vadd.f32 0.0, %v1971
        %v1973 = vpop.f32.mrb[0].mxu0
        %1974 = vmatprep.mubr.f32.mxu0 0.0
        %1975 = vmatmul.mubr.f32.gmra.mrb[0].mxu0 %v1722
        %v1976 = vpop.f32.mrb[0].mxu0
        %v1977 = vadd.f32 0.0, %v1976
        %v1978 = vpop.f32.mrb[0].mxu0
        %1979 = vmatprep.mubr.f32.mxu0 0.0
        %1980 = vmatmul.mubr.f32.gmra.mrb[0].mxu0 %v1725
        %v1981 = vpop.f32.mrb[0].mxu0
        %v1982 = vadd.f32 0.0, %v1981
        %v1983 = vpop.f32.mrb[0].mxu0
        %1984 = vmatprep.mubr.f32.mxu0 0.0
        %1985 = vmatmul.mubr.f32.gmra.mrb[0].mxu0 %v1728
        %v1986 = vpop.f32.mrb[0].mxu0
        %v1987 = vadd.f32 0.0, %v1986
        %v1988 = vpop.f32.mrb[0].mxu0
        %1989 = vmatprep.mubr.f32.mxu0 0.0
        %1990 = vmatmul.mubr.f32.gmra.mrb[0].mxu0 %v1731
        %v1991 = vpop.f32.mrb[0].mxu0
        %v1992 = vadd.f32 0.0, %v1991
        %v1993 = vpop.f32.mrb[0].mxu0
        %1994 = vmatprep.mubr.f32.mxu0 0.0
        %1995 = vmatmul.mubr.f32.gmra.mrb[0].mxu0 %v1734
        %v1996 = vpop.f32.mrb[0].mxu0
        %v1997 = vadd.f32 0.0, %v1996
        %v1998 = vpop.f32.mrb[0].mxu0
        %1999 = vmatprep.mubr.f32.mxu0 0.0
        %2000 = vmatmul.mubr.f32.gmra.mrb[0].mxu0 %v1737
        %v2001 = vpop.f32.mrb[0].mxu0
        %v2002 = vadd.f32 0.0, %v2001
        %v2003 = vpop.f32.mrb[0].mxu0
        %2004 = vmatprep.mubr.f32.mxu0 0.0
        %2005 = vmatmul.mubr.f32.gmra.mrb[0].mxu0 %v1740
        %v2006 = vpop.f32.mrb[0].mxu0
        %v2007 = vadd.f32 0.0, %v2006
        %v2008 = vpop.f32.mrb[0].mxu0
        %2009 = vmatprep.mubr.f32.mxu0 0.0
        %2010 = vmatmul.mubr.f32.gmra.mrb[0].mxu0 %v1743
        %v2011 = vpop.f32.mrb[0].mxu0
        %v2012 = vadd.f32 0.0, %v2011
        %v2013 = vpop.f32.mrb[0].mxu0
        %2014 = vmatprep.mubr.f32.mxu0 0.0
        %2015 = vmatmul.mubr.f32.gmra.mrb[0].mxu0 %v1746
        %v2016 = vpop.f32.mrb[0].mxu0
        %v2017 = vadd.f32 0.0, %v2016
        %v2018 = vpop.f32.mrb[0].mxu0
        %2019 = vmatprep.mubr.f32.mxu0 0.0
        %2020 = vmatmul.mubr.f32.gmra.mrb[0].mxu0 %v1749
        %v2021 = vpop.f32.mrb[0].mxu0
        %v2022 = vadd.f32 0.0, %v2021
        %v2023 = vpop.f32.mrb[0].mxu0
        %2024 = vmatprep.mubr.f32.mxu0 0.0
        %2025 = vmatmul.mubr.f32.gmra.mrb[0].mxu0 %v1752
        %v2026 = vpop.f32.mrb[0].mxu0
        %v2027 = vadd.f32 0.0, %v2026
        %v2028 = vpop.f32.mrb[0].mxu0
        %2029 = vmatprep.mubr.f32.mxu0 0.0
        %2030 = vmatmul.mubr.f32.gmra.mrb[0].mxu0 %v1755
        %v2031 = vpop.f32.mrb[0].mxu0
        %v2032 = vadd.f32 0.0, %v2031
        %v2033 = vpop.f32.mrb[0].mxu0
        %2034 = vmatprep.mubr.f32.mxu0 0.0
        %2035 = vmatmul.mubr.f32.gmra.mrb[0].mxu0 %v1758
        %v2036 = vpop.f32.mrb[0].mxu0
        %v2037 = vadd.f32 0.0, %v2036
        %v2038 = vpop.f32.mrb[0].mxu0
        %2039 = vmatprep.mubr.f32.mxu0 0.0
        %2040 = vmatmul.mubr.f32.gmra.mrb[0].mxu0 %v1761
        %v2041 = vpop.f32.mrb[0].mxu0
        %v2042 = vadd.f32 0.0, %v2041
        %v2043 = vpop.f32.mrb[0].mxu0
        %2044 = vmatprep.mubr.f32.mxu0 0.0
        %2045 = vmatmul.mubr.f32.gmra.mrb[0].mxu0 %v1764
        %v2046 = vpop.f32.mrb[0].mxu0
        %v2047 = vadd.f32 0.0, %v2046
        %v2048 = vpop.f32.mrb[0].mxu0
        %2049 = vmatprep.mubr.f32.mxu0 0.0
        %2050 = vmatmul.mubr.f32.gmra.mrb[0].mxu0 %v1767
        %v2051 = vpop.f32.mrb[0].mxu0
        %v2052 = vadd.f32 0.0, %v2051
        %v2053 = vpop.f32.mrb[0].mxu0
        %2054 = vmatprep.mubr.f32.mxu0 0.0
        %2055 = vmatmul.mubr.f32.gmra.mrb[0].mxu0 %v1770
        %v2056 = vpop.f32.mrb[0].mxu0
        %v2057 = vadd.f32 0.0, %v2056
        %v2058 = vpop.f32.mrb[0].mxu0
        %2059 = vmatprep.mubr.f32.mxu0 0.0
        %2060 = vmatmul.mubr.f32.gmra.mrb[0].mxu0 %v1773
        %v2061 = vpop.f32.mrb[0].mxu0
        %v2062 = vadd.f32 0.0, %v2061
        %v2063 = vpop.f32.mrb[0].mxu0
        %2064 = vmatprep.mubr.f32.mxu0 0.0
        %2065 = vmatmul.mubr.f32.gmra.mrb[0].mxu0 %v1776
        %v2066 = vpop.f32.mrb[0].mxu0
        %v2067 = vadd.f32 0.0, %v2066
        %v2068 = vpop.f32.mrb[0].mxu0
        %2069 = vmatprep.mubr.f32.mxu0 0.0
        %2070 = vmatmul.mubr.f32.gmra.mrb[0].mxu0 %v1779
        %v2071 = vpop.f32.mrb[0].mxu0
        %v2072 = vadd.f32 0.0, %v2071
        %v2073 = vpop.f32.mrb[0].mxu0
        %2074 = vmatprep.mubr.f32.mxu0 0.0
        %2075 = vmatmul.mubr.f32.gmra.mrb[0].mxu0 %v1782
        %v2076 = vpop.f32.mrb[0].mxu0
        %v2077 = vadd.f32 0.0, %v2076
        %v2078 = vpop.f32.mrb[0].mxu0
        %2079 = vmatprep.mubr.f32.mxu0 0.0
        %2080 = vmatmul.mubr.f32.gmra.mrb[0].mxu0 %v1785
        %v2081 = vpop.f32.mrb[0].mxu0
        %v2082 = vadd.f32 0.0, %v2081
        %v2083 = vpop.f32.mrb[0].mxu0
        %2084 = vmatprep.mubr.f32.mxu0 0.0
        %2085 = vmatmul.mubr.f32.gmra.mrb[0].mxu0 %v1788
        %v2086 = vpop.f32.mrb[0].mxu0
        %v2087 = vadd.f32 0.0, %v2086
        %v2088 = vpop.f32.mrb[0].mxu0
        %2089 = vmatprep.mubr.f32.mxu0 0.0
        %2090 = vmatmul.mubr.f32.gmra.mrb[0].mxu0 %v1791
        %v2091 = vpop.f32.mrb[0].mxu0
        %v2092 = vadd.f32 0.0, %v2091
        %v2093 = vpop.f32.mrb[0].mxu0
        %2094 = vmatprep.mubr.f32.mxu0 0.0
        %2095 = vmatmul.mubr.f32.gmra.mrb[0].mxu0 %v1794
        %v2096 = vpop.f32.mrb[0].mxu0
        %v2097 = vadd.f32 0.0, %v2096
        %v2098 = vpop.f32.mrb[0].mxu0
        %2099 = vmatprep.mubr.f32.mxu0 0.0
        %2100 = vmatmul.mubr.f32.gmra.mrb[0].mxu0 %v1797
        %v2101 = vpop.f32.mrb[0].mxu0
        %v2102 = vadd.f32 0.0, %v2101
        %v2103 = vpop.f32.mrb[0].mxu0
        %2104 = vmatprep.mubr.f32.mxu0 0.0
        %2105 = vmatmul.mubr.f32.gmra.mrb[0].mxu0 %v1800
        %v2106 = vpop.f32.mrb[0].mxu0
        %v2107 = vadd.f32 0.0, %v2106
        %v2108 = vpop.f32.mrb[0].mxu0
        %2109 = vdwg.mxu0
        %v2110 = vld [vmem:[#allocation3] sm:$0xff]
        %v2111 = vld [vmem:[#allocation3 + $0x8] sm:$0xff]
        %v2112 = vld [vmem:[#allocation3 + $0x10] sm:$0xff]
        %v2113 = vld [vmem:[#allocation3 + $0x18] sm:$0xff]
        %v2114 = vld [vmem:[#allocation3 + $0x20] sm:$0xff]
        %v2115 = vld [vmem:[#allocation3 + $0x28] sm:$0xff]
        %v2116 = vld [vmem:[#allocation3 + $0x30] sm:$0xff]
        %v2117 = vld [vmem:[#allocation3 + $0x38] sm:$0xff]
        %v2118 = vld [vmem:[#allocation3 + $0x40] sm:$0xff]
        %v2119 = vld [vmem:[#allocation3 + $0x48] sm:$0xff]
        %v2120 = vld [vmem:[#allocation3 + $0x50] sm:$0xff]
        %v2121 = vld [vmem:[#allocation3 + $0x58] sm:$0xff]
        %v2122 = vld [vmem:[#allocation3 + $0x60] sm:$0xff]
        %v2123 = vld [vmem:[#allocation3 + $0x68] sm:$0xff]
        %v2124 = vld [vmem:[#allocation3 + $0x70] sm:$0xff]
        %v2125 = vld [vmem:[#allocation3 + $0x78] sm:$0xff]
        %v2126 = vld [vmem:[#allocation3 + $0x80] sm:$0xff]
        %v2127 = vld [vmem:[#allocation3 + $0x88] sm:$0xff]
        %v2128 = vld [vmem:[#allocation3 + $0x90] sm:$0xff]
        %v2129 = vld [vmem:[#allocation3 + $0x98] sm:$0xff]
        %v2130 = vld [vmem:[#allocation3 + $0xa0] sm:$0xff]
        %v2131 = vld [vmem:[#allocation3 + $0xa8] sm:$0xff]
        %v2132 = vld [vmem:[#allocation3 + $0xb0] sm:$0xff]
        %v2133 = vld [vmem:[#allocation3 + $0xb8] sm:$0xff]
        %v2134 = vld [vmem:[#allocation3 + $0xc0] sm:$0xff]
        %v2135 = vld [vmem:[#allocation3 + $0xc8] sm:$0xff]
        %v2136 = vld [vmem:[#allocation3 + $0xd0] sm:$0xff]
        %v2137 = vld [vmem:[#allocation3 + $0xd8] sm:$0xff]
        %v2138 = vld [vmem:[#allocation3 + $0xe0] sm:$0xff]
        %v2139 = vld [vmem:[#allocation3 + $0xe8] sm:$0xff]
        %v2140 = vld [vmem:[#allocation3 + $0xf0] sm:$0xff]
        %v2141 = vld [vmem:[#allocation3 + $0xf8] sm:$0xff]
        %v2142 = vld [vmem:[#allocation3 + $0x100] sm:$0xff]
        %v2143 = vld [vmem:[#allocation3 + $0x108] sm:$0xff]
        %v2144 = vld [vmem:[#allocation3 + $0x110] sm:$0xff]
        %v2145 = vld [vmem:[#allocation3 + $0x118] sm:$0xff]
        %v2146 = vld [vmem:[#allocation3 + $0x120] sm:$0xff]
        %v2147 = vld [vmem:[#allocation3 + $0x128] sm:$0xff]
        %v2148 = vld [vmem:[#allocation3 + $0x130] sm:$0xff]
        %v2149 = vld [vmem:[#allocation3 + $0x138] sm:$0xff]
        %v2150 = vld [vmem:[#allocation3 + $0x140] sm:$0xff]
        %v2151 = vld [vmem:[#allocation3 + $0x148] sm:$0xff]
        %v2152 = vld [vmem:[#allocation3 + $0x150] sm:$0xff]
        %v2153 = vld [vmem:[#allocation3 + $0x158] sm:$0xff]
        %v2154 = vld [vmem:[#allocation3 + $0x160] sm:$0xff]
        %v2155 = vld [vmem:[#allocation3 + $0x168] sm:$0xff]
        %v2156 = vld [vmem:[#allocation3 + $0x170] sm:$0xff]
        %v2157 = vld [vmem:[#allocation3 + $0x178] sm:$0xff]
        %v2158 = vadd.f32 %v2110, %v1872
        %v2159 = vadd.f32 %v2111, %v1877
        %v2160 = vadd.f32 %v2112, %v1882
        %v2161 = vadd.f32 %v2113, %v1887
        %v2162 = vadd.f32 %v2114, %v1892
        %v2163 = vadd.f32 %v2115, %v1897
        %v2164 = vadd.f32 %v2116, %v1902
        %v2165 = vadd.f32 %v2117, %v1907
        %v2166 = vadd.f32 %v2118, %v1912
        %v2167 = vadd.f32 %v2119, %v1917
        %v2168 = vadd.f32 %v2120, %v1922
        %v2169 = vadd.f32 %v2121, %v1927
        %v2170 = vadd.f32 %v2122, %v1932
        %v2171 = vadd.f32 %v2123, %v1937
        %v2172 = vadd.f32 %v2124, %v1942
        %v2173 = vadd.f32 %v2125, %v1947
        %v2174 = vadd.f32 %v2126, %v1952
        %v2175 = vadd.f32 %v2127, %v1957
        %v2176 = vadd.f32 %v2128, %v1962
        %v2177 = vadd.f32 %v2129, %v1967
        %v2178 = vadd.f32 %v2130, %v1972
        %v2179 = vadd.f32 %v2131, %v1977
        %v2180 = vadd.f32 %v2132, %v1982
        %v2181 = vadd.f32 %v2133, %v1987
        %v2182 = vadd.f32 %v2134, %v1992
        %v2183 = vadd.f32 %v2135, %v1997
        %v2184 = vadd.f32 %v2136, %v2002
        %v2185 = vadd.f32 %v2137, %v2007
        %v2186 = vadd.f32 %v2138, %v2012
        %v2187 = vadd.f32 %v2139, %v2017
        %v2188 = vadd.f32 %v2140, %v2022
        %v2189 = vadd.f32 %v2141, %v2027
        %v2190 = vadd.f32 %v2142, %v2032
        %v2191 = vadd.f32 %v2143, %v2037
        %v2192 = vadd.f32 %v2144, %v2042
        %v2193 = vadd.f32 %v2145, %v2047
        %v2194 = vadd.f32 %v2146, %v2052
        %v2195 = vadd.f32 %v2147, %v2057
        %v2196 = vadd.f32 %v2148, %v2062
        %v2197 = vadd.f32 %v2149, %v2067
        %v2198 = vadd.f32 %v2150, %v2072
        %v2199 = vadd.f32 %v2151, %v2077
        %v2200 = vadd.f32 %v2152, %v2082
        %v2201 = vadd.f32 %v2153, %v2087
        %v2202 = vadd.f32 %v2154, %v2092
        %v2203 = vadd.f32 %v2155, %v2097
        %v2204 = vadd.f32 %v2156, %v2102
        %v2205 = vadd.f32 %v2157, %v2107
        %2206 = vst [vmem:[#allocation3] sm:$0xff] %v2158
        %2207 = vst [vmem:[#allocation3 + $0x8] sm:$0xff] %v2159
        %2208 = vst [vmem:[#allocation3 + $0x10] sm:$0xff] %v2160
        %2209 = vst [vmem:[#allocation3 + $0x18] sm:$0xff] %v2161
        %2210 = vst [vmem:[#allocation3 + $0x20] sm:$0xff] %v2162
        %2211 = vst [vmem:[#allocation3 + $0x28] sm:$0xff] %v2163
        %2212 = vst [vmem:[#allocation3 + $0x30] sm:$0xff] %v2164
        %2213 = vst [vmem:[#allocation3 + $0x38] sm:$0xff] %v2165
        %2214 = vst [vmem:[#allocation3 + $0x40] sm:$0xff] %v2166
        %2215 = vst [vmem:[#allocation3 + $0x48] sm:$0xff] %v2167
        %2216 = vst [vmem:[#allocation3 + $0x50] sm:$0xff] %v2168
        %2217 = vst [vmem:[#allocation3 + $0x58] sm:$0xff] %v2169
        %2218 = vst [vmem:[#allocation3 + $0x60] sm:$0xff] %v2170
        %2219 = vst [vmem:[#allocation3 + $0x68] sm:$0xff] %v2171
        %2220 = vst [vmem:[#allocation3 + $0x70] sm:$0xff] %v2172
        %2221 = vst [vmem:[#allocation3 + $0x78] sm:$0xff] %v2173
        %2222 = vst [vmem:[#allocation3 + $0x80] sm:$0xff] %v2174
        %2223 = vst [vmem:[#allocation3 + $0x88] sm:$0xff] %v2175
        %2224 = vst [vmem:[#allocation3 + $0x90] sm:$0xff] %v2176
        %2225 = vst [vmem:[#allocation3 + $0x98] sm:$0xff] %v2177
        %2226 = vst [vmem:[#allocation3 + $0xa0] sm:$0xff] %v2178
        %2227 = vst [vmem:[#allocation3 + $0xa8] sm:$0xff] %v2179
        %2228 = vst [vmem:[#allocation3 + $0xb0] sm:$0xff] %v2180
        %2229 = vst [vmem:[#allocation3 + $0xb8] sm:$0xff] %v2181
        %2230 = vst [vmem:[#allocation3 + $0xc0] sm:$0xff] %v2182
        %2231 = vst [vmem:[#allocation3 + $0xc8] sm:$0xff] %v2183
        %2232 = vst [vmem:[#allocation3 + $0xd0] sm:$0xff] %v2184
        %2233 = vst [vmem:[#allocation3 + $0xd8] sm:$0xff] %v2185
        %2234 = vst [vmem:[#allocation3 + $0xe0] sm:$0xff] %v2186
        %2235 = vst [vmem:[#allocation3 + $0xe8] sm:$0xff] %v2187
        %2236 = vst [vmem:[#allocation3 + $0xf0] sm:$0xff] %v2188
        %2237 = vst [vmem:[#allocation3 + $0xf8] sm:$0xff] %v2189
        %2238 = vst [vmem:[#allocation3 + $0x100] sm:$0xff] %v2190
        %2239 = vst [vmem:[#allocation3 + $0x108] sm:$0xff] %v2191
        %2240 = vst [vmem:[#allocation3 + $0x110] sm:$0xff] %v2192
        %2241 = vst [vmem:[#allocation3 + $0x118] sm:$0xff] %v2193
        %2242 = vst [vmem:[#allocation3 + $0x120] sm:$0xff] %v2194
        %2243 = vst [vmem:[#allocation3 + $0x128] sm:$0xff] %v2195
        %2244 = vst [vmem:[#allocation3 + $0x130] sm:$0xff] %v2196
        %2245 = vst [vmem:[#allocation3 + $0x138] sm:$0xff] %v2197
        %2246 = vst [vmem:[#allocation3 + $0x140] sm:$0xff] %v2198
        %2247 = vst [vmem:[#allocation3 + $0x148] sm:$0xff] %v2199
        %2248 = vst [vmem:[#allocation3 + $0x150] sm:$0xff] %v2200
        %2249 = vst [vmem:[#allocation3 + $0x158] sm:$0xff] %v2201
        %2250 = vst [vmem:[#allocation3 + $0x160] sm:$0xff] %v2202
        %2251 = vst [vmem:[#allocation3 + $0x168] sm:$0xff] %v2203
        %2252 = vst [vmem:[#allocation3 + $0x170] sm:$0xff] %v2204
        %2253 = vst [vmem:[#allocation3 + $0x178] sm:$0xff] %v2205
        %v2254 = vld [vmem:[#allocation2 + $0x18] sm:$0xff]
        %v2255 = vld [vmem:[#allocation2 + $0x20] sm:$0xff]
        %v2256 = vld [vmem:[#allocation2 + $0x28] sm:$0xff]
        %v2257 = vld [vmem:[#allocation2 + $0x30] sm:$0xff]
        %v2258 = vld [vmem:[#allocation2 + $0x38] sm:$0xff]
        %v2259 = vld [vmem:[#allocation2 + $0x40] sm:$0xff]
        %v2260 = vld [vmem:[#allocation2 + $0x48] sm:$0xff]
        %v2261 = vld [vmem:[#allocation2 + $0x50] sm:$0xff]
        %v2262 = vld [vmem:[#allocation2 + $0x58] sm:$0xff]
        %v2263 = vld [vmem:[#allocation2 + $0x60] sm:$0xff]
        %v2264 = vld [vmem:[#allocation2 + $0x68] sm:$0xff]
        %v2265 = vld [vmem:[#allocation2 + $0x70] sm:$0xff]
        %v2266 = vld [vmem:[#allocation2 + $0x78] sm:$0xff]
        %v2267 = vld [vmem:[#allocation2 + $0x80] sm:$0xff]
        %v2268 = vld [vmem:[#allocation2 + $0x88] sm:$0xff]
        %v2269 = vld [vmem:[#allocation2 + $0x90] sm:$0xff]
        %v2270 = vld [vmem:[#allocation2 + $0x98] sm:$0xff]
        %v2271 = vld [vmem:[#allocation2 + $0xa0] sm:$0xff]
        %v2272 = vld [vmem:[#allocation2 + $0xa8] sm:$0xff]
        %v2273 = vld [vmem:[#allocation2 + $0xb0] sm:$0xff]
        %v2274 = vld [vmem:[#allocation2 + $0xb8] sm:$0xff]
        %v2275 = vld [vmem:[#allocation2 + $0xc0] sm:$0xff]
        %v2276 = vld [vmem:[#allocation2 + $0xc8] sm:$0xff]
        %v2277 = vld [vmem:[#allocation2 + $0xd0] sm:$0xff]
        %v2278 = vld [vmem:[#allocation2 + $0xd8] sm:$0xff]
        %v2279 = vld [vmem:[#allocation2 + $0xe0] sm:$0xff]
        %v2280 = vld [vmem:[#allocation2 + $0xe8] sm:$0xff]
        %v2281 = vld [vmem:[#allocation2 + $0xf0] sm:$0xff]
        %v2282 = vld [vmem:[#allocation2 + $0xf8] sm:$0xff]
        %v2283 = vld [vmem:[#allocation2 + $0x100] sm:$0xff]
        %v2284 = vld [vmem:[#allocation2 + $0x108] sm:$0xff]
        %v2285 = vld [vmem:[#allocation2 + $0x110] sm:$0xff]
        %v2286 = vld [vmem:[#allocation2 + $0x118] sm:$0xff]
        %v2287 = vld [vmem:[#allocation2 + $0x120] sm:$0xff]
        %v2288 = vld [vmem:[#allocation2 + $0x128] sm:$0xff]
        %v2289 = vld [vmem:[#allocation2 + $0x130] sm:$0xff]
        %v2290 = vld [vmem:[#allocation2 + $0x138] sm:$0xff]
        %v2291 = vld [vmem:[#allocation2 + $0x140] sm:$0xff]
        %v2292 = vld [vmem:[#allocation2 + $0x148] sm:$0xff]
        %v2293 = vld [vmem:[#allocation2 + $0x150] sm:$0xff]
        %v2294 = vld [vmem:[#allocation2 + $0x158] sm:$0xff]
        %v2295 = vld [vmem:[#allocation2 + $0x160] sm:$0xff]
        %v2296 = vld [vmem:[#allocation2 + $0x168] sm:$0xff]
        %v2297 = vld [vmem:[#allocation2 + $0x170] sm:$0xff]
        %v2298 = vld [vmem:[#allocation2 + $0x178] sm:$0xff]
        %v2299 = vld [vmem:[#allocation2 + $0x180] sm:$0xff]
        %v2300 = vld [vmem:[#allocation2 + $0x188] sm:$0xff]
        %v2301 = vld [vmem:[#allocation2 + $0x190] sm:$0xff]
        %s2302 = scalar_lea.vmem %s2, 12
        %v2303 = vld [vmem:[%s2302] sm:$0xf]
        %v2305 = vsel %vm345, %v2254, 0
        %v2308 = vsel %vm345, %v2255, 0
        %v2311 = vsel %vm345, %v2256, 0
        %v2314 = vsel %vm345, %v2257, 0
        %v2317 = vsel %vm345, %v2258, 0
        %v2320 = vsel %vm345, %v2259, 0
        %v2323 = vsel %vm345, %v2260, 0
        %v2326 = vsel %vm345, %v2261, 0
        %v2329 = vsel %vm345, %v2262, 0
        %v2332 = vsel %vm345, %v2263, 0
        %v2335 = vsel %vm345, %v2264, 0
        %v2338 = vsel %vm345, %v2265, 0
        %v2341 = vsel %vm345, %v2266, 0
        %v2344 = vsel %vm345, %v2267, 0
        %v2347 = vsel %vm345, %v2268, 0
        %v2350 = vsel %vm345, %v2269, 0
        %v2353 = vsel %vm345, %v2270, 0
        %v2356 = vsel %vm345, %v2271, 0
        %v2359 = vsel %vm345, %v2272, 0
        %v2362 = vsel %vm345, %v2273, 0
        %v2365 = vsel %vm345, %v2274, 0
        %v2368 = vsel %vm345, %v2275, 0
        %v2371 = vsel %vm345, %v2276, 0
        %v2374 = vsel %vm345, %v2277, 0
        %v2377 = vsel %vm345, %v2278, 0
        %v2380 = vsel %vm345, %v2279, 0
        %v2383 = vsel %vm345, %v2280, 0
        %v2386 = vsel %vm345, %v2281, 0
        %v2389 = vsel %vm345, %v2282, 0
        %v2392 = vsel %vm345, %v2283, 0
        %v2395 = vsel %vm345, %v2284, 0
        %v2398 = vsel %vm345, %v2285, 0
        %v2401 = vsel %vm345, %v2286, 0
        %v2404 = vsel %vm345, %v2287, 0
        %v2407 = vsel %vm345, %v2288, 0
        %v2410 = vsel %vm345, %v2289, 0
        %v2413 = vsel %vm345, %v2290, 0
        %v2416 = vsel %vm345, %v2291, 0
        %v2419 = vsel %vm345, %v2292, 0
        %v2422 = vsel %vm345, %v2293, 0
        %v2425 = vsel %vm345, %v2294, 0
        %v2428 = vsel %vm345, %v2295, 0
        %v2431 = vsel %vm345, %v2296, 0
        %v2434 = vsel %vm345, %v2297, 0
        %v2437 = vsel %vm345, %v2298, 0
        %v2440 = vsel %vm345, %v2299, 0
        %v2443 = vsel %vm345, %v2300, 0
        %v2446 = vsel %vm345, %v2301, 0
        %v2449 = vsel %vm605, %v2303, 0
        %2451 = vmatprep.subr.mxu0 0.0
        %2452 = vmatpush1.msra.mxu0 %v2449
        %2453 = vmatprep.subr.mxu0 0.0
        %2454 = vmatpush1.msra.mxu0 0.0
        %2455 = vmatprep.subr.mxu0 0.0
        %2456 = vmatpush1.msra.mxu0 0.0
        %2457 = vmatprep.subr.mxu0 0.0
        %2458 = vmatpush1.msra.mxu0 0.0
        %2459 = vmatprep.subr.mxu0 0.0
        %2460 = vmatpush1.msra.mxu0 0.0
        %2461 = vmatprep.subr.mxu0 0.0
        %2462 = vmatpush1.msra.mxu0 0.0
        %2463 = vmatprep.subr.mxu0 0.0
        %2464 = vmatpush1.msra.mxu0 0.0
        %2465 = vmatprep.subr.mxu0 0.0
        %2466 = vmatpush1.msra.mxu0 0.0
        %2467 = vmatprep.subr.mxu0 0.0
        %2468 = vmatpush1.msra.mxu0 0.0
        %2469 = vmatprep.subr.mxu0 0.0
        %2470 = vmatpush1.msra.mxu0 0.0
        %2471 = vmatprep.subr.mxu0 0.0
        %2472 = vmatpush1.msra.mxu0 0.0
        %2473 = vmatprep.subr.mxu0 0.0
        %2474 = vmatpush1.msra.mxu0 0.0
        %2475 = vmatprep.subr.mxu0 0.0
        %2476 = vmatpush1.msra.mxu0 0.0
        %2477 = vmatprep.subr.mxu0 0.0
        %2478 = vmatpush1.msra.mxu0 0.0
        %2479 = vmatprep.subr.mxu0 0.0
        %2480 = vmatpush1.msra.mxu0 0.0
        %2481 = vmatprep.subr.mxu0 0.0
        %2482 = vmatpush1.msra.mxu0 0.0
        %2483 = vmatprep.subr.mxu0 0.0
        %2484 = vmatpush1.msra.mxu0 0.0
        %2485 = vmatprep.subr.mxu0 0.0
        %2486 = vmatpush1.msra.mxu0 0.0
        %2487 = vmatprep.subr.mxu0 0.0
        %2488 = vmatpush1.msra.mxu0 0.0
        %2489 = vmatprep.subr.mxu0 0.0
        %2490 = vmatpush1.msra.mxu0 0.0
        %2491 = vmatprep.subr.mxu0 0.0
        %2492 = vmatpush1.msra.mxu0 0.0
        %2493 = vmatprep.subr.mxu0 0.0
        %2494 = vmatpush1.msra.mxu0 0.0
        %2495 = vmatprep.subr.mxu0 0.0
        %2496 = vmatpush1.msra.mxu0 0.0
        %2497 = vmatprep.subr.mxu0 0.0
        %2498 = vmatpush1.msra.mxu0 0.0
        %2499 = vmatprep.subr.mxu0 0.0
        %2500 = vmatpush1.msra.mxu0 0.0
        %2501 = vmatprep.subr.mxu0 0.0
        %2502 = vmatpush1.msra.mxu0 0.0
        %2503 = vmatprep.subr.mxu0 0.0
        %2504 = vmatpush1.msra.mxu0 0.0
        %2505 = vmatprep.subr.mxu0 0.0
        %2506 = vmatpush1.msra.mxu0 0.0
        %2507 = vmatprep.subr.mxu0 0.0
        %2508 = vmatpush1.msra.mxu0 0.0
        %2509 = vmatprep.subr.mxu0 0.0
        %2510 = vmatpush1.msra.mxu0 0.0
        %2511 = vmatprep.subr.mxu0 0.0
        %2512 = vmatpush1.msra.mxu0 0.0
        %2513 = vmatprep.subr.mxu0 0.0
        %2514 = vmatpush1.msra.mxu0 0.0
        %2515 = vmatprep.mubr.f32.mxu0 0.0
        %2516 = vmatmul.mubr.f32.gmra.mrb[0].mxu0 %v2305
        %v2517 = vpop.f32.mrb[0].mxu0
        %v2518 = vadd.f32 0.0, %v2517
        %v2519 = vpop.f32.mrb[0].mxu0
        %2520 = vmatprep.mubr.f32.mxu0 0.0
        %2521 = vmatmul.mubr.f32.gmra.mrb[0].mxu0 %v2308
        %v2522 = vpop.f32.mrb[0].mxu0
        %v2523 = vadd.f32 0.0, %v2522
        %v2524 = vpop.f32.mrb[0].mxu0
        %2525 = vmatprep.mubr.f32.mxu0 0.0
        %2526 = vmatmul.mubr.f32.gmra.mrb[0].mxu0 %v2311
        %v2527 = vpop.f32.mrb[0].mxu0
        %v2528 = vadd.f32 0.0, %v2527
        %v2529 = vpop.f32.mrb[0].mxu0
        %2530 = vmatprep.mubr.f32.mxu0 0.0
        %2531 = vmatmul.mubr.f32.gmra.mrb[0].mxu0 %v2314
        %v2532 = vpop.f32.mrb[0].mxu0
        %v2533 = vadd.f32 0.0, %v2532
        %v2534 = vpop.f32.mrb[0].mxu0
        %2535 = vmatprep.mubr.f32.mxu0 0.0
        %2536 = vmatmul.mubr.f32.gmra.mrb[0].mxu0 %v2317
        %v2537 = vpop.f32.mrb[0].mxu0
        %v2538 = vadd.f32 0.0, %v2537
        %v2539 = vpop.f32.mrb[0].mxu0
        %2540 = vmatprep.mubr.f32.mxu0 0.0
        %2541 = vmatmul.mubr.f32.gmra.mrb[0].mxu0 %v2320
        %v2542 = vpop.f32.mrb[0].mxu0
        %v2543 = vadd.f32 0.0, %v2542
        %v2544 = vpop.f32.mrb[0].mxu0
        %2545 = vmatprep.mubr.f32.mxu0 0.0
        %2546 = vmatmul.mubr.f32.gmra.mrb[0].mxu0 %v2323
        %v2547 = vpop.f32.mrb[0].mxu0
        %v2548 = vadd.f32 0.0, %v2547
        %v2549 = vpop.f32.mrb[0].mxu0
        %2550 = vmatprep.mubr.f32.mxu0 0.0
        %2551 = vmatmul.mubr.f32.gmra.mrb[0].mxu0 %v2326
        %v2552 = vpop.f32.mrb[0].mxu0
        %v2553 = vadd.f32 0.0, %v2552
        %v2554 = vpop.f32.mrb[0].mxu0
        %2555 = vmatprep.mubr.f32.mxu0 0.0
        %2556 = vmatmul.mubr.f32.gmra.mrb[0].mxu0 %v2329
        %v2557 = vpop.f32.mrb[0].mxu0
        %v2558 = vadd.f32 0.0, %v2557
        %v2559 = vpop.f32.mrb[0].mxu0
        %2560 = vmatprep.mubr.f32.mxu0 0.0
        %2561 = vmatmul.mubr.f32.gmra.mrb[0].mxu0 %v2332
        %v2562 = vpop.f32.mrb[0].mxu0
        %v2563 = vadd.f32 0.0, %v2562
        %v2564 = vpop.f32.mrb[0].mxu0
        %2565 = vmatprep.mubr.f32.mxu0 0.0
        %2566 = vmatmul.mubr.f32.gmra.mrb[0].mxu0 %v2335
        %v2567 = vpop.f32.mrb[0].mxu0
        %v2568 = vadd.f32 0.0, %v2567
        %v2569 = vpop.f32.mrb[0].mxu0
        %2570 = vmatprep.mubr.f32.mxu0 0.0
        %2571 = vmatmul.mubr.f32.gmra.mrb[0].mxu0 %v2338
        %v2572 = vpop.f32.mrb[0].mxu0
        %v2573 = vadd.f32 0.0, %v2572
        %v2574 = vpop.f32.mrb[0].mxu0
        %2575 = vmatprep.mubr.f32.mxu0 0.0
        %2576 = vmatmul.mubr.f32.gmra.mrb[0].mxu0 %v2341
        %v2577 = vpop.f32.mrb[0].mxu0
        %v2578 = vadd.f32 0.0, %v2577
        %v2579 = vpop.f32.mrb[0].mxu0
        %2580 = vmatprep.mubr.f32.mxu0 0.0
        %2581 = vmatmul.mubr.f32.gmra.mrb[0].mxu0 %v2344
        %v2582 = vpop.f32.mrb[0].mxu0
        %v2583 = vadd.f32 0.0, %v2582
        %v2584 = vpop.f32.mrb[0].mxu0
        %2585 = vmatprep.mubr.f32.mxu0 0.0
        %2586 = vmatmul.mubr.f32.gmra.mrb[0].mxu0 %v2347
        %v2587 = vpop.f32.mrb[0].mxu0
        %v2588 = vadd.f32 0.0, %v2587
        %v2589 = vpop.f32.mrb[0].mxu0
        %2590 = vmatprep.mubr.f32.mxu0 0.0
        %2591 = vmatmul.mubr.f32.gmra.mrb[0].mxu0 %v2350
        %v2592 = vpop.f32.mrb[0].mxu0
        %v2593 = vadd.f32 0.0, %v2592
        %v2594 = vpop.f32.mrb[0].mxu0
        %2595 = vmatprep.mubr.f32.mxu0 0.0
        %2596 = vmatmul.mubr.f32.gmra.mrb[0].mxu0 %v2353
        %v2597 = vpop.f32.mrb[0].mxu0
        %v2598 = vadd.f32 0.0, %v2597
        %v2599 = vpop.f32.mrb[0].mxu0
        %2600 = vmatprep.mubr.f32.mxu0 0.0
        %2601 = vmatmul.mubr.f32.gmra.mrb[0].mxu0 %v2356
        %v2602 = vpop.f32.mrb[0].mxu0
        %v2603 = vadd.f32 0.0, %v2602
        %v2604 = vpop.f32.mrb[0].mxu0
        %2605 = vmatprep.mubr.f32.mxu0 0.0
        %2606 = vmatmul.mubr.f32.gmra.mrb[0].mxu0 %v2359
        %v2607 = vpop.f32.mrb[0].mxu0
        %v2608 = vadd.f32 0.0, %v2607
        %v2609 = vpop.f32.mrb[0].mxu0
        %2610 = vmatprep.mubr.f32.mxu0 0.0
        %2611 = vmatmul.mubr.f32.gmra.mrb[0].mxu0 %v2362
        %v2612 = vpop.f32.mrb[0].mxu0
        %v2613 = vadd.f32 0.0, %v2612
        %v2614 = vpop.f32.mrb[0].mxu0
        %2615 = vmatprep.mubr.f32.mxu0 0.0
        %2616 = vmatmul.mubr.f32.gmra.mrb[0].mxu0 %v2365
        %v2617 = vpop.f32.mrb[0].mxu0
        %v2618 = vadd.f32 0.0, %v2617
        %v2619 = vpop.f32.mrb[0].mxu0
        %2620 = vmatprep.mubr.f32.mxu0 0.0
        %2621 = vmatmul.mubr.f32.gmra.mrb[0].mxu0 %v2368
        %v2622 = vpop.f32.mrb[0].mxu0
        %v2623 = vadd.f32 0.0, %v2622
        %v2624 = vpop.f32.mrb[0].mxu0
        %2625 = vmatprep.mubr.f32.mxu0 0.0
        %2626 = vmatmul.mubr.f32.gmra.mrb[0].mxu0 %v2371
        %v2627 = vpop.f32.mrb[0].mxu0
        %v2628 = vadd.f32 0.0, %v2627
        %v2629 = vpop.f32.mrb[0].mxu0
        %2630 = vmatprep.mubr.f32.mxu0 0.0
        %2631 = vmatmul.mubr.f32.gmra.mrb[0].mxu0 %v2374
        %v2632 = vpop.f32.mrb[0].mxu0
        %v2633 = vadd.f32 0.0, %v2632
        %v2634 = vpop.f32.mrb[0].mxu0
        %2635 = vmatprep.mubr.f32.mxu0 0.0
        %2636 = vmatmul.mubr.f32.gmra.mrb[0].mxu0 %v2377
        %v2637 = vpop.f32.mrb[0].mxu0
        %v2638 = vadd.f32 0.0, %v2637
        %v2639 = vpop.f32.mrb[0].mxu0
        %2640 = vmatprep.mubr.f32.mxu0 0.0
        %2641 = vmatmul.mubr.f32.gmra.mrb[0].mxu0 %v2380
        %v2642 = vpop.f32.mrb[0].mxu0
        %v2643 = vadd.f32 0.0, %v2642
        %v2644 = vpop.f32.mrb[0].mxu0
        %2645 = vmatprep.mubr.f32.mxu0 0.0
        %2646 = vmatmul.mubr.f32.gmra.mrb[0].mxu0 %v2383
        %v2647 = vpop.f32.mrb[0].mxu0
        %v2648 = vadd.f32 0.0, %v2647
        %v2649 = vpop.f32.mrb[0].mxu0
        %2650 = vmatprep.mubr.f32.mxu0 0.0
        %2651 = vmatmul.mubr.f32.gmra.mrb[0].mxu0 %v2386
        %v2652 = vpop.f32.mrb[0].mxu0
        %v2653 = vadd.f32 0.0, %v2652
        %v2654 = vpop.f32.mrb[0].mxu0
        %2655 = vmatprep.mubr.f32.mxu0 0.0
        %2656 = vmatmul.mubr.f32.gmra.mrb[0].mxu0 %v2389
        %v2657 = vpop.f32.mrb[0].mxu0
        %v2658 = vadd.f32 0.0, %v2657
        %v2659 = vpop.f32.mrb[0].mxu0
        %2660 = vmatprep.mubr.f32.mxu0 0.0
        %2661 = vmatmul.mubr.f32.gmra.mrb[0].mxu0 %v2392
        %v2662 = vpop.f32.mrb[0].mxu0
        %v2663 = vadd.f32 0.0, %v2662
        %v2664 = vpop.f32.mrb[0].mxu0
        %2665 = vmatprep.mubr.f32.mxu0 0.0
        %2666 = vmatmul.mubr.f32.gmra.mrb[0].mxu0 %v2395
        %v2667 = vpop.f32.mrb[0].mxu0
        %v2668 = vadd.f32 0.0, %v2667
        %v2669 = vpop.f32.mrb[0].mxu0
        %2670 = vmatprep.mubr.f32.mxu0 0.0
        %2671 = vmatmul.mubr.f32.gmra.mrb[0].mxu0 %v2398
        %v2672 = vpop.f32.mrb[0].mxu0
        %v2673 = vadd.f32 0.0, %v2672
        %v2674 = vpop.f32.mrb[0].mxu0
        %2675 = vmatprep.mubr.f32.mxu0 0.0
        %2676 = vmatmul.mubr.f32.gmra.mrb[0].mxu0 %v2401
        %v2677 = vpop.f32.mrb[0].mxu0
        %v2678 = vadd.f32 0.0, %v2677
        %v2679 = vpop.f32.mrb[0].mxu0
        %2680 = vmatprep.mubr.f32.mxu0 0.0
        %2681 = vmatmul.mubr.f32.gmra.mrb[0].mxu0 %v2404
        %v2682 = vpop.f32.mrb[0].mxu0
        %v2683 = vadd.f32 0.0, %v2682
        %v2684 = vpop.f32.mrb[0].mxu0
        %2685 = vmatprep.mubr.f32.mxu0 0.0
        %2686 = vmatmul.mubr.f32.gmra.mrb[0].mxu0 %v2407
        %v2687 = vpop.f32.mrb[0].mxu0
        %v2688 = vadd.f32 0.0, %v2687
        %v2689 = vpop.f32.mrb[0].mxu0
        %2690 = vmatprep.mubr.f32.mxu0 0.0
        %2691 = vmatmul.mubr.f32.gmra.mrb[0].mxu0 %v2410
        %v2692 = vpop.f32.mrb[0].mxu0
        %v2693 = vadd.f32 0.0, %v2692
        %v2694 = vpop.f32.mrb[0].mxu0
        %2695 = vmatprep.mubr.f32.mxu0 0.0
        %2696 = vmatmul.mubr.f32.gmra.mrb[0].mxu0 %v2413
        %v2697 = vpop.f32.mrb[0].mxu0
        %v2698 = vadd.f32 0.0, %v2697
        %v2699 = vpop.f32.mrb[0].mxu0
        %2700 = vmatprep.mubr.f32.mxu0 0.0
        %2701 = vmatmul.mubr.f32.gmra.mrb[0].mxu0 %v2416
        %v2702 = vpop.f32.mrb[0].mxu0
        %v2703 = vadd.f32 0.0, %v2702
        %v2704 = vpop.f32.mrb[0].mxu0
        %2705 = vmatprep.mubr.f32.mxu0 0.0
        %2706 = vmatmul.mubr.f32.gmra.mrb[0].mxu0 %v2419
        %v2707 = vpop.f32.mrb[0].mxu0
        %v2708 = vadd.f32 0.0, %v2707
        %v2709 = vpop.f32.mrb[0].mxu0
        %2710 = vmatprep.mubr.f32.mxu0 0.0
        %2711 = vmatmul.mubr.f32.gmra.mrb[0].mxu0 %v2422
        %v2712 = vpop.f32.mrb[0].mxu0
        %v2713 = vadd.f32 0.0, %v2712
        %v2714 = vpop.f32.mrb[0].mxu0
        %2715 = vmatprep.mubr.f32.mxu0 0.0
        %2716 = vmatmul.mubr.f32.gmra.mrb[0].mxu0 %v2425
        %v2717 = vpop.f32.mrb[0].mxu0
        %v2718 = vadd.f32 0.0, %v2717
        %v2719 = vpop.f32.mrb[0].mxu0
        %2720 = vmatprep.mubr.f32.mxu0 0.0
        %2721 = vmatmul.mubr.f32.gmra.mrb[0].mxu0 %v2428
        %v2722 = vpop.f32.mrb[0].mxu0
        %v2723 = vadd.f32 0.0, %v2722
        %v2724 = vpop.f32.mrb[0].mxu0
        %2725 = vmatprep.mubr.f32.mxu0 0.0
        %2726 = vmatmul.mubr.f32.gmra.mrb[0].mxu0 %v2431
        %v2727 = vpop.f32.mrb[0].mxu0
        %v2728 = vadd.f32 0.0, %v2727
        %v2729 = vpop.f32.mrb[0].mxu0
        %2730 = vmatprep.mubr.f32.mxu0 0.0
        %2731 = vmatmul.mubr.f32.gmra.mrb[0].mxu0 %v2434
        %v2732 = vpop.f32.mrb[0].mxu0
        %v2733 = vadd.f32 0.0, %v2732
        %v2734 = vpop.f32.mrb[0].mxu0
        %2735 = vmatprep.mubr.f32.mxu0 0.0
        %2736 = vmatmul.mubr.f32.gmra.mrb[0].mxu0 %v2437
        %v2737 = vpop.f32.mrb[0].mxu0
        %v2738 = vadd.f32 0.0, %v2737
        %v2739 = vpop.f32.mrb[0].mxu0
        %2740 = vmatprep.mubr.f32.mxu0 0.0
        %2741 = vmatmul.mubr.f32.gmra.mrb[0].mxu0 %v2440
        %v2742 = vpop.f32.mrb[0].mxu0
        %v2743 = vadd.f32 0.0, %v2742
        %v2744 = vpop.f32.mrb[0].mxu0
        %2745 = vmatprep.mubr.f32.mxu0 0.0
        %2746 = vmatmul.mubr.f32.gmra.mrb[0].mxu0 %v2443
        %v2747 = vpop.f32.mrb[0].mxu0
        %v2748 = vadd.f32 0.0, %v2747
        %v2749 = vpop.f32.mrb[0].mxu0
        %2750 = vmatprep.mubr.f32.mxu0 0.0
        %2751 = vmatmul.mubr.f32.gmra.mrb[0].mxu0 %v2446
        %v2752 = vpop.f32.mrb[0].mxu0
        %v2753 = vadd.f32 0.0, %v2752
        %v2754 = vpop.f32.mrb[0].mxu0
        %2755 = vdwg.mxu0
        %v2756 = vld [vmem:[#allocation3] sm:$0xff]
        %v2757 = vld [vmem:[#allocation3 + $0x8] sm:$0xff]
        %v2758 = vld [vmem:[#allocation3 + $0x10] sm:$0xff]
        %v2759 = vld [vmem:[#allocation3 + $0x18] sm:$0xff]
        %v2760 = vld [vmem:[#allocation3 + $0x20] sm:$0xff]
        %v2761 = vld [vmem:[#allocation3 + $0x28] sm:$0xff]
        %v2762 = vld [vmem:[#allocation3 + $0x30] sm:$0xff]
        %v2763 = vld [vmem:[#allocation3 + $0x38] sm:$0xff]
        %v2764 = vld [vmem:[#allocation3 + $0x40] sm:$0xff]
        %v2765 = vld [vmem:[#allocation3 + $0x48] sm:$0xff]
        %v2766 = vld [vmem:[#allocation3 + $0x50] sm:$0xff]
        %v2767 = vld [vmem:[#allocation3 + $0x58] sm:$0xff]
        %v2768 = vld [vmem:[#allocation3 + $0x60] sm:$0xff]
        %v2769 = vld [vmem:[#allocation3 + $0x68] sm:$0xff]
        %v2770 = vld [vmem:[#allocation3 + $0x70] sm:$0xff]
        %v2771 = vld [vmem:[#allocation3 + $0x78] sm:$0xff]
        %v2772 = vld [vmem:[#allocation3 + $0x80] sm:$0xff]
        %v2773 = vld [vmem:[#allocation3 + $0x88] sm:$0xff]
        %v2774 = vld [vmem:[#allocation3 + $0x90] sm:$0xff]
        %v2775 = vld [vmem:[#allocation3 + $0x98] sm:$0xff]
        %v2776 = vld [vmem:[#allocation3 + $0xa0] sm:$0xff]
        %v2777 = vld [vmem:[#allocation3 + $0xa8] sm:$0xff]
        %v2778 = vld [vmem:[#allocation3 + $0xb0] sm:$0xff]
        %v2779 = vld [vmem:[#allocation3 + $0xb8] sm:$0xff]
        %v2780 = vld [vmem:[#allocation3 + $0xc0] sm:$0xff]
        %v2781 = vld [vmem:[#allocation3 + $0xc8] sm:$0xff]
        %v2782 = vld [vmem:[#allocation3 + $0xd0] sm:$0xff]
        %v2783 = vld [vmem:[#allocation3 + $0xd8] sm:$0xff]
        %v2784 = vld [vmem:[#allocation3 + $0xe0] sm:$0xff]
        %v2785 = vld [vmem:[#allocation3 + $0xe8] sm:$0xff]
        %v2786 = vld [vmem:[#allocation3 + $0xf0] sm:$0xff]
        %v2787 = vld [vmem:[#allocation3 + $0xf8] sm:$0xff]
        %v2788 = vld [vmem:[#allocation3 + $0x100] sm:$0xff]
        %v2789 = vld [vmem:[#allocation3 + $0x108] sm:$0xff]
        %v2790 = vld [vmem:[#allocation3 + $0x110] sm:$0xff]
        %v2791 = vld [vmem:[#allocation3 + $0x118] sm:$0xff]
        %v2792 = vld [vmem:[#allocation3 + $0x120] sm:$0xff]
        %v2793 = vld [vmem:[#allocation3 + $0x128] sm:$0xff]
        %v2794 = vld [vmem:[#allocation3 + $0x130] sm:$0xff]
        %v2795 = vld [vmem:[#allocation3 + $0x138] sm:$0xff]
        %v2796 = vld [vmem:[#allocation3 + $0x140] sm:$0xff]
        %v2797 = vld [vmem:[#allocation3 + $0x148] sm:$0xff]
        %v2798 = vld [vmem:[#allocation3 + $0x150] sm:$0xff]
        %v2799 = vld [vmem:[#allocation3 + $0x158] sm:$0xff]
        %v2800 = vld [vmem:[#allocation3 + $0x160] sm:$0xff]
        %v2801 = vld [vmem:[#allocation3 + $0x168] sm:$0xff]
        %v2802 = vld [vmem:[#allocation3 + $0x170] sm:$0xff]
        %v2803 = vld [vmem:[#allocation3 + $0x178] sm:$0xff]
        %v2804 = vadd.f32 %v2756, %v2518
        %v2805 = vadd.f32 %v2757, %v2523
        %v2806 = vadd.f32 %v2758, %v2528
        %v2807 = vadd.f32 %v2759, %v2533
        %v2808 = vadd.f32 %v2760, %v2538
        %v2809 = vadd.f32 %v2761, %v2543
        %v2810 = vadd.f32 %v2762, %v2548
        %v2811 = vadd.f32 %v2763, %v2553
        %v2812 = vadd.f32 %v2764, %v2558
        %v2813 = vadd.f32 %v2765, %v2563
        %v2814 = vadd.f32 %v2766, %v2568
        %v2815 = vadd.f32 %v2767, %v2573
        %v2816 = vadd.f32 %v2768, %v2578
        %v2817 = vadd.f32 %v2769, %v2583
        %v2818 = vadd.f32 %v2770, %v2588
        %v2819 = vadd.f32 %v2771, %v2593
        %v2820 = vadd.f32 %v2772, %v2598
        %v2821 = vadd.f32 %v2773, %v2603
        %v2822 = vadd.f32 %v2774, %v2608
        %v2823 = vadd.f32 %v2775, %v2613
        %v2824 = vadd.f32 %v2776, %v2618
        %v2825 = vadd.f32 %v2777, %v2623
        %v2826 = vadd.f32 %v2778, %v2628
        %v2827 = vadd.f32 %v2779, %v2633
        %v2828 = vadd.f32 %v2780, %v2638
        %v2829 = vadd.f32 %v2781, %v2643
        %v2830 = vadd.f32 %v2782, %v2648
        %v2831 = vadd.f32 %v2783, %v2653
        %v2832 = vadd.f32 %v2784, %v2658
        %v2833 = vadd.f32 %v2785, %v2663
        %v2834 = vadd.f32 %v2786, %v2668
        %v2835 = vadd.f32 %v2787, %v2673
        %v2836 = vadd.f32 %v2788, %v2678
        %v2837 = vadd.f32 %v2789, %v2683
        %v2838 = vadd.f32 %v2790, %v2688
        %v2839 = vadd.f32 %v2791, %v2693
        %v2840 = vadd.f32 %v2792, %v2698
        %v2841 = vadd.f32 %v2793, %v2703
        %v2842 = vadd.f32 %v2794, %v2708
        %v2843 = vadd.f32 %v2795, %v2713
        %v2844 = vadd.f32 %v2796, %v2718
        %v2845 = vadd.f32 %v2797, %v2723
        %v2846 = vadd.f32 %v2798, %v2728
        %v2847 = vadd.f32 %v2799, %v2733
        %v2848 = vadd.f32 %v2800, %v2738
        %v2849 = vadd.f32 %v2801, %v2743
        %v2850 = vadd.f32 %v2802, %v2748
        %v2851 = vadd.f32 %v2803, %v2753
        %2852 = vst [vmem:[#allocation3] sm:$0xff] %v2804
        %2853 = vst [vmem:[#allocation3 + $0x8] sm:$0xff] %v2805
        %2854 = vst [vmem:[#allocation3 + $0x10] sm:$0xff] %v2806
        %2855 = vst [vmem:[#allocation3 + $0x18] sm:$0xff] %v2807
        %2856 = vst [vmem:[#allocation3 + $0x20] sm:$0xff] %v2808
        %2857 = vst [vmem:[#allocation3 + $0x28] sm:$0xff] %v2809
        %2858 = vst [vmem:[#allocation3 + $0x30] sm:$0xff] %v2810
        %2859 = vst [vmem:[#allocation3 + $0x38] sm:$0xff] %v2811
        %2860 = vst [vmem:[#allocation3 + $0x40] sm:$0xff] %v2812
        %2861 = vst [vmem:[#allocation3 + $0x48] sm:$0xff] %v2813
        %2862 = vst [vmem:[#allocation3 + $0x50] sm:$0xff] %v2814
        %2863 = vst [vmem:[#allocation3 + $0x58] sm:$0xff] %v2815
        %2864 = vst [vmem:[#allocation3 + $0x60] sm:$0xff] %v2816
        %2865 = vst [vmem:[#allocation3 + $0x68] sm:$0xff] %v2817
        %2866 = vst [vmem:[#allocation3 + $0x70] sm:$0xff] %v2818
        %2867 = vst [vmem:[#allocation3 + $0x78] sm:$0xff] %v2819
        %2868 = vst [vmem:[#allocation3 + $0x80] sm:$0xff] %v2820
        %2869 = vst [vmem:[#allocation3 + $0x88] sm:$0xff] %v2821
        %2870 = vst [vmem:[#allocation3 + $0x90] sm:$0xff] %v2822
        %2871 = vst [vmem:[#allocation3 + $0x98] sm:$0xff] %v2823
        %2872 = vst [vmem:[#allocation3 + $0xa0] sm:$0xff] %v2824
        %2873 = vst [vmem:[#allocation3 + $0xa8] sm:$0xff] %v2825
        %2874 = vst [vmem:[#allocation3 + $0xb0] sm:$0xff] %v2826
        %2875 = vst [vmem:[#allocation3 + $0xb8] sm:$0xff] %v2827
        %2876 = vst [vmem:[#allocation3 + $0xc0] sm:$0xff] %v2828
        %2877 = vst [vmem:[#allocation3 + $0xc8] sm:$0xff] %v2829
        %2878 = vst [vmem:[#allocation3 + $0xd0] sm:$0xff] %v2830
        %2879 = vst [vmem:[#allocation3 + $0xd8] sm:$0xff] %v2831
        %2880 = vst [vmem:[#allocation3 + $0xe0] sm:$0xff] %v2832
        %2881 = vst [vmem:[#allocation3 + $0xe8] sm:$0xff] %v2833
        %2882 = vst [vmem:[#allocation3 + $0xf0] sm:$0xff] %v2834
        %2883 = vst [vmem:[#allocation3 + $0xf8] sm:$0xff] %v2835
        %2884 = vst [vmem:[#allocation3 + $0x100] sm:$0xff] %v2836
        %2885 = vst [vmem:[#allocation3 + $0x108] sm:$0xff] %v2837
        %2886 = vst [vmem:[#allocation3 + $0x110] sm:$0xff] %v2838
        %2887 = vst [vmem:[#allocation3 + $0x118] sm:$0xff] %v2839
        %2888 = vst [vmem:[#allocation3 + $0x120] sm:$0xff] %v2840
        %2889 = vst [vmem:[#allocation3 + $0x128] sm:$0xff] %v2841
        %2890 = vst [vmem:[#allocation3 + $0x130] sm:$0xff] %v2842
        %2891 = vst [vmem:[#allocation3 + $0x138] sm:$0xff] %v2843
        %2892 = vst [vmem:[#allocation3 + $0x140] sm:$0xff] %v2844
        %2893 = vst [vmem:[#allocation3 + $0x148] sm:$0xff] %v2845
        %2894 = vst [vmem:[#allocation3 + $0x150] sm:$0xff] %v2846
        %2895 = vst [vmem:[#allocation3 + $0x158] sm:$0xff] %v2847
        %2896 = vst [vmem:[#allocation3 + $0x160] sm:$0xff] %v2848
        %2897 = vst [vmem:[#allocation3 + $0x168] sm:$0xff] %v2849
        %2898 = vst [vmem:[#allocation3 + $0x170] sm:$0xff] %v2850
        %2899 = vst [vmem:[#allocation3 + $0x178] sm:$0xff] %v2851
        %v2900 = vld [vmem:[#allocation2 + $0x19] sm:$0xff]
        %v2901 = vld [vmem:[#allocation2 + $0x21] sm:$0xff]
        %v2902 = vld [vmem:[#allocation2 + $0x29] sm:$0xff]
        %v2903 = vld [vmem:[#allocation2 + $0x31] sm:$0xff]
        %v2904 = vld [vmem:[#allocation2 + $0x39] sm:$0xff]
        %v2905 = vld [vmem:[#allocation2 + $0x41] sm:$0xff]
        %v2906 = vld [vmem:[#allocation2 + $0x49] sm:$0xff]
        %v2907 = vld [vmem:[#allocation2 + $0x51] sm:$0xff]
        %v2908 = vld [vmem:[#allocation2 + $0x59] sm:$0xff]
        %v2909 = vld [vmem:[#allocation2 + $0x61] sm:$0xff]
        %v2910 = vld [vmem:[#allocation2 + $0x69] sm:$0xff]
        %v2911 = vld [vmem:[#allocation2 + $0x71] sm:$0xff]
        %v2912 = vld [vmem:[#allocation2 + $0x79] sm:$0xff]
        %v2913 = vld [vmem:[#allocation2 + $0x81] sm:$0xff]
        %v2914 = vld [vmem:[#allocation2 + $0x89] sm:$0xff]
        %v2915 = vld [vmem:[#allocation2 + $0x91] sm:$0xff]
        %v2916 = vld [vmem:[#allocation2 + $0x99] sm:$0xff]
        %v2917 = vld [vmem:[#allocation2 + $0xa1] sm:$0xff]
        %v2918 = vld [vmem:[#allocation2 + $0xa9] sm:$0xff]
        %v2919 = vld [vmem:[#allocation2 + $0xb1] sm:$0xff]
        %v2920 = vld [vmem:[#allocation2 + $0xb9] sm:$0xff]
        %v2921 = vld [vmem:[#allocation2 + $0xc1] sm:$0xff]
        %v2922 = vld [vmem:[#allocation2 + $0xc9] sm:$0xff]
        %v2923 = vld [vmem:[#allocation2 + $0xd1] sm:$0xff]
        %v2924 = vld [vmem:[#allocation2 + $0xd9] sm:$0xff]
        %v2925 = vld [vmem:[#allocation2 + $0xe1] sm:$0xff]
        %v2926 = vld [vmem:[#allocation2 + $0xe9] sm:$0xff]
        %v2927 = vld [vmem:[#allocation2 + $0xf1] sm:$0xff]
        %v2928 = vld [vmem:[#allocation2 + $0xf9] sm:$0xff]
        %v2929 = vld [vmem:[#allocation2 + $0x101] sm:$0xff]
        %v2930 = vld [vmem:[#allocation2 + $0x109] sm:$0xff]
        %v2931 = vld [vmem:[#allocation2 + $0x111] sm:$0xff]
        %v2932 = vld [vmem:[#allocation2 + $0x119] sm:$0xff]
        %v2933 = vld [vmem:[#allocation2 + $0x121] sm:$0xff]
        %v2934 = vld [vmem:[#allocation2 + $0x129] sm:$0xff]
        %v2935 = vld [vmem:[#allocation2 + $0x131] sm:$0xff]
        %v2936 = vld [vmem:[#allocation2 + $0x139] sm:$0xff]
        %v2937 = vld [vmem:[#allocation2 + $0x141] sm:$0xff]
        %v2938 = vld [vmem:[#allocation2 + $0x149] sm:$0xff]
        %v2939 = vld [vmem:[#allocation2 + $0x151] sm:$0xff]
        %v2940 = vld [vmem:[#allocation2 + $0x159] sm:$0xff]
        %v2941 = vld [vmem:[#allocation2 + $0x161] sm:$0xff]
        %v2942 = vld [vmem:[#allocation2 + $0x169] sm:$0xff]
        %v2943 = vld [vmem:[#allocation2 + $0x171] sm:$0xff]
        %v2944 = vld [vmem:[#allocation2 + $0x179] sm:$0xff]
        %v2945 = vld [vmem:[#allocation2 + $0x181] sm:$0xff]
        %v2946 = vld [vmem:[#allocation2 + $0x189] sm:$0xff]
        %v2947 = vld [vmem:[#allocation2 + $0x191] sm:$0xff]
        %s2948 = scalar_lea.vmem %s2, 16
        %v2949 = vld [vmem:[%s2948] sm:$0xf]
        %v2951 = vsel %vm345, %v2900, 0
        %v2954 = vsel %vm345, %v2901, 0
        %v2957 = vsel %vm345, %v2902, 0
        %v2960 = vsel %vm345, %v2903, 0
        %v2963 = vsel %vm345, %v2904, 0
        %v2966 = vsel %vm345, %v2905, 0
        %v2969 = vsel %vm345, %v2906, 0
        %v2972 = vsel %vm345, %v2907, 0
        %v2975 = vsel %vm345, %v2908, 0
        %v2978 = vsel %vm345, %v2909, 0
        %v2981 = vsel %vm345, %v2910, 0
        %v2984 = vsel %vm345, %v2911, 0
        %v2987 = vsel %vm345, %v2912, 0
        %v2990 = vsel %vm345, %v2913, 0
        %v2993 = vsel %vm345, %v2914, 0
        %v2996 = vsel %vm345, %v2915, 0
        %v2999 = vsel %vm345, %v2916, 0
        %v3002 = vsel %vm345, %v2917, 0
        %v3005 = vsel %vm345, %v2918, 0
        %v3008 = vsel %vm345, %v2919, 0
        %v3011 = vsel %vm345, %v2920, 0
        %v3014 = vsel %vm345, %v2921, 0
        %v3017 = vsel %vm345, %v2922, 0
        %v3020 = vsel %vm345, %v2923, 0
        %v3023 = vsel %vm345, %v2924, 0
        %v3026 = vsel %vm345, %v2925, 0
        %v3029 = vsel %vm345, %v2926, 0
        %v3032 = vsel %vm345, %v2927, 0
        %v3035 = vsel %vm345, %v2928, 0
        %v3038 = vsel %vm345, %v2929, 0
        %v3041 = vsel %vm345, %v2930, 0
        %v3044 = vsel %vm345, %v2931, 0
        %v3047 = vsel %vm345, %v2932, 0
        %v3050 = vsel %vm345, %v2933, 0
        %v3053 = vsel %vm345, %v2934, 0
        %v3056 = vsel %vm345, %v2935, 0
        %v3059 = vsel %vm345, %v2936, 0
        %v3062 = vsel %vm345, %v2937, 0
        %v3065 = vsel %vm345, %v2938, 0
        %v3068 = vsel %vm345, %v2939, 0
        %v3071 = vsel %vm345, %v2940, 0
        %v3074 = vsel %vm345, %v2941, 0
        %v3077 = vsel %vm345, %v2942, 0
        %v3080 = vsel %vm345, %v2943, 0
        %v3083 = vsel %vm345, %v2944, 0
        %v3086 = vsel %vm345, %v2945, 0
        %v3089 = vsel %vm345, %v2946, 0
        %v3092 = vsel %vm345, %v2947, 0
        %v3095 = vsel %vm605, %v2949, 0
        %3097 = vmatprep.subr.mxu0 0.0
        %3098 = vmatpush1.msra.mxu0 %v3095
        %3099 = vmatprep.subr.mxu0 0.0
        %3100 = vmatpush1.msra.mxu0 0.0
        %3101 = vmatprep.subr.mxu0 0.0
        %3102 = vmatpush1.msra.mxu0 0.0
        %3103 = vmatprep.subr.mxu0 0.0
        %3104 = vmatpush1.msra.mxu0 0.0
        %3105 = vmatprep.subr.mxu0 0.0
        %3106 = vmatpush1.msra.mxu0 0.0
        %3107 = vmatprep.subr.mxu0 0.0
        %3108 = vmatpush1.msra.mxu0 0.0
        %3109 = vmatprep.subr.mxu0 0.0
        %3110 = vmatpush1.msra.mxu0 0.0
        %3111 = vmatprep.subr.mxu0 0.0
        %3112 = vmatpush1.msra.mxu0 0.0
        %3113 = vmatprep.subr.mxu0 0.0
        %3114 = vmatpush1.msra.mxu0 0.0
        %3115 = vmatprep.subr.mxu0 0.0
        %3116 = vmatpush1.msra.mxu0 0.0
        %3117 = vmatprep.subr.mxu0 0.0
        %3118 = vmatpush1.msra.mxu0 0.0
        %3119 = vmatprep.subr.mxu0 0.0
        %3120 = vmatpush1.msra.mxu0 0.0
        %3121 = vmatprep.subr.mxu0 0.0
        %3122 = vmatpush1.msra.mxu0 0.0
        %3123 = vmatprep.subr.mxu0 0.0
        %3124 = vmatpush1.msra.mxu0 0.0
        %3125 = vmatprep.subr.mxu0 0.0
        %3126 = vmatpush1.msra.mxu0 0.0
        %3127 = vmatprep.subr.mxu0 0.0
        %3128 = vmatpush1.msra.mxu0 0.0
        %3129 = vmatprep.subr.mxu0 0.0
        %3130 = vmatpush1.msra.mxu0 0.0
        %3131 = vmatprep.subr.mxu0 0.0
        %3132 = vmatpush1.msra.mxu0 0.0
        %3133 = vmatprep.subr.mxu0 0.0
        %3134 = vmatpush1.msra.mxu0 0.0
        %3135 = vmatprep.subr.mxu0 0.0
        %3136 = vmatpush1.msra.mxu0 0.0
        %3137 = vmatprep.subr.mxu0 0.0
        %3138 = vmatpush1.msra.mxu0 0.0
        %3139 = vmatprep.subr.mxu0 0.0
        %3140 = vmatpush1.msra.mxu0 0.0
        %3141 = vmatprep.subr.mxu0 0.0
        %3142 = vmatpush1.msra.mxu0 0.0
        %3143 = vmatprep.subr.mxu0 0.0
        %3144 = vmatpush1.msra.mxu0 0.0
        %3145 = vmatprep.subr.mxu0 0.0
        %3146 = vmatpush1.msra.mxu0 0.0
        %3147 = vmatprep.subr.mxu0 0.0
        %3148 = vmatpush1.msra.mxu0 0.0
        %3149 = vmatprep.subr.mxu0 0.0
        %3150 = vmatpush1.msra.mxu0 0.0
        %3151 = vmatprep.subr.mxu0 0.0
        %3152 = vmatpush1.msra.mxu0 0.0
        %3153 = vmatprep.subr.mxu0 0.0
        %3154 = vmatpush1.msra.mxu0 0.0
        %3155 = vmatprep.subr.mxu0 0.0
        %3156 = vmatpush1.msra.mxu0 0.0
        %3157 = vmatprep.subr.mxu0 0.0
        %3158 = vmatpush1.msra.mxu0 0.0
        %3159 = vmatprep.subr.mxu0 0.0
        %3160 = vmatpush1.msra.mxu0 0.0
        %3161 = vmatprep.mubr.f32.mxu0 0.0
        %3162 = vmatmul.mubr.f32.gmra.mrb[0].mxu0 %v2951
        %v3163 = vpop.f32.mrb[0].mxu0
        %v3164 = vadd.f32 0.0, %v3163
        %v3165 = vpop.f32.mrb[0].mxu0
        %3166 = vmatprep.mubr.f32.mxu0 0.0
        %3167 = vmatmul.mubr.f32.gmra.mrb[0].mxu0 %v2954
        %v3168 = vpop.f32.mrb[0].mxu0
        %v3169 = vadd.f32 0.0, %v3168
        %v3170 = vpop.f32.mrb[0].mxu0
        %3171 = vmatprep.mubr.f32.mxu0 0.0
        %3172 = vmatmul.mubr.f32.gmra.mrb[0].mxu0 %v2957
        %v3173 = vpop.f32.mrb[0].mxu0
        %v3174 = vadd.f32 0.0, %v3173
        %v3175 = vpop.f32.mrb[0].mxu0
        %3176 = vmatprep.mubr.f32.mxu0 0.0
        %3177 = vmatmul.mubr.f32.gmra.mrb[0].mxu0 %v2960
        %v3178 = vpop.f32.mrb[0].mxu0
        %v3179 = vadd.f32 0.0, %v3178
        %v3180 = vpop.f32.mrb[0].mxu0
        %3181 = vmatprep.mubr.f32.mxu0 0.0
        %3182 = vmatmul.mubr.f32.gmra.mrb[0].mxu0 %v2963
        %v3183 = vpop.f32.mrb[0].mxu0
        %v3184 = vadd.f32 0.0, %v3183
        %v3185 = vpop.f32.mrb[0].mxu0
        %3186 = vmatprep.mubr.f32.mxu0 0.0
        %3187 = vmatmul.mubr.f32.gmra.mrb[0].mxu0 %v2966
        %v3188 = vpop.f32.mrb[0].mxu0
        %v3189 = vadd.f32 0.0, %v3188
        %v3190 = vpop.f32.mrb[0].mxu0
        %3191 = vmatprep.mubr.f32.mxu0 0.0
        %3192 = vmatmul.mubr.f32.gmra.mrb[0].mxu0 %v2969
        %v3193 = vpop.f32.mrb[0].mxu0
        %v3194 = vadd.f32 0.0, %v3193
        %v3195 = vpop.f32.mrb[0].mxu0
        %3196 = vmatprep.mubr.f32.mxu0 0.0
        %3197 = vmatmul.mubr.f32.gmra.mrb[0].mxu0 %v2972
        %v3198 = vpop.f32.mrb[0].mxu0
        %v3199 = vadd.f32 0.0, %v3198
        %v3200 = vpop.f32.mrb[0].mxu0
        %3201 = vmatprep.mubr.f32.mxu0 0.0
        %3202 = vmatmul.mubr.f32.gmra.mrb[0].mxu0 %v2975
        %v3203 = vpop.f32.mrb[0].mxu0
        %v3204 = vadd.f32 0.0, %v3203
        %v3205 = vpop.f32.mrb[0].mxu0
        %3206 = vmatprep.mubr.f32.mxu0 0.0
        %3207 = vmatmul.mubr.f32.gmra.mrb[0].mxu0 %v2978
        %v3208 = vpop.f32.mrb[0].mxu0
        %v3209 = vadd.f32 0.0, %v3208
        %v3210 = vpop.f32.mrb[0].mxu0
        %3211 = vmatprep.mubr.f32.mxu0 0.0
        %3212 = vmatmul.mubr.f32.gmra.mrb[0].mxu0 %v2981
        %v3213 = vpop.f32.mrb[0].mxu0
        %v3214 = vadd.f32 0.0, %v3213
        %v3215 = vpop.f32.mrb[0].mxu0
        %3216 = vmatprep.mubr.f32.mxu0 0.0
        %3217 = vmatmul.mubr.f32.gmra.mrb[0].mxu0 %v2984
        %v3218 = vpop.f32.mrb[0].mxu0
        %v3219 = vadd.f32 0.0, %v3218
        %v3220 = vpop.f32.mrb[0].mxu0
        %3221 = vmatprep.mubr.f32.mxu0 0.0
        %3222 = vmatmul.mubr.f32.gmra.mrb[0].mxu0 %v2987
        %v3223 = vpop.f32.mrb[0].mxu0
        %v3224 = vadd.f32 0.0, %v3223
        %v3225 = vpop.f32.mrb[0].mxu0
        %3226 = vmatprep.mubr.f32.mxu0 0.0
        %3227 = vmatmul.mubr.f32.gmra.mrb[0].mxu0 %v2990
        %v3228 = vpop.f32.mrb[0].mxu0
        %v3229 = vadd.f32 0.0, %v3228
        %v3230 = vpop.f32.mrb[0].mxu0
        %3231 = vmatprep.mubr.f32.mxu0 0.0
        %3232 = vmatmul.mubr.f32.gmra.mrb[0].mxu0 %v2993
        %v3233 = vpop.f32.mrb[0].mxu0
        %v3234 = vadd.f32 0.0, %v3233
        %v3235 = vpop.f32.mrb[0].mxu0
        %3236 = vmatprep.mubr.f32.mxu0 0.0
        %3237 = vmatmul.mubr.f32.gmra.mrb[0].mxu0 %v2996
        %v3238 = vpop.f32.mrb[0].mxu0
        %v3239 = vadd.f32 0.0, %v3238
        %v3240 = vpop.f32.mrb[0].mxu0
        %3241 = vmatprep.mubr.f32.mxu0 0.0
        %3242 = vmatmul.mubr.f32.gmra.mrb[0].mxu0 %v2999
        %v3243 = vpop.f32.mrb[0].mxu0
        %v3244 = vadd.f32 0.0, %v3243
        %v3245 = vpop.f32.mrb[0].mxu0
        %3246 = vmatprep.mubr.f32.mxu0 0.0
        %3247 = vmatmul.mubr.f32.gmra.mrb[0].mxu0 %v3002
        %v3248 = vpop.f32.mrb[0].mxu0
        %v3249 = vadd.f32 0.0, %v3248
        %v3250 = vpop.f32.mrb[0].mxu0
        %3251 = vmatprep.mubr.f32.mxu0 0.0
        %3252 = vmatmul.mubr.f32.gmra.mrb[0].mxu0 %v3005
        %v3253 = vpop.f32.mrb[0].mxu0
        %v3254 = vadd.f32 0.0, %v3253
        %v3255 = vpop.f32.mrb[0].mxu0
        %3256 = vmatprep.mubr.f32.mxu0 0.0
        %3257 = vmatmul.mubr.f32.gmra.mrb[0].mxu0 %v3008
        %v3258 = vpop.f32.mrb[0].mxu0
        %v3259 = vadd.f32 0.0, %v3258
        %v3260 = vpop.f32.mrb[0].mxu0
        %3261 = vmatprep.mubr.f32.mxu0 0.0
        %3262 = vmatmul.mubr.f32.gmra.mrb[0].mxu0 %v3011
        %v3263 = vpop.f32.mrb[0].mxu0
        %v3264 = vadd.f32 0.0, %v3263
        %v3265 = vpop.f32.mrb[0].mxu0
        %3266 = vmatprep.mubr.f32.mxu0 0.0
        %3267 = vmatmul.mubr.f32.gmra.mrb[0].mxu0 %v3014
        %v3268 = vpop.f32.mrb[0].mxu0
        %v3269 = vadd.f32 0.0, %v3268
        %v3270 = vpop.f32.mrb[0].mxu0
        %3271 = vmatprep.mubr.f32.mxu0 0.0
        %3272 = vmatmul.mubr.f32.gmra.mrb[0].mxu0 %v3017
        %v3273 = vpop.f32.mrb[0].mxu0
        %v3274 = vadd.f32 0.0, %v3273
        %v3275 = vpop.f32.mrb[0].mxu0
        %3276 = vmatprep.mubr.f32.mxu0 0.0
        %3277 = vmatmul.mubr.f32.gmra.mrb[0].mxu0 %v3020
        %v3278 = vpop.f32.mrb[0].mxu0
        %v3279 = vadd.f32 0.0, %v3278
        %v3280 = vpop.f32.mrb[0].mxu0
        %3281 = vmatprep.mubr.f32.mxu0 0.0
        %3282 = vmatmul.mubr.f32.gmra.mrb[0].mxu0 %v3023
        %v3283 = vpop.f32.mrb[0].mxu0
        %v3284 = vadd.f32 0.0, %v3283
        %v3285 = vpop.f32.mrb[0].mxu0
        %3286 = vmatprep.mubr.f32.mxu0 0.0
        %3287 = vmatmul.mubr.f32.gmra.mrb[0].mxu0 %v3026
        %v3288 = vpop.f32.mrb[0].mxu0
        %v3289 = vadd.f32 0.0, %v3288
        %v3290 = vpop.f32.mrb[0].mxu0
        %3291 = vmatprep.mubr.f32.mxu0 0.0
        %3292 = vmatmul.mubr.f32.gmra.mrb[0].mxu0 %v3029
        %v3293 = vpop.f32.mrb[0].mxu0
        %v3294 = vadd.f32 0.0, %v3293
        %v3295 = vpop.f32.mrb[0].mxu0
        %3296 = vmatprep.mubr.f32.mxu0 0.0
        %3297 = vmatmul.mubr.f32.gmra.mrb[0].mxu0 %v3032
        %v3298 = vpop.f32.mrb[0].mxu0
        %v3299 = vadd.f32 0.0, %v3298
        %v3300 = vpop.f32.mrb[0].mxu0
        %3301 = vmatprep.mubr.f32.mxu0 0.0
        %3302 = vmatmul.mubr.f32.gmra.mrb[0].mxu0 %v3035
        %v3303 = vpop.f32.mrb[0].mxu0
        %v3304 = vadd.f32 0.0, %v3303
        %v3305 = vpop.f32.mrb[0].mxu0
        %3306 = vmatprep.mubr.f32.mxu0 0.0
        %3307 = vmatmul.mubr.f32.gmra.mrb[0].mxu0 %v3038
        %v3308 = vpop.f32.mrb[0].mxu0
        %v3309 = vadd.f32 0.0, %v3308
        %v3310 = vpop.f32.mrb[0].mxu0
        %3311 = vmatprep.mubr.f32.mxu0 0.0
        %3312 = vmatmul.mubr.f32.gmra.mrb[0].mxu0 %v3041
        %v3313 = vpop.f32.mrb[0].mxu0
        %v3314 = vadd.f32 0.0, %v3313
        %v3315 = vpop.f32.mrb[0].mxu0
        %3316 = vmatprep.mubr.f32.mxu0 0.0
        %3317 = vmatmul.mubr.f32.gmra.mrb[0].mxu0 %v3044
        %v3318 = vpop.f32.mrb[0].mxu0
        %v3319 = vadd.f32 0.0, %v3318
        %v3320 = vpop.f32.mrb[0].mxu0
        %3321 = vmatprep.mubr.f32.mxu0 0.0
        %3322 = vmatmul.mubr.f32.gmra.mrb[0].mxu0 %v3047
        %v3323 = vpop.f32.mrb[0].mxu0
        %v3324 = vadd.f32 0.0, %v3323
        %v3325 = vpop.f32.mrb[0].mxu0
        %3326 = vmatprep.mubr.f32.mxu0 0.0
        %3327 = vmatmul.mubr.f32.gmra.mrb[0].mxu0 %v3050
        %v3328 = vpop.f32.mrb[0].mxu0
        %v3329 = vadd.f32 0.0, %v3328
        %v3330 = vpop.f32.mrb[0].mxu0
        %3331 = vmatprep.mubr.f32.mxu0 0.0
        %3332 = vmatmul.mubr.f32.gmra.mrb[0].mxu0 %v3053
        %v3333 = vpop.f32.mrb[0].mxu0
        %v3334 = vadd.f32 0.0, %v3333
        %v3335 = vpop.f32.mrb[0].mxu0
        %3336 = vmatprep.mubr.f32.mxu0 0.0
        %3337 = vmatmul.mubr.f32.gmra.mrb[0].mxu0 %v3056
        %v3338 = vpop.f32.mrb[0].mxu0
        %v3339 = vadd.f32 0.0, %v3338
        %v3340 = vpop.f32.mrb[0].mxu0
        %3341 = vmatprep.mubr.f32.mxu0 0.0
        %3342 = vmatmul.mubr.f32.gmra.mrb[0].mxu0 %v3059
        %v3343 = vpop.f32.mrb[0].mxu0
        %v3344 = vadd.f32 0.0, %v3343
        %v3345 = vpop.f32.mrb[0].mxu0
        %3346 = vmatprep.mubr.f32.mxu0 0.0
        %3347 = vmatmul.mubr.f32.gmra.mrb[0].mxu0 %v3062
        %v3348 = vpop.f32.mrb[0].mxu0
        %v3349 = vadd.f32 0.0, %v3348
        %v3350 = vpop.f32.mrb[0].mxu0
        %3351 = vmatprep.mubr.f32.mxu0 0.0
        %3352 = vmatmul.mubr.f32.gmra.mrb[0].mxu0 %v3065
        %v3353 = vpop.f32.mrb[0].mxu0
        %v3354 = vadd.f32 0.0, %v3353
        %v3355 = vpop.f32.mrb[0].mxu0
        %3356 = vmatprep.mubr.f32.mxu0 0.0
        %3357 = vmatmul.mubr.f32.gmra.mrb[0].mxu0 %v3068
        %v3358 = vpop.f32.mrb[0].mxu0
        %v3359 = vadd.f32 0.0, %v3358
        %v3360 = vpop.f32.mrb[0].mxu0
        %3361 = vmatprep.mubr.f32.mxu0 0.0
        %3362 = vmatmul.mubr.f32.gmra.mrb[0].mxu0 %v3071
        %v3363 = vpop.f32.mrb[0].mxu0
        %v3364 = vadd.f32 0.0, %v3363
        %v3365 = vpop.f32.mrb[0].mxu0
        %3366 = vmatprep.mubr.f32.mxu0 0.0
        %3367 = vmatmul.mubr.f32.gmra.mrb[0].mxu0 %v3074
        %v3368 = vpop.f32.mrb[0].mxu0
        %v3369 = vadd.f32 0.0, %v3368
        %v3370 = vpop.f32.mrb[0].mxu0
        %3371 = vmatprep.mubr.f32.mxu0 0.0
        %3372 = vmatmul.mubr.f32.gmra.mrb[0].mxu0 %v3077
        %v3373 = vpop.f32.mrb[0].mxu0
        %v3374 = vadd.f32 0.0, %v3373
        %v3375 = vpop.f32.mrb[0].mxu0
        %3376 = vmatprep.mubr.f32.mxu0 0.0
        %3377 = vmatmul.mubr.f32.gmra.mrb[0].mxu0 %v3080
        %v3378 = vpop.f32.mrb[0].mxu0
        %v3379 = vadd.f32 0.0, %v3378
        %v3380 = vpop.f32.mrb[0].mxu0
        %3381 = vmatprep.mubr.f32.mxu0 0.0
        %3382 = vmatmul.mubr.f32.gmra.mrb[0].mxu0 %v3083
        %v3383 = vpop.f32.mrb[0].mxu0
        %v3384 = vadd.f32 0.0, %v3383
        %v3385 = vpop.f32.mrb[0].mxu0
        %3386 = vmatprep.mubr.f32.mxu0 0.0
        %3387 = vmatmul.mubr.f32.gmra.mrb[0].mxu0 %v3086
        %v3388 = vpop.f32.mrb[0].mxu0
        %v3389 = vadd.f32 0.0, %v3388
        %v3390 = vpop.f32.mrb[0].mxu0
        %3391 = vmatprep.mubr.f32.mxu0 0.0
        %3392 = vmatmul.mubr.f32.gmra.mrb[0].mxu0 %v3089
        %v3393 = vpop.f32.mrb[0].mxu0
        %v3394 = vadd.f32 0.0, %v3393
        %v3395 = vpop.f32.mrb[0].mxu0
        %3396 = vmatprep.mubr.f32.mxu0 0.0
        %3397 = vmatmul.mubr.f32.gmra.mrb[0].mxu0 %v3092
        %v3398 = vpop.f32.mrb[0].mxu0
        %v3399 = vadd.f32 0.0, %v3398
        %v3400 = vpop.f32.mrb[0].mxu0
        %3401 = vdwg.mxu0
        %v3402 = vld [vmem:[#allocation3] sm:$0xff]
        %v3403 = vld [vmem:[#allocation3 + $0x8] sm:$0xff]
        %v3404 = vld [vmem:[#allocation3 + $0x10] sm:$0xff]
        %v3405 = vld [vmem:[#allocation3 + $0x18] sm:$0xff]
        %v3406 = vld [vmem:[#allocation3 + $0x20] sm:$0xff]
        %v3407 = vld [vmem:[#allocation3 + $0x28] sm:$0xff]
        %v3408 = vld [vmem:[#allocation3 + $0x30] sm:$0xff]
        %v3409 = vld [vmem:[#allocation3 + $0x38] sm:$0xff]
        %v3410 = vld [vmem:[#allocation3 + $0x40] sm:$0xff]
        %v3411 = vld [vmem:[#allocation3 + $0x48] sm:$0xff]
        %v3412 = vld [vmem:[#allocation3 + $0x50] sm:$0xff]
        %v3413 = vld [vmem:[#allocation3 + $0x58] sm:$0xff]
        %v3414 = vld [vmem:[#allocation3 + $0x60] sm:$0xff]
        %v3415 = vld [vmem:[#allocation3 + $0x68] sm:$0xff]
        %v3416 = vld [vmem:[#allocation3 + $0x70] sm:$0xff]
        %v3417 = vld [vmem:[#allocation3 + $0x78] sm:$0xff]
        %v3418 = vld [vmem:[#allocation3 + $0x80] sm:$0xff]
        %v3419 = vld [vmem:[#allocation3 + $0x88] sm:$0xff]
        %v3420 = vld [vmem:[#allocation3 + $0x90] sm:$0xff]
        %v3421 = vld [vmem:[#allocation3 + $0x98] sm:$0xff]
        %v3422 = vld [vmem:[#allocation3 + $0xa0] sm:$0xff]
        %v3423 = vld [vmem:[#allocation3 + $0xa8] sm:$0xff]
        %v3424 = vld [vmem:[#allocation3 + $0xb0] sm:$0xff]
        %v3425 = vld [vmem:[#allocation3 + $0xb8] sm:$0xff]
        %v3426 = vld [vmem:[#allocation3 + $0xc0] sm:$0xff]
        %v3427 = vld [vmem:[#allocation3 + $0xc8] sm:$0xff]
        %v3428 = vld [vmem:[#allocation3 + $0xd0] sm:$0xff]
        %v3429 = vld [vmem:[#allocation3 + $0xd8] sm:$0xff]
        %v3430 = vld [vmem:[#allocation3 + $0xe0] sm:$0xff]
        %v3431 = vld [vmem:[#allocation3 + $0xe8] sm:$0xff]
        %v3432 = vld [vmem:[#allocation3 + $0xf0] sm:$0xff]
        %v3433 = vld [vmem:[#allocation3 + $0xf8] sm:$0xff]
        %v3434 = vld [vmem:[#allocation3 + $0x100] sm:$0xff]
        %v3435 = vld [vmem:[#allocation3 + $0x108] sm:$0xff]
        %v3436 = vld [vmem:[#allocation3 + $0x110] sm:$0xff]
        %v3437 = vld [vmem:[#allocation3 + $0x118] sm:$0xff]
        %v3438 = vld [vmem:[#allocation3 + $0x120] sm:$0xff]
        %v3439 = vld [vmem:[#allocation3 + $0x128] sm:$0xff]
        %v3440 = vld [vmem:[#allocation3 + $0x130] sm:$0xff]
        %v3441 = vld [vmem:[#allocation3 + $0x138] sm:$0xff]
        %v3442 = vld [vmem:[#allocation3 + $0x140] sm:$0xff]
        %v3443 = vld [vmem:[#allocation3 + $0x148] sm:$0xff]
        %v3444 = vld [vmem:[#allocation3 + $0x150] sm:$0xff]
        %v3445 = vld [vmem:[#allocation3 + $0x158] sm:$0xff]
        %v3446 = vld [vmem:[#allocation3 + $0x160] sm:$0xff]
        %v3447 = vld [vmem:[#allocation3 + $0x168] sm:$0xff]
        %v3448 = vld [vmem:[#allocation3 + $0x170] sm:$0xff]
        %v3449 = vld [vmem:[#allocation3 + $0x178] sm:$0xff]
        %v3450 = vadd.f32 %v3402, %v3164
        %v3451 = vadd.f32 %v3403, %v3169
        %v3452 = vadd.f32 %v3404, %v3174
        %v3453 = vadd.f32 %v3405, %v3179
        %v3454 = vadd.f32 %v3406, %v3184
        %v3455 = vadd.f32 %v3407, %v3189
        %v3456 = vadd.f32 %v3408, %v3194
        %v3457 = vadd.f32 %v3409, %v3199
        %v3458 = vadd.f32 %v3410, %v3204
        %v3459 = vadd.f32 %v3411, %v3209
        %v3460 = vadd.f32 %v3412, %v3214
        %v3461 = vadd.f32 %v3413, %v3219
        %v3462 = vadd.f32 %v3414, %v3224
        %v3463 = vadd.f32 %v3415, %v3229
        %v3464 = vadd.f32 %v3416, %v3234
        %v3465 = vadd.f32 %v3417, %v3239
        %v3466 = vadd.f32 %v3418, %v3244
        %v3467 = vadd.f32 %v3419, %v3249
        %v3468 = vadd.f32 %v3420, %v3254
        %v3469 = vadd.f32 %v3421, %v3259
        %v3470 = vadd.f32 %v3422, %v3264
        %v3471 = vadd.f32 %v3423, %v3269
        %v3472 = vadd.f32 %v3424, %v3274
        %v3473 = vadd.f32 %v3425, %v3279
        %v3474 = vadd.f32 %v3426, %v3284
        %v3475 = vadd.f32 %v3427, %v3289
        %v3476 = vadd.f32 %v3428, %v3294
        %v3477 = vadd.f32 %v3429, %v3299
        %v3478 = vadd.f32 %v3430, %v3304
        %v3479 = vadd.f32 %v3431, %v3309
        %v3480 = vadd.f32 %v3432, %v3314
        %v3481 = vadd.f32 %v3433, %v3319
        %v3482 = vadd.f32 %v3434, %v3324
        %v3483 = vadd.f32 %v3435, %v3329
        %v3484 = vadd.f32 %v3436, %v3334
        %v3485 = vadd.f32 %v3437, %v3339
        %v3486 = vadd.f32 %v3438, %v3344
        %v3487 = vadd.f32 %v3439, %v3349
        %v3488 = vadd.f32 %v3440, %v3354
        %v3489 = vadd.f32 %v3441, %v3359
        %v3490 = vadd.f32 %v3442, %v3364
        %v3491 = vadd.f32 %v3443, %v3369
        %v3492 = vadd.f32 %v3444, %v3374
        %v3493 = vadd.f32 %v3445, %v3379
        %v3494 = vadd.f32 %v3446, %v3384
        %v3495 = vadd.f32 %v3447, %v3389
        %v3496 = vadd.f32 %v3448, %v3394
        %v3497 = vadd.f32 %v3449, %v3399
        %3498 = vst [vmem:[#allocation3] sm:$0xff] %v3450
        %3499 = vst [vmem:[#allocation3 + $0x8] sm:$0xff] %v3451
        %3500 = vst [vmem:[#allocation3 + $0x10] sm:$0xff] %v3452
        %3501 = vst [vmem:[#allocation3 + $0x18] sm:$0xff] %v3453
        %3502 = vst [vmem:[#allocation3 + $0x20] sm:$0xff] %v3454
        %3503 = vst [vmem:[#allocation3 + $0x28] sm:$0xff] %v3455
        %3504 = vst [vmem:[#allocation3 + $0x30] sm:$0xff] %v3456
        %3505 = vst [vmem:[#allocation3 + $0x38] sm:$0xff] %v3457
        %3506 = vst [vmem:[#allocation3 + $0x40] sm:$0xff] %v3458
        %3507 = vst [vmem:[#allocation3 + $0x48] sm:$0xff] %v3459
        %3508 = vst [vmem:[#allocation3 + $0x50] sm:$0xff] %v3460
        %3509 = vst [vmem:[#allocation3 + $0x58] sm:$0xff] %v3461
        %3510 = vst [vmem:[#allocation3 + $0x60] sm:$0xff] %v3462
        %3511 = vst [vmem:[#allocation3 + $0x68] sm:$0xff] %v3463
        %3512 = vst [vmem:[#allocation3 + $0x70] sm:$0xff] %v3464
        %3513 = vst [vmem:[#allocation3 + $0x78] sm:$0xff] %v3465
        %3514 = vst [vmem:[#allocation3 + $0x80] sm:$0xff] %v3466
        %3515 = vst [vmem:[#allocation3 + $0x88] sm:$0xff] %v3467
        %3516 = vst [vmem:[#allocation3 + $0x90] sm:$0xff] %v3468
        %3517 = vst [vmem:[#allocation3 + $0x98] sm:$0xff] %v3469
        %3518 = vst [vmem:[#allocation3 + $0xa0] sm:$0xff] %v3470
        %3519 = vst [vmem:[#allocation3 + $0xa8] sm:$0xff] %v3471
        %3520 = vst [vmem:[#allocation3 + $0xb0] sm:$0xff] %v3472
        %3521 = vst [vmem:[#allocation3 + $0xb8] sm:$0xff] %v3473
        %3522 = vst [vmem:[#allocation3 + $0xc0] sm:$0xff] %v3474
        %3523 = vst [vmem:[#allocation3 + $0xc8] sm:$0xff] %v3475
        %3524 = vst [vmem:[#allocation3 + $0xd0] sm:$0xff] %v3476
        %3525 = vst [vmem:[#allocation3 + $0xd8] sm:$0xff] %v3477
        %3526 = vst [vmem:[#allocation3 + $0xe0] sm:$0xff] %v3478
        %3527 = vst [vmem:[#allocation3 + $0xe8] sm:$0xff] %v3479
        %3528 = vst [vmem:[#allocation3 + $0xf0] sm:$0xff] %v3480
        %3529 = vst [vmem:[#allocation3 + $0xf8] sm:$0xff] %v3481
        %3530 = vst [vmem:[#allocation3 + $0x100] sm:$0xff] %v3482
        %3531 = vst [vmem:[#allocation3 + $0x108] sm:$0xff] %v3483
        %3532 = vst [vmem:[#allocation3 + $0x110] sm:$0xff] %v3484
        %3533 = vst [vmem:[#allocation3 + $0x118] sm:$0xff] %v3485
        %3534 = vst [vmem:[#allocation3 + $0x120] sm:$0xff] %v3486
        %3535 = vst [vmem:[#allocation3 + $0x128] sm:$0xff] %v3487
        %3536 = vst [vmem:[#allocation3 + $0x130] sm:$0xff] %v3488
        %3537 = vst [vmem:[#allocation3 + $0x138] sm:$0xff] %v3489
        %3538 = vst [vmem:[#allocation3 + $0x140] sm:$0xff] %v3490
        %3539 = vst [vmem:[#allocation3 + $0x148] sm:$0xff] %v3491
        %3540 = vst [vmem:[#allocation3 + $0x150] sm:$0xff] %v3492
        %3541 = vst [vmem:[#allocation3 + $0x158] sm:$0xff] %v3493
        %3542 = vst [vmem:[#allocation3 + $0x160] sm:$0xff] %v3494
        %3543 = vst [vmem:[#allocation3 + $0x168] sm:$0xff] %v3495
        %3544 = vst [vmem:[#allocation3 + $0x170] sm:$0xff] %v3496
        %3545 = vst [vmem:[#allocation3 + $0x178] sm:$0xff] %v3497
        %v3546 = vld [vmem:[#allocation2 + $0x1a] sm:$0xff]
        %v3547 = vld [vmem:[#allocation2 + $0x22] sm:$0xff]
        %v3548 = vld [vmem:[#allocation2 + $0x2a] sm:$0xff]
        %v3549 = vld [vmem:[#allocation2 + $0x32] sm:$0xff]
        %v3550 = vld [vmem:[#allocation2 + $0x3a] sm:$0xff]
        %v3551 = vld [vmem:[#allocation2 + $0x42] sm:$0xff]
        %v3552 = vld [vmem:[#allocation2 + $0x4a] sm:$0xff]
        %v3553 = vld [vmem:[#allocation2 + $0x52] sm:$0xff]
        %v3554 = vld [vmem:[#allocation2 + $0x5a] sm:$0xff]
        %v3555 = vld [vmem:[#allocation2 + $0x62] sm:$0xff]
        %v3556 = vld [vmem:[#allocation2 + $0x6a] sm:$0xff]
        %v3557 = vld [vmem:[#allocation2 + $0x72] sm:$0xff]
        %v3558 = vld [vmem:[#allocation2 + $0x7a] sm:$0xff]
        %v3559 = vld [vmem:[#allocation2 + $0x82] sm:$0xff]
        %v3560 = vld [vmem:[#allocation2 + $0x8a] sm:$0xff]
        %v3561 = vld [vmem:[#allocation2 + $0x92] sm:$0xff]
        %v3562 = vld [vmem:[#allocation2 + $0x9a] sm:$0xff]
        %v3563 = vld [vmem:[#allocation2 + $0xa2] sm:$0xff]
        %v3564 = vld [vmem:[#allocation2 + $0xaa] sm:$0xff]
        %v3565 = vld [vmem:[#allocation2 + $0xb2] sm:$0xff]
        %v3566 = vld [vmem:[#allocation2 + $0xba] sm:$0xff]
        %v3567 = vld [vmem:[#allocation2 + $0xc2] sm:$0xff]
        %v3568 = vld [vmem:[#allocation2 + $0xca] sm:$0xff]
        %v3569 = vld [vmem:[#allocation2 + $0xd2] sm:$0xff]
        %v3570 = vld [vmem:[#allocation2 + $0xda] sm:$0xff]
        %v3571 = vld [vmem:[#allocation2 + $0xe2] sm:$0xff]
        %v3572 = vld [vmem:[#allocation2 + $0xea] sm:$0xff]
        %v3573 = vld [vmem:[#allocation2 + $0xf2] sm:$0xff]
        %v3574 = vld [vmem:[#allocation2 + $0xfa] sm:$0xff]
        %v3575 = vld [vmem:[#allocation2 + $0x102] sm:$0xff]
        %v3576 = vld [vmem:[#allocation2 + $0x10a] sm:$0xff]
        %v3577 = vld [vmem:[#allocation2 + $0x112] sm:$0xff]
        %v3578 = vld [vmem:[#allocation2 + $0x11a] sm:$0xff]
        %v3579 = vld [vmem:[#allocation2 + $0x122] sm:$0xff]
        %v3580 = vld [vmem:[#allocation2 + $0x12a] sm:$0xff]
        %v3581 = vld [vmem:[#allocation2 + $0x132] sm:$0xff]
        %v3582 = vld [vmem:[#allocation2 + $0x13a] sm:$0xff]
        %v3583 = vld [vmem:[#allocation2 + $0x142] sm:$0xff]
        %v3584 = vld [vmem:[#allocation2 + $0x14a] sm:$0xff]
        %v3585 = vld [vmem:[#allocation2 + $0x152] sm:$0xff]
        %v3586 = vld [vmem:[#allocation2 + $0x15a] sm:$0xff]
        %v3587 = vld [vmem:[#allocation2 + $0x162] sm:$0xff]
        %v3588 = vld [vmem:[#allocation2 + $0x16a] sm:$0xff]
        %v3589 = vld [vmem:[#allocation2 + $0x172] sm:$0xff]
        %v3590 = vld [vmem:[#allocation2 + $0x17a] sm:$0xff]
        %v3591 = vld [vmem:[#allocation2 + $0x182] sm:$0xff]
        %v3592 = vld [vmem:[#allocation2 + $0x18a] sm:$0xff]
        %v3593 = vld [vmem:[#allocation2 + $0x192] sm:$0xff]
        %s3594 = scalar_lea.vmem %s2, 20
        %v3595 = vld [vmem:[%s3594] sm:$0xf]
        %v3597 = vsel %vm345, %v3546, 0
        %v3600 = vsel %vm345, %v3547, 0
        %v3603 = vsel %vm345, %v3548, 0
        %v3606 = vsel %vm345, %v3549, 0
        %v3609 = vsel %vm345, %v3550, 0
        %v3612 = vsel %vm345, %v3551, 0
        %v3615 = vsel %vm345, %v3552, 0
        %v3618 = vsel %vm345, %v3553, 0
        %v3621 = vsel %vm345, %v3554, 0
        %v3624 = vsel %vm345, %v3555, 0
        %v3627 = vsel %vm345, %v3556, 0
        %v3630 = vsel %vm345, %v3557, 0
        %v3633 = vsel %vm345, %v3558, 0
        %v3636 = vsel %vm345, %v3559, 0
        %v3639 = vsel %vm345, %v3560, 0
        %v3642 = vsel %vm345, %v3561, 0
        %v3645 = vsel %vm345, %v3562, 0
        %v3648 = vsel %vm345, %v3563, 0
        %v3651 = vsel %vm345, %v3564, 0
        %v3654 = vsel %vm345, %v3565, 0
        %v3657 = vsel %vm345, %v3566, 0
        %v3660 = vsel %vm345, %v3567, 0
        %v3663 = vsel %vm345, %v3568, 0
        %v3666 = vsel %vm345, %v3569, 0
        %v3669 = vsel %vm345, %v3570, 0
        %v3672 = vsel %vm345, %v3571, 0
        %v3675 = vsel %vm345, %v3572, 0
        %v3678 = vsel %vm345, %v3573, 0
        %v3681 = vsel %vm345, %v3574, 0
        %v3684 = vsel %vm345, %v3575, 0
        %v3687 = vsel %vm345, %v3576, 0
        %v3690 = vsel %vm345, %v3577, 0
        %v3693 = vsel %vm345, %v3578, 0
        %v3696 = vsel %vm345, %v3579, 0
        %v3699 = vsel %vm345, %v3580, 0
        %v3702 = vsel %vm345, %v3581, 0
        %v3705 = vsel %vm345, %v3582, 0
        %v3708 = vsel %vm345, %v3583, 0
        %v3711 = vsel %vm345, %v3584, 0
        %v3714 = vsel %vm345, %v3585, 0
        %v3717 = vsel %vm345, %v3586, 0
        %v3720 = vsel %vm345, %v3587, 0
        %v3723 = vsel %vm345, %v3588, 0
        %v3726 = vsel %vm345, %v3589, 0
        %v3729 = vsel %vm345, %v3590, 0
        %v3732 = vsel %vm345, %v3591, 0
        %v3735 = vsel %vm345, %v3592, 0
        %v3738 = vsel %vm345, %v3593, 0
        %v3741 = vsel %vm605, %v3595, 0
        %3743 = vmatprep.subr.mxu0 0.0
        %3744 = vmatpush1.msra.mxu0 %v3741
        %3745 = vmatprep.subr.mxu0 0.0
        %3746 = vmatpush1.msra.mxu0 0.0
        %3747 = vmatprep.subr.mxu0 0.0
        %3748 = vmatpush1.msra.mxu0 0.0
        %3749 = vmatprep.subr.mxu0 0.0
        %3750 = vmatpush1.msra.mxu0 0.0
        %3751 = vmatprep.subr.mxu0 0.0
        %3752 = vmatpush1.msra.mxu0 0.0
        %3753 = vmatprep.subr.mxu0 0.0
        %3754 = vmatpush1.msra.mxu0 0.0
        %3755 = vmatprep.subr.mxu0 0.0
        %3756 = vmatpush1.msra.mxu0 0.0
        %3757 = vmatprep.subr.mxu0 0.0
        %3758 = vmatpush1.msra.mxu0 0.0
        %3759 = vmatprep.subr.mxu0 0.0
        %3760 = vmatpush1.msra.mxu0 0.0
        %3761 = vmatprep.subr.mxu0 0.0
        %3762 = vmatpush1.msra.mxu0 0.0
        %3763 = vmatprep.subr.mxu0 0.0
        %3764 = vmatpush1.msra.mxu0 0.0
        %3765 = vmatprep.subr.mxu0 0.0
        %3766 = vmatpush1.msra.mxu0 0.0
        %3767 = vmatprep.subr.mxu0 0.0
        %3768 = vmatpush1.msra.mxu0 0.0
        %3769 = vmatprep.subr.mxu0 0.0
        %3770 = vmatpush1.msra.mxu0 0.0
        %3771 = vmatprep.subr.mxu0 0.0
        %3772 = vmatpush1.msra.mxu0 0.0
        %3773 = vmatprep.subr.mxu0 0.0
        %3774 = vmatpush1.msra.mxu0 0.0
        %3775 = vmatprep.subr.mxu0 0.0
        %3776 = vmatpush1.msra.mxu0 0.0
        %3777 = vmatprep.subr.mxu0 0.0
        %3778 = vmatpush1.msra.mxu0 0.0
        %3779 = vmatprep.subr.mxu0 0.0
        %3780 = vmatpush1.msra.mxu0 0.0
        %3781 = vmatprep.subr.mxu0 0.0
        %3782 = vmatpush1.msra.mxu0 0.0
        %3783 = vmatprep.subr.mxu0 0.0
        %3784 = vmatpush1.msra.mxu0 0.0
        %3785 = vmatprep.subr.mxu0 0.0
        %3786 = vmatpush1.msra.mxu0 0.0
        %3787 = vmatprep.subr.mxu0 0.0
        %3788 = vmatpush1.msra.mxu0 0.0
        %3789 = vmatprep.subr.mxu0 0.0
        %3790 = vmatpush1.msra.mxu0 0.0
        %3791 = vmatprep.subr.mxu0 0.0
        %3792 = vmatpush1.msra.mxu0 0.0
        %3793 = vmatprep.subr.mxu0 0.0
        %3794 = vmatpush1.msra.mxu0 0.0
        %3795 = vmatprep.subr.mxu0 0.0
        %3796 = vmatpush1.msra.mxu0 0.0
        %3797 = vmatprep.subr.mxu0 0.0
        %3798 = vmatpush1.msra.mxu0 0.0
        %3799 = vmatprep.subr.mxu0 0.0
        %3800 = vmatpush1.msra.mxu0 0.0
        %3801 = vmatprep.subr.mxu0 0.0
        %3802 = vmatpush1.msra.mxu0 0.0
        %3803 = vmatprep.subr.mxu0 0.0
        %3804 = vmatpush1.msra.mxu0 0.0
        %3805 = vmatprep.subr.mxu0 0.0
        %3806 = vmatpush1.msra.mxu0 0.0
        %3807 = vmatprep.mubr.f32.mxu0 0.0
        %3808 = vmatmul.mubr.f32.gmra.mrb[0].mxu0 %v3597
        %v3809 = vpop.f32.mrb[0].mxu0
        %v3810 = vadd.f32 0.0, %v3809
        %v3811 = vpop.f32.mrb[0].mxu0
        %3812 = vmatprep.mubr.f32.mxu0 0.0
        %3813 = vmatmul.mubr.f32.gmra.mrb[0].mxu0 %v3600
        %v3814 = vpop.f32.mrb[0].mxu0
        %v3815 = vadd.f32 0.0, %v3814
        %v3816 = vpop.f32.mrb[0].mxu0
        %3817 = vmatprep.mubr.f32.mxu0 0.0
        %3818 = vmatmul.mubr.f32.gmra.mrb[0].mxu0 %v3603
        %v3819 = vpop.f32.mrb[0].mxu0
        %v3820 = vadd.f32 0.0, %v3819
        %v3821 = vpop.f32.mrb[0].mxu0
        %3822 = vmatprep.mubr.f32.mxu0 0.0
        %3823 = vmatmul.mubr.f32.gmra.mrb[0].mxu0 %v3606
        %v3824 = vpop.f32.mrb[0].mxu0
        %v3825 = vadd.f32 0.0, %v3824
        %v3826 = vpop.f32.mrb[0].mxu0
        %3827 = vmatprep.mubr.f32.mxu0 0.0
        %3828 = vmatmul.mubr.f32.gmra.mrb[0].mxu0 %v3609
        %v3829 = vpop.f32.mrb[0].mxu0
        %v3830 = vadd.f32 0.0, %v3829
        %v3831 = vpop.f32.mrb[0].mxu0
        %3832 = vmatprep.mubr.f32.mxu0 0.0
        %3833 = vmatmul.mubr.f32.gmra.mrb[0].mxu0 %v3612
        %v3834 = vpop.f32.mrb[0].mxu0
        %v3835 = vadd.f32 0.0, %v3834
        %v3836 = vpop.f32.mrb[0].mxu0
        %3837 = vmatprep.mubr.f32.mxu0 0.0
        %3838 = vmatmul.mubr.f32.gmra.mrb[0].mxu0 %v3615
        %v3839 = vpop.f32.mrb[0].mxu0
        %v3840 = vadd.f32 0.0, %v3839
        %v3841 = vpop.f32.mrb[0].mxu0
        %3842 = vmatprep.mubr.f32.mxu0 0.0
        %3843 = vmatmul.mubr.f32.gmra.mrb[0].mxu0 %v3618
        %v3844 = vpop.f32.mrb[0].mxu0
        %v3845 = vadd.f32 0.0, %v3844
        %v3846 = vpop.f32.mrb[0].mxu0
        %3847 = vmatprep.mubr.f32.mxu0 0.0
        %3848 = vmatmul.mubr.f32.gmra.mrb[0].mxu0 %v3621
        %v3849 = vpop.f32.mrb[0].mxu0
        %v3850 = vadd.f32 0.0, %v3849
        %v3851 = vpop.f32.mrb[0].mxu0
        %3852 = vmatprep.mubr.f32.mxu0 0.0
        %3853 = vmatmul.mubr.f32.gmra.mrb[0].mxu0 %v3624
        %v3854 = vpop.f32.mrb[0].mxu0
        %v3855 = vadd.f32 0.0, %v3854
        %v3856 = vpop.f32.mrb[0].mxu0
        %3857 = vmatprep.mubr.f32.mxu0 0.0
        %3858 = vmatmul.mubr.f32.gmra.mrb[0].mxu0 %v3627
        %v3859 = vpop.f32.mrb[0].mxu0
        %v3860 = vadd.f32 0.0, %v3859
        %v3861 = vpop.f32.mrb[0].mxu0
        %3862 = vmatprep.mubr.f32.mxu0 0.0
        %3863 = vmatmul.mubr.f32.gmra.mrb[0].mxu0 %v3630
        %v3864 = vpop.f32.mrb[0].mxu0
        %v3865 = vadd.f32 0.0, %v3864
        %v3866 = vpop.f32.mrb[0].mxu0
        %3867 = vmatprep.mubr.f32.mxu0 0.0
        %3868 = vmatmul.mubr.f32.gmra.mrb[0].mxu0 %v3633
        %v3869 = vpop.f32.mrb[0].mxu0
        %v3870 = vadd.f32 0.0, %v3869
        %v3871 = vpop.f32.mrb[0].mxu0
        %3872 = vmatprep.mubr.f32.mxu0 0.0
        %3873 = vmatmul.mubr.f32.gmra.mrb[0].mxu0 %v3636
        %v3874 = vpop.f32.mrb[0].mxu0
        %v3875 = vadd.f32 0.0, %v3874
        %v3876 = vpop.f32.mrb[0].mxu0
        %3877 = vmatprep.mubr.f32.mxu0 0.0
        %3878 = vmatmul.mubr.f32.gmra.mrb[0].mxu0 %v3639
        %v3879 = vpop.f32.mrb[0].mxu0
        %v3880 = vadd.f32 0.0, %v3879
        %v3881 = vpop.f32.mrb[0].mxu0
        %3882 = vmatprep.mubr.f32.mxu0 0.0
        %3883 = vmatmul.mubr.f32.gmra.mrb[0].mxu0 %v3642
        %v3884 = vpop.f32.mrb[0].mxu0
        %v3885 = vadd.f32 0.0, %v3884
        %v3886 = vpop.f32.mrb[0].mxu0
        %3887 = vmatprep.mubr.f32.mxu0 0.0
        %3888 = vmatmul.mubr.f32.gmra.mrb[0].mxu0 %v3645
        %v3889 = vpop.f32.mrb[0].mxu0
        %v3890 = vadd.f32 0.0, %v3889
        %v3891 = vpop.f32.mrb[0].mxu0
        %3892 = vmatprep.mubr.f32.mxu0 0.0
        %3893 = vmatmul.mubr.f32.gmra.mrb[0].mxu0 %v3648
        %v3894 = vpop.f32.mrb[0].mxu0
        %v3895 = vadd.f32 0.0, %v3894
        %v3896 = vpop.f32.mrb[0].mxu0
        %3897 = vmatprep.mubr.f32.mxu0 0.0
        %3898 = vmatmul.mubr.f32.gmra.mrb[0].mxu0 %v3651
        %v3899 = vpop.f32.mrb[0].mxu0
        %v3900 = vadd.f32 0.0, %v3899
        %v3901 = vpop.f32.mrb[0].mxu0
        %3902 = vmatprep.mubr.f32.mxu0 0.0
        %3903 = vmatmul.mubr.f32.gmra.mrb[0].mxu0 %v3654
        %v3904 = vpop.f32.mrb[0].mxu0
        %v3905 = vadd.f32 0.0, %v3904
        %v3906 = vpop.f32.mrb[0].mxu0
        %3907 = vmatprep.mubr.f32.mxu0 0.0
        %3908 = vmatmul.mubr.f32.gmra.mrb[0].mxu0 %v3657
        %v3909 = vpop.f32.mrb[0].mxu0
        %v3910 = vadd.f32 0.0, %v3909
        %v3911 = vpop.f32.mrb[0].mxu0
        %3912 = vmatprep.mubr.f32.mxu0 0.0
        %3913 = vmatmul.mubr.f32.gmra.mrb[0].mxu0 %v3660
        %v3914 = vpop.f32.mrb[0].mxu0
        %v3915 = vadd.f32 0.0, %v3914
        %v3916 = vpop.f32.mrb[0].mxu0
        %3917 = vmatprep.mubr.f32.mxu0 0.0
        %3918 = vmatmul.mubr.f32.gmra.mrb[0].mxu0 %v3663
        %v3919 = vpop.f32.mrb[0].mxu0
        %v3920 = vadd.f32 0.0, %v3919
        %v3921 = vpop.f32.mrb[0].mxu0
        %3922 = vmatprep.mubr.f32.mxu0 0.0
        %3923 = vmatmul.mubr.f32.gmra.mrb[0].mxu0 %v3666
        %v3924 = vpop.f32.mrb[0].mxu0
        %v3925 = vadd.f32 0.0, %v3924
        %v3926 = vpop.f32.mrb[0].mxu0
        %3927 = vmatprep.mubr.f32.mxu0 0.0
        %3928 = vmatmul.mubr.f32.gmra.mrb[0].mxu0 %v3669
        %v3929 = vpop.f32.mrb[0].mxu0
        %v3930 = vadd.f32 0.0, %v3929
        %v3931 = vpop.f32.mrb[0].mxu0
        %3932 = vmatprep.mubr.f32.mxu0 0.0
        %3933 = vmatmul.mubr.f32.gmra.mrb[0].mxu0 %v3672
        %v3934 = vpop.f32.mrb[0].mxu0
        %v3935 = vadd.f32 0.0, %v3934
        %v3936 = vpop.f32.mrb[0].mxu0
        %3937 = vmatprep.mubr.f32.mxu0 0.0
        %3938 = vmatmul.mubr.f32.gmra.mrb[0].mxu0 %v3675
        %v3939 = vpop.f32.mrb[0].mxu0
        %v3940 = vadd.f32 0.0, %v3939
        %v3941 = vpop.f32.mrb[0].mxu0
        %3942 = vmatprep.mubr.f32.mxu0 0.0
        %3943 = vmatmul.mubr.f32.gmra.mrb[0].mxu0 %v3678
        %v3944 = vpop.f32.mrb[0].mxu0
        %v3945 = vadd.f32 0.0, %v3944
        %v3946 = vpop.f32.mrb[0].mxu0
        %3947 = vmatprep.mubr.f32.mxu0 0.0
        %3948 = vmatmul.mubr.f32.gmra.mrb[0].mxu0 %v3681
        %v3949 = vpop.f32.mrb[0].mxu0
        %v3950 = vadd.f32 0.0, %v3949
        %v3951 = vpop.f32.mrb[0].mxu0
        %3952 = vmatprep.mubr.f32.mxu0 0.0
        %3953 = vmatmul.mubr.f32.gmra.mrb[0].mxu0 %v3684
        %v3954 = vpop.f32.mrb[0].mxu0
        %v3955 = vadd.f32 0.0, %v3954
        %v3956 = vpop.f32.mrb[0].mxu0
        %3957 = vmatprep.mubr.f32.mxu0 0.0
        %3958 = vmatmul.mubr.f32.gmra.mrb[0].mxu0 %v3687
        %v3959 = vpop.f32.mrb[0].mxu0
        %v3960 = vadd.f32 0.0, %v3959
        %v3961 = vpop.f32.mrb[0].mxu0
        %3962 = vmatprep.mubr.f32.mxu0 0.0
        %3963 = vmatmul.mubr.f32.gmra.mrb[0].mxu0 %v3690
        %v3964 = vpop.f32.mrb[0].mxu0
        %v3965 = vadd.f32 0.0, %v3964
        %v3966 = vpop.f32.mrb[0].mxu0
        %3967 = vmatprep.mubr.f32.mxu0 0.0
        %3968 = vmatmul.mubr.f32.gmra.mrb[0].mxu0 %v3693
        %v3969 = vpop.f32.mrb[0].mxu0
        %v3970 = vadd.f32 0.0, %v3969
        %v3971 = vpop.f32.mrb[0].mxu0
        %3972 = vmatprep.mubr.f32.mxu0 0.0
        %3973 = vmatmul.mubr.f32.gmra.mrb[0].mxu0 %v3696
        %v3974 = vpop.f32.mrb[0].mxu0
        %v3975 = vadd.f32 0.0, %v3974
        %v3976 = vpop.f32.mrb[0].mxu0
        %3977 = vmatprep.mubr.f32.mxu0 0.0
        %3978 = vmatmul.mubr.f32.gmra.mrb[0].mxu0 %v3699
        %v3979 = vpop.f32.mrb[0].mxu0
        %v3980 = vadd.f32 0.0, %v3979
        %v3981 = vpop.f32.mrb[0].mxu0
        %3982 = vmatprep.mubr.f32.mxu0 0.0
        %3983 = vmatmul.mubr.f32.gmra.mrb[0].mxu0 %v3702
        %v3984 = vpop.f32.mrb[0].mxu0
        %v3985 = vadd.f32 0.0, %v3984
        %v3986 = vpop.f32.mrb[0].mxu0
        %3987 = vmatprep.mubr.f32.mxu0 0.0
        %3988 = vmatmul.mubr.f32.gmra.mrb[0].mxu0 %v3705
        %v3989 = vpop.f32.mrb[0].mxu0
        %v3990 = vadd.f32 0.0, %v3989
        %v3991 = vpop.f32.mrb[0].mxu0
        %3992 = vmatprep.mubr.f32.mxu0 0.0
        %3993 = vmatmul.mubr.f32.gmra.mrb[0].mxu0 %v3708
        %v3994 = vpop.f32.mrb[0].mxu0
        %v3995 = vadd.f32 0.0, %v3994
        %v3996 = vpop.f32.mrb[0].mxu0
        %3997 = vmatprep.mubr.f32.mxu0 0.0
        %3998 = vmatmul.mubr.f32.gmra.mrb[0].mxu0 %v3711
        %v3999 = vpop.f32.mrb[0].mxu0
        %v4000 = vadd.f32 0.0, %v3999
        %v4001 = vpop.f32.mrb[0].mxu0
        %4002 = vmatprep.mubr.f32.mxu0 0.0
        %4003 = vmatmul.mubr.f32.gmra.mrb[0].mxu0 %v3714
        %v4004 = vpop.f32.mrb[0].mxu0
        %v4005 = vadd.f32 0.0, %v4004
        %v4006 = vpop.f32.mrb[0].mxu0
        %4007 = vmatprep.mubr.f32.mxu0 0.0
        %4008 = vmatmul.mubr.f32.gmra.mrb[0].mxu0 %v3717
        %v4009 = vpop.f32.mrb[0].mxu0
        %v4010 = vadd.f32 0.0, %v4009
        %v4011 = vpop.f32.mrb[0].mxu0
        %4012 = vmatprep.mubr.f32.mxu0 0.0
        %4013 = vmatmul.mubr.f32.gmra.mrb[0].mxu0 %v3720
        %v4014 = vpop.f32.mrb[0].mxu0
        %v4015 = vadd.f32 0.0, %v4014
        %v4016 = vpop.f32.mrb[0].mxu0
        %4017 = vmatprep.mubr.f32.mxu0 0.0
        %4018 = vmatmul.mubr.f32.gmra.mrb[0].mxu0 %v3723
        %v4019 = vpop.f32.mrb[0].mxu0
        %v4020 = vadd.f32 0.0, %v4019
        %v4021 = vpop.f32.mrb[0].mxu0
        %4022 = vmatprep.mubr.f32.mxu0 0.0
        %4023 = vmatmul.mubr.f32.gmra.mrb[0].mxu0 %v3726
        %v4024 = vpop.f32.mrb[0].mxu0
        %v4025 = vadd.f32 0.0, %v4024
        %v4026 = vpop.f32.mrb[0].mxu0
        %4027 = vmatprep.mubr.f32.mxu0 0.0
        %4028 = vmatmul.mubr.f32.gmra.mrb[0].mxu0 %v3729
        %v4029 = vpop.f32.mrb[0].mxu0
        %v4030 = vadd.f32 0.0, %v4029
        %v4031 = vpop.f32.mrb[0].mxu0
        %4032 = vmatprep.mubr.f32.mxu0 0.0
        %4033 = vmatmul.mubr.f32.gmra.mrb[0].mxu0 %v3732
        %v4034 = vpop.f32.mrb[0].mxu0
        %v4035 = vadd.f32 0.0, %v4034
        %v4036 = vpop.f32.mrb[0].mxu0
        %4037 = vmatprep.mubr.f32.mxu0 0.0
        %4038 = vmatmul.mubr.f32.gmra.mrb[0].mxu0 %v3735
        %v4039 = vpop.f32.mrb[0].mxu0
        %v4040 = vadd.f32 0.0, %v4039
        %v4041 = vpop.f32.mrb[0].mxu0
        %4042 = vmatprep.mubr.f32.mxu0 0.0
        %4043 = vmatmul.mubr.f32.gmra.mrb[0].mxu0 %v3738
        %v4044 = vpop.f32.mrb[0].mxu0
        %v4045 = vadd.f32 0.0, %v4044
        %v4046 = vpop.f32.mrb[0].mxu0
        %4047 = vdwg.mxu0
        %v4048 = vld [vmem:[#allocation3] sm:$0xff]
        %v4049 = vld [vmem:[#allocation3 + $0x8] sm:$0xff]
        %v4050 = vld [vmem:[#allocation3 + $0x10] sm:$0xff]
        %v4051 = vld [vmem:[#allocation3 + $0x18] sm:$0xff]
        %v4052 = vld [vmem:[#allocation3 + $0x20] sm:$0xff]
        %v4053 = vld [vmem:[#allocation3 + $0x28] sm:$0xff]
        %v4054 = vld [vmem:[#allocation3 + $0x30] sm:$0xff]
        %v4055 = vld [vmem:[#allocation3 + $0x38] sm:$0xff]
        %v4056 = vld [vmem:[#allocation3 + $0x40] sm:$0xff]
        %v4057 = vld [vmem:[#allocation3 + $0x48] sm:$0xff]
        %v4058 = vld [vmem:[#allocation3 + $0x50] sm:$0xff]
        %v4059 = vld [vmem:[#allocation3 + $0x58] sm:$0xff]
        %v4060 = vld [vmem:[#allocation3 + $0x60] sm:$0xff]
        %v4061 = vld [vmem:[#allocation3 + $0x68] sm:$0xff]
        %v4062 = vld [vmem:[#allocation3 + $0x70] sm:$0xff]
        %v4063 = vld [vmem:[#allocation3 + $0x78] sm:$0xff]
        %v4064 = vld [vmem:[#allocation3 + $0x80] sm:$0xff]
        %v4065 = vld [vmem:[#allocation3 + $0x88] sm:$0xff]
        %v4066 = vld [vmem:[#allocation3 + $0x90] sm:$0xff]
        %v4067 = vld [vmem:[#allocation3 + $0x98] sm:$0xff]
        %v4068 = vld [vmem:[#allocation3 + $0xa0] sm:$0xff]
        %v4069 = vld [vmem:[#allocation3 + $0xa8] sm:$0xff]
        %v4070 = vld [vmem:[#allocation3 + $0xb0] sm:$0xff]
        %v4071 = vld [vmem:[#allocation3 + $0xb8] sm:$0xff]
        %v4072 = vld [vmem:[#allocation3 + $0xc0] sm:$0xff]
        %v4073 = vld [vmem:[#allocation3 + $0xc8] sm:$0xff]
        %v4074 = vld [vmem:[#allocation3 + $0xd0] sm:$0xff]
        %v4075 = vld [vmem:[#allocation3 + $0xd8] sm:$0xff]
        %v4076 = vld [vmem:[#allocation3 + $0xe0] sm:$0xff]
        %v4077 = vld [vmem:[#allocation3 + $0xe8] sm:$0xff]
        %v4078 = vld [vmem:[#allocation3 + $0xf0] sm:$0xff]
        %v4079 = vld [vmem:[#allocation3 + $0xf8] sm:$0xff]
        %v4080 = vld [vmem:[#allocation3 + $0x100] sm:$0xff]
        %v4081 = vld [vmem:[#allocation3 + $0x108] sm:$0xff]
        %v4082 = vld [vmem:[#allocation3 + $0x110] sm:$0xff]
        %v4083 = vld [vmem:[#allocation3 + $0x118] sm:$0xff]
        %v4084 = vld [vmem:[#allocation3 + $0x120] sm:$0xff]
        %v4085 = vld [vmem:[#allocation3 + $0x128] sm:$0xff]
        %v4086 = vld [vmem:[#allocation3 + $0x130] sm:$0xff]
        %v4087 = vld [vmem:[#allocation3 + $0x138] sm:$0xff]
        %v4088 = vld [vmem:[#allocation3 + $0x140] sm:$0xff]
        %v4089 = vld [vmem:[#allocation3 + $0x148] sm:$0xff]
        %v4090 = vld [vmem:[#allocation3 + $0x150] sm:$0xff]
        %v4091 = vld [vmem:[#allocation3 + $0x158] sm:$0xff]
        %v4092 = vld [vmem:[#allocation3 + $0x160] sm:$0xff]
        %v4093 = vld [vmem:[#allocation3 + $0x168] sm:$0xff]
        %v4094 = vld [vmem:[#allocation3 + $0x170] sm:$0xff]
        %v4095 = vld [vmem:[#allocation3 + $0x178] sm:$0xff]
        %v4096 = vadd.f32 %v4048, %v3810
        %v4097 = vadd.f32 %v4049, %v3815
        %v4098 = vadd.f32 %v4050, %v3820
        %v4099 = vadd.f32 %v4051, %v3825
        %v4100 = vadd.f32 %v4052, %v3830
        %v4101 = vadd.f32 %v4053, %v3835
        %v4102 = vadd.f32 %v4054, %v3840
        %v4103 = vadd.f32 %v4055, %v3845
        %v4104 = vadd.f32 %v4056, %v3850
        %v4105 = vadd.f32 %v4057, %v3855
        %v4106 = vadd.f32 %v4058, %v3860
        %v4107 = vadd.f32 %v4059, %v3865
        %v4108 = vadd.f32 %v4060, %v3870
        %v4109 = vadd.f32 %v4061, %v3875
        %v4110 = vadd.f32 %v4062, %v3880
        %v4111 = vadd.f32 %v4063, %v3885
        %v4112 = vadd.f32 %v4064, %v3890
        %v4113 = vadd.f32 %v4065, %v3895
        %v4114 = vadd.f32 %v4066, %v3900
        %v4115 = vadd.f32 %v4067, %v3905
        %v4116 = vadd.f32 %v4068, %v3910
        %v4117 = vadd.f32 %v4069, %v3915
        %v4118 = vadd.f32 %v4070, %v3920
        %v4119 = vadd.f32 %v4071, %v3925
        %v4120 = vadd.f32 %v4072, %v3930
        %v4121 = vadd.f32 %v4073, %v3935
        %v4122 = vadd.f32 %v4074, %v3940
        %v4123 = vadd.f32 %v4075, %v3945
        %v4124 = vadd.f32 %v4076, %v3950
        %v4125 = vadd.f32 %v4077, %v3955
        %v4126 = vadd.f32 %v4078, %v3960
        %v4127 = vadd.f32 %v4079, %v3965
        %v4128 = vadd.f32 %v4080, %v3970
        %v4129 = vadd.f32 %v4081, %v3975
        %v4130 = vadd.f32 %v4082, %v3980
        %v4131 = vadd.f32 %v4083, %v3985
        %v4132 = vadd.f32 %v4084, %v3990
        %v4133 = vadd.f32 %v4085, %v3995
        %v4134 = vadd.f32 %v4086, %v4000
        %v4135 = vadd.f32 %v4087, %v4005
        %v4136 = vadd.f32 %v4088, %v4010
        %v4137 = vadd.f32 %v4089, %v4015
        %v4138 = vadd.f32 %v4090, %v4020
        %v4139 = vadd.f32 %v4091, %v4025
        %v4140 = vadd.f32 %v4092, %v4030
        %v4141 = vadd.f32 %v4093, %v4035
        %v4142 = vadd.f32 %v4094, %v4040
        %v4143 = vadd.f32 %v4095, %v4045
        %4144 = vst [vmem:[#allocation3] sm:$0xff] %v4096
        %4145 = vst [vmem:[#allocation3 + $0x8] sm:$0xff] %v4097
        %4146 = vst [vmem:[#allocation3 + $0x10] sm:$0xff] %v4098
        %4147 = vst [vmem:[#allocation3 + $0x18] sm:$0xff] %v4099
        %4148 = vst [vmem:[#allocation3 + $0x20] sm:$0xff] %v4100
        %4149 = vst [vmem:[#allocation3 + $0x28] sm:$0xff] %v4101
        %4150 = vst [vmem:[#allocation3 + $0x30] sm:$0xff] %v4102
        %4151 = vst [vmem:[#allocation3 + $0x38] sm:$0xff] %v4103
        %4152 = vst [vmem:[#allocation3 + $0x40] sm:$0xff] %v4104
        %4153 = vst [vmem:[#allocation3 + $0x48] sm:$0xff] %v4105
        %4154 = vst [vmem:[#allocation3 + $0x50] sm:$0xff] %v4106
        %4155 = vst [vmem:[#allocation3 + $0x58] sm:$0xff] %v4107
        %4156 = vst [vmem:[#allocation3 + $0x60] sm:$0xff] %v4108
        %4157 = vst [vmem:[#allocation3 + $0x68] sm:$0xff] %v4109
        %4158 = vst [vmem:[#allocation3 + $0x70] sm:$0xff] %v4110
        %4159 = vst [vmem:[#allocation3 + $0x78] sm:$0xff] %v4111
        %4160 = vst [vmem:[#allocation3 + $0x80] sm:$0xff] %v4112
        %4161 = vst [vmem:[#allocation3 + $0x88] sm:$0xff] %v4113
        %4162 = vst [vmem:[#allocation3 + $0x90] sm:$0xff] %v4114
        %4163 = vst [vmem:[#allocation3 + $0x98] sm:$0xff] %v4115
        %4164 = vst [vmem:[#allocation3 + $0xa0] sm:$0xff] %v4116
        %4165 = vst [vmem:[#allocation3 + $0xa8] sm:$0xff] %v4117
        %4166 = vst [vmem:[#allocation3 + $0xb0] sm:$0xff] %v4118
        %4167 = vst [vmem:[#allocation3 + $0xb8] sm:$0xff] %v4119
        %4168 = vst [vmem:[#allocation3 + $0xc0] sm:$0xff] %v4120
        %4169 = vst [vmem:[#allocation3 + $0xc8] sm:$0xff] %v4121
        %4170 = vst [vmem:[#allocation3 + $0xd0] sm:$0xff] %v4122
        %4171 = vst [vmem:[#allocation3 + $0xd8] sm:$0xff] %v4123
        %4172 = vst [vmem:[#allocation3 + $0xe0] sm:$0xff] %v4124
        %4173 = vst [vmem:[#allocation3 + $0xe8] sm:$0xff] %v4125
        %4174 = vst [vmem:[#allocation3 + $0xf0] sm:$0xff] %v4126
        %4175 = vst [vmem:[#allocation3 + $0xf8] sm:$0xff] %v4127
        %4176 = vst [vmem:[#allocation3 + $0x100] sm:$0xff] %v4128
        %4177 = vst [vmem:[#allocation3 + $0x108] sm:$0xff] %v4129
        %4178 = vst [vmem:[#allocation3 + $0x110] sm:$0xff] %v4130
        %4179 = vst [vmem:[#allocation3 + $0x118] sm:$0xff] %v4131
        %4180 = vst [vmem:[#allocation3 + $0x120] sm:$0xff] %v4132
        %4181 = vst [vmem:[#allocation3 + $0x128] sm:$0xff] %v4133
        %4182 = vst [vmem:[#allocation3 + $0x130] sm:$0xff] %v4134
        %4183 = vst [vmem:[#allocation3 + $0x138] sm:$0xff] %v4135
        %4184 = vst [vmem:[#allocation3 + $0x140] sm:$0xff] %v4136
        %4185 = vst [vmem:[#allocation3 + $0x148] sm:$0xff] %v4137
        %4186 = vst [vmem:[#allocation3 + $0x150] sm:$0xff] %v4138
        %4187 = vst [vmem:[#allocation3 + $0x158] sm:$0xff] %v4139
        %4188 = vst [vmem:[#allocation3 + $0x160] sm:$0xff] %v4140
        %4189 = vst [vmem:[#allocation3 + $0x168] sm:$0xff] %v4141
        %4190 = vst [vmem:[#allocation3 + $0x170] sm:$0xff] %v4142
        %4191 = vst [vmem:[#allocation3 + $0x178] sm:$0xff] %v4143
        %v4192 = vld [vmem:[#allocation2 + $0x30] sm:$0xff]
        %v4193 = vld [vmem:[#allocation2 + $0x38] sm:$0xff]
        %v4194 = vld [vmem:[#allocation2 + $0x40] sm:$0xff]
        %v4195 = vld [vmem:[#allocation2 + $0x48] sm:$0xff]
        %v4196 = vld [vmem:[#allocation2 + $0x50] sm:$0xff]
        %v4197 = vld [vmem:[#allocation2 + $0x58] sm:$0xff]
        %v4198 = vld [vmem:[#allocation2 + $0x60] sm:$0xff]
        %v4199 = vld [vmem:[#allocation2 + $0x68] sm:$0xff]
        %v4200 = vld [vmem:[#allocation2 + $0x70] sm:$0xff]
        %v4201 = vld [vmem:[#allocation2 + $0x78] sm:$0xff]
        %v4202 = vld [vmem:[#allocation2 + $0x80] sm:$0xff]
        %v4203 = vld [vmem:[#allocation2 + $0x88] sm:$0xff]
        %v4204 = vld [vmem:[#allocation2 + $0x90] sm:$0xff]
        %v4205 = vld [vmem:[#allocation2 + $0x98] sm:$0xff]
        %v4206 = vld [vmem:[#allocation2 + $0xa0] sm:$0xff]
        %v4207 = vld [vmem:[#allocation2 + $0xa8] sm:$0xff]
        %v4208 = vld [vmem:[#allocation2 + $0xb0] sm:$0xff]
        %v4209 = vld [vmem:[#allocation2 + $0xb8] sm:$0xff]
        %v4210 = vld [vmem:[#allocation2 + $0xc0] sm:$0xff]
        %v4211 = vld [vmem:[#allocation2 + $0xc8] sm:$0xff]
        %v4212 = vld [vmem:[#allocation2 + $0xd0] sm:$0xff]
        %v4213 = vld [vmem:[#allocation2 + $0xd8] sm:$0xff]
        %v4214 = vld [vmem:[#allocation2 + $0xe0] sm:$0xff]
        %v4215 = vld [vmem:[#allocation2 + $0xe8] sm:$0xff]
        %v4216 = vld [vmem:[#allocation2 + $0xf0] sm:$0xff]
        %v4217 = vld [vmem:[#allocation2 + $0xf8] sm:$0xff]
        %v4218 = vld [vmem:[#allocation2 + $0x100] sm:$0xff]
        %v4219 = vld [vmem:[#allocation2 + $0x108] sm:$0xff]
        %v4220 = vld [vmem:[#allocation2 + $0x110] sm:$0xff]
        %v4221 = vld [vmem:[#allocation2 + $0x118] sm:$0xff]
        %v4222 = vld [vmem:[#allocation2 + $0x120] sm:$0xff]
        %v4223 = vld [vmem:[#allocation2 + $0x128] sm:$0xff]
        %v4224 = vld [vmem:[#allocation2 + $0x130] sm:$0xff]
        %v4225 = vld [vmem:[#allocation2 + $0x138] sm:$0xff]
        %v4226 = vld [vmem:[#allocation2 + $0x140] sm:$0xff]
        %v4227 = vld [vmem:[#allocation2 + $0x148] sm:$0xff]
        %v4228 = vld [vmem:[#allocation2 + $0x150] sm:$0xff]
        %v4229 = vld [vmem:[#allocation2 + $0x158] sm:$0xff]
        %v4230 = vld [vmem:[#allocation2 + $0x160] sm:$0xff]
        %v4231 = vld [vmem:[#allocation2 + $0x168] sm:$0xff]
        %v4232 = vld [vmem:[#allocation2 + $0x170] sm:$0xff]
        %v4233 = vld [vmem:[#allocation2 + $0x178] sm:$0xff]
        %v4234 = vld [vmem:[#allocation2 + $0x180] sm:$0xff]
        %v4235 = vld [vmem:[#allocation2 + $0x188] sm:$0xff]
        %v4236 = vld [vmem:[#allocation2 + $0x190] sm:$0xff]
        %v4237 = vld [vmem:[#allocation2 + $0x198] sm:$0xff]
        %v4238 = vld [vmem:[#allocation2 + $0x1a0] sm:$0xff]
        %v4239 = vld [vmem:[#allocation2 + $0x1a8] sm:$0xff]
        %s4240 = scalar_lea.vmem %s2, 24
        %v4241 = vld [vmem:[%s4240] sm:$0xf]
        %v4243 = vsel %vm345, %v4192, 0
        %v4246 = vsel %vm345, %v4193, 0
        %v4249 = vsel %vm345, %v4194, 0
        %v4252 = vsel %vm345, %v4195, 0
        %v4255 = vsel %vm345, %v4196, 0
        %v4258 = vsel %vm345, %v4197, 0
        %v4261 = vsel %vm345, %v4198, 0
        %v4264 = vsel %vm345, %v4199, 0
        %v4267 = vsel %vm345, %v4200, 0
        %v4270 = vsel %vm345, %v4201, 0
        %v4273 = vsel %vm345, %v4202, 0
        %v4276 = vsel %vm345, %v4203, 0
        %v4279 = vsel %vm345, %v4204, 0
        %v4282 = vsel %vm345, %v4205, 0
        %v4285 = vsel %vm345, %v4206, 0
        %v4288 = vsel %vm345, %v4207, 0
        %v4291 = vsel %vm345, %v4208, 0
        %v4294 = vsel %vm345, %v4209, 0
        %v4297 = vsel %vm345, %v4210, 0
        %v4300 = vsel %vm345, %v4211, 0
        %v4303 = vsel %vm345, %v4212, 0
        %v4306 = vsel %vm345, %v4213, 0
        %v4309 = vsel %vm345, %v4214, 0
        %v4312 = vsel %vm345, %v4215, 0
        %v4315 = vsel %vm345, %v4216, 0
        %v4318 = vsel %vm345, %v4217, 0
        %v4321 = vsel %vm345, %v4218, 0
        %v4324 = vsel %vm345, %v4219, 0
        %v4327 = vsel %vm345, %v4220, 0
        %v4330 = vsel %vm345, %v4221, 0
        %v4333 = vsel %vm345, %v4222, 0
        %v4336 = vsel %vm345, %v4223, 0
        %v4339 = vsel %vm345, %v4224, 0
        %v4342 = vsel %vm345, %v4225, 0
        %v4345 = vsel %vm345, %v4226, 0
        %v4348 = vsel %vm345, %v4227, 0
        %v4351 = vsel %vm345, %v4228, 0
        %v4354 = vsel %vm345, %v4229, 0
        %v4357 = vsel %vm345, %v4230, 0
        %v4360 = vsel %vm345, %v4231, 0
        %v4363 = vsel %vm345, %v4232, 0
        %v4366 = vsel %vm345, %v4233, 0
        %v4369 = vsel %vm345, %v4234, 0
        %v4372 = vsel %vm345, %v4235, 0
        %v4375 = vsel %vm345, %v4236, 0
        %v4378 = vsel %vm345, %v4237, 0
        %v4381 = vsel %vm345, %v4238, 0
        %v4384 = vsel %vm345, %v4239, 0
        %v4387 = vsel %vm605, %v4241, 0
        %4389 = vmatprep.subr.mxu0 0.0
        %4390 = vmatpush1.msra.mxu0 %v4387
        %4391 = vmatprep.subr.mxu0 0.0
        %4392 = vmatpush1.msra.mxu0 0.0
        %4393 = vmatprep.subr.mxu0 0.0
        %4394 = vmatpush1.msra.mxu0 0.0
        %4395 = vmatprep.subr.mxu0 0.0
        %4396 = vmatpush1.msra.mxu0 0.0
        %4397 = vmatprep.subr.mxu0 0.0
        %4398 = vmatpush1.msra.mxu0 0.0
        %4399 = vmatprep.subr.mxu0 0.0
        %4400 = vmatpush1.msra.mxu0 0.0
        %4401 = vmatprep.subr.mxu0 0.0
        %4402 = vmatpush1.msra.mxu0 0.0
        %4403 = vmatprep.subr.mxu0 0.0
        %4404 = vmatpush1.msra.mxu0 0.0
        %4405 = vmatprep.subr.mxu0 0.0
        %4406 = vmatpush1.msra.mxu0 0.0
        %4407 = vmatprep.subr.mxu0 0.0
        %4408 = vmatpush1.msra.mxu0 0.0
        %4409 = vmatprep.subr.mxu0 0.0
        %4410 = vmatpush1.msra.mxu0 0.0
        %4411 = vmatprep.subr.mxu0 0.0
        %4412 = vmatpush1.msra.mxu0 0.0
        %4413 = vmatprep.subr.mxu0 0.0
        %4414 = vmatpush1.msra.mxu0 0.0
        %4415 = vmatprep.subr.mxu0 0.0
        %4416 = vmatpush1.msra.mxu0 0.0
        %4417 = vmatprep.subr.mxu0 0.0
        %4418 = vmatpush1.msra.mxu0 0.0
        %4419 = vmatprep.subr.mxu0 0.0
        %4420 = vmatpush1.msra.mxu0 0.0
        %4421 = vmatprep.subr.mxu0 0.0
        %4422 = vmatpush1.msra.mxu0 0.0
        %4423 = vmatprep.subr.mxu0 0.0
        %4424 = vmatpush1.msra.mxu0 0.0
        %4425 = vmatprep.subr.mxu0 0.0
        %4426 = vmatpush1.msra.mxu0 0.0
        %4427 = vmatprep.subr.mxu0 0.0
        %4428 = vmatpush1.msra.mxu0 0.0
        %4429 = vmatprep.subr.mxu0 0.0
        %4430 = vmatpush1.msra.mxu0 0.0
        %4431 = vmatprep.subr.mxu0 0.0
        %4432 = vmatpush1.msra.mxu0 0.0
        %4433 = vmatprep.subr.mxu0 0.0
        %4434 = vmatpush1.msra.mxu0 0.0
        %4435 = vmatprep.subr.mxu0 0.0
        %4436 = vmatpush1.msra.mxu0 0.0
        %4437 = vmatprep.subr.mxu0 0.0
        %4438 = vmatpush1.msra.mxu0 0.0
        %4439 = vmatprep.subr.mxu0 0.0
        %4440 = vmatpush1.msra.mxu0 0.0
        %4441 = vmatprep.subr.mxu0 0.0
        %4442 = vmatpush1.msra.mxu0 0.0
        %4443 = vmatprep.subr.mxu0 0.0
        %4444 = vmatpush1.msra.mxu0 0.0
        %4445 = vmatprep.subr.mxu0 0.0
        %4446 = vmatpush1.msra.mxu0 0.0
        %4447 = vmatprep.subr.mxu0 0.0
        %4448 = vmatpush1.msra.mxu0 0.0
        %4449 = vmatprep.subr.mxu0 0.0
        %4450 = vmatpush1.msra.mxu0 0.0
        %4451 = vmatprep.subr.mxu0 0.0
        %4452 = vmatpush1.msra.mxu0 0.0
        %4453 = vmatprep.mubr.f32.mxu0 0.0
        %4454 = vmatmul.mubr.f32.gmra.mrb[0].mxu0 %v4243
        %v4455 = vpop.f32.mrb[0].mxu0
        %v4456 = vadd.f32 0.0, %v4455
        %v4457 = vpop.f32.mrb[0].mxu0
        %4458 = vmatprep.mubr.f32.mxu0 0.0
        %4459 = vmatmul.mubr.f32.gmra.mrb[0].mxu0 %v4246
        %v4460 = vpop.f32.mrb[0].mxu0
        %v4461 = vadd.f32 0.0, %v4460
        %v4462 = vpop.f32.mrb[0].mxu0
        %4463 = vmatprep.mubr.f32.mxu0 0.0
        %4464 = vmatmul.mubr.f32.gmra.mrb[0].mxu0 %v4249
        %v4465 = vpop.f32.mrb[0].mxu0
        %v4466 = vadd.f32 0.0, %v4465
        %v4467 = vpop.f32.mrb[0].mxu0
        %4468 = vmatprep.mubr.f32.mxu0 0.0
        %4469 = vmatmul.mubr.f32.gmra.mrb[0].mxu0 %v4252
        %v4470 = vpop.f32.mrb[0].mxu0
        %v4471 = vadd.f32 0.0, %v4470
        %v4472 = vpop.f32.mrb[0].mxu0
        %4473 = vmatprep.mubr.f32.mxu0 0.0
        %4474 = vmatmul.mubr.f32.gmra.mrb[0].mxu0 %v4255
        %v4475 = vpop.f32.mrb[0].mxu0
        %v4476 = vadd.f32 0.0, %v4475
        %v4477 = vpop.f32.mrb[0].mxu0
        %4478 = vmatprep.mubr.f32.mxu0 0.0
        %4479 = vmatmul.mubr.f32.gmra.mrb[0].mxu0 %v4258
        %v4480 = vpop.f32.mrb[0].mxu0
        %v4481 = vadd.f32 0.0, %v4480
        %v4482 = vpop.f32.mrb[0].mxu0
        %4483 = vmatprep.mubr.f32.mxu0 0.0
        %4484 = vmatmul.mubr.f32.gmra.mrb[0].mxu0 %v4261
        %v4485 = vpop.f32.mrb[0].mxu0
        %v4486 = vadd.f32 0.0, %v4485
        %v4487 = vpop.f32.mrb[0].mxu0
        %4488 = vmatprep.mubr.f32.mxu0 0.0
        %4489 = vmatmul.mubr.f32.gmra.mrb[0].mxu0 %v4264
        %v4490 = vpop.f32.mrb[0].mxu0
        %v4491 = vadd.f32 0.0, %v4490
        %v4492 = vpop.f32.mrb[0].mxu0
        %4493 = vmatprep.mubr.f32.mxu0 0.0
        %4494 = vmatmul.mubr.f32.gmra.mrb[0].mxu0 %v4267
        %v4495 = vpop.f32.mrb[0].mxu0
        %v4496 = vadd.f32 0.0, %v4495
        %v4497 = vpop.f32.mrb[0].mxu0
        %4498 = vmatprep.mubr.f32.mxu0 0.0
        %4499 = vmatmul.mubr.f32.gmra.mrb[0].mxu0 %v4270
        %v4500 = vpop.f32.mrb[0].mxu0
        %v4501 = vadd.f32 0.0, %v4500
        %v4502 = vpop.f32.mrb[0].mxu0
        %4503 = vmatprep.mubr.f32.mxu0 0.0
        %4504 = vmatmul.mubr.f32.gmra.mrb[0].mxu0 %v4273
        %v4505 = vpop.f32.mrb[0].mxu0
        %v4506 = vadd.f32 0.0, %v4505
        %v4507 = vpop.f32.mrb[0].mxu0
        %4508 = vmatprep.mubr.f32.mxu0 0.0
        %4509 = vmatmul.mubr.f32.gmra.mrb[0].mxu0 %v4276
        %v4510 = vpop.f32.mrb[0].mxu0
        %v4511 = vadd.f32 0.0, %v4510
        %v4512 = vpop.f32.mrb[0].mxu0
        %4513 = vmatprep.mubr.f32.mxu0 0.0
        %4514 = vmatmul.mubr.f32.gmra.mrb[0].mxu0 %v4279
        %v4515 = vpop.f32.mrb[0].mxu0
        %v4516 = vadd.f32 0.0, %v4515
        %v4517 = vpop.f32.mrb[0].mxu0
        %4518 = vmatprep.mubr.f32.mxu0 0.0
        %4519 = vmatmul.mubr.f32.gmra.mrb[0].mxu0 %v4282
        %v4520 = vpop.f32.mrb[0].mxu0
        %v4521 = vadd.f32 0.0, %v4520
        %v4522 = vpop.f32.mrb[0].mxu0
        %4523 = vmatprep.mubr.f32.mxu0 0.0
        %4524 = vmatmul.mubr.f32.gmra.mrb[0].mxu0 %v4285
        %v4525 = vpop.f32.mrb[0].mxu0
        %v4526 = vadd.f32 0.0, %v4525
        %v4527 = vpop.f32.mrb[0].mxu0
        %4528 = vmatprep.mubr.f32.mxu0 0.0
        %4529 = vmatmul.mubr.f32.gmra.mrb[0].mxu0 %v4288
        %v4530 = vpop.f32.mrb[0].mxu0
        %v4531 = vadd.f32 0.0, %v4530
        %v4532 = vpop.f32.mrb[0].mxu0
        %4533 = vmatprep.mubr.f32.mxu0 0.0
        %4534 = vmatmul.mubr.f32.gmra.mrb[0].mxu0 %v4291
        %v4535 = vpop.f32.mrb[0].mxu0
        %v4536 = vadd.f32 0.0, %v4535
        %v4537 = vpop.f32.mrb[0].mxu0
        %4538 = vmatprep.mubr.f32.mxu0 0.0
        %4539 = vmatmul.mubr.f32.gmra.mrb[0].mxu0 %v4294
        %v4540 = vpop.f32.mrb[0].mxu0
        %v4541 = vadd.f32 0.0, %v4540
        %v4542 = vpop.f32.mrb[0].mxu0
        %4543 = vmatprep.mubr.f32.mxu0 0.0
        %4544 = vmatmul.mubr.f32.gmra.mrb[0].mxu0 %v4297
        %v4545 = vpop.f32.mrb[0].mxu0
        %v4546 = vadd.f32 0.0, %v4545
        %v4547 = vpop.f32.mrb[0].mxu0
        %4548 = vmatprep.mubr.f32.mxu0 0.0
        %4549 = vmatmul.mubr.f32.gmra.mrb[0].mxu0 %v4300
        %v4550 = vpop.f32.mrb[0].mxu0
        %v4551 = vadd.f32 0.0, %v4550
        %v4552 = vpop.f32.mrb[0].mxu0
        %4553 = vmatprep.mubr.f32.mxu0 0.0
        %4554 = vmatmul.mubr.f32.gmra.mrb[0].mxu0 %v4303
        %v4555 = vpop.f32.mrb[0].mxu0
        %v4556 = vadd.f32 0.0, %v4555
        %v4557 = vpop.f32.mrb[0].mxu0
        %4558 = vmatprep.mubr.f32.mxu0 0.0
        %4559 = vmatmul.mubr.f32.gmra.mrb[0].mxu0 %v4306
        %v4560 = vpop.f32.mrb[0].mxu0
        %v4561 = vadd.f32 0.0, %v4560
        %v4562 = vpop.f32.mrb[0].mxu0
        %4563 = vmatprep.mubr.f32.mxu0 0.0
        %4564 = vmatmul.mubr.f32.gmra.mrb[0].mxu0 %v4309
        %v4565 = vpop.f32.mrb[0].mxu0
        %v4566 = vadd.f32 0.0, %v4565
        %v4567 = vpop.f32.mrb[0].mxu0
        %4568 = vmatprep.mubr.f32.mxu0 0.0
        %4569 = vmatmul.mubr.f32.gmra.mrb[0].mxu0 %v4312
        %v4570 = vpop.f32.mrb[0].mxu0
        %v4571 = vadd.f32 0.0, %v4570
        %v4572 = vpop.f32.mrb[0].mxu0
        %4573 = vmatprep.mubr.f32.mxu0 0.0
        %4574 = vmatmul.mubr.f32.gmra.mrb[0].mxu0 %v4315
        %v4575 = vpop.f32.mrb[0].mxu0
        %v4576 = vadd.f32 0.0, %v4575
        %v4577 = vpop.f32.mrb[0].mxu0
        %4578 = vmatprep.mubr.f32.mxu0 0.0
        %4579 = vmatmul.mubr.f32.gmra.mrb[0].mxu0 %v4318
        %v4580 = vpop.f32.mrb[0].mxu0
        %v4581 = vadd.f32 0.0, %v4580
        %v4582 = vpop.f32.mrb[0].mxu0
        %4583 = vmatprep.mubr.f32.mxu0 0.0
        %4584 = vmatmul.mubr.f32.gmra.mrb[0].mxu0 %v4321
        %v4585 = vpop.f32.mrb[0].mxu0
        %v4586 = vadd.f32 0.0, %v4585
        %v4587 = vpop.f32.mrb[0].mxu0
        %4588 = vmatprep.mubr.f32.mxu0 0.0
        %4589 = vmatmul.mubr.f32.gmra.mrb[0].mxu0 %v4324
        %v4590 = vpop.f32.mrb[0].mxu0
        %v4591 = vadd.f32 0.0, %v4590
        %v4592 = vpop.f32.mrb[0].mxu0
        %4593 = vmatprep.mubr.f32.mxu0 0.0
        %4594 = vmatmul.mubr.f32.gmra.mrb[0].mxu0 %v4327
        %v4595 = vpop.f32.mrb[0].mxu0
        %v4596 = vadd.f32 0.0, %v4595
        %v4597 = vpop.f32.mrb[0].mxu0
        %4598 = vmatprep.mubr.f32.mxu0 0.0
        %4599 = vmatmul.mubr.f32.gmra.mrb[0].mxu0 %v4330
        %v4600 = vpop.f32.mrb[0].mxu0
        %v4601 = vadd.f32 0.0, %v4600
        %v4602 = vpop.f32.mrb[0].mxu0
        %4603 = vmatprep.mubr.f32.mxu0 0.0
        %4604 = vmatmul.mubr.f32.gmra.mrb[0].mxu0 %v4333
        %v4605 = vpop.f32.mrb[0].mxu0
        %v4606 = vadd.f32 0.0, %v4605
        %v4607 = vpop.f32.mrb[0].mxu0
        %4608 = vmatprep.mubr.f32.mxu0 0.0
        %4609 = vmatmul.mubr.f32.gmra.mrb[0].mxu0 %v4336
        %v4610 = vpop.f32.mrb[0].mxu0
        %v4611 = vadd.f32 0.0, %v4610
        %v4612 = vpop.f32.mrb[0].mxu0
        %4613 = vmatprep.mubr.f32.mxu0 0.0
        %4614 = vmatmul.mubr.f32.gmra.mrb[0].mxu0 %v4339
        %v4615 = vpop.f32.mrb[0].mxu0
        %v4616 = vadd.f32 0.0, %v4615
        %v4617 = vpop.f32.mrb[0].mxu0
        %4618 = vmatprep.mubr.f32.mxu0 0.0
        %4619 = vmatmul.mubr.f32.gmra.mrb[0].mxu0 %v4342
        %v4620 = vpop.f32.mrb[0].mxu0
        %v4621 = vadd.f32 0.0, %v4620
        %v4622 = vpop.f32.mrb[0].mxu0
        %4623 = vmatprep.mubr.f32.mxu0 0.0
        %4624 = vmatmul.mubr.f32.gmra.mrb[0].mxu0 %v4345
        %v4625 = vpop.f32.mrb[0].mxu0
        %v4626 = vadd.f32 0.0, %v4625
        %v4627 = vpop.f32.mrb[0].mxu0
        %4628 = vmatprep.mubr.f32.mxu0 0.0
        %4629 = vmatmul.mubr.f32.gmra.mrb[0].mxu0 %v4348
        %v4630 = vpop.f32.mrb[0].mxu0
        %v4631 = vadd.f32 0.0, %v4630
        %v4632 = vpop.f32.mrb[0].mxu0
        %4633 = vmatprep.mubr.f32.mxu0 0.0
        %4634 = vmatmul.mubr.f32.gmra.mrb[0].mxu0 %v4351
        %v4635 = vpop.f32.mrb[0].mxu0
        %v4636 = vadd.f32 0.0, %v4635
        %v4637 = vpop.f32.mrb[0].mxu0
        %4638 = vmatprep.mubr.f32.mxu0 0.0
        %4639 = vmatmul.mubr.f32.gmra.mrb[0].mxu0 %v4354
        %v4640 = vpop.f32.mrb[0].mxu0
        %v4641 = vadd.f32 0.0, %v4640
        %v4642 = vpop.f32.mrb[0].mxu0
        %4643 = vmatprep.mubr.f32.mxu0 0.0
        %4644 = vmatmul.mubr.f32.gmra.mrb[0].mxu0 %v4357
        %v4645 = vpop.f32.mrb[0].mxu0
        %v4646 = vadd.f32 0.0, %v4645
        %v4647 = vpop.f32.mrb[0].mxu0
        %4648 = vmatprep.mubr.f32.mxu0 0.0
        %4649 = vmatmul.mubr.f32.gmra.mrb[0].mxu0 %v4360
        %v4650 = vpop.f32.mrb[0].mxu0
        %v4651 = vadd.f32 0.0, %v4650
        %v4652 = vpop.f32.mrb[0].mxu0
        %4653 = vmatprep.mubr.f32.mxu0 0.0
        %4654 = vmatmul.mubr.f32.gmra.mrb[0].mxu0 %v4363
        %v4655 = vpop.f32.mrb[0].mxu0
        %v4656 = vadd.f32 0.0, %v4655
        %v4657 = vpop.f32.mrb[0].mxu0
        %4658 = vmatprep.mubr.f32.mxu0 0.0
        %4659 = vmatmul.mubr.f32.gmra.mrb[0].mxu0 %v4366
        %v4660 = vpop.f32.mrb[0].mxu0
        %v4661 = vadd.f32 0.0, %v4660
        %v4662 = vpop.f32.mrb[0].mxu0
        %4663 = vmatprep.mubr.f32.mxu0 0.0
        %4664 = vmatmul.mubr.f32.gmra.mrb[0].mxu0 %v4369
        %v4665 = vpop.f32.mrb[0].mxu0
        %v4666 = vadd.f32 0.0, %v4665
        %v4667 = vpop.f32.mrb[0].mxu0
        %4668 = vmatprep.mubr.f32.mxu0 0.0
        %4669 = vmatmul.mubr.f32.gmra.mrb[0].mxu0 %v4372
        %v4670 = vpop.f32.mrb[0].mxu0
        %v4671 = vadd.f32 0.0, %v4670
        %v4672 = vpop.f32.mrb[0].mxu0
        %4673 = vmatprep.mubr.f32.mxu0 0.0
        %4674 = vmatmul.mubr.f32.gmra.mrb[0].mxu0 %v4375
        %v4675 = vpop.f32.mrb[0].mxu0
        %v4676 = vadd.f32 0.0, %v4675
        %v4677 = vpop.f32.mrb[0].mxu0
        %4678 = vmatprep.mubr.f32.mxu0 0.0
        %4679 = vmatmul.mubr.f32.gmra.mrb[0].mxu0 %v4378
        %v4680 = vpop.f32.mrb[0].mxu0
        %v4681 = vadd.f32 0.0, %v4680
        %v4682 = vpop.f32.mrb[0].mxu0
        %4683 = vmatprep.mubr.f32.mxu0 0.0
        %4684 = vmatmul.mubr.f32.gmra.mrb[0].mxu0 %v4381
        %v4685 = vpop.f32.mrb[0].mxu0
        %v4686 = vadd.f32 0.0, %v4685
        %v4687 = vpop.f32.mrb[0].mxu0
        %4688 = vmatprep.mubr.f32.mxu0 0.0
        %4689 = vmatmul.mubr.f32.gmra.mrb[0].mxu0 %v4384
        %v4690 = vpop.f32.mrb[0].mxu0
        %v4691 = vadd.f32 0.0, %v4690
        %v4692 = vpop.f32.mrb[0].mxu0
        %4693 = vdwg.mxu0
        %v4694 = vld [vmem:[#allocation3] sm:$0xff]
        %v4695 = vld [vmem:[#allocation3 + $0x8] sm:$0xff]
        %v4696 = vld [vmem:[#allocation3 + $0x10] sm:$0xff]
        %v4697 = vld [vmem:[#allocation3 + $0x18] sm:$0xff]
        %v4698 = vld [vmem:[#allocation3 + $0x20] sm:$0xff]
        %v4699 = vld [vmem:[#allocation3 + $0x28] sm:$0xff]
        %v4700 = vld [vmem:[#allocation3 + $0x30] sm:$0xff]
        %v4701 = vld [vmem:[#allocation3 + $0x38] sm:$0xff]
        %v4702 = vld [vmem:[#allocation3 + $0x40] sm:$0xff]
        %v4703 = vld [vmem:[#allocation3 + $0x48] sm:$0xff]
        %v4704 = vld [vmem:[#allocation3 + $0x50] sm:$0xff]
        %v4705 = vld [vmem:[#allocation3 + $0x58] sm:$0xff]
        %v4706 = vld [vmem:[#allocation3 + $0x60] sm:$0xff]
        %v4707 = vld [vmem:[#allocation3 + $0x68] sm:$0xff]
        %v4708 = vld [vmem:[#allocation3 + $0x70] sm:$0xff]
        %v4709 = vld [vmem:[#allocation3 + $0x78] sm:$0xff]
        %v4710 = vld [vmem:[#allocation3 + $0x80] sm:$0xff]
        %v4711 = vld [vmem:[#allocation3 + $0x88] sm:$0xff]
        %v4712 = vld [vmem:[#allocation3 + $0x90] sm:$0xff]
        %v4713 = vld [vmem:[#allocation3 + $0x98] sm:$0xff]
        %v4714 = vld [vmem:[#allocation3 + $0xa0] sm:$0xff]
        %v4715 = vld [vmem:[#allocation3 + $0xa8] sm:$0xff]
        %v4716 = vld [vmem:[#allocation3 + $0xb0] sm:$0xff]
        %v4717 = vld [vmem:[#allocation3 + $0xb8] sm:$0xff]
        %v4718 = vld [vmem:[#allocation3 + $0xc0] sm:$0xff]
        %v4719 = vld [vmem:[#allocation3 + $0xc8] sm:$0xff]
        %v4720 = vld [vmem:[#allocation3 + $0xd0] sm:$0xff]
        %v4721 = vld [vmem:[#allocation3 + $0xd8] sm:$0xff]
        %v4722 = vld [vmem:[#allocation3 + $0xe0] sm:$0xff]
        %v4723 = vld [vmem:[#allocation3 + $0xe8] sm:$0xff]
        %v4724 = vld [vmem:[#allocation3 + $0xf0] sm:$0xff]
        %v4725 = vld [vmem:[#allocation3 + $0xf8] sm:$0xff]
        %v4726 = vld [vmem:[#allocation3 + $0x100] sm:$0xff]
        %v4727 = vld [vmem:[#allocation3 + $0x108] sm:$0xff]
        %v4728 = vld [vmem:[#allocation3 + $0x110] sm:$0xff]
        %v4729 = vld [vmem:[#allocation3 + $0x118] sm:$0xff]
        %v4730 = vld [vmem:[#allocation3 + $0x120] sm:$0xff]
        %v4731 = vld [vmem:[#allocation3 + $0x128] sm:$0xff]
        %v4732 = vld [vmem:[#allocation3 + $0x130] sm:$0xff]
        %v4733 = vld [vmem:[#allocation3 + $0x138] sm:$0xff]
        %v4734 = vld [vmem:[#allocation3 + $0x140] sm:$0xff]
        %v4735 = vld [vmem:[#allocation3 + $0x148] sm:$0xff]
        %v4736 = vld [vmem:[#allocation3 + $0x150] sm:$0xff]
        %v4737 = vld [vmem:[#allocation3 + $0x158] sm:$0xff]
        %v4738 = vld [vmem:[#allocation3 + $0x160] sm:$0xff]
        %v4739 = vld [vmem:[#allocation3 + $0x168] sm:$0xff]
        %v4740 = vld [vmem:[#allocation3 + $0x170] sm:$0xff]
        %v4741 = vld [vmem:[#allocation3 + $0x178] sm:$0xff]
        %v4742 = vadd.f32 %v4694, %v4456
        %v4743 = vadd.f32 %v4695, %v4461
        %v4744 = vadd.f32 %v4696, %v4466
        %v4745 = vadd.f32 %v4697, %v4471
        %v4746 = vadd.f32 %v4698, %v4476
        %v4747 = vadd.f32 %v4699, %v4481
        %v4748 = vadd.f32 %v4700, %v4486
        %v4749 = vadd.f32 %v4701, %v4491
        %v4750 = vadd.f32 %v4702, %v4496
        %v4751 = vadd.f32 %v4703, %v4501
        %v4752 = vadd.f32 %v4704, %v4506
        %v4753 = vadd.f32 %v4705, %v4511
        %v4754 = vadd.f32 %v4706, %v4516
        %v4755 = vadd.f32 %v4707, %v4521
        %v4756 = vadd.f32 %v4708, %v4526
        %v4757 = vadd.f32 %v4709, %v4531
        %v4758 = vadd.f32 %v4710, %v4536
        %v4759 = vadd.f32 %v4711, %v4541
        %v4760 = vadd.f32 %v4712, %v4546
        %v4761 = vadd.f32 %v4713, %v4551
        %v4762 = vadd.f32 %v4714, %v4556
        %v4763 = vadd.f32 %v4715, %v4561
        %v4764 = vadd.f32 %v4716, %v4566
        %v4765 = vadd.f32 %v4717, %v4571
        %v4766 = vadd.f32 %v4718, %v4576
        %v4767 = vadd.f32 %v4719, %v4581
        %v4768 = vadd.f32 %v4720, %v4586
        %v4769 = vadd.f32 %v4721, %v4591
        %v4770 = vadd.f32 %v4722, %v4596
        %v4771 = vadd.f32 %v4723, %v4601
        %v4772 = vadd.f32 %v4724, %v4606
        %v4773 = vadd.f32 %v4725, %v4611
        %v4774 = vadd.f32 %v4726, %v4616
        %v4775 = vadd.f32 %v4727, %v4621
        %v4776 = vadd.f32 %v4728, %v4626
        %v4777 = vadd.f32 %v4729, %v4631
        %v4778 = vadd.f32 %v4730, %v4636
        %v4779 = vadd.f32 %v4731, %v4641
        %v4780 = vadd.f32 %v4732, %v4646
        %v4781 = vadd.f32 %v4733, %v4651
        %v4782 = vadd.f32 %v4734, %v4656
        %v4783 = vadd.f32 %v4735, %v4661
        %v4784 = vadd.f32 %v4736, %v4666
        %v4785 = vadd.f32 %v4737, %v4671
        %v4786 = vadd.f32 %v4738, %v4676
        %v4787 = vadd.f32 %v4739, %v4681
        %v4788 = vadd.f32 %v4740, %v4686
        %v4789 = vadd.f32 %v4741, %v4691
        %4790 = vst [vmem:[#allocation3] sm:$0xff] %v4742
        %4791 = vst [vmem:[#allocation3 + $0x8] sm:$0xff] %v4743
        %4792 = vst [vmem:[#allocation3 + $0x10] sm:$0xff] %v4744
        %4793 = vst [vmem:[#allocation3 + $0x18] sm:$0xff] %v4745
        %4794 = vst [vmem:[#allocation3 + $0x20] sm:$0xff] %v4746
        %4795 = vst [vmem:[#allocation3 + $0x28] sm:$0xff] %v4747
        %4796 = vst [vmem:[#allocation3 + $0x30] sm:$0xff] %v4748
        %4797 = vst [vmem:[#allocation3 + $0x38] sm:$0xff] %v4749
        %4798 = vst [vmem:[#allocation3 + $0x40] sm:$0xff] %v4750
        %4799 = vst [vmem:[#allocation3 + $0x48] sm:$0xff] %v4751
        %4800 = vst [vmem:[#allocation3 + $0x50] sm:$0xff] %v4752
        %4801 = vst [vmem:[#allocation3 + $0x58] sm:$0xff] %v4753
        %4802 = vst [vmem:[#allocation3 + $0x60] sm:$0xff] %v4754
        %4803 = vst [vmem:[#allocation3 + $0x68] sm:$0xff] %v4755
        %4804 = vst [vmem:[#allocation3 + $0x70] sm:$0xff] %v4756
        %4805 = vst [vmem:[#allocation3 + $0x78] sm:$0xff] %v4757
        %4806 = vst [vmem:[#allocation3 + $0x80] sm:$0xff] %v4758
        %4807 = vst [vmem:[#allocation3 + $0x88] sm:$0xff] %v4759
        %4808 = vst [vmem:[#allocation3 + $0x90] sm:$0xff] %v4760
        %4809 = vst [vmem:[#allocation3 + $0x98] sm:$0xff] %v4761
        %4810 = vst [vmem:[#allocation3 + $0xa0] sm:$0xff] %v4762
        %4811 = vst [vmem:[#allocation3 + $0xa8] sm:$0xff] %v4763
        %4812 = vst [vmem:[#allocation3 + $0xb0] sm:$0xff] %v4764
        %4813 = vst [vmem:[#allocation3 + $0xb8] sm:$0xff] %v4765
        %4814 = vst [vmem:[#allocation3 + $0xc0] sm:$0xff] %v4766
        %4815 = vst [vmem:[#allocation3 + $0xc8] sm:$0xff] %v4767
        %4816 = vst [vmem:[#allocation3 + $0xd0] sm:$0xff] %v4768
        %4817 = vst [vmem:[#allocation3 + $0xd8] sm:$0xff] %v4769
        %4818 = vst [vmem:[#allocation3 + $0xe0] sm:$0xff] %v4770
        %4819 = vst [vmem:[#allocation3 + $0xe8] sm:$0xff] %v4771
        %4820 = vst [vmem:[#allocation3 + $0xf0] sm:$0xff] %v4772
        %4821 = vst [vmem:[#allocation3 + $0xf8] sm:$0xff] %v4773
        %4822 = vst [vmem:[#allocation3 + $0x100] sm:$0xff] %v4774
        %4823 = vst [vmem:[#allocation3 + $0x108] sm:$0xff] %v4775
        %4824 = vst [vmem:[#allocation3 + $0x110] sm:$0xff] %v4776
        %4825 = vst [vmem:[#allocation3 + $0x118] sm:$0xff] %v4777
        %4826 = vst [vmem:[#allocation3 + $0x120] sm:$0xff] %v4778
        %4827 = vst [vmem:[#allocation3 + $0x128] sm:$0xff] %v4779
        %4828 = vst [vmem:[#allocation3 + $0x130] sm:$0xff] %v4780
        %4829 = vst [vmem:[#allocation3 + $0x138] sm:$0xff] %v4781
        %4830 = vst [vmem:[#allocation3 + $0x140] sm:$0xff] %v4782
        %4831 = vst [vmem:[#allocation3 + $0x148] sm:$0xff] %v4783
        %4832 = vst [vmem:[#allocation3 + $0x150] sm:$0xff] %v4784
        %4833 = vst [vmem:[#allocation3 + $0x158] sm:$0xff] %v4785
        %4834 = vst [vmem:[#allocation3 + $0x160] sm:$0xff] %v4786
        %4835 = vst [vmem:[#allocation3 + $0x168] sm:$0xff] %v4787
        %4836 = vst [vmem:[#allocation3 + $0x170] sm:$0xff] %v4788
        %4837 = vst [vmem:[#allocation3 + $0x178] sm:$0xff] %v4789
        %v4838 = vld [vmem:[#allocation2 + $0x31] sm:$0xff]
        %v4839 = vld [vmem:[#allocation2 + $0x39] sm:$0xff]
        %v4840 = vld [vmem:[#allocation2 + $0x41] sm:$0xff]
        %v4841 = vld [vmem:[#allocation2 + $0x49] sm:$0xff]
        %v4842 = vld [vmem:[#allocation2 + $0x51] sm:$0xff]
        %v4843 = vld [vmem:[#allocation2 + $0x59] sm:$0xff]
        %v4844 = vld [vmem:[#allocation2 + $0x61] sm:$0xff]
        %v4845 = vld [vmem:[#allocation2 + $0x69] sm:$0xff]
        %v4846 = vld [vmem:[#allocation2 + $0x71] sm:$0xff]
        %v4847 = vld [vmem:[#allocation2 + $0x79] sm:$0xff]
        %v4848 = vld [vmem:[#allocation2 + $0x81] sm:$0xff]
        %v4849 = vld [vmem:[#allocation2 + $0x89] sm:$0xff]
        %v4850 = vld [vmem:[#allocation2 + $0x91] sm:$0xff]
        %v4851 = vld [vmem:[#allocation2 + $0x99] sm:$0xff]
        %v4852 = vld [vmem:[#allocation2 + $0xa1] sm:$0xff]
        %v4853 = vld [vmem:[#allocation2 + $0xa9] sm:$0xff]
        %v4854 = vld [vmem:[#allocation2 + $0xb1] sm:$0xff]
        %v4855 = vld [vmem:[#allocation2 + $0xb9] sm:$0xff]
        %v4856 = vld [vmem:[#allocation2 + $0xc1] sm:$0xff]
        %v4857 = vld [vmem:[#allocation2 + $0xc9] sm:$0xff]
        %v4858 = vld [vmem:[#allocation2 + $0xd1] sm:$0xff]
        %v4859 = vld [vmem:[#allocation2 + $0xd9] sm:$0xff]
        %v4860 = vld [vmem:[#allocation2 + $0xe1] sm:$0xff]
        %v4861 = vld [vmem:[#allocation2 + $0xe9] sm:$0xff]
        %v4862 = vld [vmem:[#allocation2 + $0xf1] sm:$0xff]
        %v4863 = vld [vmem:[#allocation2 + $0xf9] sm:$0xff]
        %v4864 = vld [vmem:[#allocation2 + $0x101] sm:$0xff]
        %v4865 = vld [vmem:[#allocation2 + $0x109] sm:$0xff]
        %v4866 = vld [vmem:[#allocation2 + $0x111] sm:$0xff]
        %v4867 = vld [vmem:[#allocation2 + $0x119] sm:$0xff]
        %v4868 = vld [vmem:[#allocation2 + $0x121] sm:$0xff]
        %v4869 = vld [vmem:[#allocation2 + $0x129] sm:$0xff]
        %v4870 = vld [vmem:[#allocation2 + $0x131] sm:$0xff]
        %v4871 = vld [vmem:[#allocation2 + $0x139] sm:$0xff]
        %v4872 = vld [vmem:[#allocation2 + $0x141] sm:$0xff]
        %v4873 = vld [vmem:[#allocation2 + $0x149] sm:$0xff]
        %v4874 = vld [vmem:[#allocation2 + $0x151] sm:$0xff]
        %v4875 = vld [vmem:[#allocation2 + $0x159] sm:$0xff]
        %v4876 = vld [vmem:[#allocation2 + $0x161] sm:$0xff]
        %v4877 = vld [vmem:[#allocation2 + $0x169] sm:$0xff]
        %v4878 = vld [vmem:[#allocation2 + $0x171] sm:$0xff]
        %v4879 = vld [vmem:[#allocation2 + $0x179] sm:$0xff]
        %v4880 = vld [vmem:[#allocation2 + $0x181] sm:$0xff]
        %v4881 = vld [vmem:[#allocation2 + $0x189] sm:$0xff]
        %v4882 = vld [vmem:[#allocation2 + $0x191] sm:$0xff]
        %v4883 = vld [vmem:[#allocation2 + $0x199] sm:$0xff]
        %v4884 = vld [vmem:[#allocation2 + $0x1a1] sm:$0xff]
        %v4885 = vld [vmem:[#allocation2 + $0x1a9] sm:$0xff]
        %s4886 = scalar_lea.vmem %s2, 28
        %v4887 = vld [vmem:[%s4886] sm:$0xf]
        %v4889 = vsel %vm345, %v4838, 0
        %v4892 = vsel %vm345, %v4839, 0
        %v4895 = vsel %vm345, %v4840, 0
        %v4898 = vsel %vm345, %v4841, 0
        %v4901 = vsel %vm345, %v4842, 0
        %v4904 = vsel %vm345, %v4843, 0
        %v4907 = vsel %vm345, %v4844, 0
        %v4910 = vsel %vm345, %v4845, 0
        %v4913 = vsel %vm345, %v4846, 0
        %v4916 = vsel %vm345, %v4847, 0
        %v4919 = vsel %vm345, %v4848, 0
        %v4922 = vsel %vm345, %v4849, 0
        %v4925 = vsel %vm345, %v4850, 0
        %v4928 = vsel %vm345, %v4851, 0
        %v4931 = vsel %vm345, %v4852, 0
        %v4934 = vsel %vm345, %v4853, 0
        %v4937 = vsel %vm345, %v4854, 0
        %v4940 = vsel %vm345, %v4855, 0
        %v4943 = vsel %vm345, %v4856, 0
        %v4946 = vsel %vm345, %v4857, 0
        %v4949 = vsel %vm345, %v4858, 0
        %v4952 = vsel %vm345, %v4859, 0
        %v4955 = vsel %vm345, %v4860, 0
        %v4958 = vsel %vm345, %v4861, 0
        %v4961 = vsel %vm345, %v4862, 0
        %v4964 = vsel %vm345, %v4863, 0
        %v4967 = vsel %vm345, %v4864, 0
        %v4970 = vsel %vm345, %v4865, 0
        %v4973 = vsel %vm345, %v4866, 0
        %v4976 = vsel %vm345, %v4867, 0
        %v4979 = vsel %vm345, %v4868, 0
        %v4982 = vsel %vm345, %v4869, 0
        %v4985 = vsel %vm345, %v4870, 0
        %v4988 = vsel %vm345, %v4871, 0
        %v4991 = vsel %vm345, %v4872, 0
        %v4994 = vsel %vm345, %v4873, 0
        %v4997 = vsel %vm345, %v4874, 0
        %v5000 = vsel %vm345, %v4875, 0
        %v5003 = vsel %vm345, %v4876, 0
        %v5006 = vsel %vm345, %v4877, 0
        %v5009 = vsel %vm345, %v4878, 0
        %v5012 = vsel %vm345, %v4879, 0
        %v5015 = vsel %vm345, %v4880, 0
        %v5018 = vsel %vm345, %v4881, 0
        %v5021 = vsel %vm345, %v4882, 0
        %v5024 = vsel %vm345, %v4883, 0
        %v5027 = vsel %vm345, %v4884, 0
        %v5030 = vsel %vm345, %v4885, 0
        %v5033 = vsel %vm605, %v4887, 0
        %5035 = vmatprep.subr.mxu0 0.0
        %5036 = vmatpush1.msra.mxu0 %v5033
        %5037 = vmatprep.subr.mxu0 0.0
        %5038 = vmatpush1.msra.mxu0 0.0
        %5039 = vmatprep.subr.mxu0 0.0
        %5040 = vmatpush1.msra.mxu0 0.0
        %5041 = vmatprep.subr.mxu0 0.0
        %5042 = vmatpush1.msra.mxu0 0.0
        %5043 = vmatprep.subr.mxu0 0.0
        %5044 = vmatpush1.msra.mxu0 0.0
        %5045 = vmatprep.subr.mxu0 0.0
        %5046 = vmatpush1.msra.mxu0 0.0
        %5047 = vmatprep.subr.mxu0 0.0
        %5048 = vmatpush1.msra.mxu0 0.0
        %5049 = vmatprep.subr.mxu0 0.0
        %5050 = vmatpush1.msra.mxu0 0.0
        %5051 = vmatprep.subr.mxu0 0.0
        %5052 = vmatpush1.msra.mxu0 0.0
        %5053 = vmatprep.subr.mxu0 0.0
        %5054 = vmatpush1.msra.mxu0 0.0
        %5055 = vmatprep.subr.mxu0 0.0
        %5056 = vmatpush1.msra.mxu0 0.0
        %5057 = vmatprep.subr.mxu0 0.0
        %5058 = vmatpush1.msra.mxu0 0.0
        %5059 = vmatprep.subr.mxu0 0.0
        %5060 = vmatpush1.msra.mxu0 0.0
        %5061 = vmatprep.subr.mxu0 0.0
        %5062 = vmatpush1.msra.mxu0 0.0
        %5063 = vmatprep.subr.mxu0 0.0
        %5064 = vmatpush1.msra.mxu0 0.0
        %5065 = vmatprep.subr.mxu0 0.0
        %5066 = vmatpush1.msra.mxu0 0.0
        %5067 = vmatprep.subr.mxu0 0.0
        %5068 = vmatpush1.msra.mxu0 0.0
        %5069 = vmatprep.subr.mxu0 0.0
        %5070 = vmatpush1.msra.mxu0 0.0
        %5071 = vmatprep.subr.mxu0 0.0
        %5072 = vmatpush1.msra.mxu0 0.0
        %5073 = vmatprep.subr.mxu0 0.0
        %5074 = vmatpush1.msra.mxu0 0.0
        %5075 = vmatprep.subr.mxu0 0.0
        %5076 = vmatpush1.msra.mxu0 0.0
        %5077 = vmatprep.subr.mxu0 0.0
        %5078 = vmatpush1.msra.mxu0 0.0
        %5079 = vmatprep.subr.mxu0 0.0
        %5080 = vmatpush1.msra.mxu0 0.0
        %5081 = vmatprep.subr.mxu0 0.0
        %5082 = vmatpush1.msra.mxu0 0.0
        %5083 = vmatprep.subr.mxu0 0.0
        %5084 = vmatpush1.msra.mxu0 0.0
        %5085 = vmatprep.subr.mxu0 0.0
        %5086 = vmatpush1.msra.mxu0 0.0
        %5087 = vmatprep.subr.mxu0 0.0
        %5088 = vmatpush1.msra.mxu0 0.0
        %5089 = vmatprep.subr.mxu0 0.0
        %5090 = vmatpush1.msra.mxu0 0.0
        %5091 = vmatprep.subr.mxu0 0.0
        %5092 = vmatpush1.msra.mxu0 0.0
        %5093 = vmatprep.subr.mxu0 0.0
        %5094 = vmatpush1.msra.mxu0 0.0
        %5095 = vmatprep.subr.mxu0 0.0
        %5096 = vmatpush1.msra.mxu0 0.0
        %5097 = vmatprep.subr.mxu0 0.0
        %5098 = vmatpush1.msra.mxu0 0.0
        %5099 = vmatprep.mubr.f32.mxu0 0.0
        %5100 = vmatmul.mubr.f32.gmra.mrb[0].mxu0 %v4889
        %v5101 = vpop.f32.mrb[0].mxu0
        %v5102 = vadd.f32 0.0, %v5101
        %v5103 = vpop.f32.mrb[0].mxu0
        %5104 = vmatprep.mubr.f32.mxu0 0.0
        %5105 = vmatmul.mubr.f32.gmra.mrb[0].mxu0 %v4892
        %v5106 = vpop.f32.mrb[0].mxu0
        %v5107 = vadd.f32 0.0, %v5106
        %v5108 = vpop.f32.mrb[0].mxu0
        %5109 = vmatprep.mubr.f32.mxu0 0.0
        %5110 = vmatmul.mubr.f32.gmra.mrb[0].mxu0 %v4895
        %v5111 = vpop.f32.mrb[0].mxu0
        %v5112 = vadd.f32 0.0, %v5111
        %v5113 = vpop.f32.mrb[0].mxu0
        %5114 = vmatprep.mubr.f32.mxu0 0.0
        %5115 = vmatmul.mubr.f32.gmra.mrb[0].mxu0 %v4898
        %v5116 = vpop.f32.mrb[0].mxu0
        %v5117 = vadd.f32 0.0, %v5116
        %v5118 = vpop.f32.mrb[0].mxu0
        %5119 = vmatprep.mubr.f32.mxu0 0.0
        %5120 = vmatmul.mubr.f32.gmra.mrb[0].mxu0 %v4901
        %v5121 = vpop.f32.mrb[0].mxu0
        %v5122 = vadd.f32 0.0, %v5121
        %v5123 = vpop.f32.mrb[0].mxu0
        %5124 = vmatprep.mubr.f32.mxu0 0.0
        %5125 = vmatmul.mubr.f32.gmra.mrb[0].mxu0 %v4904
        %v5126 = vpop.f32.mrb[0].mxu0
        %v5127 = vadd.f32 0.0, %v5126
        %v5128 = vpop.f32.mrb[0].mxu0
        %5129 = vmatprep.mubr.f32.mxu0 0.0
        %5130 = vmatmul.mubr.f32.gmra.mrb[0].mxu0 %v4907
        %v5131 = vpop.f32.mrb[0].mxu0
        %v5132 = vadd.f32 0.0, %v5131
        %v5133 = vpop.f32.mrb[0].mxu0
        %5134 = vmatprep.mubr.f32.mxu0 0.0
        %5135 = vmatmul.mubr.f32.gmra.mrb[0].mxu0 %v4910
        %v5136 = vpop.f32.mrb[0].mxu0
        %v5137 = vadd.f32 0.0, %v5136
        %v5138 = vpop.f32.mrb[0].mxu0
        %5139 = vmatprep.mubr.f32.mxu0 0.0
        %5140 = vmatmul.mubr.f32.gmra.mrb[0].mxu0 %v4913
        %v5141 = vpop.f32.mrb[0].mxu0
        %v5142 = vadd.f32 0.0, %v5141
        %v5143 = vpop.f32.mrb[0].mxu0
        %5144 = vmatprep.mubr.f32.mxu0 0.0
        %5145 = vmatmul.mubr.f32.gmra.mrb[0].mxu0 %v4916
        %v5146 = vpop.f32.mrb[0].mxu0
        %v5147 = vadd.f32 0.0, %v5146
        %v5148 = vpop.f32.mrb[0].mxu0
        %5149 = vmatprep.mubr.f32.mxu0 0.0
        %5150 = vmatmul.mubr.f32.gmra.mrb[0].mxu0 %v4919
        %v5151 = vpop.f32.mrb[0].mxu0
        %v5152 = vadd.f32 0.0, %v5151
        %v5153 = vpop.f32.mrb[0].mxu0
        %5154 = vmatprep.mubr.f32.mxu0 0.0
        %5155 = vmatmul.mubr.f32.gmra.mrb[0].mxu0 %v4922
        %v5156 = vpop.f32.mrb[0].mxu0
        %v5157 = vadd.f32 0.0, %v5156
        %v5158 = vpop.f32.mrb[0].mxu0
        %5159 = vmatprep.mubr.f32.mxu0 0.0
        %5160 = vmatmul.mubr.f32.gmra.mrb[0].mxu0 %v4925
        %v5161 = vpop.f32.mrb[0].mxu0
        %v5162 = vadd.f32 0.0, %v5161
        %v5163 = vpop.f32.mrb[0].mxu0
        %5164 = vmatprep.mubr.f32.mxu0 0.0
        %5165 = vmatmul.mubr.f32.gmra.mrb[0].mxu0 %v4928
        %v5166 = vpop.f32.mrb[0].mxu0
        %v5167 = vadd.f32 0.0, %v5166
        %v5168 = vpop.f32.mrb[0].mxu0
        %5169 = vmatprep.mubr.f32.mxu0 0.0
        %5170 = vmatmul.mubr.f32.gmra.mrb[0].mxu0 %v4931
        %v5171 = vpop.f32.mrb[0].mxu0
        %v5172 = vadd.f32 0.0, %v5171
        %v5173 = vpop.f32.mrb[0].mxu0
        %5174 = vmatprep.mubr.f32.mxu0 0.0
        %5175 = vmatmul.mubr.f32.gmra.mrb[0].mxu0 %v4934
        %v5176 = vpop.f32.mrb[0].mxu0
        %v5177 = vadd.f32 0.0, %v5176
        %v5178 = vpop.f32.mrb[0].mxu0
        %5179 = vmatprep.mubr.f32.mxu0 0.0
        %5180 = vmatmul.mubr.f32.gmra.mrb[0].mxu0 %v4937
        %v5181 = vpop.f32.mrb[0].mxu0
        %v5182 = vadd.f32 0.0, %v5181
        %v5183 = vpop.f32.mrb[0].mxu0
        %5184 = vmatprep.mubr.f32.mxu0 0.0
        %5185 = vmatmul.mubr.f32.gmra.mrb[0].mxu0 %v4940
        %v5186 = vpop.f32.mrb[0].mxu0
        %v5187 = vadd.f32 0.0, %v5186
        %v5188 = vpop.f32.mrb[0].mxu0
        %5189 = vmatprep.mubr.f32.mxu0 0.0
        %5190 = vmatmul.mubr.f32.gmra.mrb[0].mxu0 %v4943
        %v5191 = vpop.f32.mrb[0].mxu0
        %v5192 = vadd.f32 0.0, %v5191
        %v5193 = vpop.f32.mrb[0].mxu0
        %5194 = vmatprep.mubr.f32.mxu0 0.0
        %5195 = vmatmul.mubr.f32.gmra.mrb[0].mxu0 %v4946
        %v5196 = vpop.f32.mrb[0].mxu0
        %v5197 = vadd.f32 0.0, %v5196
        %v5198 = vpop.f32.mrb[0].mxu0
        %5199 = vmatprep.mubr.f32.mxu0 0.0
        %5200 = vmatmul.mubr.f32.gmra.mrb[0].mxu0 %v4949
        %v5201 = vpop.f32.mrb[0].mxu0
        %v5202 = vadd.f32 0.0, %v5201
        %v5203 = vpop.f32.mrb[0].mxu0
        %5204 = vmatprep.mubr.f32.mxu0 0.0
        %5205 = vmatmul.mubr.f32.gmra.mrb[0].mxu0 %v4952
        %v5206 = vpop.f32.mrb[0].mxu0
        %v5207 = vadd.f32 0.0, %v5206
        %v5208 = vpop.f32.mrb[0].mxu0
        %5209 = vmatprep.mubr.f32.mxu0 0.0
        %5210 = vmatmul.mubr.f32.gmra.mrb[0].mxu0 %v4955
        %v5211 = vpop.f32.mrb[0].mxu0
        %v5212 = vadd.f32 0.0, %v5211
        %v5213 = vpop.f32.mrb[0].mxu0
        %5214 = vmatprep.mubr.f32.mxu0 0.0
        %5215 = vmatmul.mubr.f32.gmra.mrb[0].mxu0 %v4958
        %v5216 = vpop.f32.mrb[0].mxu0
        %v5217 = vadd.f32 0.0, %v5216
        %v5218 = vpop.f32.mrb[0].mxu0
        %5219 = vmatprep.mubr.f32.mxu0 0.0
        %5220 = vmatmul.mubr.f32.gmra.mrb[0].mxu0 %v4961
        %v5221 = vpop.f32.mrb[0].mxu0
        %v5222 = vadd.f32 0.0, %v5221
        %v5223 = vpop.f32.mrb[0].mxu0
        %5224 = vmatprep.mubr.f32.mxu0 0.0
        %5225 = vmatmul.mubr.f32.gmra.mrb[0].mxu0 %v4964
        %v5226 = vpop.f32.mrb[0].mxu0
        %v5227 = vadd.f32 0.0, %v5226
        %v5228 = vpop.f32.mrb[0].mxu0
        %5229 = vmatprep.mubr.f32.mxu0 0.0
        %5230 = vmatmul.mubr.f32.gmra.mrb[0].mxu0 %v4967
        %v5231 = vpop.f32.mrb[0].mxu0
        %v5232 = vadd.f32 0.0, %v5231
        %v5233 = vpop.f32.mrb[0].mxu0
        %5234 = vmatprep.mubr.f32.mxu0 0.0
        %5235 = vmatmul.mubr.f32.gmra.mrb[0].mxu0 %v4970
        %v5236 = vpop.f32.mrb[0].mxu0
        %v5237 = vadd.f32 0.0, %v5236
        %v5238 = vpop.f32.mrb[0].mxu0
        %5239 = vmatprep.mubr.f32.mxu0 0.0
        %5240 = vmatmul.mubr.f32.gmra.mrb[0].mxu0 %v4973
        %v5241 = vpop.f32.mrb[0].mxu0
        %v5242 = vadd.f32 0.0, %v5241
        %v5243 = vpop.f32.mrb[0].mxu0
        %5244 = vmatprep.mubr.f32.mxu0 0.0
        %5245 = vmatmul.mubr.f32.gmra.mrb[0].mxu0 %v4976
        %v5246 = vpop.f32.mrb[0].mxu0
        %v5247 = vadd.f32 0.0, %v5246
        %v5248 = vpop.f32.mrb[0].mxu0
        %5249 = vmatprep.mubr.f32.mxu0 0.0
        %5250 = vmatmul.mubr.f32.gmra.mrb[0].mxu0 %v4979
        %v5251 = vpop.f32.mrb[0].mxu0
        %v5252 = vadd.f32 0.0, %v5251
        %v5253 = vpop.f32.mrb[0].mxu0
        %5254 = vmatprep.mubr.f32.mxu0 0.0
        %5255 = vmatmul.mubr.f32.gmra.mrb[0].mxu0 %v4982
        %v5256 = vpop.f32.mrb[0].mxu0
        %v5257 = vadd.f32 0.0, %v5256
        %v5258 = vpop.f32.mrb[0].mxu0
        %5259 = vmatprep.mubr.f32.mxu0 0.0
        %5260 = vmatmul.mubr.f32.gmra.mrb[0].mxu0 %v4985
        %v5261 = vpop.f32.mrb[0].mxu0
        %v5262 = vadd.f32 0.0, %v5261
        %v5263 = vpop.f32.mrb[0].mxu0
        %5264 = vmatprep.mubr.f32.mxu0 0.0
        %5265 = vmatmul.mubr.f32.gmra.mrb[0].mxu0 %v4988
        %v5266 = vpop.f32.mrb[0].mxu0
        %v5267 = vadd.f32 0.0, %v5266
        %v5268 = vpop.f32.mrb[0].mxu0
        %5269 = vmatprep.mubr.f32.mxu0 0.0
        %5270 = vmatmul.mubr.f32.gmra.mrb[0].mxu0 %v4991
        %v5271 = vpop.f32.mrb[0].mxu0
        %v5272 = vadd.f32 0.0, %v5271
        %v5273 = vpop.f32.mrb[0].mxu0
        %5274 = vmatprep.mubr.f32.mxu0 0.0
        %5275 = vmatmul.mubr.f32.gmra.mrb[0].mxu0 %v4994
        %v5276 = vpop.f32.mrb[0].mxu0
        %v5277 = vadd.f32 0.0, %v5276
        %v5278 = vpop.f32.mrb[0].mxu0
        %5279 = vmatprep.mubr.f32.mxu0 0.0
        %5280 = vmatmul.mubr.f32.gmra.mrb[0].mxu0 %v4997
        %v5281 = vpop.f32.mrb[0].mxu0
        %v5282 = vadd.f32 0.0, %v5281
        %v5283 = vpop.f32.mrb[0].mxu0
        %5284 = vmatprep.mubr.f32.mxu0 0.0
        %5285 = vmatmul.mubr.f32.gmra.mrb[0].mxu0 %v5000
        %v5286 = vpop.f32.mrb[0].mxu0
        %v5287 = vadd.f32 0.0, %v5286
        %v5288 = vpop.f32.mrb[0].mxu0
        %5289 = vmatprep.mubr.f32.mxu0 0.0
        %5290 = vmatmul.mubr.f32.gmra.mrb[0].mxu0 %v5003
        %v5291 = vpop.f32.mrb[0].mxu0
        %v5292 = vadd.f32 0.0, %v5291
        %v5293 = vpop.f32.mrb[0].mxu0
        %5294 = vmatprep.mubr.f32.mxu0 0.0
        %5295 = vmatmul.mubr.f32.gmra.mrb[0].mxu0 %v5006
        %v5296 = vpop.f32.mrb[0].mxu0
        %v5297 = vadd.f32 0.0, %v5296
        %v5298 = vpop.f32.mrb[0].mxu0
        %5299 = vmatprep.mubr.f32.mxu0 0.0
        %5300 = vmatmul.mubr.f32.gmra.mrb[0].mxu0 %v5009
        %v5301 = vpop.f32.mrb[0].mxu0
        %v5302 = vadd.f32 0.0, %v5301
        %v5303 = vpop.f32.mrb[0].mxu0
        %5304 = vmatprep.mubr.f32.mxu0 0.0
        %5305 = vmatmul.mubr.f32.gmra.mrb[0].mxu0 %v5012
        %v5306 = vpop.f32.mrb[0].mxu0
        %v5307 = vadd.f32 0.0, %v5306
        %v5308 = vpop.f32.mrb[0].mxu0
        %5309 = vmatprep.mubr.f32.mxu0 0.0
        %5310 = vmatmul.mubr.f32.gmra.mrb[0].mxu0 %v5015
        %v5311 = vpop.f32.mrb[0].mxu0
        %v5312 = vadd.f32 0.0, %v5311
        %v5313 = vpop.f32.mrb[0].mxu0
        %5314 = vmatprep.mubr.f32.mxu0 0.0
        %5315 = vmatmul.mubr.f32.gmra.mrb[0].mxu0 %v5018
        %v5316 = vpop.f32.mrb[0].mxu0
        %v5317 = vadd.f32 0.0, %v5316
        %v5318 = vpop.f32.mrb[0].mxu0
        %5319 = vmatprep.mubr.f32.mxu0 0.0
        %5320 = vmatmul.mubr.f32.gmra.mrb[0].mxu0 %v5021
        %v5321 = vpop.f32.mrb[0].mxu0
        %v5322 = vadd.f32 0.0, %v5321
        %v5323 = vpop.f32.mrb[0].mxu0
        %5324 = vmatprep.mubr.f32.mxu0 0.0
        %5325 = vmatmul.mubr.f32.gmra.mrb[0].mxu0 %v5024
        %v5326 = vpop.f32.mrb[0].mxu0
        %v5327 = vadd.f32 0.0, %v5326
        %v5328 = vpop.f32.mrb[0].mxu0
        %5329 = vmatprep.mubr.f32.mxu0 0.0
        %5330 = vmatmul.mubr.f32.gmra.mrb[0].mxu0 %v5027
        %v5331 = vpop.f32.mrb[0].mxu0
        %v5332 = vadd.f32 0.0, %v5331
        %v5333 = vpop.f32.mrb[0].mxu0
        %5334 = vmatprep.mubr.f32.mxu0 0.0
        %5335 = vmatmul.mubr.f32.gmra.mrb[0].mxu0 %v5030
        %v5336 = vpop.f32.mrb[0].mxu0
        %v5337 = vadd.f32 0.0, %v5336
        %v5338 = vpop.f32.mrb[0].mxu0
        %5339 = vdwg.mxu0
        %v5340 = vld [vmem:[#allocation3] sm:$0xff]
        %v5341 = vld [vmem:[#allocation3 + $0x8] sm:$0xff]
        %v5342 = vld [vmem:[#allocation3 + $0x10] sm:$0xff]
        %v5343 = vld [vmem:[#allocation3 + $0x18] sm:$0xff]
        %v5344 = vld [vmem:[#allocation3 + $0x20] sm:$0xff]
        %v5345 = vld [vmem:[#allocation3 + $0x28] sm:$0xff]
        %v5346 = vld [vmem:[#allocation3 + $0x30] sm:$0xff]
        %v5347 = vld [vmem:[#allocation3 + $0x38] sm:$0xff]
        %v5348 = vld [vmem:[#allocation3 + $0x40] sm:$0xff]
        %v5349 = vld [vmem:[#allocation3 + $0x48] sm:$0xff]
        %v5350 = vld [vmem:[#allocation3 + $0x50] sm:$0xff]
        %v5351 = vld [vmem:[#allocation3 + $0x58] sm:$0xff]
        %v5352 = vld [vmem:[#allocation3 + $0x60] sm:$0xff]
        %v5353 = vld [vmem:[#allocation3 + $0x68] sm:$0xff]
        %v5354 = vld [vmem:[#allocation3 + $0x70] sm:$0xff]
        %v5355 = vld [vmem:[#allocation3 + $0x78] sm:$0xff]
        %v5356 = vld [vmem:[#allocation3 + $0x80] sm:$0xff]
        %v5357 = vld [vmem:[#allocation3 + $0x88] sm:$0xff]
        %v5358 = vld [vmem:[#allocation3 + $0x90] sm:$0xff]
        %v5359 = vld [vmem:[#allocation3 + $0x98] sm:$0xff]
        %v5360 = vld [vmem:[#allocation3 + $0xa0] sm:$0xff]
        %v5361 = vld [vmem:[#allocation3 + $0xa8] sm:$0xff]
        %v5362 = vld [vmem:[#allocation3 + $0xb0] sm:$0xff]
        %v5363 = vld [vmem:[#allocation3 + $0xb8] sm:$0xff]
        %v5364 = vld [vmem:[#allocation3 + $0xc0] sm:$0xff]
        %v5365 = vld [vmem:[#allocation3 + $0xc8] sm:$0xff]
        %v5366 = vld [vmem:[#allocation3 + $0xd0] sm:$0xff]
        %v5367 = vld [vmem:[#allocation3 + $0xd8] sm:$0xff]
        %v5368 = vld [vmem:[#allocation3 + $0xe0] sm:$0xff]
        %v5369 = vld [vmem:[#allocation3 + $0xe8] sm:$0xff]
        %v5370 = vld [vmem:[#allocation3 + $0xf0] sm:$0xff]
        %v5371 = vld [vmem:[#allocation3 + $0xf8] sm:$0xff]
        %v5372 = vld [vmem:[#allocation3 + $0x100] sm:$0xff]
        %v5373 = vld [vmem:[#allocation3 + $0x108] sm:$0xff]
        %v5374 = vld [vmem:[#allocation3 + $0x110] sm:$0xff]
        %v5375 = vld [vmem:[#allocation3 + $0x118] sm:$0xff]
        %v5376 = vld [vmem:[#allocation3 + $0x120] sm:$0xff]
        %v5377 = vld [vmem:[#allocation3 + $0x128] sm:$0xff]
        %v5378 = vld [vmem:[#allocation3 + $0x130] sm:$0xff]
        %v5379 = vld [vmem:[#allocation3 + $0x138] sm:$0xff]
        %v5380 = vld [vmem:[#allocation3 + $0x140] sm:$0xff]
        %v5381 = vld [vmem:[#allocation3 + $0x148] sm:$0xff]
        %v5382 = vld [vmem:[#allocation3 + $0x150] sm:$0xff]
        %v5383 = vld [vmem:[#allocation3 + $0x158] sm:$0xff]
        %v5384 = vld [vmem:[#allocation3 + $0x160] sm:$0xff]
        %v5385 = vld [vmem:[#allocation3 + $0x168] sm:$0xff]
        %v5386 = vld [vmem:[#allocation3 + $0x170] sm:$0xff]
        %v5387 = vld [vmem:[#allocation3 + $0x178] sm:$0xff]
        %v5388 = vadd.f32 %v5340, %v5102
        %v5389 = vadd.f32 %v5341, %v5107
        %v5390 = vadd.f32 %v5342, %v5112
        %v5391 = vadd.f32 %v5343, %v5117
        %v5392 = vadd.f32 %v5344, %v5122
        %v5393 = vadd.f32 %v5345, %v5127
        %v5394 = vadd.f32 %v5346, %v5132
        %v5395 = vadd.f32 %v5347, %v5137
        %v5396 = vadd.f32 %v5348, %v5142
        %v5397 = vadd.f32 %v5349, %v5147
        %v5398 = vadd.f32 %v5350, %v5152
        %v5399 = vadd.f32 %v5351, %v5157
        %v5400 = vadd.f32 %v5352, %v5162
        %v5401 = vadd.f32 %v5353, %v5167
        %v5402 = vadd.f32 %v5354, %v5172
        %v5403 = vadd.f32 %v5355, %v5177
        %v5404 = vadd.f32 %v5356, %v5182
        %v5405 = vadd.f32 %v5357, %v5187
        %v5406 = vadd.f32 %v5358, %v5192
        %v5407 = vadd.f32 %v5359, %v5197
        %v5408 = vadd.f32 %v5360, %v5202
        %v5409 = vadd.f32 %v5361, %v5207
        %v5410 = vadd.f32 %v5362, %v5212
        %v5411 = vadd.f32 %v5363, %v5217
        %v5412 = vadd.f32 %v5364, %v5222
        %v5413 = vadd.f32 %v5365, %v5227
        %v5414 = vadd.f32 %v5366, %v5232
        %v5415 = vadd.f32 %v5367, %v5237
        %v5416 = vadd.f32 %v5368, %v5242
        %v5417 = vadd.f32 %v5369, %v5247
        %v5418 = vadd.f32 %v5370, %v5252
        %v5419 = vadd.f32 %v5371, %v5257
        %v5420 = vadd.f32 %v5372, %v5262
        %v5421 = vadd.f32 %v5373, %v5267
        %v5422 = vadd.f32 %v5374, %v5272
        %v5423 = vadd.f32 %v5375, %v5277
        %v5424 = vadd.f32 %v5376, %v5282
        %v5425 = vadd.f32 %v5377, %v5287
        %v5426 = vadd.f32 %v5378, %v5292
        %v5427 = vadd.f32 %v5379, %v5297
        %v5428 = vadd.f32 %v5380, %v5302
        %v5429 = vadd.f32 %v5381, %v5307
        %v5430 = vadd.f32 %v5382, %v5312
        %v5431 = vadd.f32 %v5383, %v5317
        %v5432 = vadd.f32 %v5384, %v5322
        %v5433 = vadd.f32 %v5385, %v5327
        %v5434 = vadd.f32 %v5386, %v5332
        %v5435 = vadd.f32 %v5387, %v5337
        %5436 = vst [vmem:[#allocation3] sm:$0xff] %v5388
        %5437 = vst [vmem:[#allocation3 + $0x8] sm:$0xff] %v5389
        %5438 = vst [vmem:[#allocation3 + $0x10] sm:$0xff] %v5390
        %5439 = vst [vmem:[#allocation3 + $0x18] sm:$0xff] %v5391
        %5440 = vst [vmem:[#allocation3 + $0x20] sm:$0xff] %v5392
        %5441 = vst [vmem:[#allocation3 + $0x28] sm:$0xff] %v5393
        %5442 = vst [vmem:[#allocation3 + $0x30] sm:$0xff] %v5394
        %5443 = vst [vmem:[#allocation3 + $0x38] sm:$0xff] %v5395
        %5444 = vst [vmem:[#allocation3 + $0x40] sm:$0xff] %v5396
        %5445 = vst [vmem:[#allocation3 + $0x48] sm:$0xff] %v5397
        %5446 = vst [vmem:[#allocation3 + $0x50] sm:$0xff] %v5398
        %5447 = vst [vmem:[#allocation3 + $0x58] sm:$0xff] %v5399
        %5448 = vst [vmem:[#allocation3 + $0x60] sm:$0xff] %v5400
        %5449 = vst [vmem:[#allocation3 + $0x68] sm:$0xff] %v5401
        %5450 = vst [vmem:[#allocation3 + $0x70] sm:$0xff] %v5402
        %5451 = vst [vmem:[#allocation3 + $0x78] sm:$0xff] %v5403
        %5452 = vst [vmem:[#allocation3 + $0x80] sm:$0xff] %v5404
        %5453 = vst [vmem:[#allocation3 + $0x88] sm:$0xff] %v5405
        %5454 = vst [vmem:[#allocation3 + $0x90] sm:$0xff] %v5406
        %5455 = vst [vmem:[#allocation3 + $0x98] sm:$0xff] %v5407
        %5456 = vst [vmem:[#allocation3 + $0xa0] sm:$0xff] %v5408
        %5457 = vst [vmem:[#allocation3 + $0xa8] sm:$0xff] %v5409
        %5458 = vst [vmem:[#allocation3 + $0xb0] sm:$0xff] %v5410
        %5459 = vst [vmem:[#allocation3 + $0xb8] sm:$0xff] %v5411
        %5460 = vst [vmem:[#allocation3 + $0xc0] sm:$0xff] %v5412
        %5461 = vst [vmem:[#allocation3 + $0xc8] sm:$0xff] %v5413
        %5462 = vst [vmem:[#allocation3 + $0xd0] sm:$0xff] %v5414
        %5463 = vst [vmem:[#allocation3 + $0xd8] sm:$0xff] %v5415
        %5464 = vst [vmem:[#allocation3 + $0xe0] sm:$0xff] %v5416
        %5465 = vst [vmem:[#allocation3 + $0xe8] sm:$0xff] %v5417
        %5466 = vst [vmem:[#allocation3 + $0xf0] sm:$0xff] %v5418
        %5467 = vst [vmem:[#allocation3 + $0xf8] sm:$0xff] %v5419
        %5468 = vst [vmem:[#allocation3 + $0x100] sm:$0xff] %v5420
        %5469 = vst [vmem:[#allocation3 + $0x108] sm:$0xff] %v5421
        %5470 = vst [vmem:[#allocation3 + $0x110] sm:$0xff] %v5422
        %5471 = vst [vmem:[#allocation3 + $0x118] sm:$0xff] %v5423
        %5472 = vst [vmem:[#allocation3 + $0x120] sm:$0xff] %v5424
        %5473 = vst [vmem:[#allocation3 + $0x128] sm:$0xff] %v5425
        %5474 = vst [vmem:[#allocation3 + $0x130] sm:$0xff] %v5426
        %5475 = vst [vmem:[#allocation3 + $0x138] sm:$0xff] %v5427
        %5476 = vst [vmem:[#allocation3 + $0x140] sm:$0xff] %v5428
        %5477 = vst [vmem:[#allocation3 + $0x148] sm:$0xff] %v5429
        %5478 = vst [vmem:[#allocation3 + $0x150] sm:$0xff] %v5430
        %5479 = vst [vmem:[#allocation3 + $0x158] sm:$0xff] %v5431
        %5480 = vst [vmem:[#allocation3 + $0x160] sm:$0xff] %v5432
        %5481 = vst [vmem:[#allocation3 + $0x168] sm:$0xff] %v5433
        %5482 = vst [vmem:[#allocation3 + $0x170] sm:$0xff] %v5434
        %5483 = vst [vmem:[#allocation3 + $0x178] sm:$0xff] %v5435
        %v5484 = vld [vmem:[#allocation2 + $0x32] sm:$0xff]
        %v5485 = vld [vmem:[#allocation2 + $0x3a] sm:$0xff]
        %v5486 = vld [vmem:[#allocation2 + $0x42] sm:$0xff]
        %v5487 = vld [vmem:[#allocation2 + $0x4a] sm:$0xff]
        %v5488 = vld [vmem:[#allocation2 + $0x52] sm:$0xff]
        %v5489 = vld [vmem:[#allocation2 + $0x5a] sm:$0xff]
        %v5490 = vld [vmem:[#allocation2 + $0x62] sm:$0xff]
        %v5491 = vld [vmem:[#allocation2 + $0x6a] sm:$0xff]
        %v5492 = vld [vmem:[#allocation2 + $0x72] sm:$0xff]
        %v5493 = vld [vmem:[#allocation2 + $0x7a] sm:$0xff]
        %v5494 = vld [vmem:[#allocation2 + $0x82] sm:$0xff]
        %v5495 = vld [vmem:[#allocation2 + $0x8a] sm:$0xff]
        %v5496 = vld [vmem:[#allocation2 + $0x92] sm:$0xff]
        %v5497 = vld [vmem:[#allocation2 + $0x9a] sm:$0xff]
        %v5498 = vld [vmem:[#allocation2 + $0xa2] sm:$0xff]
        %v5499 = vld [vmem:[#allocation2 + $0xaa] sm:$0xff]
        %v5500 = vld [vmem:[#allocation2 + $0xb2] sm:$0xff]
        %v5501 = vld [vmem:[#allocation2 + $0xba] sm:$0xff]
        %v5502 = vld [vmem:[#allocation2 + $0xc2] sm:$0xff]
        %v5503 = vld [vmem:[#allocation2 + $0xca] sm:$0xff]
        %v5504 = vld [vmem:[#allocation2 + $0xd2] sm:$0xff]
        %v5505 = vld [vmem:[#allocation2 + $0xda] sm:$0xff]
        %v5506 = vld [vmem:[#allocation2 + $0xe2] sm:$0xff]
        %v5507 = vld [vmem:[#allocation2 + $0xea] sm:$0xff]
        %v5508 = vld [vmem:[#allocation2 + $0xf2] sm:$0xff]
        %v5509 = vld [vmem:[#allocation2 + $0xfa] sm:$0xff]
        %v5510 = vld [vmem:[#allocation2 + $0x102] sm:$0xff]
        %v5511 = vld [vmem:[#allocation2 + $0x10a] sm:$0xff]
        %v5512 = vld [vmem:[#allocation2 + $0x112] sm:$0xff]
        %v5513 = vld [vmem:[#allocation2 + $0x11a] sm:$0xff]
        %v5514 = vld [vmem:[#allocation2 + $0x122] sm:$0xff]
        %v5515 = vld [vmem:[#allocation2 + $0x12a] sm:$0xff]
        %v5516 = vld [vmem:[#allocation2 + $0x132] sm:$0xff]
        %v5517 = vld [vmem:[#allocation2 + $0x13a] sm:$0xff]
        %v5518 = vld [vmem:[#allocation2 + $0x142] sm:$0xff]
        %v5519 = vld [vmem:[#allocation2 + $0x14a] sm:$0xff]
        %v5520 = vld [vmem:[#allocation2 + $0x152] sm:$0xff]
        %v5521 = vld [vmem:[#allocation2 + $0x15a] sm:$0xff]
        %v5522 = vld [vmem:[#allocation2 + $0x162] sm:$0xff]
        %v5523 = vld [vmem:[#allocation2 + $0x16a] sm:$0xff]
        %v5524 = vld [vmem:[#allocation2 + $0x172] sm:$0xff]
        %v5525 = vld [vmem:[#allocation2 + $0x17a] sm:$0xff]
        %v5526 = vld [vmem:[#allocation2 + $0x182] sm:$0xff]
        %v5527 = vld [vmem:[#allocation2 + $0x18a] sm:$0xff]
        %v5528 = vld [vmem:[#allocation2 + $0x192] sm:$0xff]
        %v5529 = vld [vmem:[#allocation2 + $0x19a] sm:$0xff]
        %v5530 = vld [vmem:[#allocation2 + $0x1a2] sm:$0xff]
        %v5531 = vld [vmem:[#allocation2 + $0x1aa] sm:$0xff]
        %s5532 = scalar_lea.vmem %s2, 32
        %v5533 = vld [vmem:[%s5532] sm:$0xf]
        %v5535 = vsel %vm345, %v5484, 0
        %v5538 = vsel %vm345, %v5485, 0
        %v5541 = vsel %vm345, %v5486, 0
        %v5544 = vsel %vm345, %v5487, 0
        %v5547 = vsel %vm345, %v5488, 0
        %v5550 = vsel %vm345, %v5489, 0
        %v5553 = vsel %vm345, %v5490, 0
        %v5556 = vsel %vm345, %v5491, 0
        %v5559 = vsel %vm345, %v5492, 0
        %v5562 = vsel %vm345, %v5493, 0
        %v5565 = vsel %vm345, %v5494, 0
        %v5568 = vsel %vm345, %v5495, 0
        %v5571 = vsel %vm345, %v5496, 0
        %v5574 = vsel %vm345, %v5497, 0
        %v5577 = vsel %vm345, %v5498, 0
        %v5580 = vsel %vm345, %v5499, 0
        %v5583 = vsel %vm345, %v5500, 0
        %v5586 = vsel %vm345, %v5501, 0
        %v5589 = vsel %vm345, %v5502, 0
        %v5592 = vsel %vm345, %v5503, 0
        %v5595 = vsel %vm345, %v5504, 0
        %v5598 = vsel %vm345, %v5505, 0
        %v5601 = vsel %vm345, %v5506, 0
        %v5604 = vsel %vm345, %v5507, 0
        %v5607 = vsel %vm345, %v5508, 0
        %v5610 = vsel %vm345, %v5509, 0
        %v5613 = vsel %vm345, %v5510, 0
        %v5616 = vsel %vm345, %v5511, 0
        %v5619 = vsel %vm345, %v5512, 0
        %v5622 = vsel %vm345, %v5513, 0
        %v5625 = vsel %vm345, %v5514, 0
        %v5628 = vsel %vm345, %v5515, 0
        %v5631 = vsel %vm345, %v5516, 0
        %v5634 = vsel %vm345, %v5517, 0
        %v5637 = vsel %vm345, %v5518, 0
        %v5640 = vsel %vm345, %v5519, 0
        %v5643 = vsel %vm345, %v5520, 0
        %v5646 = vsel %vm345, %v5521, 0
        %v5649 = vsel %vm345, %v5522, 0
        %v5652 = vsel %vm345, %v5523, 0
        %v5655 = vsel %vm345, %v5524, 0
        %v5658 = vsel %vm345, %v5525, 0
        %v5661 = vsel %vm345, %v5526, 0
        %v5664 = vsel %vm345, %v5527, 0
        %v5667 = vsel %vm345, %v5528, 0
        %v5670 = vsel %vm345, %v5529, 0
        %v5673 = vsel %vm345, %v5530, 0
        %v5676 = vsel %vm345, %v5531, 0
        %v5679 = vsel %vm605, %v5533, 0
        %5681 = vmatprep.subr.mxu0 0.0
        %5682 = vmatpush1.msra.mxu0 %v5679
        %5683 = vmatprep.subr.mxu0 0.0
        %5684 = vmatpush1.msra.mxu0 0.0
        %5685 = vmatprep.subr.mxu0 0.0
        %5686 = vmatpush1.msra.mxu0 0.0
        %5687 = vmatprep.subr.mxu0 0.0
        %5688 = vmatpush1.msra.mxu0 0.0
        %5689 = vmatprep.subr.mxu0 0.0
        %5690 = vmatpush1.msra.mxu0 0.0
        %5691 = vmatprep.subr.mxu0 0.0
        %5692 = vmatpush1.msra.mxu0 0.0
        %5693 = vmatprep.subr.mxu0 0.0
        %5694 = vmatpush1.msra.mxu0 0.0
        %5695 = vmatprep.subr.mxu0 0.0
        %5696 = vmatpush1.msra.mxu0 0.0
        %5697 = vmatprep.subr.mxu0 0.0
        %5698 = vmatpush1.msra.mxu0 0.0
        %5699 = vmatprep.subr.mxu0 0.0
        %5700 = vmatpush1.msra.mxu0 0.0
        %5701 = vmatprep.subr.mxu0 0.0
        %5702 = vmatpush1.msra.mxu0 0.0
        %5703 = vmatprep.subr.mxu0 0.0
        %5704 = vmatpush1.msra.mxu0 0.0
        %5705 = vmatprep.subr.mxu0 0.0
        %5706 = vmatpush1.msra.mxu0 0.0
        %5707 = vmatprep.subr.mxu0 0.0
        %5708 = vmatpush1.msra.mxu0 0.0
        %5709 = vmatprep.subr.mxu0 0.0
        %5710 = vmatpush1.msra.mxu0 0.0
        %5711 = vmatprep.subr.mxu0 0.0
        %5712 = vmatpush1.msra.mxu0 0.0
        %5713 = vmatprep.subr.mxu0 0.0
        %5714 = vmatpush1.msra.mxu0 0.0
        %5715 = vmatprep.subr.mxu0 0.0
        %5716 = vmatpush1.msra.mxu0 0.0
        %5717 = vmatprep.subr.mxu0 0.0
        %5718 = vmatpush1.msra.mxu0 0.0
        %5719 = vmatprep.subr.mxu0 0.0
        %5720 = vmatpush1.msra.mxu0 0.0
        %5721 = vmatprep.subr.mxu0 0.0
        %5722 = vmatpush1.msra.mxu0 0.0
        %5723 = vmatprep.subr.mxu0 0.0
        %5724 = vmatpush1.msra.mxu0 0.0
        %5725 = vmatprep.subr.mxu0 0.0
        %5726 = vmatpush1.msra.mxu0 0.0
        %5727 = vmatprep.subr.mxu0 0.0
        %5728 = vmatpush1.msra.mxu0 0.0
        %5729 = vmatprep.subr.mxu0 0.0
        %5730 = vmatpush1.msra.mxu0 0.0
        %5731 = vmatprep.subr.mxu0 0.0
        %5732 = vmatpush1.msra.mxu0 0.0
        %5733 = vmatprep.subr.mxu0 0.0
        %5734 = vmatpush1.msra.mxu0 0.0
        %5735 = vmatprep.subr.mxu0 0.0
        %5736 = vmatpush1.msra.mxu0 0.0
        %5737 = vmatprep.subr.mxu0 0.0
        %5738 = vmatpush1.msra.mxu0 0.0
        %5739 = vmatprep.subr.mxu0 0.0
        %5740 = vmatpush1.msra.mxu0 0.0
        %5741 = vmatprep.subr.mxu0 0.0
        %5742 = vmatpush1.msra.mxu0 0.0
        %5743 = vmatprep.subr.mxu0 0.0
        %5744 = vmatpush1.msra.mxu0 0.0
        %5745 = vmatprep.mubr.f32.mxu0 0.0
        %5746 = vmatmul.mubr.f32.gmra.mrb[0].mxu0 %v5535
        %v5747 = vpop.f32.mrb[0].mxu0
        %v5748 = vadd.f32 0.0, %v5747
        %v5749 = vpop.f32.mrb[0].mxu0
        %5750 = vmatprep.mubr.f32.mxu0 0.0
        %5751 = vmatmul.mubr.f32.gmra.mrb[0].mxu0 %v5538
        %v5752 = vpop.f32.mrb[0].mxu0
        %v5753 = vadd.f32 0.0, %v5752
        %v5754 = vpop.f32.mrb[0].mxu0
        %5755 = vmatprep.mubr.f32.mxu0 0.0
        %5756 = vmatmul.mubr.f32.gmra.mrb[0].mxu0 %v5541
        %v5757 = vpop.f32.mrb[0].mxu0
        %v5758 = vadd.f32 0.0, %v5757
        %v5759 = vpop.f32.mrb[0].mxu0
        %5760 = vmatprep.mubr.f32.mxu0 0.0
        %5761 = vmatmul.mubr.f32.gmra.mrb[0].mxu0 %v5544
        %v5762 = vpop.f32.mrb[0].mxu0
        %v5763 = vadd.f32 0.0, %v5762
        %v5764 = vpop.f32.mrb[0].mxu0
        %5765 = vmatprep.mubr.f32.mxu0 0.0
        %5766 = vmatmul.mubr.f32.gmra.mrb[0].mxu0 %v5547
        %v5767 = vpop.f32.mrb[0].mxu0
        %v5768 = vadd.f32 0.0, %v5767
        %v5769 = vpop.f32.mrb[0].mxu0
        %5770 = vmatprep.mubr.f32.mxu0 0.0
        %5771 = vmatmul.mubr.f32.gmra.mrb[0].mxu0 %v5550
        %v5772 = vpop.f32.mrb[0].mxu0
        %v5773 = vadd.f32 0.0, %v5772
        %v5774 = vpop.f32.mrb[0].mxu0
        %5775 = vmatprep.mubr.f32.mxu0 0.0
        %5776 = vmatmul.mubr.f32.gmra.mrb[0].mxu0 %v5553
        %v5777 = vpop.f32.mrb[0].mxu0
        %v5778 = vadd.f32 0.0, %v5777
        %v5779 = vpop.f32.mrb[0].mxu0
        %5780 = vmatprep.mubr.f32.mxu0 0.0
        %5781 = vmatmul.mubr.f32.gmra.mrb[0].mxu0 %v5556
        %v5782 = vpop.f32.mrb[0].mxu0
        %v5783 = vadd.f32 0.0, %v5782
        %v5784 = vpop.f32.mrb[0].mxu0
        %5785 = vmatprep.mubr.f32.mxu0 0.0
        %5786 = vmatmul.mubr.f32.gmra.mrb[0].mxu0 %v5559
        %v5787 = vpop.f32.mrb[0].mxu0
        %v5788 = vadd.f32 0.0, %v5787
        %v5789 = vpop.f32.mrb[0].mxu0
        %5790 = vmatprep.mubr.f32.mxu0 0.0
        %5791 = vmatmul.mubr.f32.gmra.mrb[0].mxu0 %v5562
        %v5792 = vpop.f32.mrb[0].mxu0
        %v5793 = vadd.f32 0.0, %v5792
        %v5794 = vpop.f32.mrb[0].mxu0
        %5795 = vmatprep.mubr.f32.mxu0 0.0
        %5796 = vmatmul.mubr.f32.gmra.mrb[0].mxu0 %v5565
        %v5797 = vpop.f32.mrb[0].mxu0
        %v5798 = vadd.f32 0.0, %v5797
        %v5799 = vpop.f32.mrb[0].mxu0
        %5800 = vmatprep.mubr.f32.mxu0 0.0
        %5801 = vmatmul.mubr.f32.gmra.mrb[0].mxu0 %v5568
        %v5802 = vpop.f32.mrb[0].mxu0
        %v5803 = vadd.f32 0.0, %v5802
        %v5804 = vpop.f32.mrb[0].mxu0
        %5805 = vmatprep.mubr.f32.mxu0 0.0
        %5806 = vmatmul.mubr.f32.gmra.mrb[0].mxu0 %v5571
        %v5807 = vpop.f32.mrb[0].mxu0
        %v5808 = vadd.f32 0.0, %v5807
        %v5809 = vpop.f32.mrb[0].mxu0
        %5810 = vmatprep.mubr.f32.mxu0 0.0
        %5811 = vmatmul.mubr.f32.gmra.mrb[0].mxu0 %v5574
        %v5812 = vpop.f32.mrb[0].mxu0
        %v5813 = vadd.f32 0.0, %v5812
        %v5814 = vpop.f32.mrb[0].mxu0
        %5815 = vmatprep.mubr.f32.mxu0 0.0
        %5816 = vmatmul.mubr.f32.gmra.mrb[0].mxu0 %v5577
        %v5817 = vpop.f32.mrb[0].mxu0
        %v5818 = vadd.f32 0.0, %v5817
        %v5819 = vpop.f32.mrb[0].mxu0
        %5820 = vmatprep.mubr.f32.mxu0 0.0
        %5821 = vmatmul.mubr.f32.gmra.mrb[0].mxu0 %v5580
        %v5822 = vpop.f32.mrb[0].mxu0
        %v5823 = vadd.f32 0.0, %v5822
        %v5824 = vpop.f32.mrb[0].mxu0
        %5825 = vmatprep.mubr.f32.mxu0 0.0
        %5826 = vmatmul.mubr.f32.gmra.mrb[0].mxu0 %v5583
        %v5827 = vpop.f32.mrb[0].mxu0
        %v5828 = vadd.f32 0.0, %v5827
        %v5829 = vpop.f32.mrb[0].mxu0
        %5830 = vmatprep.mubr.f32.mxu0 0.0
        %5831 = vmatmul.mubr.f32.gmra.mrb[0].mxu0 %v5586
        %v5832 = vpop.f32.mrb[0].mxu0
        %v5833 = vadd.f32 0.0, %v5832
        %v5834 = vpop.f32.mrb[0].mxu0
        %5835 = vmatprep.mubr.f32.mxu0 0.0
        %5836 = vmatmul.mubr.f32.gmra.mrb[0].mxu0 %v5589
        %v5837 = vpop.f32.mrb[0].mxu0
        %v5838 = vadd.f32 0.0, %v5837
        %v5839 = vpop.f32.mrb[0].mxu0
        %5840 = vmatprep.mubr.f32.mxu0 0.0
        %5841 = vmatmul.mubr.f32.gmra.mrb[0].mxu0 %v5592
        %v5842 = vpop.f32.mrb[0].mxu0
        %v5843 = vadd.f32 0.0, %v5842
        %v5844 = vpop.f32.mrb[0].mxu0
        %5845 = vmatprep.mubr.f32.mxu0 0.0
        %5846 = vmatmul.mubr.f32.gmra.mrb[0].mxu0 %v5595
        %v5847 = vpop.f32.mrb[0].mxu0
        %v5848 = vadd.f32 0.0, %v5847
        %v5849 = vpop.f32.mrb[0].mxu0
        %5850 = vmatprep.mubr.f32.mxu0 0.0
        %5851 = vmatmul.mubr.f32.gmra.mrb[0].mxu0 %v5598
        %v5852 = vpop.f32.mrb[0].mxu0
        %v5853 = vadd.f32 0.0, %v5852
        %v5854 = vpop.f32.mrb[0].mxu0
        %5855 = vmatprep.mubr.f32.mxu0 0.0
        %5856 = vmatmul.mubr.f32.gmra.mrb[0].mxu0 %v5601
        %v5857 = vpop.f32.mrb[0].mxu0
        %v5858 = vadd.f32 0.0, %v5857
        %v5859 = vpop.f32.mrb[0].mxu0
        %5860 = vmatprep.mubr.f32.mxu0 0.0
        %5861 = vmatmul.mubr.f32.gmra.mrb[0].mxu0 %v5604
        %v5862 = vpop.f32.mrb[0].mxu0
        %v5863 = vadd.f32 0.0, %v5862
        %v5864 = vpop.f32.mrb[0].mxu0
        %5865 = vmatprep.mubr.f32.mxu0 0.0
        %5866 = vmatmul.mubr.f32.gmra.mrb[0].mxu0 %v5607
        %v5867 = vpop.f32.mrb[0].mxu0
        %v5868 = vadd.f32 0.0, %v5867
        %v5869 = vpop.f32.mrb[0].mxu0
        %5870 = vmatprep.mubr.f32.mxu0 0.0
        %5871 = vmatmul.mubr.f32.gmra.mrb[0].mxu0 %v5610
        %v5872 = vpop.f32.mrb[0].mxu0
        %v5873 = vadd.f32 0.0, %v5872
        %v5874 = vpop.f32.mrb[0].mxu0
        %5875 = vmatprep.mubr.f32.mxu0 0.0
        %5876 = vmatmul.mubr.f32.gmra.mrb[0].mxu0 %v5613
        %v5877 = vpop.f32.mrb[0].mxu0
        %v5878 = vadd.f32 0.0, %v5877
        %v5879 = vpop.f32.mrb[0].mxu0
        %5880 = vmatprep.mubr.f32.mxu0 0.0
        %5881 = vmatmul.mubr.f32.gmra.mrb[0].mxu0 %v5616
        %v5882 = vpop.f32.mrb[0].mxu0
        %v5883 = vadd.f32 0.0, %v5882
        %v5884 = vpop.f32.mrb[0].mxu0
        %5885 = vmatprep.mubr.f32.mxu0 0.0
        %5886 = vmatmul.mubr.f32.gmra.mrb[0].mxu0 %v5619
        %v5887 = vpop.f32.mrb[0].mxu0
        %v5888 = vadd.f32 0.0, %v5887
        %v5889 = vpop.f32.mrb[0].mxu0
        %5890 = vmatprep.mubr.f32.mxu0 0.0
        %5891 = vmatmul.mubr.f32.gmra.mrb[0].mxu0 %v5622
        %v5892 = vpop.f32.mrb[0].mxu0
        %v5893 = vadd.f32 0.0, %v5892
        %v5894 = vpop.f32.mrb[0].mxu0
        %5895 = vmatprep.mubr.f32.mxu0 0.0
        %5896 = vmatmul.mubr.f32.gmra.mrb[0].mxu0 %v5625
        %v5897 = vpop.f32.mrb[0].mxu0
        %v5898 = vadd.f32 0.0, %v5897
        %v5899 = vpop.f32.mrb[0].mxu0
        %5900 = vmatprep.mubr.f32.mxu0 0.0
        %5901 = vmatmul.mubr.f32.gmra.mrb[0].mxu0 %v5628
        %v5902 = vpop.f32.mrb[0].mxu0
        %v5903 = vadd.f32 0.0, %v5902
        %v5904 = vpop.f32.mrb[0].mxu0
        %5905 = vmatprep.mubr.f32.mxu0 0.0
        %5906 = vmatmul.mubr.f32.gmra.mrb[0].mxu0 %v5631
        %v5907 = vpop.f32.mrb[0].mxu0
        %v5908 = vadd.f32 0.0, %v5907
        %v5909 = vpop.f32.mrb[0].mxu0
        %5910 = vmatprep.mubr.f32.mxu0 0.0
        %5911 = vmatmul.mubr.f32.gmra.mrb[0].mxu0 %v5634
        %v5912 = vpop.f32.mrb[0].mxu0
        %v5913 = vadd.f32 0.0, %v5912
        %v5914 = vpop.f32.mrb[0].mxu0
        %5915 = vmatprep.mubr.f32.mxu0 0.0
        %5916 = vmatmul.mubr.f32.gmra.mrb[0].mxu0 %v5637
        %v5917 = vpop.f32.mrb[0].mxu0
        %v5918 = vadd.f32 0.0, %v5917
        %v5919 = vpop.f32.mrb[0].mxu0
        %5920 = vmatprep.mubr.f32.mxu0 0.0
        %5921 = vmatmul.mubr.f32.gmra.mrb[0].mxu0 %v5640
        %v5922 = vpop.f32.mrb[0].mxu0
        %v5923 = vadd.f32 0.0, %v5922
        %v5924 = vpop.f32.mrb[0].mxu0
        %5925 = vmatprep.mubr.f32.mxu0 0.0
        %5926 = vmatmul.mubr.f32.gmra.mrb[0].mxu0 %v5643
        %v5927 = vpop.f32.mrb[0].mxu0
        %v5928 = vadd.f32 0.0, %v5927
        %v5929 = vpop.f32.mrb[0].mxu0
        %5930 = vmatprep.mubr.f32.mxu0 0.0
        %5931 = vmatmul.mubr.f32.gmra.mrb[0].mxu0 %v5646
        %v5932 = vpop.f32.mrb[0].mxu0
        %v5933 = vadd.f32 0.0, %v5932
        %v5934 = vpop.f32.mrb[0].mxu0
        %5935 = vmatprep.mubr.f32.mxu0 0.0
        %5936 = vmatmul.mubr.f32.gmra.mrb[0].mxu0 %v5649
        %v5937 = vpop.f32.mrb[0].mxu0
        %v5938 = vadd.f32 0.0, %v5937
        %v5939 = vpop.f32.mrb[0].mxu0
        %5940 = vmatprep.mubr.f32.mxu0 0.0
        %5941 = vmatmul.mubr.f32.gmra.mrb[0].mxu0 %v5652
        %v5942 = vpop.f32.mrb[0].mxu0
        %v5943 = vadd.f32 0.0, %v5942
        %v5944 = vpop.f32.mrb[0].mxu0
        %5945 = vmatprep.mubr.f32.mxu0 0.0
        %5946 = vmatmul.mubr.f32.gmra.mrb[0].mxu0 %v5655
        %v5947 = vpop.f32.mrb[0].mxu0
        %v5948 = vadd.f32 0.0, %v5947
        %v5949 = vpop.f32.mrb[0].mxu0
        %5950 = vmatprep.mubr.f32.mxu0 0.0
        %5951 = vmatmul.mubr.f32.gmra.mrb[0].mxu0 %v5658
        %v5952 = vpop.f32.mrb[0].mxu0
        %v5953 = vadd.f32 0.0, %v5952
        %v5954 = vpop.f32.mrb[0].mxu0
        %5955 = vmatprep.mubr.f32.mxu0 0.0
        %5956 = vmatmul.mubr.f32.gmra.mrb[0].mxu0 %v5661
        %v5957 = vpop.f32.mrb[0].mxu0
        %v5958 = vadd.f32 0.0, %v5957
        %v5959 = vpop.f32.mrb[0].mxu0
        %5960 = vmatprep.mubr.f32.mxu0 0.0
        %5961 = vmatmul.mubr.f32.gmra.mrb[0].mxu0 %v5664
        %v5962 = vpop.f32.mrb[0].mxu0
        %v5963 = vadd.f32 0.0, %v5962
        %v5964 = vpop.f32.mrb[0].mxu0
        %5965 = vmatprep.mubr.f32.mxu0 0.0
        %5966 = vmatmul.mubr.f32.gmra.mrb[0].mxu0 %v5667
        %v5967 = vpop.f32.mrb[0].mxu0
        %v5968 = vadd.f32 0.0, %v5967
        %v5969 = vpop.f32.mrb[0].mxu0
        %5970 = vmatprep.mubr.f32.mxu0 0.0
        %5971 = vmatmul.mubr.f32.gmra.mrb[0].mxu0 %v5670
        %v5972 = vpop.f32.mrb[0].mxu0
        %v5973 = vadd.f32 0.0, %v5972
        %v5974 = vpop.f32.mrb[0].mxu0
        %5975 = vmatprep.mubr.f32.mxu0 0.0
        %5976 = vmatmul.mubr.f32.gmra.mrb[0].mxu0 %v5673
        %v5977 = vpop.f32.mrb[0].mxu0
        %v5978 = vadd.f32 0.0, %v5977
        %v5979 = vpop.f32.mrb[0].mxu0
        %5980 = vmatprep.mubr.f32.mxu0 0.0
        %5981 = vmatmul.mubr.f32.gmra.mrb[0].mxu0 %v5676
        %v5982 = vpop.f32.mrb[0].mxu0
        %v5983 = vadd.f32 0.0, %v5982
        %v5984 = vpop.f32.mrb[0].mxu0
        %5985 = vdwg.mxu0
        %v5986 = vld [vmem:[#allocation3] sm:$0xff]
        %v5987 = vld [vmem:[#allocation3 + $0x8] sm:$0xff]
        %v5988 = vld [vmem:[#allocation3 + $0x10] sm:$0xff]
        %v5989 = vld [vmem:[#allocation3 + $0x18] sm:$0xff]
        %v5990 = vld [vmem:[#allocation3 + $0x20] sm:$0xff]
        %v5991 = vld [vmem:[#allocation3 + $0x28] sm:$0xff]
        %v5992 = vld [vmem:[#allocation3 + $0x30] sm:$0xff]
        %v5993 = vld [vmem:[#allocation3 + $0x38] sm:$0xff]
        %v5994 = vld [vmem:[#allocation3 + $0x40] sm:$0xff]
        %v5995 = vld [vmem:[#allocation3 + $0x48] sm:$0xff]
        %v5996 = vld [vmem:[#allocation3 + $0x50] sm:$0xff]
        %v5997 = vld [vmem:[#allocation3 + $0x58] sm:$0xff]
        %v5998 = vld [vmem:[#allocation3 + $0x60] sm:$0xff]
        %v5999 = vld [vmem:[#allocation3 + $0x68] sm:$0xff]
        %v6000 = vld [vmem:[#allocation3 + $0x70] sm:$0xff]
        %v6001 = vld [vmem:[#allocation3 + $0x78] sm:$0xff]
        %v6002 = vld [vmem:[#allocation3 + $0x80] sm:$0xff]
        %v6003 = vld [vmem:[#allocation3 + $0x88] sm:$0xff]
        %v6004 = vld [vmem:[#allocation3 + $0x90] sm:$0xff]
        %v6005 = vld [vmem:[#allocation3 + $0x98] sm:$0xff]
        %v6006 = vld [vmem:[#allocation3 + $0xa0] sm:$0xff]
        %v6007 = vld [vmem:[#allocation3 + $0xa8] sm:$0xff]
        %v6008 = vld [vmem:[#allocation3 + $0xb0] sm:$0xff]
        %v6009 = vld [vmem:[#allocation3 + $0xb8] sm:$0xff]
        %v6010 = vld [vmem:[#allocation3 + $0xc0] sm:$0xff]
        %v6011 = vld [vmem:[#allocation3 + $0xc8] sm:$0xff]
        %v6012 = vld [vmem:[#allocation3 + $0xd0] sm:$0xff]
        %v6013 = vld [vmem:[#allocation3 + $0xd8] sm:$0xff]
        %v6014 = vld [vmem:[#allocation3 + $0xe0] sm:$0xff]
        %v6015 = vld [vmem:[#allocation3 + $0xe8] sm:$0xff]
        %v6016 = vld [vmem:[#allocation3 + $0xf0] sm:$0xff]
        %v6017 = vld [vmem:[#allocation3 + $0xf8] sm:$0xff]
        %v6018 = vld [vmem:[#allocation3 + $0x100] sm:$0xff]
        %v6019 = vld [vmem:[#allocation3 + $0x108] sm:$0xff]
        %v6020 = vld [vmem:[#allocation3 + $0x110] sm:$0xff]
        %v6021 = vld [vmem:[#allocation3 + $0x118] sm:$0xff]
        %v6022 = vld [vmem:[#allocation3 + $0x120] sm:$0xff]
        %v6023 = vld [vmem:[#allocation3 + $0x128] sm:$0xff]
        %v6024 = vld [vmem:[#allocation3 + $0x130] sm:$0xff]
        %v6025 = vld [vmem:[#allocation3 + $0x138] sm:$0xff]
        %v6026 = vld [vmem:[#allocation3 + $0x140] sm:$0xff]
        %v6027 = vld [vmem:[#allocation3 + $0x148] sm:$0xff]
        %v6028 = vld [vmem:[#allocation3 + $0x150] sm:$0xff]
        %v6029 = vld [vmem:[#allocation3 + $0x158] sm:$0xff]
        %v6030 = vld [vmem:[#allocation3 + $0x160] sm:$0xff]
        %v6031 = vld [vmem:[#allocation3 + $0x168] sm:$0xff]
        %v6032 = vld [vmem:[#allocation3 + $0x170] sm:$0xff]
        %v6033 = vld [vmem:[#allocation3 + $0x178] sm:$0xff]
        %v6034 = vadd.f32 %v5986, %v5748
        %v6035 = vadd.f32 %v5987, %v5753
        %v6036 = vadd.f32 %v5988, %v5758
        %v6037 = vadd.f32 %v5989, %v5763
        %v6038 = vadd.f32 %v5990, %v5768
        %v6039 = vadd.f32 %v5991, %v5773
        %v6040 = vadd.f32 %v5992, %v5778
        %v6041 = vadd.f32 %v5993, %v5783
        %v6042 = vadd.f32 %v5994, %v5788
        %v6043 = vadd.f32 %v5995, %v5793
        %v6044 = vadd.f32 %v5996, %v5798
        %v6045 = vadd.f32 %v5997, %v5803
        %v6046 = vadd.f32 %v5998, %v5808
        %v6047 = vadd.f32 %v5999, %v5813
        %v6048 = vadd.f32 %v6000, %v5818
        %v6049 = vadd.f32 %v6001, %v5823
        %v6050 = vadd.f32 %v6002, %v5828
        %v6051 = vadd.f32 %v6003, %v5833
        %v6052 = vadd.f32 %v6004, %v5838
        %v6053 = vadd.f32 %v6005, %v5843
        %v6054 = vadd.f32 %v6006, %v5848
        %v6055 = vadd.f32 %v6007, %v5853
        %v6056 = vadd.f32 %v6008, %v5858
        %v6057 = vadd.f32 %v6009, %v5863
        %v6058 = vadd.f32 %v6010, %v5868
        %v6059 = vadd.f32 %v6011, %v5873
        %v6060 = vadd.f32 %v6012, %v5878
        %v6061 = vadd.f32 %v6013, %v5883
        %v6062 = vadd.f32 %v6014, %v5888
        %v6063 = vadd.f32 %v6015, %v5893
        %v6064 = vadd.f32 %v6016, %v5898
        %v6065 = vadd.f32 %v6017, %v5903
        %v6066 = vadd.f32 %v6018, %v5908
        %v6067 = vadd.f32 %v6019, %v5913
        %v6068 = vadd.f32 %v6020, %v5918
        %v6069 = vadd.f32 %v6021, %v5923
        %v6070 = vadd.f32 %v6022, %v5928
        %v6071 = vadd.f32 %v6023, %v5933
        %v6072 = vadd.f32 %v6024, %v5938
        %v6073 = vadd.f32 %v6025, %v5943
        %v6074 = vadd.f32 %v6026, %v5948
        %v6075 = vadd.f32 %v6027, %v5953
        %v6076 = vadd.f32 %v6028, %v5958
        %v6077 = vadd.f32 %v6029, %v5963
        %v6078 = vadd.f32 %v6030, %v5968
        %v6079 = vadd.f32 %v6031, %v5973
        %v6080 = vadd.f32 %v6032, %v5978
        %v6081 = vadd.f32 %v6033, %v5983
        %6082 = vst [vmem:[#allocation3] sm:$0xff] %v6034
        %6083 = vst [vmem:[#allocation3 + $0x8] sm:$0xff] %v6035
        %6084 = vst [vmem:[#allocation3 + $0x10] sm:$0xff] %v6036
        %6085 = vst [vmem:[#allocation3 + $0x18] sm:$0xff] %v6037
        %6086 = vst [vmem:[#allocation3 + $0x20] sm:$0xff] %v6038
        %6087 = vst [vmem:[#allocation3 + $0x28] sm:$0xff] %v6039
        %6088 = vst [vmem:[#allocation3 + $0x30] sm:$0xff] %v6040
        %6089 = vst [vmem:[#allocation3 + $0x38] sm:$0xff] %v6041
        %6090 = vst [vmem:[#allocation3 + $0x40] sm:$0xff] %v6042
        %6091 = vst [vmem:[#allocation3 + $0x48] sm:$0xff] %v6043
        %6092 = vst [vmem:[#allocation3 + $0x50] sm:$0xff] %v6044
        %6093 = vst [vmem:[#allocation3 + $0x58] sm:$0xff] %v6045
        %6094 = vst [vmem:[#allocation3 + $0x60] sm:$0xff] %v6046
        %6095 = vst [vmem:[#allocation3 + $0x68] sm:$0xff] %v6047
        %6096 = vst [vmem:[#allocation3 + $0x70] sm:$0xff] %v6048
        %6097 = vst [vmem:[#allocation3 + $0x78] sm:$0xff] %v6049
        %6098 = vst [vmem:[#allocation3 + $0x80] sm:$0xff] %v6050
        %6099 = vst [vmem:[#allocation3 + $0x88] sm:$0xff] %v6051
        %6100 = vst [vmem:[#allocation3 + $0x90] sm:$0xff] %v6052
        %6101 = vst [vmem:[#allocation3 + $0x98] sm:$0xff] %v6053
        %6102 = vst [vmem:[#allocation3 + $0xa0] sm:$0xff] %v6054
        %6103 = vst [vmem:[#allocation3 + $0xa8] sm:$0xff] %v6055
        %6104 = vst [vmem:[#allocation3 + $0xb0] sm:$0xff] %v6056
        %6105 = vst [vmem:[#allocation3 + $0xb8] sm:$0xff] %v6057
        %6106 = vst [vmem:[#allocation3 + $0xc0] sm:$0xff] %v6058
        %6107 = vst [vmem:[#allocation3 + $0xc8] sm:$0xff] %v6059
        %6108 = vst [vmem:[#allocation3 + $0xd0] sm:$0xff] %v6060
        %6109 = vst [vmem:[#allocation3 + $0xd8] sm:$0xff] %v6061
        %6110 = vst [vmem:[#allocation3 + $0xe0] sm:$0xff] %v6062
        %6111 = vst [vmem:[#allocation3 + $0xe8] sm:$0xff] %v6063
        %6112 = vst [vmem:[#allocation3 + $0xf0] sm:$0xff] %v6064
        %6113 = vst [vmem:[#allocation3 + $0xf8] sm:$0xff] %v6065
        %6114 = vst [vmem:[#allocation3 + $0x100] sm:$0xff] %v6066
        %6115 = vst [vmem:[#allocation3 + $0x108] sm:$0xff] %v6067
        %6116 = vst [vmem:[#allocation3 + $0x110] sm:$0xff] %v6068
        %6117 = vst [vmem:[#allocation3 + $0x118] sm:$0xff] %v6069
        %6118 = vst [vmem:[#allocation3 + $0x120] sm:$0xff] %v6070
        %6119 = vst [vmem:[#allocation3 + $0x128] sm:$0xff] %v6071
        %6120 = vst [vmem:[#allocation3 + $0x130] sm:$0xff] %v6072
        %6121 = vst [vmem:[#allocation3 + $0x138] sm:$0xff] %v6073
        %6122 = vst [vmem:[#allocation3 + $0x140] sm:$0xff] %v6074
        %6123 = vst [vmem:[#allocation3 + $0x148] sm:$0xff] %v6075
        %6124 = vst [vmem:[#allocation3 + $0x150] sm:$0xff] %v6076
        %6125 = vst [vmem:[#allocation3 + $0x158] sm:$0xff] %v6077
        %6126 = vst [vmem:[#allocation3 + $0x160] sm:$0xff] %v6078
        %6127 = vst [vmem:[#allocation3 + $0x168] sm:$0xff] %v6079
        %6128 = vst [vmem:[#allocation3 + $0x170] sm:$0xff] %v6080
        %6129 = vst [vmem:[#allocation3 + $0x178] sm:$0xff] %v6081
        %v6130 = vld [vmem:[#allocation3] sm:$0xff]
        %v6131 = vld [vmem:[#allocation3 + $0x8] sm:$0xff]
        %v6132 = vld [vmem:[#allocation3 + $0x10] sm:$0xff]
        %v6133 = vld [vmem:[#allocation3 + $0x18] sm:$0xff]
        %v6134 = vld [vmem:[#allocation3 + $0x20] sm:$0xff]
        %v6135 = vld [vmem:[#allocation3 + $0x28] sm:$0xff]
        %v6136 = vld [vmem:[#allocation3 + $0x30] sm:$0xff]
        %v6137 = vld [vmem:[#allocation3 + $0x38] sm:$0xff]
        %v6138 = vld [vmem:[#allocation3 + $0x40] sm:$0xff]
        %v6139 = vld [vmem:[#allocation3 + $0x48] sm:$0xff]
        %v6140 = vld [vmem:[#allocation3 + $0x50] sm:$0xff]
        %v6141 = vld [vmem:[#allocation3 + $0x58] sm:$0xff]
        %v6142 = vld [vmem:[#allocation3 + $0x60] sm:$0xff]
        %v6143 = vld [vmem:[#allocation3 + $0x68] sm:$0xff]
        %v6144 = vld [vmem:[#allocation3 + $0x70] sm:$0xff]
        %v6145 = vld [vmem:[#allocation3 + $0x78] sm:$0xff]
        %v6146 = vld [vmem:[#allocation3 + $0x80] sm:$0xff]
        %v6147 = vld [vmem:[#allocation3 + $0x88] sm:$0xff]
        %v6148 = vld [vmem:[#allocation3 + $0x90] sm:$0xff]
        %v6149 = vld [vmem:[#allocation3 + $0x98] sm:$0xff]
        %v6150 = vld [vmem:[#allocation3 + $0xa0] sm:$0xff]
        %v6151 = vld [vmem:[#allocation3 + $0xa8] sm:$0xff]
        %v6152 = vld [vmem:[#allocation3 + $0xb0] sm:$0xff]
        %v6153 = vld [vmem:[#allocation3 + $0xb8] sm:$0xff]
        %v6154 = vld [vmem:[#allocation3 + $0xc0] sm:$0xff]
        %v6155 = vld [vmem:[#allocation3 + $0xc8] sm:$0xff]
        %v6156 = vld [vmem:[#allocation3 + $0xd0] sm:$0xff]
        %v6157 = vld [vmem:[#allocation3 + $0xd8] sm:$0xff]
        %v6158 = vld [vmem:[#allocation3 + $0xe0] sm:$0xff]
        %v6159 = vld [vmem:[#allocation3 + $0xe8] sm:$0xff]
        %v6160 = vld [vmem:[#allocation3 + $0xf0] sm:$0xff]
        %v6161 = vld [vmem:[#allocation3 + $0xf8] sm:$0xff]
        %v6162 = vld [vmem:[#allocation3 + $0x100] sm:$0xff]
        %v6163 = vld [vmem:[#allocation3 + $0x108] sm:$0xff]
        %v6164 = vld [vmem:[#allocation3 + $0x110] sm:$0xff]
        %v6165 = vld [vmem:[#allocation3 + $0x118] sm:$0xff]
        %v6166 = vld [vmem:[#allocation3 + $0x120] sm:$0xff]
        %v6167 = vld [vmem:[#allocation3 + $0x128] sm:$0xff]
        %v6168 = vld [vmem:[#allocation3 + $0x130] sm:$0xff]
        %v6169 = vld [vmem:[#allocation3 + $0x138] sm:$0xff]
        %v6170 = vld [vmem:[#allocation3 + $0x140] sm:$0xff]
        %v6171 = vld [vmem:[#allocation3 + $0x148] sm:$0xff]
        %v6172 = vld [vmem:[#allocation3 + $0x150] sm:$0xff]
        %v6173 = vld [vmem:[#allocation3 + $0x158] sm:$0xff]
        %v6174 = vld [vmem:[#allocation3 + $0x160] sm:$0xff]
        %v6175 = vld [vmem:[#allocation3 + $0x168] sm:$0xff]
        %v6176 = vld [vmem:[#allocation3 + $0x170] sm:$0xff]
        %v6177 = vld [vmem:[#allocation3 + $0x178] sm:$0xff]
        %v6178 = vld [vmem:[%s3] sm:$0x1]
        %v6180 = vlaneseq
        %v6181 = vshrl.u32 %v6180, 7
        %v6182 = vsub.s32 0, %v6181
        %v6183 = vrot.slane %v6178, %v6182
        %v6185 = vadd.f32 %v6130, %v6183
        %v6186 = vadd.f32 %v6131, %v6183
        %v6187 = vadd.f32 %v6132, %v6183
        %v6188 = vadd.f32 %v6133, %v6183
        %v6189 = vadd.f32 %v6134, %v6183
        %v6190 = vadd.f32 %v6135, %v6183
        %v6191 = vadd.f32 %v6136, %v6183
        %v6192 = vadd.f32 %v6137, %v6183
        %v6193 = vadd.f32 %v6138, %v6183
        %v6194 = vadd.f32 %v6139, %v6183
        %v6195 = vadd.f32 %v6140, %v6183
        %v6196 = vadd.f32 %v6141, %v6183
        %v6197 = vadd.f32 %v6142, %v6183
        %v6198 = vadd.f32 %v6143, %v6183
        %v6199 = vadd.f32 %v6144, %v6183
        %v6200 = vadd.f32 %v6145, %v6183
        %v6201 = vadd.f32 %v6146, %v6183
        %v6202 = vadd.f32 %v6147, %v6183
        %v6203 = vadd.f32 %v6148, %v6183
        %v6204 = vadd.f32 %v6149, %v6183
        %v6205 = vadd.f32 %v6150, %v6183
        %v6206 = vadd.f32 %v6151, %v6183
        %v6207 = vadd.f32 %v6152, %v6183
        %v6208 = vadd.f32 %v6153, %v6183
        %v6209 = vadd.f32 %v6154, %v6183
        %v6210 = vadd.f32 %v6155, %v6183
        %v6211 = vadd.f32 %v6156, %v6183
        %v6212 = vadd.f32 %v6157, %v6183
        %v6213 = vadd.f32 %v6158, %v6183
        %v6214 = vadd.f32 %v6159, %v6183
        %v6215 = vadd.f32 %v6160, %v6183
        %v6216 = vadd.f32 %v6161, %v6183
        %v6217 = vadd.f32 %v6162, %v6183
        %v6218 = vadd.f32 %v6163, %v6183
        %v6219 = vadd.f32 %v6164, %v6183
        %v6220 = vadd.f32 %v6165, %v6183
        %v6221 = vadd.f32 %v6166, %v6183
        %v6222 = vadd.f32 %v6167, %v6183
        %v6223 = vadd.f32 %v6168, %v6183
        %v6224 = vadd.f32 %v6169, %v6183
        %v6225 = vadd.f32 %v6170, %v6183
        %v6226 = vadd.f32 %v6171, %v6183
        %v6227 = vadd.f32 %v6172, %v6183
        %v6228 = vadd.f32 %v6173, %v6183
        %v6229 = vadd.f32 %v6174, %v6183
        %v6230 = vadd.f32 %v6175, %v6183
        %v6231 = vadd.f32 %v6176, %v6183
        %v6232 = vadd.f32 %v6177, %v6183
        %v6233 = vmul.f32 %v6185, 0.5
        %v6234 = vmul.f32 %v6186, 0.5
        %v6235 = vmul.f32 %v6187, 0.5
        %v6236 = vmul.f32 %v6188, 0.5
        %v6237 = vmul.f32 %v6189, 0.5
        %v6238 = vmul.f32 %v6190, 0.5
        %v6239 = vmul.f32 %v6191, 0.5
        %v6240 = vmul.f32 %v6192, 0.5
        %v6241 = vmul.f32 %v6193, 0.5
        %v6242 = vmul.f32 %v6194, 0.5
        %v6243 = vmul.f32 %v6195, 0.5
        %v6244 = vmul.f32 %v6196, 0.5
        %v6245 = vmul.f32 %v6197, 0.5
        %v6246 = vmul.f32 %v6198, 0.5
        %v6247 = vmul.f32 %v6199, 0.5
        %v6248 = vmul.f32 %v6200, 0.5
        %v6249 = vmul.f32 %v6201, 0.5
        %v6250 = vmul.f32 %v6202, 0.5
        %v6251 = vmul.f32 %v6203, 0.5
        %v6252 = vmul.f32 %v6204, 0.5
        %v6253 = vmul.f32 %v6205, 0.5
        %v6254 = vmul.f32 %v6206, 0.5
        %v6255 = vmul.f32 %v6207, 0.5
        %v6256 = vmul.f32 %v6208, 0.5
        %v6257 = vmul.f32 %v6209, 0.5
        %v6258 = vmul.f32 %v6210, 0.5
        %v6259 = vmul.f32 %v6211, 0.5
        %v6260 = vmul.f32 %v6212, 0.5
        %v6261 = vmul.f32 %v6213, 0.5
        %v6262 = vmul.f32 %v6214, 0.5
        %v6263 = vmul.f32 %v6215, 0.5
        %v6264 = vmul.f32 %v6216, 0.5
        %v6265 = vmul.f32 %v6217, 0.5
        %v6266 = vmul.f32 %v6218, 0.5
        %v6267 = vmul.f32 %v6219, 0.5
        %v6268 = vmul.f32 %v6220, 0.5
        %v6269 = vmul.f32 %v6221, 0.5
        %v6270 = vmul.f32 %v6222, 0.5
        %v6271 = vmul.f32 %v6223, 0.5
        %v6272 = vmul.f32 %v6224, 0.5
        %v6273 = vmul.f32 %v6225, 0.5
        %v6274 = vmul.f32 %v6226, 0.5
        %v6275 = vmul.f32 %v6227, 0.5
        %v6276 = vmul.f32 %v6228, 0.5
        %v6277 = vmul.f32 %v6229, 0.5
        %v6278 = vmul.f32 %v6230, 0.5
        %v6279 = vmul.f32 %v6231, 0.5
        %v6280 = vmul.f32 %v6232, 0.5
        %v6281 = vtanh.pop %v6233
        %v6282 = vtanh.pop %v6234
        %v6283 = vtanh.pop %v6235
        %v6284 = vtanh.pop %v6236
        %v6285 = vtanh.pop %v6237
        %v6286 = vtanh.pop %v6238
        %v6287 = vtanh.pop %v6239
        %v6288 = vtanh.pop %v6240
        %v6289 = vtanh.pop %v6241
        %v6290 = vtanh.pop %v6242
        %v6291 = vtanh.pop %v6243
        %v6292 = vtanh.pop %v6244
        %v6293 = vtanh.pop %v6245
        %v6294 = vtanh.pop %v6246
        %v6295 = vtanh.pop %v6247
        %v6296 = vtanh.pop %v6248
        %v6297 = vtanh.pop %v6249
        %v6298 = vtanh.pop %v6250
        %v6299 = vtanh.pop %v6251
        %v6300 = vtanh.pop %v6252
        %v6301 = vtanh.pop %v6253
        %v6302 = vtanh.pop %v6254
        %v6303 = vtanh.pop %v6255
        %v6304 = vtanh.pop %v6256
        %v6305 = vtanh.pop %v6257
        %v6306 = vtanh.pop %v6258
        %v6307 = vtanh.pop %v6259
        %v6308 = vtanh.pop %v6260
        %v6309 = vtanh.pop %v6261
        %v6310 = vtanh.pop %v6262
        %v6311 = vtanh.pop %v6263
        %v6312 = vtanh.pop %v6264
        %v6313 = vtanh.pop %v6265
        %v6314 = vtanh.pop %v6266
        %v6315 = vtanh.pop %v6267
        %v6316 = vtanh.pop %v6268
        %v6317 = vtanh.pop %v6269
        %v6318 = vtanh.pop %v6270
        %v6319 = vtanh.pop %v6271
        %v6320 = vtanh.pop %v6272
        %v6321 = vtanh.pop %v6273
        %v6322 = vtanh.pop %v6274
        %v6323 = vtanh.pop %v6275
        %v6324 = vtanh.pop %v6276
        %v6325 = vtanh.pop %v6277
        %v6326 = vtanh.pop %v6278
        %v6327 = vtanh.pop %v6279
        %v6328 = vtanh.pop %v6280
        %v6329 = vadd.f32 %v6281, 1.0
        %v6330 = vadd.f32 %v6282, 1.0
        %v6331 = vadd.f32 %v6283, 1.0
        %v6332 = vadd.f32 %v6284, 1.0
        %v6333 = vadd.f32 %v6285, 1.0
        %v6334 = vadd.f32 %v6286, 1.0
        %v6335 = vadd.f32 %v6287, 1.0
        %v6336 = vadd.f32 %v6288, 1.0
        %v6337 = vadd.f32 %v6289, 1.0
        %v6338 = vadd.f32 %v6290, 1.0
        %v6339 = vadd.f32 %v6291, 1.0
        %v6340 = vadd.f32 %v6292, 1.0
        %v6341 = vadd.f32 %v6293, 1.0
        %v6342 = vadd.f32 %v6294, 1.0
        %v6343 = vadd.f32 %v6295, 1.0
        %v6344 = vadd.f32 %v6296, 1.0
        %v6345 = vadd.f32 %v6297, 1.0
        %v6346 = vadd.f32 %v6298, 1.0
        %v6347 = vadd.f32 %v6299, 1.0
        %v6348 = vadd.f32 %v6300, 1.0
        %v6349 = vadd.f32 %v6301, 1.0
        %v6350 = vadd.f32 %v6302, 1.0
        %v6351 = vadd.f32 %v6303, 1.0
        %v6352 = vadd.f32 %v6304, 1.0
        %v6353 = vadd.f32 %v6305, 1.0
        %v6354 = vadd.f32 %v6306, 1.0
        %v6355 = vadd.f32 %v6307, 1.0
        %v6356 = vadd.f32 %v6308, 1.0
        %v6357 = vadd.f32 %v6309, 1.0
        %v6358 = vadd.f32 %v6310, 1.0
        %v6359 = vadd.f32 %v6311, 1.0
        %v6360 = vadd.f32 %v6312, 1.0
        %v6361 = vadd.f32 %v6313, 1.0
        %v6362 = vadd.f32 %v6314, 1.0
        %v6363 = vadd.f32 %v6315, 1.0
        %v6364 = vadd.f32 %v6316, 1.0
        %v6365 = vadd.f32 %v6317, 1.0
        %v6366 = vadd.f32 %v6318, 1.0
        %v6367 = vadd.f32 %v6319, 1.0
        %v6368 = vadd.f32 %v6320, 1.0
        %v6369 = vadd.f32 %v6321, 1.0
        %v6370 = vadd.f32 %v6322, 1.0
        %v6371 = vadd.f32 %v6323, 1.0
        %v6372 = vadd.f32 %v6324, 1.0
        %v6373 = vadd.f32 %v6325, 1.0
        %v6374 = vadd.f32 %v6326, 1.0
        %v6375 = vadd.f32 %v6327, 1.0
        %v6376 = vadd.f32 %v6328, 1.0
        %v6377 = vmul.f32 %v6233, %v6329
        %v6378 = vmul.f32 %v6234, %v6330
        %v6379 = vmul.f32 %v6235, %v6331
        %v6380 = vmul.f32 %v6236, %v6332
        %v6381 = vmul.f32 %v6237, %v6333
        %v6382 = vmul.f32 %v6238, %v6334
        %v6383 = vmul.f32 %v6239, %v6335
        %v6384 = vmul.f32 %v6240, %v6336
        %v6385 = vmul.f32 %v6241, %v6337
        %v6386 = vmul.f32 %v6242, %v6338
        %v6387 = vmul.f32 %v6243, %v6339
        %v6388 = vmul.f32 %v6244, %v6340
        %v6389 = vmul.f32 %v6245, %v6341
        %v6390 = vmul.f32 %v6246, %v6342
        %v6391 = vmul.f32 %v6247, %v6343
        %v6392 = vmul.f32 %v6248, %v6344
        %v6393 = vmul.f32 %v6249, %v6345
        %v6394 = vmul.f32 %v6250, %v6346
        %v6395 = vmul.f32 %v6251, %v6347
        %v6396 = vmul.f32 %v6252, %v6348
        %v6397 = vmul.f32 %v6253, %v6349
        %v6398 = vmul.f32 %v6254, %v6350
        %v6399 = vmul.f32 %v6255, %v6351
        %v6400 = vmul.f32 %v6256, %v6352
        %v6401 = vmul.f32 %v6257, %v6353
        %v6402 = vmul.f32 %v6258, %v6354
        %v6403 = vmul.f32 %v6259, %v6355
        %v6404 = vmul.f32 %v6260, %v6356
        %v6405 = vmul.f32 %v6261, %v6357
        %v6406 = vmul.f32 %v6262, %v6358
        %v6407 = vmul.f32 %v6263, %v6359
        %v6408 = vmul.f32 %v6264, %v6360
        %v6409 = vmul.f32 %v6265, %v6361
        %v6410 = vmul.f32 %v6266, %v6362
        %v6411 = vmul.f32 %v6267, %v6363
        %v6412 = vmul.f32 %v6268, %v6364
        %v6413 = vmul.f32 %v6269, %v6365
        %v6414 = vmul.f32 %v6270, %v6366
        %v6415 = vmul.f32 %v6271, %v6367
        %v6416 = vmul.f32 %v6272, %v6368
        %v6417 = vmul.f32 %v6273, %v6369
        %v6418 = vmul.f32 %v6274, %v6370
        %v6419 = vmul.f32 %v6275, %v6371
        %v6420 = vmul.f32 %v6276, %v6372
        %v6421 = vmul.f32 %v6277, %v6373
        %v6422 = vmul.f32 %v6278, %v6374
        %v6423 = vmul.f32 %v6279, %v6375
        %v6424 = vmul.f32 %v6280, %v6376
        %6425 = vst [vmem:[%s263] sm:$0xff] %v6377
        %6426 = vst [vmem:[%s263 + $0x8] sm:$0xff] %v6378
        %6427 = vst [vmem:[%s263 + $0x10] sm:$0xff] %v6379
        %6428 = vst [vmem:[%s263 + $0x18] sm:$0xff] %v6380
        %6429 = vst [vmem:[%s263 + $0x20] sm:$0xff] %v6381
        %6430 = vst [vmem:[%s263 + $0x28] sm:$0xff] %v6382
        %6431 = vst [vmem:[%s263 + $0x30] sm:$0xff] %v6383
        %6432 = vst [vmem:[%s263 + $0x38] sm:$0xff] %v6384
        %6433 = vst [vmem:[%s263 + $0x40] sm:$0xff] %v6385
        %6434 = vst [vmem:[%s263 + $0x48] sm:$0xff] %v6386
        %6435 = vst [vmem:[%s263 + $0x50] sm:$0xff] %v6387
        %6436 = vst [vmem:[%s263 + $0x58] sm:$0xff] %v6388
        %6437 = vst [vmem:[%s263 + $0x60] sm:$0xff] %v6389
        %6438 = vst [vmem:[%s263 + $0x68] sm:$0xff] %v6390
        %6439 = vst [vmem:[%s263 + $0x70] sm:$0xff] %v6391
        %6440 = vst [vmem:[%s263 + $0x78] sm:$0xff] %v6392
        %6441 = vst [vmem:[%s263 + $0x80] sm:$0xff] %v6393
        %6442 = vst [vmem:[%s263 + $0x88] sm:$0xff] %v6394
        %6443 = vst [vmem:[%s263 + $0x90] sm:$0xff] %v6395
        %6444 = vst [vmem:[%s263 + $0x98] sm:$0xff] %v6396
        %6445 = vst [vmem:[%s263 + $0xa0] sm:$0xff] %v6397
        %6446 = vst [vmem:[%s263 + $0xa8] sm:$0xff] %v6398
        %6447 = vst [vmem:[%s263 + $0xb0] sm:$0xff] %v6399
        %6448 = vst [vmem:[%s263 + $0xb8] sm:$0xff] %v6400
        %6449 = vst [vmem:[%s263 + $0xc0] sm:$0xff] %v6401
        %6450 = vst [vmem:[%s263 + $0xc8] sm:$0xff] %v6402
        %6451 = vst [vmem:[%s263 + $0xd0] sm:$0xff] %v6403
        %6452 = vst [vmem:[%s263 + $0xd8] sm:$0xff] %v6404
        %6453 = vst [vmem:[%s263 + $0xe0] sm:$0xff] %v6405
        %6454 = vst [vmem:[%s263 + $0xe8] sm:$0xff] %v6406
        %6455 = vst [vmem:[%s263 + $0xf0] sm:$0xff] %v6407
        %6456 = vst [vmem:[%s263 + $0xf8] sm:$0xff] %v6408
        %6457 = vst [vmem:[%s263 + $0x100] sm:$0xff] %v6409
        %6458 = vst [vmem:[%s263 + $0x108] sm:$0xff] %v6410
        %6459 = vst [vmem:[%s263 + $0x110] sm:$0xff] %v6411
        %6460 = vst [vmem:[%s263 + $0x118] sm:$0xff] %v6412
        %6461 = vst [vmem:[%s263 + $0x120] sm:$0xff] %v6413
        %6462 = vst [vmem:[%s263 + $0x128] sm:$0xff] %v6414
        %6463 = vst [vmem:[%s263 + $0x130] sm:$0xff] %v6415
        %6464 = vst [vmem:[%s263 + $0x138] sm:$0xff] %v6416
        %6465 = vst [vmem:[%s263 + $0x140] sm:$0xff] %v6417
        %6466 = vst [vmem:[%s263 + $0x148] sm:$0xff] %v6418
        %6467 = vst [vmem:[%s263 + $0x150] sm:$0xff] %v6419
        %6468 = vst [vmem:[%s263 + $0x158] sm:$0xff] %v6420
        %6469 = vst [vmem:[%s263 + $0x160] sm:$0xff] %v6421
        %6470 = vst [vmem:[%s263 + $0x168] sm:$0xff] %v6422
        %6471 = vst [vmem:[%s263 + $0x170] sm:$0xff] %v6423
        %6472 = vst [vmem:[%s263 + $0x178] sm:$0xff] %v6424
        %s6473 = sand.u32 %s142, 1
        %s6474 = scalar_lea.sflag [#allocation5], %s6473
        %s6475 = sand.u32 %s142, 1
        %s6476 = smul.addr %s6475, 384
        %s6477 = scalar_lea.vmem [#allocation4], %s6476
        // Predicated region
        $region37: #{tpu_custom_call.1} parent=35 // pred_check
          %p6478 = pneg %p152
        $region38: #{tpu_custom_call.1} parent=35 // pred_check_branch
          %6480 = sbr.rel (%p6478) target = $region40
        $region39: #{tpu_custom_call.1} parent=35 // pred_region
          %s6481 = smul.u32 48, %s23
          %s6483 = ssub.s32 6144, 6144
          %6484 = vsyncadd %s6474, %s6483
          %s6485 = smul.addr %s22, 48
          %s6486 = sadd.s32 %s6481, %s6485
          %s6487 = smul.addr %s6486, 128
          %s6488 = scalar_lea.hbm %s4, %s6487
          %s6489 = sshll.u32 %s6477, 4
          %s6490 = int_to_ptr.vmem [resolvable:$true] %s6489
          %6495 = dma.vmem_to_hbm [thread:$0]  %s6490, 6144, %s6488, %s6474, 128, 128, 8
        $region40: #{tpu_custom_call.1} parent=35 // pred_fallthru
          _
      $region36: #{tpu_custom_call.1} parent=5 // pred_fallthru
        _
      %p6496 = scmp.le.s32.totalorder 2, %s13
      // Predicated region
      $region41: #{tpu_custom_call.1} parent=5 // pred_check
        %p6497 = pneg %p6496
      $region42: #{tpu_custom_call.1} parent=5 // pred_check_branch
        %6499 = sbr.rel (%p6497) target = $region44
      $region43: #{tpu_custom_call.1} parent=5 // pred_region
        %s6500 = ssub.s32 %s13, 2
        // Predicated region
        $region45: #{tpu_custom_call.1} parent=43 // pred_check
          %p6501 = pneg %p158
        $region46: #{tpu_custom_call.1} parent=43 // pred_check_branch
          %6503 = sbr.rel (%p6501) target = $region48
        $region47: #{tpu_custom_call.1} parent=43 // pred_region
          %s6504 = sand.u32 %s143, 1
          %s6505 = scalar_lea.sflag [#allocation5], %s6504
          %s6506 = sand.u32 %s143, 1
          %s6507 = smul.addr %s6506, 384
          %s6508 = scalar_lea.vmem [#allocation4], %s6507
          %6509 = dma.done %s6505, 6144
        $region48: #{tpu_custom_call.1} parent=43 // pred_fallthru
          _
      $region44: #{tpu_custom_call.1} parent=5 // pred_fallthru
        _
    $region6: #{tpu_custom_call.1} parent=1 // loop_footer
      %s17 = sadd.s32 1, %s13
    $region7: #{tpu_custom_call.1} parent=1 // loop_footer_branch
      %12 = sbr.rel target = $region3
    $region8: #{tpu_custom_call.1} parent=1 // loop_exit
      _
    %6510 = vsyncpa [#allocation5], 1
    %s6511 = scalar_lea.sflag [#allocation5], 1
    %6512 = vsyncpa %s6511, 1

</llo_original>
